<compile_context>
chip_gen: v7x
topology: tpu7x:2x2x1
jax: 0.10.0
libtpu: 0.0.40
codegen_flags: <defaults>
</compile_context>

<pallas_src>
import functools

import jax
import jax.numpy as jnp
from jax import lax
from jax.experimental import pallas as pl
from jax.experimental.pallas import tpu as pltpu

BN_EPS = 1e-5

_COMPILER_PARAMS = pltpu.CompilerParams(
    dimension_semantics=("parallel",),          # batch axis is independent work
    vmem_limit_bytes=32 * 1024 * 1024,
)


# ----------------------------- Pallas kernels ------------------------------

def _conv3x3_kernel(x_ref, w_ref, o_ref, *, wp2, pout):
    """Fused reflect-padded 3x3 conv as 9 accumulated MXU matmuls.

    x_ref : (1, (H+2)*(W+2)+2, Cin)   flattened padded image (+2 slack rows)
    w_ref : (9, Cin, Cout)            taps in (dy, dx) row-major order
    o_ref : (1, H*(W+2), Cout)        output on the padded-width flat grid
    """
    acc = None
    for t in range(9):
        dy, dx = divmod(t, 3)
        off = dy * wp2 + dx
        part = jnp.dot(x_ref[0, off:off + pout, :], w_ref[t],
                       preferred_element_type=jnp.float32)
        acc = part if acc is None else acc + part
    o_ref[0] = acc


def _pointwise_kernel(x_ref, w_ref, scale_ref, shift_ref, o_ref, *, relu):
    """1x1 conv (token-major matmul) + folded BatchNorm affine + optional ReLU."""
    y = jnp.dot(x_ref[0], w_ref[...], preferred_element_type=jnp.float32)
    y = y * scale_ref[...] + shift_ref[...]
    if relu:
        y = jnp.maximum(y, 0.0)
    o_ref[0] = y


def _finalize_kernel(*refs, has_res):
    """SpectralTransform.conv2 (zero-padded to full width) + add to 3x3-conv output +
    folded BN + ReLU (+ residual add of the block input)."""
    if has_res:
        y_ref, spec_ref, w2_ref, scale_ref, shift_ref, res_ref, o_ref = refs
    else:
        y_ref, spec_ref, w2_ref, scale_ref, shift_ref, o_ref = refs
        res_ref = None
    z = y_ref[0] + jnp.dot(spec_ref[0], w2_ref[...],
                           preferred_element_type=jnp.float32)
    z = jnp.maximum(z * scale_ref[...] + shift_ref[...], 0.0)
    if has_res:
        z = z + res_ref[0]
    o_ref[0] = z


# ------------------------------ Pallas wrappers -----------------------------

def _conv3x3_pallas(xflat, w9, h, w):
    b, p2p, cin = xflat.shape
    cout = w9.shape[-1]
    pout = h * (w + 2)
    return pl.pallas_call(
        functools.partial(_conv3x3_kernel, wp2=w + 2, pout=pout),
        out_shape=jax.ShapeDtypeStruct((b, pout, cout), jnp.float32),
        grid_spec=pltpu.PrefetchScalarGridSpec(
            num_scalar_prefetch=0, grid=(b,),
            in_specs=[pl.BlockSpec((1, p2p, cin), lambda i: (i, 0, 0)),
                      pl.BlockSpec((9, cin, cout), lambda i: (0, 0, 0))],
            out_specs=pl.BlockSpec((1, pout, cout), lambda i: (i, 0, 0))),
        compiler_params=_COMPILER_PARAMS,
    )(xflat, w9)


def _pointwise_pallas(x, wgt, scale, shift, *, relu):
    b, n, cin = x.shape
    cout = wgt.shape[-1]
    return pl.pallas_call(
        functools.partial(_pointwise_kernel, relu=relu),
        out_shape=jax.ShapeDtypeStruct((b, n, cout), jnp.float32),
        grid_spec=pltpu.PrefetchScalarGridSpec(
            num_scalar_prefetch=0, grid=(b,),
            in_specs=[pl.BlockSpec((1, n, cin), lambda i: (i, 0, 0)),
                      pl.BlockSpec((cin, cout), lambda i: (0, 0)),
                      pl.BlockSpec((1, cout), lambda i: (0, 0)),
                      pl.BlockSpec((1, cout), lambda i: (0, 0))],
            out_specs=pl.BlockSpec((1, n, cout), lambda i: (i, 0, 0))),
        compiler_params=_COMPILER_PARAMS,
    )(x, wgt, scale.reshape(1, cout), shift.reshape(1, cout))


def _finalize_pallas(y, spec, w2pad, scale, shift, res=None):
    b, n, c = y.shape
    cg2 = spec.shape[-1]
    inputs = [y, spec, w2pad, scale.reshape(1, c), shift.reshape(1, c)]
    in_specs = [pl.BlockSpec((1, n, c), lambda i: (i, 0, 0)),
                pl.BlockSpec((1, n, cg2), lambda i: (i, 0, 0)),
                pl.BlockSpec((cg2, c), lambda i: (0, 0)),
                pl.BlockSpec((1, c), lambda i: (0, 0)),
                pl.BlockSpec((1, c), lambda i: (0, 0))]
    if res is not None:
        inputs.append(res)
        in_specs.append(pl.BlockSpec((1, n, c), lambda i: (i, 0, 0)))
    return pl.pallas_call(
        functools.partial(_finalize_kernel, has_res=res is not None),
        out_shape=jax.ShapeDtypeStruct((b, n, c), jnp.float32),
        grid_spec=pltpu.PrefetchScalarGridSpec(
            num_scalar_prefetch=0, grid=(b,),
            in_specs=in_specs,
            out_specs=pl.BlockSpec((1, n, c), lambda i: (i, 0, 0))),
        compiler_params=_COMPILER_PARAMS,
    )(*inputs)


# -------------------------- module forward (Pallas) -------------------------

def _fourier_unit(x, wgt, scale, shift, pointwise_fn):
    """FourierUnit (fft_norm='ortho'): rfft2 -> interleaved re/im channels ->
    1x1 conv + BN + ReLU -> back to complex -> irfft2.  Channel-last layout."""
    b, h, w, c = x.shape
    # TODO(synk): 2-D real FFT/IFFT has no Pallas primitive; computed with jnp.fft (XLA) here.
    f = jnp.fft.rfft2(x, axes=(1, 2), norm="ortho")                 # (B, H, Wf, C) complex
    wf = f.shape[2]
    fr = jnp.stack([f.real, f.imag], axis=-1).reshape(b, h, wf, 2 * c)   # [c0_re, c0_im, ...]
    g = pointwise_fn(fr.reshape(b, h * wf, 2 * c), wgt, scale, shift)
    g = g.reshape(b, h, wf, c, 2)
    gc = lax.complex(g[..., 0], g[..., 1])
    return jnp.fft.irfft2(gc, s=(h, w), axes=(1, 2), norm="ortho")


def _pointwise_relu_pallas(x, wgt, scale, shift):
    return _pointwise_pallas(x, wgt, scale, shift, relu=True)


def _ffc_bn_act_pallas(x_l, x_g, p, residual=None):
    """One FFC_BN_ACT layer (kernel_size=3, reflect pad, bias=False, eval-mode BN, ReLU)."""
    b, h, w, cl = x_l.shape
    cg = x_g.shape[-1]
    c = cl + cg
    hw = h * w
    out_cl = cl          # FFCResnetBlock uses dim->dim with ratio_gin == ratio_gout

    # --- fused 3x3 conv: block weight [l2l | l2g ; g2l | 0] -> one kernel, one MXU pass ---
    x = jnp.concatenate([x_l, x_g], axis=-1)
    xpad = jnp.pad(x, ((0, 0), (1, 1), (1, 1), (0, 0)), mode="reflect")
    xflat = xpad.reshape(b, (h + 2) * (w + 2), c)
    xflat = jnp.pad(xflat, ((0, 0), (0, 2), (0, 0)))   # slack rows so every tap slice is in-bounds
    y = _conv3x3_pallas(xflat, p["w_conv9"], h, w)     # (B, H*(W+2), C)
    y = y.reshape(b, h, w + 2, c)[:, :, :w, :]         # drop the padded-width garbage columns

    # --- SpectralTransform(x_g): conv1(1x1)+BN+ReLU, FourierUnit, LFU ---
    s = _pointwise_pallas(x_g.reshape(b, hw, cg), p["w_st1"],
                          p["st1_scale"], p["st1_shift"], relu=True)
    cg2 = s.shape[-1]
    s = s.reshape(b, h, w, cg2)
    fu = _fourier_unit(s, p["w_fu"], p["fu_scale"], p["fu_shift"], _pointwise_relu_pallas)
    # LFU (enable_lfu=True): take first cg2//4 channels, fold 2x2 spatial quadrants into
    # channels, run a FourierUnit at half resolution, tile back.  (Pure layout ops in XLA.)
    s4 = s[..., :cg2 // 4]
    xs = jnp.concatenate([s4[:, :h // 2], s4[:, h // 2:]], axis=-1)
    xs = jnp.concatenate([xs[:, :, :w // 2], xs[:, :, w // 2:]], axis=-1)
    lf = _fourier_unit(xs, p["w_lfu"], p["lfu_scale"], p["lfu_shift"], _pointwise_relu_pallas)
    lf = jnp.tile(lf, (1, 2, 2, 1))
    spec_in = (s + fu + lf).reshape(b, hw, cg2)

    # --- SpectralTransform.conv2 + combine local/global + BN + ReLU (+ residual), fused ---
    res = None
    if residual is not None:
        res = jnp.concatenate(residual, axis=-1).reshape(b, hw, c)
    z = _finalize_pallas(y.reshape(b, hw, c), spec_in, p["w_st2_pad"],
                         p["bn_scale"], p["bn_shift"], res)
    z = z.reshape(b, h, w, c)
    return z[..., :out_cl], z[..., out_cl:]


def ffc_resnet_block_pallas(x_l, x_g, params):
    """FFCResnetBlock.forward for tuple input (x_l, x_g), NHWC layout."""
    id_l, id_g = x_l, x_g
    x_l, x_g = _ffc_bn_act_pallas(x_l, x_g, params["conv1"])
    x_l, x_g = _ffc_bn_act_pallas(x_l, x_g, params["conv2"], residual=(id_l, id_g))
    return x_l, x_g


def ffc_resnet_block_nchw(x_l_nchw, x_g_nchw, params):
    """NCHW interface matching the PyTorch module."""
    to_nhwc = lambda t: jnp.transpose(t, (0, 2, 3, 1))
    to_nchw = lambda t: jnp.transpose(t, (0, 3, 1, 2))
    o_l, o_g = ffc_resnet_block_pallas(to_nhwc(x_l_nchw), to_nhwc(x_g_nchw), params)
    return to_nchw(o_l), to_nchw(o_g)


# -------------------------- pure-JAX reference path -------------------------

def _pointwise_ref(x, wgt, scale, shift):
    return jnp.maximum(jnp.einsum("bnc,co->bno", x, wgt) * scale + shift, 0.0)


def _ffc_bn_act_ref(x_l, x_g, p):
    b, h, w, cl = x_l.shape
    cg = x_g.shape[-1]
    out_cl = cl
    x = jnp.concatenate([x_l, x_g], axis=-1)
    xpad = jnp.pad(x, ((0, 0), (1, 1), (1, 1), (0, 0)), mode="reflect")
    y = lax.conv_general_dilated(xpad, p["w_conv"], (1, 1), "VALID",
                                 dimension_numbers=("NHWC", "HWIO", "NHWC"))
    s = _pointwise_ref(x_g.reshape(b, h * w, cg), p["w_st1"],
                       p["st1_scale"], p["st1_shift"]).reshape(b, h, w, -1)
    cg2 = s.shape[-1]
    fu = _fourier_unit(s, p["w_fu"], p["fu_scale"], p["fu_shift"], _pointwise_ref)
    s4 = s[..., :cg2 // 4]
    xs = jnp.concatenate([s4[:, :h // 2], s4[:, h // 2:]], axis=-1)
    xs = jnp.concatenate([xs[:, :, :w // 2], xs[:, :, w // 2:]], axis=-1)
    lf = _fourier_unit(xs, p["w_lfu"], p["lfu_scale"], p["lfu_shift"], _pointwise_ref)
    lf = jnp.tile(lf, (1, 2, 2, 1))
    spec = jnp.einsum("bhwc,co->bhwo", s + fu + lf, p["w_st2"])
    yl = y[..., :out_cl]
    yg = y[..., out_cl:] + spec
    z = jnp.concatenate([yl, yg], axis=-1)
    z = jnp.maximum(z * p["bn_scale"] + p["bn_shift"], 0.0)
    return z[..., :out_cl], z[..., out_cl:]


def ffc_resnet_block_ref_nchw(x_l_nchw, x_g_nchw, params):
    to_nhwc = lambda t: jnp.transpose(t, (0, 2, 3, 1))
    to_nchw = lambda t: jnp.transpose(t, (0, 3, 1, 2))
    x_l, x_g = to_nhwc(x_l_nchw), to_nhwc(x_g_nchw)
    id_l, id_g = x_l, x_g
    x_l, x_g = _ffc_bn_act_ref(x_l, x_g, params["conv1"])
    x_l, x_g = _ffc_bn_act_ref(x_l, x_g, params["conv2"])
    return to_nchw(id_l + x_l), to_nchw(id_g + x_g)


# ------------------------------ parameter setup -----------------------------

def _fold_bn(key, c):
    """Eval-mode BatchNorm2d folded to per-channel scale/shift."""
    k1, k2, k3, k4 = jax.random.split(key, 4)
    gamma = 1.0 + 0.1 * jax.random.normal(k1, (c,), jnp.float32)
    beta = 0.1 * jax.random.normal(k2, (c,), jnp.float32)
    running_mean = 0.1 * jax.random.normal(k3, (c,), jnp.float32)
    running_var = 1.0 + 0.2 * jax.random.uniform(k4, (c,), jnp.float32)
    scale = gamma * lax.rsqrt(running_var + BN_EPS)
    shift = beta - running_mean * scale
    return scale, shift


def _init_ffc_bn_act(key, dim, ratio_gin, ratio_gout):
    in_cg = int(dim * ratio_gin)
    in_cl = dim - in_cg
    out_cg = int(dim * ratio_gout)
    out_cl = dim - out_cg
    cg2 = out_cg // 2
    ks = jax.random.split(key, 12)
    nrm = jax.random.normal
    s3 = (9 * dim) ** -0.5
    w_l2l = s3 * nrm(ks[0], (3, 3, in_cl, out_cl), jnp.float32)
    w_l2g = s3 * nrm(ks[1], (3, 3, in_cl, out_cg), jnp.float32)
    w_g2l = s3 * nrm(ks[2], (3, 3, in_cg, out_cl), jnp.float32)
    # fused block weight: out cols [0:out_cl] = l2l(x_l)+g2l(x_g); cols [out_cl:] = l2g(x_l)
    w_conv = jnp.zeros((3, 3, dim, out_cl + out_cg), jnp.float32)
    w_conv = w_conv.at[:, :, :in_cl, :out_cl].set(w_l2l)
    w_conv = w_conv.at[:, :, :in_cl, out_cl:].set(w_l2g)
    w_conv = w_conv.at[:, :, in_cl:, :out_cl].set(w_g2l)

    w_st1 = (in_cg ** -0.5) * nrm(ks[3], (in_cg, cg2), jnp.float32)
    st1_scale, st1_shift = _fold_bn(ks[4], cg2)
    w_fu = ((2 * cg2) ** -0.5) * nrm(ks[5], (2 * cg2, 2 * cg2), jnp.float32)
    fu_scale, fu_shift = _fold_bn(ks[6], 2 * cg2)
    w_lfu = ((2 * cg2) ** -0.5) * nrm(ks[7], (2 * cg2, 2 * cg2), jnp.float32)
    lfu_scale, lfu_shift = _fold_bn(ks[8], 2 * cg2)
    w_st2 = (cg2 ** -0.5) * nrm(ks[9], (cg2, out_cg), jnp.float32)
    bnl_scale, bnl_shift = _fold_bn(ks[10], out_cl)
    bng_scale, bng_shift = _fold_bn(ks[11], out_cg)

    # zero-pad conv2 weight to full width so the finalize kernel adds it only to global cols
    w_st2_pad = jnp.zeros((cg2, out_cl + out_cg), jnp.float32).at[:, out_cl:].set(w_st2)
    return {
        "w_conv": w_conv,
        "w_conv9": w_conv.reshape(9, dim, out_cl + out_cg),
        "w_st1": w_st1, "st1_scale": st1_scale, "st1_shift": st1_shift,
        "w_fu": w_fu, "fu_scale": fu_scale, "fu_shift": fu_shift,
        "w_lfu": w_lfu, "lfu_scale": lfu_scale, "lfu_shift": lfu_shift,
        "w_st2": w_st2, "w_st2_pad": w_st2_pad,
        "bn_scale": jnp.concatenate([bnl_scale, bng_scale]),
        "bn_shift": jnp.concatenate([bnl_shift, bng_shift]),
    }


# ------------------------------------ main -----------------------------------

if __name__ == "__main__":
    key = jax.random.PRNGKey(0)
    kxl, kxg, kp1, kp2 = jax.random.split(key, 4)

    B, DIM, H, W = 2, 64, 16, 16
    RATIO = 0.5                       # ratio_gin = ratio_gout = 0.5
    CG = int(DIM * RATIO)
    CL = DIM - CG

    # NCHW inputs like the PyTorch module (tuple input: local / global streams)
    x_l = jax.random.normal(kxl, (B, CL, H, W), jnp.float32)
    x_g = jax.random.normal(kxg, (B, CG, H, W), jnp.float32)
    params = {"conv1": _init_ffc_bn_act(kp1, DIM, RATIO, RATIO),
              "conv2": _init_ffc_bn_act(kp2, DIM, RATIO, RATIO)}

    out_l, out_g = jax.jit(ffc_resnet_block_nchw)(x_l, x_g, params)
    out_l = jax.block_until_ready(out_l)
    out_g = jax.block_until_ready(out_g)

    ref_l, ref_g = ffc_resnet_block_ref_nchw(x_l, x_g, params)
    ref_l = jax.block_until_ready(ref_l)
    ref_g = jax.block_until_ready(ref_g)

    assert out_l.shape == (B, CL, H, W) and out_g.shape == (B, CG, H, W)
    err_l = float(jnp.max(jnp.abs(out_l - ref_l)))
    err_g = float(jnp.max(jnp.abs(out_g - ref_g)))
    assert err_l < 1e-2 and err_g < 1e-2, (err_l, err_g)
    print("KERNEL_OK")
</pallas_src>

<mosaic_0001>
module attributes {stable_mosaic.version = 11 : i64} {
  func.func @_pointwise_kernel(%arg0: i32, %arg1: memref<1x256x32xf32, #tpu.memory_space<vmem>>, %arg2: memref<32x16xf32, #tpu.memory_space<vmem>>, %arg3: memref<1x16xf32, #tpu.memory_space<vmem>>, %arg4: memref<1x16xf32, #tpu.memory_space<vmem>>, %arg5: memref<1x256x16xf32, #tpu.memory_space<vmem>>) attributes {dimension_semantics = [#tpu.dimension_semantics<parallel>], iteration_bounds = array<i64: 2>, scalar_prefetch = 0 : i64, scratch_operands = 0 : i64, tpu.core_type = #tpu.core_type<tc>, window_params = [{transform_indices = @transform_0, window_bounds = array<i64: 1, 256, 32>}, {pipeline_mode = #tpu.pipeline_mode<synchronous>, transform_indices = @transform_1, window_bounds = array<i64: 32, 16>}, {pipeline_mode = #tpu.pipeline_mode<synchronous>, transform_indices = @transform_2, window_bounds = array<i64: 1, 16>}, {pipeline_mode = #tpu.pipeline_mode<synchronous>, transform_indices = @transform_3, window_bounds = array<i64: 1, 16>}, {transform_indices = @transform_4, window_bounds = array<i64: 1, 256, 16>}]} {
    %c0 = arith.constant 0 : index
    %c0_0 = arith.constant 0 : index
    %c0_1 = arith.constant 0 : index
    %0 = vector.load %arg1[%c0, %c0_0, %c0_1] : memref<1x256x32xf32, #tpu.memory_space<vmem>>, vector<1x256x32xf32>
    %1 = vector.shape_cast %0 : vector<1x256x32xf32> to vector<256x32xf32>
    %c0_2 = arith.constant 0 : index
    %c0_3 = arith.constant 0 : index
    %2 = vector.load %arg2[%c0_2, %c0_3] : memref<32x16xf32, #tpu.memory_space<vmem>>, vector<32x16xf32>
    %cst = arith.constant dense<0.000000e+00> : vector<256x16xf32>
    %3 = tpu.matmul %1, %2, %cst {dimension_numbers = #tpu.dot_dimension_numbers<[1], [0], [0], [1], [0, 0, 1, 1], [], []>} : vector<256x32xf32>, vector<32x16xf32>, vector<256x16xf32> -> vector<256x16xf32>
    %c0_4 = arith.constant 0 : index
    %c0_5 = arith.constant 0 : index
    %4 = vector.load %arg3[%c0_4, %c0_5] : memref<1x16xf32, #tpu.memory_space<vmem>>, vector<1x16xf32>
    %5 = vector.broadcast %4 : vector<1x16xf32> to vector<256x16xf32>
    %6 = arith.mulf %3, %5 : vector<256x16xf32>
    %c0_6 = arith.constant 0 : index
    %c0_7 = arith.constant 0 : index
    %7 = vector.load %arg4[%c0_6, %c0_7] : memref<1x16xf32, #tpu.memory_space<vmem>>, vector<1x16xf32>
    %8 = vector.broadcast %7 : vector<1x16xf32> to vector<256x16xf32>
    %9 = arith.addf %6, %8 : vector<256x16xf32>
    %cst_8 = arith.constant 0.000000e+00 : f32
    %10 = vector.broadcast %cst_8 : f32 to vector<256x16xf32>
    %11 = arith.maximumf %9, %10 : vector<256x16xf32>
    %c0_9 = arith.constant 0 : index
    %c0_10 = arith.constant 0 : index
    %c0_11 = arith.constant 0 : index
    %12 = vector.load %arg5[%c0_9, %c0_10, %c0_11] : memref<1x256x16xf32, #tpu.memory_space<vmem>>, vector<1x256x16xf32>
    %13 = vector.shape_cast %12 : vector<1x256x16xf32> to vector<256x16xf32>
    %14 = vector.shape_cast %11 : vector<256x16xf32> to vector<1x256x16xf32>
    tpu.vector_store %arg5[%c0_9, %c0_10, %c0_11], %14 {strides = array<i32>} : memref<1x256x16xf32, #tpu.memory_space<vmem>>, vector<1x256x16xf32>,
    return
  }
  func.func @transform_0(%arg0: i32) -> (i32, i32, i32) {
    %c0_i32 = arith.constant 0 : i32
    %c0_i32_0 = arith.constant 0 : i32
    %c0_i32_1 = arith.constant 0 : i32
    return %arg0, %c0_i32, %c0_i32_0 : i32, i32, i32
  }
  func.func @transform_1(%arg0: i32) -> (i32, i32) {
    %c0_i32 = arith.constant 0 : i32
    %c0_i32_0 = arith.constant 0 : i32
    %c0_i32_1 = arith.constant 0 : i32
    return %c0_i32, %c0_i32_0 : i32, i32
  }
  func.func @transform_2(%arg0: i32) -> (i32, i32) {
    %c0_i32 = arith.constant 0 : i32
    %c0_i32_0 = arith.constant 0 : i32
    %c0_i32_1 = arith.constant 0 : i32
    return %c0_i32, %c0_i32_0 : i32, i32
  }
  func.func @transform_3(%arg0: i32) -> (i32, i32) {
    %c0_i32 = arith.constant 0 : i32
    %c0_i32_0 = arith.constant 0 : i32
    %c0_i32_1 = arith.constant 0 : i32
    return %c0_i32, %c0_i32_0 : i32, i32
  }
  func.func @transform_4(%arg0: i32) -> (i32, i32, i32) {
    %c0_i32 = arith.constant 0 : i32
    %c0_i32_0 = arith.constant 0 : i32
    %c0_i32_1 = arith.constant 0 : i32
    return %arg0, %c0_i32, %c0_i32_0 : i32, i32, i32
  }
}

module attributes {stable_mosaic.version = 11 : i64} {
  func.func @_pointwise_kernel(%arg0: i32, %arg1: memref<1x144x32xf32, #tpu.memory_space<vmem>>, %arg2: memref<32x32xf32, #tpu.memory_space<vmem>>, %arg3: memref<1x32xf32, #tpu.memory_space<vmem>>, %arg4: memref<1x32xf32, #tpu.memory_space<vmem>>, %arg5: memref<1x144x32xf32, #tpu.memory_space<vmem>>) attributes {dimension_semantics = [#tpu.dimension_semantics<parallel>], iteration_bounds = array<i64: 2>, scalar_prefetch = 0 : i64, scratch_operands = 0 : i64, tpu.core_type = #tpu.core_type<tc>, window_params = [{transform_indices = @transform_0, window_bounds = array<i64: 1, 144, 32>}, {pipeline_mode = #tpu.pipeline_mode<synchronous>, transform_indices = @transform_1, window_bounds = array<i64: 32, 32>}, {pipeline_mode = #tpu.pipeline_mode<synchronous>, transform_indices = @transform_2, window_bounds = array<i64: 1, 32>}, {pipeline_mode = #tpu.pipeline_mode<synchronous>, transform_indices = @transform_3, window_bounds = array<i64: 1, 32>}, {transform_indices = @transform_4, window_bounds = array<i64: 1, 144, 32>}]} {
    %c0 = arith.constant 0 : index
    %c0_0 = arith.constant 0 : index
    %c0_1 = arith.constant 0 : index
    %0 = vector.load %arg1[%c0, %c0_0, %c0_1] : memref<1x144x32xf32, #tpu.memory_space<vmem>>, vector<1x144x32xf32>
    %1 = vector.shape_cast %0 : vector<1x144x32xf32> to vector<144x32xf32>
    %c0_2 = arith.constant 0 : index
    %c0_3 = arith.constant 0 : index
    %2 = vector.load %arg2[%c0_2, %c0_3] : memref<32x32xf32, #tpu.memory_space<vmem>>, vector<32x32xf32>
    %cst = arith.constant dense<0.000000e+00> : vector<144x32xf32>
    %3 = tpu.matmul %1, %2, %cst {dimension_numbers = #tpu.dot_dimension_numbers<[1], [0], [0], [1], [0, 0, 1, 1], [], []>} : vector<144x32xf32>, vector<32x32xf32>, vector<144x32xf32> -> vector<144x32xf32>
    %c0_4 = arith.constant 0 : index
    %c0_5 = arith.constant 0 : index
    %4 = vector.load %arg3[%c0_4, %c0_5] : memref<1x32xf32, #tpu.memory_space<vmem>>, vector<1x32xf32>
    %5 = vector.broadcast %4 : vector<1x32xf32> to vector<144x32xf32>
    %6 = arith.mulf %3, %5 : vector<144x32xf32>
    %c0_6 = arith.constant 0 : index
    %c0_7 = arith.constant 0 : index
    %7 = vector.load %arg4[%c0_6, %c0_7] : memref<1x32xf32, #tpu.memory_space<vmem>>, vector<1x32xf32>
    %8 = vector.broadcast %7 : vector<1x32xf32> to vector<144x32xf32>
    %9 = arith.addf %6, %8 : vector<144x32xf32>
    %cst_8 = arith.constant 0.000000e+00 : f32
    %10 = vector.broadcast %cst_8 : f32 to vector<144x32xf32>
    %11 = arith.maximumf %9, %10 : vector<144x32xf32>
    %c0_9 = arith.constant 0 : index
    %c0_10 = arith.constant 0 : index
    %c0_11 = arith.constant 0 : index
    %12 = vector.load %arg5[%c0_9, %c0_10, %c0_11] : memref<1x144x32xf32, #tpu.memory_space<vmem>>, vector<1x144x32xf32>
    %13 = vector.shape_cast %12 : vector<1x144x32xf32> to vector<144x32xf32>
    %14 = vector.shape_cast %11 : vector<144x32xf32> to vector<1x144x32xf32>
    tpu.vector_store %arg5[%c0_9, %c0_10, %c0_11], %14 {strides = array<i32>} : memref<1x144x32xf32, #tpu.memory_space<vmem>>, vector<1x144x32xf32>,
    return
  }
  func.func @transform_0(%arg0: i32) -> (i32, i32, i32) {
    %c0_i32 = arith.constant 0 : i32
    %c0_i32_0 = arith.constant 0 : i32
    %c0_i32_1 = arith.constant 0 : i32
    return %arg0, %c0_i32, %c0_i32_0 : i32, i32, i32
  }
  func.func @transform_1(%arg0: i32) -> (i32, i32) {
    %c0_i32 = arith.constant 0 : i32
    %c0_i32_0 = arith.constant 0 : i32
    %c0_i32_1 = arith.constant 0 : i32
    return %c0_i32, %c0_i32_0 : i32, i32
  }
  func.func @transform_2(%arg0: i32) -> (i32, i32) {
    %c0_i32 = arith.constant 0 : i32
    %c0_i32_0 = arith.constant 0 : i32
    %c0_i32_1 = arith.constant 0 : i32
    return %c0_i32, %c0_i32_0 : i32, i32
  }
  func.func @transform_3(%arg0: i32) -> (i32, i32) {
    %c0_i32 = arith.constant 0 : i32
    %c0_i32_0 = arith.constant 0 : i32
    %c0_i32_1 = arith.constant 0 : i32
    return %c0_i32, %c0_i32_0 : i32, i32
  }
  func.func @transform_4(%arg0: i32) -> (i32, i32, i32) {
    %c0_i32 = arith.constant 0 : i32
    %c0_i32_0 = arith.constant 0 : i32
    %c0_i32_1 = arith.constant 0 : i32
    return %arg0, %c0_i32, %c0_i32_0 : i32, i32, i32
  }
}

module attributes {stable_mosaic.version = 11 : i64} {
  func.func @_pointwise_kernel(%arg0: i32, %arg1: memref<1x40x32xf32, #tpu.memory_space<vmem>>, %arg2: memref<32x32xf32, #tpu.memory_space<vmem>>, %arg3: memref<1x32xf32, #tpu.memory_space<vmem>>, %arg4: memref<1x32xf32, #tpu.memory_space<vmem>>, %arg5: memref<1x40x32xf32, #tpu.memory_space<vmem>>) attributes {dimension_semantics = [#tpu.dimension_semantics<parallel>], iteration_bounds = array<i64: 2>, scalar_prefetch = 0 : i64, scratch_operands = 0 : i64, tpu.core_type = #tpu.core_type<tc>, window_params = [{transform_indices = @transform_0, window_bounds = array<i64: 1, 40, 32>}, {pipeline_mode = #tpu.pipeline_mode<synchronous>, transform_indices = @transform_1, window_bounds = array<i64: 32, 32>}, {pipeline_mode = #tpu.pipeline_mode<synchronous>, transform_indices = @transform_2, window_bounds = array<i64: 1, 32>}, {pipeline_mode = #tpu.pipeline_mode<synchronous>, transform_indices = @transform_3, window_bounds = array<i64: 1, 32>}, {transform_indices = @transform_4, window_bounds = array<i64: 1, 40, 32>}]} {
    %c0 = arith.constant 0 : index
    %c0_0 = arith.constant 0 : index
    %c0_1 = arith.constant 0 : index
    %0 = vector.load %arg1[%c0, %c0_0, %c0_1] : memref<1x40x32xf32, #tpu.memory_space<vmem>>, vector<1x40x32xf32>
    %1 = vector.shape_cast %0 : vector<1x40x32xf32> to vector<40x32xf32>
    %c0_2 = arith.constant 0 : index
    %c0_3 = arith.constant 0 : index
    %2 = vector.load %arg2[%c0_2, %c0_3] : memref<32x32xf32, #tpu.memory_space<vmem>>, vector<32x32xf32>
    %cst = arith.constant dense<0.000000e+00> : vector<40x32xf32>
    %3 = tpu.matmul %1, %2, %cst {dimension_numbers = #tpu.dot_dimension_numbers<[1], [0], [0], [1], [0, 0, 1, 1], [], []>} : vector<40x32xf32>, vector<32x32xf32>, vector<40x32xf32> -> vector<40x32xf32>
    %c0_4 = arith.constant 0 : index
    %c0_5 = arith.constant 0 : index
    %4 = vector.load %arg3[%c0_4, %c0_5] : memref<1x32xf32, #tpu.memory_space<vmem>>, vector<1x32xf32>
    %5 = vector.broadcast %4 : vector<1x32xf32> to vector<40x32xf32>
    %6 = arith.mulf %3, %5 : vector<40x32xf32>
    %c0_6 = arith.constant 0 : index
    %c0_7 = arith.constant 0 : index
    %7 = vector.load %arg4[%c0_6, %c0_7] : memref<1x32xf32, #tpu.memory_space<vmem>>, vector<1x32xf32>
    %8 = vector.broadcast %7 : vector<1x32xf32> to vector<40x32xf32>
    %9 = arith.addf %6, %8 : vector<40x32xf32>
    %cst_8 = arith.constant 0.000000e+00 : f32
    %10 = vector.broadcast %cst_8 : f32 to vector<40x32xf32>
    %11 = arith.maximumf %9, %10 : vector<40x32xf32>
    %c0_9 = arith.constant 0 : index
    %c0_10 = arith.constant 0 : index
    %c0_11 = arith.constant 0 : index
    %12 = vector.load %arg5[%c0_9, %c0_10, %c0_11] : memref<1x40x32xf32, #tpu.memory_space<vmem>>, vector<1x40x32xf32>
    %13 = vector.shape_cast %12 : vector<1x40x32xf32> to vector<40x32xf32>
    %14 = vector.shape_cast %11 : vector<40x32xf32> to vector<1x40x32xf32>
    tpu.vector_store %arg5[%c0_9, %c0_10, %c0_11], %14 {strides = array<i32>} : memref<1x40x32xf32, #tpu.memory_space<vmem>>, vector<1x40x32xf32>,
    return
  }
  func.func @transform_0(%arg0: i32) -> (i32, i32, i32) {
    %c0_i32 = arith.constant 0 : i32
    %c0_i32_0 = arith.constant 0 : i32
    %c0_i32_1 = arith.constant 0 : i32
    return %arg0, %c0_i32, %c0_i32_0 : i32, i32, i32
  }
  func.func @transform_1(%arg0: i32) -> (i32, i32) {
    %c0_i32 = arith.constant 0 : i32
    %c0_i32_0 = arith.constant 0 : i32
    %c0_i32_1 = arith.constant 0 : i32
    return %c0_i32, %c0_i32_0 : i32, i32
  }
  func.func @transform_2(%arg0: i32) -> (i32, i32) {
    %c0_i32 = arith.constant 0 : i32
    %c0_i32_0 = arith.constant 0 : i32
    %c0_i32_1 = arith.constant 0 : i32
    return %c0_i32, %c0_i32_0 : i32, i32
  }
  func.func @transform_3(%arg0: i32) -> (i32, i32) {
    %c0_i32 = arith.constant 0 : i32
    %c0_i32_0 = arith.constant 0 : i32
    %c0_i32_1 = arith.constant 0 : i32
    return %c0_i32, %c0_i32_0 : i32, i32
  }
  func.func @transform_4(%arg0: i32) -> (i32, i32, i32) {
    %c0_i32 = arith.constant 0 : i32
    %c0_i32_0 = arith.constant 0 : i32
    %c0_i32_1 = arith.constant 0 : i32
    return %arg0, %c0_i32, %c0_i32_0 : i32, i32, i32
  }
}

module attributes {stable_mosaic.version = 11 : i64} {
  func.func @_conv3x3_kernel(%arg0: i32, %arg1: memref<1x326x64xf32, #tpu.memory_space<vmem>>, %arg2: memref<9x64x64xf32, #tpu.memory_space<vmem>>, %arg3: memref<1x288x64xf32, #tpu.memory_space<vmem>>) attributes {dimension_semantics = [#tpu.dimension_semantics<parallel>], iteration_bounds = array<i64: 2>, scalar_prefetch = 0 : i64, scratch_operands = 0 : i64, tpu.core_type = #tpu.core_type<tc>, window_params = [{transform_indices = @transform_0, window_bounds = array<i64: 1, 326, 64>}, {pipeline_mode = #tpu.pipeline_mode<synchronous>, transform_indices = @transform_1, window_bounds = array<i64: 9, 64, 64>}, {transform_indices = @transform_2, window_bounds = array<i64: 1, 288, 64>}]} {
    %c0 = arith.constant 0 : index
    %c0_0 = arith.constant 0 : index
    %c0_1 = arith.constant 0 : index
    %0 = vector.load %arg1[%c0, %c0_0, %c0_1] : memref<1x326x64xf32, #tpu.memory_space<vmem>>, vector<1x288x64xf32>
    %1 = vector.shape_cast %0 : vector<1x288x64xf32> to vector<288x64xf32>
    %c0_2 = arith.constant 0 : index
    %c0_3 = arith.constant 0 : index
    %c0_4 = arith.constant 0 : index
    %2 = vector.load %arg2[%c0_2, %c0_3, %c0_4] : memref<9x64x64xf32, #tpu.memory_space<vmem>>, vector<1x64x64xf32>
    %3 = vector.shape_cast %2 : vector<1x64x64xf32> to vector<64x64xf32>
    %cst = arith.constant dense<0.000000e+00> : vector<288x64xf32>
    %4 = tpu.matmul %1, %3, %cst {dimension_numbers = #tpu.dot_dimension_numbers<[1], [0], [0], [1], [0, 0, 1, 1], [], []>} : vector<288x64xf32>, vector<64x64xf32>, vector<288x64xf32> -> vector<288x64xf32>
    %c0_5 = arith.constant 0 : index
    %c1 = arith.constant 1 : index
    %c0_6 = arith.constant 0 : index
    %5 = vector.load %arg1[%c0_5, %c1, %c0_6] : memref<1x326x64xf32, #tpu.memory_space<vmem>>, vector<1x288x64xf32>
    %6 = vector.shape_cast %5 : vector<1x288x64xf32> to vector<288x64xf32>
    %c1_7 = arith.constant 1 : index
    %c0_8 = arith.constant 0 : index
    %c0_9 = arith.constant 0 : index
    %7 = vector.load %arg2[%c1_7, %c0_8, %c0_9] : memref<9x64x64xf32, #tpu.memory_space<vmem>>, vector<1x64x64xf32>
    %8 = vector.shape_cast %7 : vector<1x64x64xf32> to vector<64x64xf32>
    %cst_10 = arith.constant dense<0.000000e+00> : vector<288x64xf32>
    %9 = tpu.matmul %6, %8, %cst_10 {dimension_numbers = #tpu.dot_dimension_numbers<[1], [0], [0], [1], [0, 0, 1, 1], [], []>} : vector<288x64xf32>, vector<64x64xf32>, vector<288x64xf32> -> vector<288x64xf32>
    %10 = arith.addf %4, %9 : vector<288x64xf32>
    %c0_11 = arith.constant 0 : index
    %c2 = arith.constant 2 : index
    %c0_12 = arith.constant 0 : index
    %11 = vector.load %arg1[%c0_11, %c2, %c0_12] : memref<1x326x64xf32, #tpu.memory_space<vmem>>, vector<1x288x64xf32>
    %12 = vector.shape_cast %11 : vector<1x288x64xf32> to vector<288x64xf32>
    %c2_13 = arith.constant 2 : index
    %c0_14 = arith.constant 0 : index
    %c0_15 = arith.constant 0 : index
    %13 = vector.load %arg2[%c2_13, %c0_14, %c0_15] : memref<9x64x64xf32, #tpu.memory_space<vmem>>, vector<1x64x64xf32>
    %14 = vector.shape_cast %13 : vector<1x64x64xf32> to vector<64x64xf32>
    %cst_16 = arith.constant dense<0.000000e+00> : vector<288x64xf32>
    %15 = tpu.matmul %12, %14, %cst_16 {dimension_numbers = #tpu.dot_dimension_numbers<[1], [0], [0], [1], [0, 0, 1, 1], [], []>} : vector<288x64xf32>, vector<64x64xf32>, vector<288x64xf32> -> vector<288x64xf32>
    %16 = arith.addf %10, %15 : vector<288x64xf32>
    %c0_17 = arith.constant 0 : index
    %c18 = arith.constant 18 : index
    %c0_18 = arith.constant 0 : index
    %17 = vector.load %arg1[%c0_17, %c18, %c0_18] : memref<1x326x64xf32, #tpu.memory_space<vmem>>, vector<1x288x64xf32>
    %18 = vector.shape_cast %17 : vector<1x288x64xf32> to vector<288x64xf32>
    %c3 = arith.constant 3 : index
    %c0_19 = arith.constant 0 : index
    %c0_20 = arith.constant 0 : index
    %19 = vector.load %arg2[%c3, %c0_19, %c0_20] : memref<9x64x64xf32, #tpu.memory_space<vmem>>, vector<1x64x64xf32>
    %20 = vector.shape_cast %19 : vector<1x64x64xf32> to vector<64x64xf32>
    %cst_21 = arith.constant dense<0.000000e+00> : vector<288x64xf32>
    %21 = tpu.matmul %18, %20, %cst_21 {dimension_numbers = #tpu.dot_dimension_numbers<[1], [0], [0], [1], [0, 0, 1, 1], [], []>} : vector<288x64xf32>, vector<64x64xf32>, vector<288x64xf32> -> vector<288x64xf32>
    %22 = arith.addf %16, %21 : vector<288x64xf32>
    %c0_22 = arith.constant 0 : index
    %c19 = arith.constant 19 : index
    %c0_23 = arith.constant 0 : index
    %23 = vector.load %arg1[%c0_22, %c19, %c0_23] : memref<1x326x64xf32, #tpu.memory_space<vmem>>, vector<1x288x64xf32>
    %24 = vector.shape_cast %23 : vector<1x288x64xf32> to vector<288x64xf32>
    %c4 = arith.constant 4 : index
    %c0_24 = arith.constant 0 : index
    %c0_25 = arith.constant 0 : index
    %25 = vector.load %arg2[%c4, %c0_24, %c0_25] : memref<9x64x64xf32, #tpu.memory_space<vmem>>, vector<1x64x64xf32>
    %26 = vector.shape_cast %25 : vector<1x64x64xf32> to vector<64x64xf32>
    %cst_26 = arith.constant dense<0.000000e+00> : vector<288x64xf32>
    %27 = tpu.matmul %24, %26, %cst_26 {dimension_numbers = #tpu.dot_dimension_numbers<[1], [0], [0], [1], [0, 0, 1, 1], [], []>} : vector<288x64xf32>, vector<64x64xf32>, vector<288x64xf32> -> vector<288x64xf32>
    %28 = arith.addf %22, %27 : vector<288x64xf32>
    %c0_27 = arith.constant 0 : index
    %c20 = arith.constant 20 : index
    %c0_28 = arith.constant 0 : index
    %29 = vector.load %arg1[%c0_27, %c20, %c0_28] : memref<1x326x64xf32, #tpu.memory_space<vmem>>, vector<1x288x64xf32>
    %30 = vector.shape_cast %29 : vector<1x288x64xf32> to vector<288x64xf32>
    %c5 = arith.constant 5 : index
    %c0_29 = arith.constant 0 : index
    %c0_30 = arith.constant 0 : index
    %31 = vector.load %arg2[%c5, %c0_29, %c0_30] : memref<9x64x64xf32, #tpu.memory_space<vmem>>, vector<1x64x64xf32>
    %32 = vector.shape_cast %31 : vector<1x64x64xf32> to vector<64x64xf32>
    %cst_31 = arith.constant dense<0.000000e+00> : vector<288x64xf32>
    %33 = tpu.matmul %30, %32, %cst_31 {dimension_numbers = #tpu.dot_dimension_numbers<[1], [0], [0], [1], [0, 0, 1, 1], [], []>} : vector<288x64xf32>, vector<64x64xf32>, vector<288x64xf32> -> vector<288x64xf32>
    %34 = arith.addf %28, %33 : vector<288x64xf32>
    %c0_32 = arith.constant 0 : index
    %c36 = arith.constant 36 : index
    %c0_33 = arith.constant 0 : index
    %35 = vector.load %arg1[%c0_32, %c36, %c0_33] : memref<1x326x64xf32, #tpu.memory_space<vmem>>, vector<1x288x64xf32>
    %36 = vector.shape_cast %35 : vector<1x288x64xf32> to vector<288x64xf32>
    %c6 = arith.constant 6 : index
    %c0_34 = arith.constant 0 : index
    %c0_35 = arith.constant 0 : index
    %37 = vector.load %arg2[%c6, %c0_34, %c0_35] : memref<9x64x64xf32, #tpu.memory_space<vmem>>, vector<1x64x64xf32>
    %38 = vector.shape_cast %37 : vector<1x64x64xf32> to vector<64x64xf32>
    %cst_36 = arith.constant dense<0.000000e+00> : vector<288x64xf32>
    %39 = tpu.matmul %36, %38, %cst_36 {dimension_numbers = #tpu.dot_dimension_numbers<[1], [0], [0], [1], [0, 0, 1, 1], [], []>} : vector<288x64xf32>, vector<64x64xf32>, vector<288x64xf32> -> vector<288x64xf32>
    %40 = arith.addf %34, %39 : vector<288x64xf32>
    %c0_37 = arith.constant 0 : index
    %c37 = arith.constant 37 : index
    %c0_38 = arith.constant 0 : index
    %41 = vector.load %arg1[%c0_37, %c37, %c0_38] : memref<1x326x64xf32, #tpu.memory_space<vmem>>, vector<1x288x64xf32>
    %42 = vector.shape_cast %41 : vector<1x288x64xf32> to vector<288x64xf32>
    %c7 = arith.constant 7 : index
    %c0_39 = arith.constant 0 : index
    %c0_40 = arith.constant 0 : index
    %43 = vector.load %arg2[%c7, %c0_39, %c0_40] : memref<9x64x64xf32, #tpu.memory_space<vmem>>, vector<1x64x64xf32>
    %44 = vector.shape_cast %43 : vector<1x64x64xf32> to vector<64x64xf32>
    %cst_41 = arith.constant dense<0.000000e+00> : vector<288x64xf32>
    %45 = tpu.matmul %42, %44, %cst_41 {dimension_numbers = #tpu.dot_dimension_numbers<[1], [0], [0], [1], [0, 0, 1, 1], [], []>} : vector<288x64xf32>, vector<64x64xf32>, vector<288x64xf32> -> vector<288x64xf32>
    %46 = arith.addf %40, %45 : vector<288x64xf32>
    %c0_42 = arith.constant 0 : index
    %c38 = arith.constant 38 : index
    %c0_43 = arith.constant 0 : index
    %47 = vector.load %arg1[%c0_42, %c38, %c0_43] : memref<1x326x64xf32, #tpu.memory_space<vmem>>, vector<1x288x64xf32>
    %48 = vector.shape_cast %47 : vector<1x288x64xf32> to vector<288x64xf32>
    %c8 = arith.constant 8 : index
    %c0_44 = arith.constant 0 : index
    %c0_45 = arith.constant 0 : index
    %49 = vector.load %arg2[%c8, %c0_44, %c0_45] : memref<9x64x64xf32, #tpu.memory_space<vmem>>, vector<1x64x64xf32>
    %50 = vector.shape_cast %49 : vector<1x64x64xf32> to vector<64x64xf32>
    %cst_46 = arith.constant dense<0.000000e+00> : vector<288x64xf32>
    %51 = tpu.matmul %48, %50, %cst_46 {dimension_numbers = #tpu.dot_dimension_numbers<[1], [0], [0], [1], [0, 0, 1, 1], [], []>} : vector<288x64xf32>, vector<64x64xf32>, vector<288x64xf32> -> vector<288x64xf32>
    %52 = arith.addf %46, %51 : vector<288x64xf32>
    %c0_47 = arith.constant 0 : index
    %c0_48 = arith.constant 0 : index
    %c0_49 = arith.constant 0 : index
    %53 = vector.load %arg3[%c0_47, %c0_48, %c0_49] : memref<1x288x64xf32, #tpu.memory_space<vmem>>, vector<1x288x64xf32>
    %54 = vector.shape_cast %53 : vector<1x288x64xf32> to vector<288x64xf32>
    %55 = vector.shape_cast %52 : vector<288x64xf32> to vector<1x288x64xf32>
    tpu.vector_store %arg3[%c0_47, %c0_48, %c0_49], %55 {strides = array<i32>} : memref<1x288x64xf32, #tpu.memory_space<vmem>>, vector<1x288x64xf32>,
    return
  }
  func.func @transform_0(%arg0: i32) -> (i32, i32, i32) {
    %c0_i32 = arith.constant 0 : i32
    %c0_i32_0 = arith.constant 0 : i32
    %c0_i32_1 = arith.constant 0 : i32
    return %arg0, %c0_i32, %c0_i32_0 : i32, i32, i32
  }
  func.func @transform_1(%arg0: i32) -> (i32, i32, i32) {
    %c0_i32 = arith.constant 0 : i32
    %c0_i32_0 = arith.constant 0 : i32
    %c0_i32_1 = arith.constant 0 : i32
    %c0_i32_2 = arith.constant 0 : i32
    return %c0_i32, %c0_i32_0, %c0_i32_1 : i32, i32, i32
  }
  func.func @transform_2(%arg0: i32) -> (i32, i32, i32) {
    %c0_i32 = arith.constant 0 : i32
    %c0_i32_0 = arith.constant 0 : i32
    %c0_i32_1 = arith.constant 0 : i32
    return %arg0, %c0_i32, %c0_i32_0 : i32, i32, i32
  }
}

module attributes {stable_mosaic.version = 11 : i64} {
  func.func @_finalize_kernel(%arg0: i32, %arg1: memref<1x256x64xf32, #tpu.memory_space<vmem>>, %arg2: memref<1x256x16xf32, #tpu.memory_space<vmem>>, %arg3: memref<16x64xf32, #tpu.memory_space<vmem>>, %arg4: memref<1x64xf32, #tpu.memory_space<vmem>>, %arg5: memref<1x64xf32, #tpu.memory_space<vmem>>, %arg6: memref<1x256x64xf32, #tpu.memory_space<vmem>>) attributes {dimension_semantics = [#tpu.dimension_semantics<parallel>], iteration_bounds = array<i64: 2>, scalar_prefetch = 0 : i64, scratch_operands = 0 : i64, tpu.core_type = #tpu.core_type<tc>, window_params = [{transform_indices = @transform_0, window_bounds = array<i64: 1, 256, 64>}, {transform_indices = @transform_1, window_bounds = array<i64: 1, 256, 16>}, {pipeline_mode = #tpu.pipeline_mode<synchronous>, transform_indices = @transform_2, window_bounds = array<i64: 16, 64>}, {pipeline_mode = #tpu.pipeline_mode<synchronous>, transform_indices = @transform_3, window_bounds = array<i64: 1, 64>}, {pipeline_mode = #tpu.pipeline_mode<synchronous>, transform_indices = @transform_4, window_bounds = array<i64: 1, 64>}, {transform_indices = @transform_5, window_bounds = array<i64: 1, 256, 64>}]} {
    %c0 = arith.constant 0 : index
    %c0_0 = arith.constant 0 : index
    %c0_1 = arith.constant 0 : index
    %0 = vector.load %arg1[%c0, %c0_0, %c0_1] : memref<1x256x64xf32, #tpu.memory_space<vmem>>, vector<1x256x64xf32>
    %1 = vector.shape_cast %0 : vector<1x256x64xf32> to vector<256x64xf32>
    %c0_2 = arith.constant 0 : index
    %c0_3 = arith.constant 0 : index
    %c0_4 = arith.constant 0 : index
    %2 = vector.load %arg2[%c0_2, %c0_3, %c0_4] : memref<1x256x16xf32, #tpu.memory_space<vmem>>, vector<1x256x16xf32>
    %3 = vector.shape_cast %2 : vector<1x256x16xf32> to vector<256x16xf32>
    %c0_5 = arith.constant 0 : index
    %c0_6 = arith.constant 0 : index
    %4 = vector.load %arg3[%c0_5, %c0_6] : memref<16x64xf32, #tpu.memory_space<vmem>>, vector<16x64xf32>
    %cst = arith.constant dense<0.000000e+00> : vector<256x64xf32>
    %5 = tpu.matmul %3, %4, %cst {dimension_numbers = #tpu.dot_dimension_numbers<[1], [0], [0], [1], [0, 0, 1, 1], [], []>} : vector<256x16xf32>, vector<16x64xf32>, vector<256x64xf32> -> vector<256x64xf32>
    %6 = arith.addf %1, %5 : vector<256x64xf32>
    %c0_7 = arith.constant 0 : index
    %c0_8 = arith.constant 0 : index
    %7 = vector.load %arg4[%c0_7, %c0_8] : memref<1x64xf32, #tpu.memory_space<vmem>>, vector<1x64xf32>
    %8 = vector.broadcast %7 : vector<1x64xf32> to vector<256x64xf32>
    %9 = arith.mulf %6, %8 : vector<256x64xf32>
    %c0_9 = arith.constant 0 : index
    %c0_10 = arith.constant 0 : index
    %10 = vector.load %arg5[%c0_9, %c0_10] : memref<1x64xf32, #tpu.memory_space<vmem>>, vector<1x64xf32>
    %11 = vector.broadcast %10 : vector<1x64xf32> to vector<256x64xf32>
    %12 = arith.addf %9, %11 : vector<256x64xf32>
    %cst_11 = arith.constant 0.000000e+00 : f32
    %13 = vector.broadcast %cst_11 : f32 to vector<256x64xf32>
    %14 = arith.maximumf %12, %13 : vector<256x64xf32>
    %c0_12 = arith.constant 0 : index
    %c0_13 = arith.constant 0 : index
    %c0_14 = arith.constant 0 : index
    %15 = vector.load %arg6[%c0_12, %c0_13, %c0_14] : memref<1x256x64xf32, #tpu.memory_space<vmem>>, vector<1x256x64xf32>
    %16 = vector.shape_cast %15 : vector<1x256x64xf32> to vector<256x64xf32>
    %17 = vector.shape_cast %14 : vector<256x64xf32> to vector<1x256x64xf32>
    tpu.vector_store %arg6[%c0_12, %c0_13, %c0_14], %17 {strides = array<i32>} : memref<1x256x64xf32, #tpu.memory_space<vmem>>, vector<1x256x64xf32>,
    return
  }
  func.func @transform_0(%arg0: i32) -> (i32, i32, i32) {
    %c0_i32 = arith.constant 0 : i32
    %c0_i32_0 = arith.constant 0 : i32
    %c0_i32_1 = arith.constant 0 : i32
    return %arg0, %c0_i32, %c0_i32_0 : i32, i32, i32
  }
  func.func @transform_1(%arg0: i32) -> (i32, i32, i32) {
    %c0_i32 = arith.constant 0 : i32
    %c0_i32_0 = arith.constant 0 : i32
    %c0_i32_1 = arith.constant 0 : i32
    return %arg0, %c0_i32, %c0_i32_0 : i32, i32, i32
  }
  func.func @transform_2(%arg0: i32) -> (i32, i32) {
    %c0_i32 = arith.constant 0 : i32
    %c0_i32_0 = arith.constant 0 : i32
    %c0_i32_1 = arith.constant 0 : i32
    return %c0_i32, %c0_i32_0 : i32, i32
  }
  func.func @transform_3(%arg0: i32) -> (i32, i32) {
    %c0_i32 = arith.constant 0 : i32
    %c0_i32_0 = arith.constant 0 : i32
    %c0_i32_1 = arith.constant 0 : i32
    return %c0_i32, %c0_i32_0 : i32, i32
  }
  func.func @transform_4(%arg0: i32) -> (i32, i32) {
    %c0_i32 = arith.constant 0 : i32
    %c0_i32_0 = arith.constant 0 : i32
    %c0_i32_1 = arith.constant 0 : i32
    return %c0_i32, %c0_i32_0 : i32, i32
  }
  func.func @transform_5(%arg0: i32) -> (i32, i32, i32) {
    %c0_i32 = arith.constant 0 : i32
    %c0_i32_0 = arith.constant 0 : i32
    %c0_i32_1 = arith.constant 0 : i32
    return %arg0, %c0_i32, %c0_i32_0 : i32, i32, i32
  }
}

module attributes {stable_mosaic.version = 11 : i64} {
  func.func @_pointwise_kernel(%arg0: i32, %arg1: memref<1x256x32xf32, #tpu.memory_space<vmem>>, %arg2: memref<32x16xf32, #tpu.memory_space<vmem>>, %arg3: memref<1x16xf32, #tpu.memory_space<vmem>>, %arg4: memref<1x16xf32, #tpu.memory_space<vmem>>, %arg5: memref<1x256x16xf32, #tpu.memory_space<vmem>>) attributes {dimension_semantics = [#tpu.dimension_semantics<parallel>], iteration_bounds = array<i64: 2>, scalar_prefetch = 0 : i64, scratch_operands = 0 : i64, tpu.core_type = #tpu.core_type<tc>, window_params = [{transform_indices = @transform_0, window_bounds = array<i64: 1, 256, 32>}, {pipeline_mode = #tpu.pipeline_mode<synchronous>, transform_indices = @transform_1, window_bounds = array<i64: 32, 16>}, {pipeline_mode = #tpu.pipeline_mode<synchronous>, transform_indices = @transform_2, window_bounds = array<i64: 1, 16>}, {pipeline_mode = #tpu.pipeline_mode<synchronous>, transform_indices = @transform_3, window_bounds = array<i64: 1, 16>}, {transform_indices = @transform_4, window_bounds = array<i64: 1, 256, 16>}]} {
    %c0 = arith.constant 0 : index
    %c0_0 = arith.constant 0 : index
    %c0_1 = arith.constant 0 : index
    %0 = vector.load %arg1[%c0, %c0_0, %c0_1] : memref<1x256x32xf32, #tpu.memory_space<vmem>>, vector<1x256x32xf32>
    %1 = vector.shape_cast %0 : vector<1x256x32xf32> to vector<256x32xf32>
    %c0_2 = arith.constant 0 : index
    %c0_3 = arith.constant 0 : index
    %2 = vector.load %arg2[%c0_2, %c0_3] : memref<32x16xf32, #tpu.memory_space<vmem>>, vector<32x16xf32>
    %cst = arith.constant dense<0.000000e+00> : vector<256x16xf32>
    %3 = tpu.matmul %1, %2, %cst {dimension_numbers = #tpu.dot_dimension_numbers<[1], [0], [0], [1], [0, 0, 1, 1], [], []>} : vector<256x32xf32>, vector<32x16xf32>, vector<256x16xf32> -> vector<256x16xf32>
    %c0_4 = arith.constant 0 : index
    %c0_5 = arith.constant 0 : index
    %4 = vector.load %arg3[%c0_4, %c0_5] : memref<1x16xf32, #tpu.memory_space<vmem>>, vector<1x16xf32>
    %5 = vector.broadcast %4 : vector<1x16xf32> to vector<256x16xf32>
    %6 = arith.mulf %3, %5 : vector<256x16xf32>
    %c0_6 = arith.constant 0 : index
    %c0_7 = arith.constant 0 : index
    %7 = vector.load %arg4[%c0_6, %c0_7] : memref<1x16xf32, #tpu.memory_space<vmem>>, vector<1x16xf32>
    %8 = vector.broadcast %7 : vector<1x16xf32> to vector<256x16xf32>
    %9 = arith.addf %6, %8 : vector<256x16xf32>
    %cst_8 = arith.constant 0.000000e+00 : f32
    %10 = vector.broadcast %cst_8 : f32 to vector<256x16xf32>
    %11 = arith.maximumf %9, %10 : vector<256x16xf32>
    %c0_9 = arith.constant 0 : index
    %c0_10 = arith.constant 0 : index
    %c0_11 = arith.constant 0 : index
    %12 = vector.load %arg5[%c0_9, %c0_10, %c0_11] : memref<1x256x16xf32, #tpu.memory_space<vmem>>, vector<1x256x16xf32>
    %13 = vector.shape_cast %12 : vector<1x256x16xf32> to vector<256x16xf32>
    %14 = vector.shape_cast %11 : vector<256x16xf32> to vector<1x256x16xf32>
    tpu.vector_store %arg5[%c0_9, %c0_10, %c0_11], %14 {strides = array<i32>} : memref<1x256x16xf32, #tpu.memory_space<vmem>>, vector<1x256x16xf32>,
    return
  }
  func.func @transform_0(%arg0: i32) -> (i32, i32, i32) {
    %c0_i32 = arith.constant 0 : i32
    %c0_i32_0 = arith.constant 0 : i32
    %c0_i32_1 = arith.constant 0 : i32
    return %arg0, %c0_i32, %c0_i32_0 : i32, i32, i32
  }
  func.func @transform_1(%arg0: i32) -> (i32, i32) {
    %c0_i32 = arith.constant 0 : i32
    %c0_i32_0 = arith.constant 0 : i32
    %c0_i32_1 = arith.constant 0 : i32
    return %c0_i32, %c0_i32_0 : i32, i32
  }
  func.func @transform_2(%arg0: i32) -> (i32, i32) {
    %c0_i32 = arith.constant 0 : i32
    %c0_i32_0 = arith.constant 0 : i32
    %c0_i32_1 = arith.constant 0 : i32
    return %c0_i32, %c0_i32_0 : i32, i32
  }
  func.func @transform_3(%arg0: i32) -> (i32, i32) {
    %c0_i32 = arith.constant 0 : i32
    %c0_i32_0 = arith.constant 0 : i32
    %c0_i32_1 = arith.constant 0 : i32
    return %c0_i32, %c0_i32_0 : i32, i32
  }
  func.func @transform_4(%arg0: i32) -> (i32, i32, i32) {
    %c0_i32 = arith.constant 0 : i32
    %c0_i32_0 = arith.constant 0 : i32
    %c0_i32_1 = arith.constant 0 : i32
    return %arg0, %c0_i32, %c0_i32_0 : i32, i32, i32
  }
}

module attributes {stable_mosaic.version = 11 : i64} {
  func.func @_finalize_kernel(%arg0: i32, %arg1: memref<1x256x64xf32, #tpu.memory_space<vmem>>, %arg2: memref<1x256x16xf32, #tpu.memory_space<vmem>>, %arg3: memref<16x64xf32, #tpu.memory_space<vmem>>, %arg4: memref<1x64xf32, #tpu.memory_space<vmem>>, %arg5: memref<1x64xf32, #tpu.memory_space<vmem>>, %arg6: memref<1x256x64xf32, #tpu.memory_space<vmem>>, %arg7: memref<1x256x64xf32, #tpu.memory_space<vmem>>) attributes {dimension_semantics = [#tpu.dimension_semantics<parallel>], iteration_bounds = array<i64: 2>, scalar_prefetch = 0 : i64, scratch_operands = 0 : i64, tpu.core_type = #tpu.core_type<tc>, window_params = [{transform_indices = @transform_0, window_bounds = array<i64: 1, 256, 64>}, {transform_indices = @transform_1, window_bounds = array<i64: 1, 256, 16>}, {pipeline_mode = #tpu.pipeline_mode<synchronous>, transform_indices = @transform_2, window_bounds = array<i64: 16, 64>}, {pipeline_mode = #tpu.pipeline_mode<synchronous>, transform_indices = @transform_3, window_bounds = array<i64: 1, 64>}, {pipeline_mode = #tpu.pipeline_mode<synchronous>, transform_indices = @transform_4, window_bounds = array<i64: 1, 64>}, {transform_indices = @transform_5, window_bounds = array<i64: 1, 256, 64>}, {transform_indices = @transform_6, window_bounds = array<i64: 1, 256, 64>}]} {
    %c0 = arith.constant 0 : index
    %c0_0 = arith.constant 0 : index
    %c0_1 = arith.constant 0 : index
    %0 = vector.load %arg1[%c0, %c0_0, %c0_1] : memref<1x256x64xf32, #tpu.memory_space<vmem>>, vector<1x256x64xf32>
    %1 = vector.shape_cast %0 : vector<1x256x64xf32> to vector<256x64xf32>
    %c0_2 = arith.constant 0 : index
    %c0_3 = arith.constant 0 : index
    %c0_4 = arith.constant 0 : index
    %2 = vector.load %arg2[%c0_2, %c0_3, %c0_4] : memref<1x256x16xf32, #tpu.memory_space<vmem>>, vector<1x256x16xf32>
    %3 = vector.shape_cast %2 : vector<1x256x16xf32> to vector<256x16xf32>
    %c0_5 = arith.constant 0 : index
    %c0_6 = arith.constant 0 : index
    %4 = vector.load %arg3[%c0_5, %c0_6] : memref<16x64xf32, #tpu.memory_space<vmem>>, vector<16x64xf32>
    %cst = arith.constant dense<0.000000e+00> : vector<256x64xf32>
    %5 = tpu.matmul %3, %4, %cst {dimension_numbers = #tpu.dot_dimension_numbers<[1], [0], [0], [1], [0, 0, 1, 1], [], []>} : vector<256x16xf32>, vector<16x64xf32>, vector<256x64xf32> -> vector<256x64xf32>
    %6 = arith.addf %1, %5 : vector<256x64xf32>
    %c0_7 = arith.constant 0 : index
    %c0_8 = arith.constant 0 : index
    %7 = vector.load %arg4[%c0_7, %c0_8] : memref<1x64xf32, #tpu.memory_space<vmem>>, vector<1x64xf32>
    %8 = vector.broadcast %7 : vector<1x64xf32> to vector<256x64xf32>
    %9 = arith.mulf %6, %8 : vector<256x64xf32>
    %c0_9 = arith.constant 0 : index
    %c0_10 = arith.constant 0 : index
    %10 = vector.load %arg5[%c0_9, %c0_10] : memref<1x64xf32, #tpu.memory_space<vmem>>, vector<1x64xf32>
    %11 = vector.broadcast %10 : vector<1x64xf32> to vector<256x64xf32>
    %12 = arith.addf %9, %11 : vector<256x64xf32>
    %cst_11 = arith.constant 0.000000e+00 : f32
    %13 = vector.broadcast %cst_11 : f32 to vector<256x64xf32>
    %14 = arith.maximumf %12, %13 : vector<256x64xf32>
    %c0_12 = arith.constant 0 : index
    %c0_13 = arith.constant 0 : index
    %c0_14 = arith.constant 0 : index
    %15 = vector.load %arg6[%c0_12, %c0_13, %c0_14] : memref<1x256x64xf32, #tpu.memory_space<vmem>>, vector<1x256x64xf32>
    %16 = vector.shape_cast %15 : vector<1x256x64xf32> to vector<256x64xf32>
    %17 = arith.addf %14, %16 : vector<256x64xf32>
    %c0_15 = arith.constant 0 : index
    %c0_16 = arith.constant 0 : index
    %c0_17 = arith.constant 0 : index
    %18 = vector.load %arg7[%c0_15, %c0_16, %c0_17] : memref<1x256x64xf32, #tpu.memory_space<vmem>>, vector<1x256x64xf32>
    %19 = vector.shape_cast %18 : vector<1x256x64xf32> to vector<256x64xf32>
    %20 = vector.shape_cast %17 : vector<256x64xf32> to vector<1x256x64xf32>
    tpu.vector_store %arg7[%c0_15, %c0_16, %c0_17], %20 {strides = array<i32>} : memref<1x256x64xf32, #tpu.memory_space<vmem>>, vector<1x256x64xf32>,
    return
  }
  func.func @transform_0(%arg0: i32) -> (i32, i32, i32) {
    %c0_i32 = arith.constant 0 : i32
    %c0_i32_0 = arith.constant 0 : i32
    %c0_i32_1 = arith.constant 0 : i32
    return %arg0, %c0_i32, %c0_i32_0 : i32, i32, i32
  }
  func.func @transform_1(%arg0: i32) -> (i32, i32, i32) {
    %c0_i32 = arith.constant 0 : i32
    %c0_i32_0 = arith.constant 0 : i32
    %c0_i32_1 = arith.constant 0 : i32
    return %arg0, %c0_i32, %c0_i32_0 : i32, i32, i32
  }
  func.func @transform_2(%arg0: i32) -> (i32, i32) {
    %c0_i32 = arith.constant 0 : i32
    %c0_i32_0 = arith.constant 0 : i32
    %c0_i32_1 = arith.constant 0 : i32
    return %c0_i32, %c0_i32_0 : i32, i32
  }
  func.func @transform_3(%arg0: i32) -> (i32, i32) {
    %c0_i32 = arith.constant 0 : i32
    %c0_i32_0 = arith.constant 0 : i32
    %c0_i32_1 = arith.constant 0 : i32
    return %c0_i32, %c0_i32_0 : i32, i32
  }
  func.func @transform_4(%arg0: i32) -> (i32, i32) {
    %c0_i32 = arith.constant 0 : i32
    %c0_i32_0 = arith.constant 0 : i32
    %c0_i32_1 = arith.constant 0 : i32
    return %c0_i32, %c0_i32_0 : i32, i32
  }
  func.func @transform_5(%arg0: i32) -> (i32, i32, i32) {
    %c0_i32 = arith.constant 0 : i32
    %c0_i32_0 = arith.constant 0 : i32
    %c0_i32_1 = arith.constant 0 : i32
    return %arg0, %c0_i32, %c0_i32_0 : i32, i32, i32
  }
  func.func @transform_6(%arg0: i32) -> (i32, i32, i32) {
    %c0_i32 = arith.constant 0 : i32
    %c0_i32_0 = arith.constant 0 : i32
    %c0_i32_1 = arith.constant 0 : i32
    return %arg0, %c0_i32, %c0_i32_0 : i32, i32, i32
  }
}

</mosaic_0001>

<llo_original>
// kernel: ffc_resnet_block_nchw.11
$region0: #{ffc_resnet_block_nchw.11}
  #allocation0 [shape = 'u32[]', space=smem, size = 0x4, offset = 0x4, fixed_abs, tag = 'smem constant byte address 0x4 - core index']
  #allocation1 [shape = 'u32[144,128]{1,0:T(1,128)}', space=vmem, size = 0x12000, scoped, tag = 'internal scratch']
  %s0 = inlined_call_operand.hbm [shape: f32[2,256,32], index: 0, kind: input, shape index: {}]
  %s1 = inlined_call_operand.vmem [shape: f32[32,16], index: 1, kind: input, shape index: {}]
  %s2 = inlined_call_operand.vmem [shape: f32[1,16], index: 2, kind: input, shape index: {}]
  %s3 = inlined_call_operand.vmem [shape: f32[1,16], index: 3, kind: input, shape index: {}]
  %s4 = inlined_call_operand.vmem [shape: f32[2,256,16], index: 4, kind: output, shape index: {}]
  %s5 = sld [smem:[#allocation0]]
  $region53: #{ffc_resnet_block_nchw.11} parent=0
    _
  %s7 = ssub.s32 1, %s5
  %s8 = scalar_select 0, %s7, %s5
  $region1: #{ffc_resnet_block_nchw.11} parent=0
    #allocation2 [shape = 'u8[262144]{0}', space=vmem, size = 0x40000, scoped, tag = 'input window, operand 0']
    #allocation3 [shape = 's32[2]{0}', space=sflag, size = 0x8, scoped, tag = 'scoped memory for ffc_resnet_block_nchw.11']
    %9 = vsyncpa [#allocation3], 0
    %s10 = scalar_lea.sflag [#allocation3], 1
    %11 = vsyncpa %s10, 0
    loop: start=0, step=1, limit=4
    $region2: #{ffc_resnet_block_nchw.11} parent=1 // loop_pre_header
      _
    $region3: #{ffc_resnet_block_nchw.11} parent=1 // loop_header
      %s13 = sphi 0, %s17
      %p14 = scmp.ge.s32.totalorder %s13, 4
      %s23 = sphi 0, %s25
      %s26 = sphi 0, %s23
      %s27 = sphi 0, %s26
      %s43 = sphi 0, %s27
      %s47 = sphi 0, %s47
      %s49 = sphi 0, %s47
      %s50 = sphi 0, %s49
      %s64 = sphi 0, %s50
      %s68 = sphi 0, %s68
      %s70 = sphi 0, %s68
      %s71 = sphi 0, %s70
      %s85 = sphi 0, %s71
      %s89 = sphi 0, %s89
      %s91 = sphi 0, %s89
      %s92 = sphi 0, %s91
      %s106 = sphi 0, %s92
      %s112 = sphi 0, %s114
      %s115 = sphi 0, %s112
      %s116 = sphi 0, %s115
      %s132 = sphi 0, %s116
    $region4: #{ffc_resnet_block_nchw.11} parent=1 // loop_header_branch
      %16 = sbr.rel (%p14) target = $region8
    $region5: #{ffc_resnet_block_nchw.11} parent=1 // loop_body
      %s18 = ssub.s32 %s13, 1
      %s19 = ssub.s32 %s13, 2
      %s20 = sadd.s32 %s13, 1
      %s21 = ssub.s32 %s13, %s20
      %p22 = scmp.eq.s32.totalorder %s21, 0
      %s24 = sadd.s32 %s23, 1
      %s25 = scalar_select %p22, %s23, %s24
      %p28 = pneg %p22
      %p29 = scmp.eq.s32.totalorder %s13, 1
      %p30 = por %p28, %p29
      %p31 = scmp.ne.s32.totalorder %s23, %s26
      %p32 = scmp.eq.s32.totalorder %s13, 0
      %p33 = por %p31, %p32
      %p34 = scmp.ne.s32.totalorder %s23, %s26
      %p35 = scmp.eq.s32.totalorder %s18, 1
      %p36 = por %p34, %p35
      %p37 = scmp.ne.s32.totalorder %s26, %s27
      %p38 = scmp.eq.s32.totalorder %s18, 0
      %p39 = por %p37, %p38
      %p40 = scmp.ne.s32.totalorder %s26, %s27
      %p41 = scmp.eq.s32.totalorder %s19, 1
      %p42 = por %p40, %p41
      %p44 = scmp.ne.s32.totalorder %s27, %s43
      %p45 = scmp.eq.s32.totalorder %s19, 0
      %p46 = por %p44, %p45
      %s48 = sadd.s32 %s47, 1
      %p51 = scmp.eq.s32.totalorder %s13, 1
      %p52 = scmp.ne.s32.totalorder %s47, %s49
      %p53 = scmp.eq.s32.totalorder %s13, 0
      %p54 = por %p52, %p53
      %p55 = scmp.ne.s32.totalorder %s47, %s49
      %p56 = scmp.eq.s32.totalorder %s18, 1
      %p57 = por %p55, %p56
      %p58 = scmp.ne.s32.totalorder %s49, %s50
      %p59 = scmp.eq.s32.totalorder %s18, 0
      %p60 = por %p58, %p59
      %p61 = scmp.ne.s32.totalorder %s49, %s50
      %p62 = scmp.eq.s32.totalorder %s19, 1
      %p63 = por %p61, %p62
      %p65 = scmp.ne.s32.totalorder %s50, %s64
      %p66 = scmp.eq.s32.totalorder %s19, 0
      %p67 = por %p65, %p66
      %s69 = sadd.s32 %s68, 1
      %p72 = scmp.eq.s32.totalorder %s13, 1
      %p73 = scmp.ne.s32.totalorder %s68, %s70
      %p74 = scmp.eq.s32.totalorder %s13, 0
      %p75 = por %p73, %p74
      %p76 = scmp.ne.s32.totalorder %s68, %s70
      %p77 = scmp.eq.s32.totalorder %s18, 1
      %p78 = por %p76, %p77
      %p79 = scmp.ne.s32.totalorder %s70, %s71
      %p80 = scmp.eq.s32.totalorder %s18, 0
      %p81 = por %p79, %p80
      %p82 = scmp.ne.s32.totalorder %s70, %s71
      %p83 = scmp.eq.s32.totalorder %s19, 1
      %p84 = por %p82, %p83
      %p86 = scmp.ne.s32.totalorder %s71, %s85
      %p87 = scmp.eq.s32.totalorder %s19, 0
      %p88 = por %p86, %p87
      %s90 = sadd.s32 %s89, 1
      %p93 = scmp.eq.s32.totalorder %s13, 1
      %p94 = scmp.ne.s32.totalorder %s89, %s91
      %p95 = scmp.eq.s32.totalorder %s13, 0
      %p96 = por %p94, %p95
      %p97 = scmp.ne.s32.totalorder %s89, %s91
      %p98 = scmp.eq.s32.totalorder %s18, 1
      %p99 = por %p97, %p98
      %p100 = scmp.ne.s32.totalorder %s91, %s92
      %p101 = scmp.eq.s32.totalorder %s18, 0
      %p102 = por %p100, %p101
      %p103 = scmp.ne.s32.totalorder %s91, %s92
      %p104 = scmp.eq.s32.totalorder %s19, 1
      %p105 = por %p103, %p104
      %p107 = scmp.ne.s32.totalorder %s92, %s106
      %p108 = scmp.eq.s32.totalorder %s19, 0
      %p109 = por %p107, %p108
      %s110 = ssub.s32 %s13, %s20
      %p111 = scmp.eq.s32.totalorder %s110, 0
      %s113 = sadd.s32 %s112, 1
      %s114 = scalar_select %p111, %s112, %s113
      %p117 = pneg %p111
      %p118 = scmp.eq.s32.totalorder %s13, 1
      %p119 = por %p117, %p118
      %p120 = scmp.ne.s32.totalorder %s112, %s115
      %p121 = scmp.eq.s32.totalorder %s13, 0
      %p122 = por %p120, %p121
      %p123 = scmp.ne.s32.totalorder %s112, %s115
      %p124 = scmp.eq.s32.totalorder %s18, 1
      %p125 = por %p123, %p124
      %p126 = scmp.ne.s32.totalorder %s115, %s116
      %p127 = scmp.eq.s32.totalorder %s18, 0
      %p128 = por %p126, %p127
      %p129 = scmp.ne.s32.totalorder %s115, %s116
      %p130 = scmp.eq.s32.totalorder %s19, 1
      %p131 = por %p129, %p130
      %p133 = scmp.ne.s32.totalorder %s116, %s132
      %p134 = scmp.eq.s32.totalorder %s19, 0
      %p135 = por %p133, %p134
      %p136 = scmp.le.s32.totalorder 1, %s13
      %p137 = scmp.lt.s32.totalorder %s13, 3
      %p138 = pnand %p136, %p137
      %p139 = pneg %p138
      // Predicated region
      $region9: #{ffc_resnet_block_nchw.11} parent=5 // pred_check
        _
      $region10: #{ffc_resnet_block_nchw.11} parent=5 // pred_check_branch
        %141 = sbr.rel (%p138) target = $region12
      $region11: #{ffc_resnet_block_nchw.11} parent=5 // pred_region
        %s142 = ssub.s32 %s13, 1
        // Predicated region
        $region13: #{ffc_resnet_block_nchw.11} parent=11 // pred_check
          %p143 = pneg %p60
        $region14: #{ffc_resnet_block_nchw.11} parent=11 // pred_check_branch
          %145 = sbr.rel (%p143) target = $region16
        $region15: #{ffc_resnet_block_nchw.11} parent=11 // pred_region
          _
        $region16: #{ffc_resnet_block_nchw.11} parent=11 // pred_fallthru
          _
        // Predicated region
        $region17: #{ffc_resnet_block_nchw.11} parent=11 // pred_check
          %p146 = pneg %p81
        $region18: #{ffc_resnet_block_nchw.11} parent=11 // pred_check_branch
          %148 = sbr.rel (%p146) target = $region20
        $region19: #{ffc_resnet_block_nchw.11} parent=11 // pred_region
          _
        $region20: #{ffc_resnet_block_nchw.11} parent=11 // pred_fallthru
          _
        // Predicated region
        $region21: #{ffc_resnet_block_nchw.11} parent=11 // pred_check
          %p149 = pneg %p102
        $region22: #{ffc_resnet_block_nchw.11} parent=11 // pred_check_branch
          %151 = sbr.rel (%p149) target = $region24
        $region23: #{ffc_resnet_block_nchw.11} parent=11 // pred_region
          _
        $region24: #{ffc_resnet_block_nchw.11} parent=11 // pred_fallthru
          _
      $region12: #{ffc_resnet_block_nchw.11} parent=5 // pred_fallthru
        _
      %p152 = scmp.lt.s32.totalorder %s13, 2
      // Predicated region
      $region25: #{ffc_resnet_block_nchw.11} parent=5 // pred_check
        %p153 = pneg %p152
      $region26: #{ffc_resnet_block_nchw.11} parent=5 // pred_check_branch
        %155 = sbr.rel (%p153) target = $region28
      $region27: #{ffc_resnet_block_nchw.11} parent=5 // pred_region
        // Predicated region
        $region29: #{ffc_resnet_block_nchw.11} parent=27 // pred_check
          %p156 = pneg %p33
        $region30: #{ffc_resnet_block_nchw.11} parent=27 // pred_check_branch
          %158 = sbr.rel (%p156) target = $region32
        $region31: #{ffc_resnet_block_nchw.11} parent=27 // pred_region
          %s159 = sand.u32 %s23, 1
          %s160 = scalar_lea.sflag [#allocation3], %s159
          %s161 = sand.u32 %s23, 1
          %s162 = smul.addr %s161, 256
          %s163 = scalar_lea.vmem [#allocation2], %s162
          %s165 = ssub.s32 4096, 4096
          %166 = vsyncadd %s160, %s165
          %s167 = smul.addr %s13, 32
          %s168 = smul.addr %s167, 128
          %s169 = scalar_lea.hbm %s0, %s168
          %s170 = sshll.u32 %s163, 4
          %s171 = int_to_ptr.vmem [resolvable:$true] %s170
          %176 = dma.hbm_to_vmem [thread:$0]  %s169, 4096, %s171, %s160, 128, 128, 8
        $region32: #{ffc_resnet_block_nchw.11} parent=27 // pred_fallthru
          _
      $region28: #{ffc_resnet_block_nchw.11} parent=5 // pred_fallthru
        _
      %p177 = scmp.le.s32.totalorder 1, %s13
      %p178 = scmp.lt.s32.totalorder %s13, 3
      %p179 = pnand %p177, %p178
      %p180 = pneg %p179
      // Predicated region
      $region33: #{ffc_resnet_block_nchw.11} parent=5 // pred_check
        _
      $region34: #{ffc_resnet_block_nchw.11} parent=5 // pred_check_branch
        %182 = sbr.rel (%p179) target = $region36
      $region35: #{ffc_resnet_block_nchw.11} parent=5 // pred_region
        %s183 = ssub.s32 %s13, 1
        %s184 = sand.u32 %s26, 1
        %s185 = scalar_lea.sflag [#allocation3], %s184
        %s186 = sand.u32 %s26, 1
        %s187 = smul.addr %s186, 256
        %s188 = scalar_lea.vmem [#allocation2], %s187
        // Predicated region
        $region37: #{ffc_resnet_block_nchw.11} parent=35 // pred_check
          %p189 = pneg %p39
        $region38: #{ffc_resnet_block_nchw.11} parent=35 // pred_check_branch
          %191 = sbr.rel (%p189) target = $region40
        $region39: #{ffc_resnet_block_nchw.11} parent=35 // pred_region
          %192 = dma.done %s185, 4096
        $region40: #{ffc_resnet_block_nchw.11} parent=35 // pred_fallthru
          _
        %s193 = sand.u32 %s26, 1
        %s194 = scalar_lea.sflag [#allocation3], %s193
        %s195 = sand.u32 %s26, 1
        %s196 = smul.addr %s195, 256
        %s197 = scalar_lea.vmem [#allocation2], %s196
        %p198 = pneg %p39
        %p199 = pneg %p36
        %p200 = pneg %p60
        %p201 = pneg %p57
        %p202 = pneg %p81
        %p203 = pneg %p78
        %p204 = pneg %p102
        %p205 = pneg %p99
        %p206 = pneg %p128
        %p207 = pneg %p125
        %p208 = scmp.lt.s32.totalorder %s18, 1
        %s209 = scalar_select %p208, %s18, 1
        %s210 = smul.addr %s209, 32
        %s211 = smul.addr %s210, 8
        %s212 = scalar_lea.vmem %s4, %s211
        %p213 = scmp.lt.s32.totalorder %s18, 1
        %s214 = scalar_select %p213, %s18, 1
        %s215 = smul.addr %s214, 32
        %s216 = smul.addr %s215, 8
        %s217 = scalar_lea.vmem %s4, %s216
        %v218 = vld [vmem:[%s188] sm:$0xff]
        %v219 = vld [vmem:[%s188 + $0x8] sm:$0xff]
        %v220 = vld [vmem:[%s188 + $0x10] sm:$0xff]
        %v221 = vld [vmem:[%s188 + $0x18] sm:$0xff]
        %v222 = vld [vmem:[%s188 + $0x20] sm:$0xff]
        %v223 = vld [vmem:[%s188 + $0x28] sm:$0xff]
        %v224 = vld [vmem:[%s188 + $0x30] sm:$0xff]
        %v225 = vld [vmem:[%s188 + $0x38] sm:$0xff]
        %v226 = vld [vmem:[%s188 + $0x40] sm:$0xff]
        %v227 = vld [vmem:[%s188 + $0x48] sm:$0xff]
        %v228 = vld [vmem:[%s188 + $0x50] sm:$0xff]
        %v229 = vld [vmem:[%s188 + $0x58] sm:$0xff]
        %v230 = vld [vmem:[%s188 + $0x60] sm:$0xff]
        %v231 = vld [vmem:[%s188 + $0x68] sm:$0xff]
        %v232 = vld [vmem:[%s188 + $0x70] sm:$0xff]
        %v233 = vld [vmem:[%s188 + $0x78] sm:$0xff]
        %v234 = vld [vmem:[%s188 + $0x80] sm:$0xff]
        %v235 = vld [vmem:[%s188 + $0x88] sm:$0xff]
        %v236 = vld [vmem:[%s188 + $0x90] sm:$0xff]
        %v237 = vld [vmem:[%s188 + $0x98] sm:$0xff]
        %v238 = vld [vmem:[%s188 + $0xa0] sm:$0xff]
        %v239 = vld [vmem:[%s188 + $0xa8] sm:$0xff]
        %v240 = vld [vmem:[%s188 + $0xb0] sm:$0xff]
        %v241 = vld [vmem:[%s188 + $0xb8] sm:$0xff]
        %v242 = vld [vmem:[%s188 + $0xc0] sm:$0xff]
        %v243 = vld [vmem:[%s188 + $0xc8] sm:$0xff]
        %v244 = vld [vmem:[%s188 + $0xd0] sm:$0xff]
        %v245 = vld [vmem:[%s188 + $0xd8] sm:$0xff]
        %v246 = vld [vmem:[%s188 + $0xe0] sm:$0xff]
        %v247 = vld [vmem:[%s188 + $0xe8] sm:$0xff]
        %v248 = vld [vmem:[%s188 + $0xf0] sm:$0xff]
        %v249 = vld [vmem:[%s188 + $0xf8] sm:$0xff]
        %v250 = vld [vmem:[%s1] sm:$0xff]
        %v251 = vld [vmem:[%s1 + $0x8] sm:$0xff]
        %v252 = vld [vmem:[%s1 + $0x10] sm:$0xff]
        %v253 = vld [vmem:[%s1 + $0x18] sm:$0xff]
        %vm254 = vcmask 261120
        %v256 = vsel %vm254, %v218, 0
        %v259 = vsel %vm254, %v219, 0
        %v262 = vsel %vm254, %v220, 0
        %v265 = vsel %vm254, %v221, 0
        %v268 = vsel %vm254, %v222, 0
        %v271 = vsel %vm254, %v223, 0
        %v274 = vsel %vm254, %v224, 0
        %v277 = vsel %vm254, %v225, 0
        %v280 = vsel %vm254, %v226, 0
        %v283 = vsel %vm254, %v227, 0
        %v286 = vsel %vm254, %v228, 0
        %v289 = vsel %vm254, %v229, 0
        %v292 = vsel %vm254, %v230, 0
        %v295 = vsel %vm254, %v231, 0
        %v298 = vsel %vm254, %v232, 0
        %v301 = vsel %vm254, %v233, 0
        %v304 = vsel %vm254, %v234, 0
        %v307 = vsel %vm254, %v235, 0
        %v310 = vsel %vm254, %v236, 0
        %v313 = vsel %vm254, %v237, 0
        %v316 = vsel %vm254, %v238, 0
        %v319 = vsel %vm254, %v239, 0
        %v322 = vsel %vm254, %v240, 0
        %v325 = vsel %vm254, %v241, 0
        %v328 = vsel %vm254, %v242, 0
        %v331 = vsel %vm254, %v243, 0
        %v334 = vsel %vm254, %v244, 0
        %v337 = vsel %vm254, %v245, 0
        %v340 = vsel %vm254, %v246, 0
        %v343 = vsel %vm254, %v247, 0
        %v346 = vsel %vm254, %v248, 0
        %v349 = vsel %vm254, %v249, 0
        %351 = vmatprep.subr.mxu0 0.0
        %352 = vmatpush1.msra.mxu0 %v250
        %353 = vmatprep.subr.mxu0 0.0
        %354 = vmatpush1.msra.mxu0 %v251
        %355 = vmatprep.subr.mxu0 0.0
        %356 = vmatpush1.msra.mxu0 %v252
        %357 = vmatprep.subr.mxu0 0.0
        %358 = vmatpush1.msra.mxu0 %v253
        %359 = vmatprep.subr.mxu0 0.0
        %360 = vmatpush1.msra.mxu0 0.0
        %361 = vmatprep.subr.mxu0 0.0
        %362 = vmatpush1.msra.mxu0 0.0
        %363 = vmatprep.subr.mxu0 0.0
        %364 = vmatpush1.msra.mxu0 0.0
        %365 = vmatprep.subr.mxu0 0.0
        %366 = vmatpush1.msra.mxu0 0.0
        %367 = vmatprep.subr.mxu0 0.0
        %368 = vmatpush1.msra.mxu0 0.0
        %369 = vmatprep.subr.mxu0 0.0
        %370 = vmatpush1.msra.mxu0 0.0
        %371 = vmatprep.subr.mxu0 0.0
        %372 = vmatpush1.msra.mxu0 0.0
        %373 = vmatprep.subr.mxu0 0.0
        %374 = vmatpush1.msra.mxu0 0.0
        %375 = vmatprep.subr.mxu0 0.0
        %376 = vmatpush1.msra.mxu0 0.0
        %377 = vmatprep.subr.mxu0 0.0
        %378 = vmatpush1.msra.mxu0 0.0
        %379 = vmatprep.subr.mxu0 0.0
        %380 = vmatpush1.msra.mxu0 0.0
        %381 = vmatprep.subr.mxu0 0.0
        %382 = vmatpush1.msra.mxu0 0.0
        %383 = vmatprep.subr.mxu0 0.0
        %384 = vmatpush1.msra.mxu0 0.0
        %385 = vmatprep.subr.mxu0 0.0
        %386 = vmatpush1.msra.mxu0 0.0
        %387 = vmatprep.subr.mxu0 0.0
        %388 = vmatpush1.msra.mxu0 0.0
        %389 = vmatprep.subr.mxu0 0.0
        %390 = vmatpush1.msra.mxu0 0.0
        %391 = vmatprep.subr.mxu0 0.0
        %392 = vmatpush1.msra.mxu0 0.0
        %393 = vmatprep.subr.mxu0 0.0
        %394 = vmatpush1.msra.mxu0 0.0
        %395 = vmatprep.subr.mxu0 0.0
        %396 = vmatpush1.msra.mxu0 0.0
        %397 = vmatprep.subr.mxu0 0.0
        %398 = vmatpush1.msra.mxu0 0.0
        %399 = vmatprep.subr.mxu0 0.0
        %400 = vmatpush1.msra.mxu0 0.0
        %401 = vmatprep.subr.mxu0 0.0
        %402 = vmatpush1.msra.mxu0 0.0
        %403 = vmatprep.subr.mxu0 0.0
        %404 = vmatpush1.msra.mxu0 0.0
        %405 = vmatprep.subr.mxu0 0.0
        %406 = vmatpush1.msra.mxu0 0.0
        %407 = vmatprep.subr.mxu0 0.0
        %408 = vmatpush1.msra.mxu0 0.0
        %409 = vmatprep.subr.mxu0 0.0
        %410 = vmatpush1.msra.mxu0 0.0
        %411 = vmatprep.subr.mxu0 0.0
        %412 = vmatpush1.msra.mxu0 0.0
        %413 = vmatprep.subr.mxu0 0.0
        %414 = vmatpush1.msra.mxu0 0.0
        %415 = vmatprep.mubr.f32.mxu0 0.0
        %416 = vmatmul.mubr.f32.gmra.mrb[0].mxu0 %v256
        %v417 = vpop.f32.mrb[0].mxu0
        %v418 = vadd.f32 0.0, %v417
        %v419 = vpop.f32.mrb[0].mxu0
        %420 = vmatprep.mubr.f32.mxu0 0.0
        %421 = vmatmul.mubr.f32.gmra.mrb[0].mxu0 %v259
        %v422 = vpop.f32.mrb[0].mxu0
        %v423 = vadd.f32 0.0, %v422
        %v424 = vpop.f32.mrb[0].mxu0
        %425 = vmatprep.mubr.f32.mxu0 0.0
        %426 = vmatmul.mubr.f32.gmra.mrb[0].mxu0 %v262
        %v427 = vpop.f32.mrb[0].mxu0
        %v428 = vadd.f32 0.0, %v427
        %v429 = vpop.f32.mrb[0].mxu0
        %430 = vmatprep.mubr.f32.mxu0 0.0
        %431 = vmatmul.mubr.f32.gmra.mrb[0].mxu0 %v265
        %v432 = vpop.f32.mrb[0].mxu0
        %v433 = vadd.f32 0.0, %v432
        %v434 = vpop.f32.mrb[0].mxu0
        %435 = vmatprep.mubr.f32.mxu0 0.0
        %436 = vmatmul.mubr.f32.gmra.mrb[0].mxu0 %v268
        %v437 = vpop.f32.mrb[0].mxu0
        %v438 = vadd.f32 0.0, %v437
        %v439 = vpop.f32.mrb[0].mxu0
        %440 = vmatprep.mubr.f32.mxu0 0.0
        %441 = vmatmul.mubr.f32.gmra.mrb[0].mxu0 %v271
        %v442 = vpop.f32.mrb[0].mxu0
        %v443 = vadd.f32 0.0, %v442
        %v444 = vpop.f32.mrb[0].mxu0
        %445 = vmatprep.mubr.f32.mxu0 0.0
        %446 = vmatmul.mubr.f32.gmra.mrb[0].mxu0 %v274
        %v447 = vpop.f32.mrb[0].mxu0
        %v448 = vadd.f32 0.0, %v447
        %v449 = vpop.f32.mrb[0].mxu0
        %450 = vmatprep.mubr.f32.mxu0 0.0
        %451 = vmatmul.mubr.f32.gmra.mrb[0].mxu0 %v277
        %v452 = vpop.f32.mrb[0].mxu0
        %v453 = vadd.f32 0.0, %v452
        %v454 = vpop.f32.mrb[0].mxu0
        %455 = vmatprep.mubr.f32.mxu0 0.0
        %456 = vmatmul.mubr.f32.gmra.mrb[0].mxu0 %v280
        %v457 = vpop.f32.mrb[0].mxu0
        %v458 = vadd.f32 0.0, %v457
        %v459 = vpop.f32.mrb[0].mxu0
        %460 = vmatprep.mubr.f32.mxu0 0.0
        %461 = vmatmul.mubr.f32.gmra.mrb[0].mxu0 %v283
        %v462 = vpop.f32.mrb[0].mxu0
        %v463 = vadd.f32 0.0, %v462
        %v464 = vpop.f32.mrb[0].mxu0
        %465 = vmatprep.mubr.f32.mxu0 0.0
        %466 = vmatmul.mubr.f32.gmra.mrb[0].mxu0 %v286
        %v467 = vpop.f32.mrb[0].mxu0
        %v468 = vadd.f32 0.0, %v467
        %v469 = vpop.f32.mrb[0].mxu0
        %470 = vmatprep.mubr.f32.mxu0 0.0
        %471 = vmatmul.mubr.f32.gmra.mrb[0].mxu0 %v289
        %v472 = vpop.f32.mrb[0].mxu0
        %v473 = vadd.f32 0.0, %v472
        %v474 = vpop.f32.mrb[0].mxu0
        %475 = vmatprep.mubr.f32.mxu0 0.0
        %476 = vmatmul.mubr.f32.gmra.mrb[0].mxu0 %v292
        %v477 = vpop.f32.mrb[0].mxu0
        %v478 = vadd.f32 0.0, %v477
        %v479 = vpop.f32.mrb[0].mxu0
        %480 = vmatprep.mubr.f32.mxu0 0.0
        %481 = vmatmul.mubr.f32.gmra.mrb[0].mxu0 %v295
        %v482 = vpop.f32.mrb[0].mxu0
        %v483 = vadd.f32 0.0, %v482
        %v484 = vpop.f32.mrb[0].mxu0
        %485 = vmatprep.mubr.f32.mxu0 0.0
        %486 = vmatmul.mubr.f32.gmra.mrb[0].mxu0 %v298
        %v487 = vpop.f32.mrb[0].mxu0
        %v488 = vadd.f32 0.0, %v487
        %v489 = vpop.f32.mrb[0].mxu0
        %490 = vmatprep.mubr.f32.mxu0 0.0
        %491 = vmatmul.mubr.f32.gmra.mrb[0].mxu0 %v301
        %v492 = vpop.f32.mrb[0].mxu0
        %v493 = vadd.f32 0.0, %v492
        %v494 = vpop.f32.mrb[0].mxu0
        %495 = vmatprep.mubr.f32.mxu0 0.0
        %496 = vmatmul.mubr.f32.gmra.mrb[0].mxu0 %v304
        %v497 = vpop.f32.mrb[0].mxu0
        %v498 = vadd.f32 0.0, %v497
        %v499 = vpop.f32.mrb[0].mxu0
        %500 = vmatprep.mubr.f32.mxu0 0.0
        %501 = vmatmul.mubr.f32.gmra.mrb[0].mxu0 %v307
        %v502 = vpop.f32.mrb[0].mxu0
        %v503 = vadd.f32 0.0, %v502
        %v504 = vpop.f32.mrb[0].mxu0
        %505 = vmatprep.mubr.f32.mxu0 0.0
        %506 = vmatmul.mubr.f32.gmra.mrb[0].mxu0 %v310
        %v507 = vpop.f32.mrb[0].mxu0
        %v508 = vadd.f32 0.0, %v507
        %v509 = vpop.f32.mrb[0].mxu0
        %510 = vmatprep.mubr.f32.mxu0 0.0
        %511 = vmatmul.mubr.f32.gmra.mrb[0].mxu0 %v313
        %v512 = vpop.f32.mrb[0].mxu0
        %v513 = vadd.f32 0.0, %v512
        %v514 = vpop.f32.mrb[0].mxu0
        %515 = vmatprep.mubr.f32.mxu0 0.0
        %516 = vmatmul.mubr.f32.gmra.mrb[0].mxu0 %v316
        %v517 = vpop.f32.mrb[0].mxu0
        %v518 = vadd.f32 0.0, %v517
        %v519 = vpop.f32.mrb[0].mxu0
        %520 = vmatprep.mubr.f32.mxu0 0.0
        %521 = vmatmul.mubr.f32.gmra.mrb[0].mxu0 %v319
        %v522 = vpop.f32.mrb[0].mxu0
        %v523 = vadd.f32 0.0, %v522
        %v524 = vpop.f32.mrb[0].mxu0
        %525 = vmatprep.mubr.f32.mxu0 0.0
        %526 = vmatmul.mubr.f32.gmra.mrb[0].mxu0 %v322
        %v527 = vpop.f32.mrb[0].mxu0
        %v528 = vadd.f32 0.0, %v527
        %v529 = vpop.f32.mrb[0].mxu0
        %530 = vmatprep.mubr.f32.mxu0 0.0
        %531 = vmatmul.mubr.f32.gmra.mrb[0].mxu0 %v325
        %v532 = vpop.f32.mrb[0].mxu0
        %v533 = vadd.f32 0.0, %v532
        %v534 = vpop.f32.mrb[0].mxu0
        %535 = vmatprep.mubr.f32.mxu0 0.0
        %536 = vmatmul.mubr.f32.gmra.mrb[0].mxu0 %v328
        %v537 = vpop.f32.mrb[0].mxu0
        %v538 = vadd.f32 0.0, %v537
        %v539 = vpop.f32.mrb[0].mxu0
        %540 = vmatprep.mubr.f32.mxu0 0.0
        %541 = vmatmul.mubr.f32.gmra.mrb[0].mxu0 %v331
        %v542 = vpop.f32.mrb[0].mxu0
        %v543 = vadd.f32 0.0, %v542
        %v544 = vpop.f32.mrb[0].mxu0
        %545 = vmatprep.mubr.f32.mxu0 0.0
        %546 = vmatmul.mubr.f32.gmra.mrb[0].mxu0 %v334
        %v547 = vpop.f32.mrb[0].mxu0
        %v548 = vadd.f32 0.0, %v547
        %v549 = vpop.f32.mrb[0].mxu0
        %550 = vmatprep.mubr.f32.mxu0 0.0
        %551 = vmatmul.mubr.f32.gmra.mrb[0].mxu0 %v337
        %v552 = vpop.f32.mrb[0].mxu0
        %v553 = vadd.f32 0.0, %v552
        %v554 = vpop.f32.mrb[0].mxu0
        %555 = vmatprep.mubr.f32.mxu0 0.0
        %556 = vmatmul.mubr.f32.gmra.mrb[0].mxu0 %v340
        %v557 = vpop.f32.mrb[0].mxu0
        %v558 = vadd.f32 0.0, %v557
        %v559 = vpop.f32.mrb[0].mxu0
        %560 = vmatprep.mubr.f32.mxu0 0.0
        %561 = vmatmul.mubr.f32.gmra.mrb[0].mxu0 %v343
        %v562 = vpop.f32.mrb[0].mxu0
        %v563 = vadd.f32 0.0, %v562
        %v564 = vpop.f32.mrb[0].mxu0
        %565 = vmatprep.mubr.f32.mxu0 0.0
        %566 = vmatmul.mubr.f32.gmra.mrb[0].mxu0 %v346
        %v567 = vpop.f32.mrb[0].mxu0
        %v568 = vadd.f32 0.0, %v567
        %v569 = vpop.f32.mrb[0].mxu0
        %570 = vmatprep.mubr.f32.mxu0 0.0
        %571 = vmatmul.mubr.f32.gmra.mrb[0].mxu0 %v349
        %v572 = vpop.f32.mrb[0].mxu0
        %v573 = vadd.f32 0.0, %v572
        %v574 = vpop.f32.mrb[0].mxu0
        %575 = vdwg.mxu0
        %v576 = vld [vmem:[%s2] sm:$0x1]
        %v578 = vlaneseq
        %v579 = vshrl.u32 %v578, 7
        %v580 = vsub.s32 0, %v579
        %v581 = vrot.slane %v576, %v580
        %v583 = vmul.f32 %v418, %v581
        %v584 = vmul.f32 %v423, %v581
        %v585 = vmul.f32 %v428, %v581
        %v586 = vmul.f32 %v433, %v581
        %v587 = vmul.f32 %v438, %v581
        %v588 = vmul.f32 %v443, %v581
        %v589 = vmul.f32 %v448, %v581
        %v590 = vmul.f32 %v453, %v581
        %v591 = vmul.f32 %v458, %v581
        %v592 = vmul.f32 %v463, %v581
        %v593 = vmul.f32 %v468, %v581
        %v594 = vmul.f32 %v473, %v581
        %v595 = vmul.f32 %v478, %v581
        %v596 = vmul.f32 %v483, %v581
        %v597 = vmul.f32 %v488, %v581
        %v598 = vmul.f32 %v493, %v581
        %v599 = vmul.f32 %v498, %v581
        %v600 = vmul.f32 %v503, %v581
        %v601 = vmul.f32 %v508, %v581
        %v602 = vmul.f32 %v513, %v581
        %v603 = vmul.f32 %v518, %v581
        %v604 = vmul.f32 %v523, %v581
        %v605 = vmul.f32 %v528, %v581
        %v606 = vmul.f32 %v533, %v581
        %v607 = vmul.f32 %v538, %v581
        %v608 = vmul.f32 %v543, %v581
        %v609 = vmul.f32 %v548, %v581
        %v610 = vmul.f32 %v553, %v581
        %v611 = vmul.f32 %v558, %v581
        %v612 = vmul.f32 %v563, %v581
        %v613 = vmul.f32 %v568, %v581
        %v614 = vmul.f32 %v573, %v581
        %v615 = vld [vmem:[%s3] sm:$0x1]
        %v617 = vlaneseq
        %v618 = vshrl.u32 %v617, 7
        %v619 = vsub.s32 0, %v618
        %v620 = vrot.slane %v615, %v619
        %v622 = vadd.f32 %v583, %v620
        %v623 = vadd.f32 %v584, %v620
        %v624 = vadd.f32 %v585, %v620
        %v625 = vadd.f32 %v586, %v620
        %v626 = vadd.f32 %v587, %v620
        %v627 = vadd.f32 %v588, %v620
        %v628 = vadd.f32 %v589, %v620
        %v629 = vadd.f32 %v590, %v620
        %v630 = vadd.f32 %v591, %v620
        %v631 = vadd.f32 %v592, %v620
        %v632 = vadd.f32 %v593, %v620
        %v633 = vadd.f32 %v594, %v620
        %v634 = vadd.f32 %v595, %v620
        %v635 = vadd.f32 %v596, %v620
        %v636 = vadd.f32 %v597, %v620
        %v637 = vadd.f32 %v598, %v620
        %v638 = vadd.f32 %v599, %v620
        %v639 = vadd.f32 %v600, %v620
        %v640 = vadd.f32 %v601, %v620
        %v641 = vadd.f32 %v602, %v620
        %v642 = vadd.f32 %v603, %v620
        %v643 = vadd.f32 %v604, %v620
        %v644 = vadd.f32 %v605, %v620
        %v645 = vadd.f32 %v606, %v620
        %v646 = vadd.f32 %v607, %v620
        %v647 = vadd.f32 %v608, %v620
        %v648 = vadd.f32 %v609, %v620
        %v649 = vadd.f32 %v610, %v620
        %v650 = vadd.f32 %v611, %v620
        %v651 = vadd.f32 %v612, %v620
        %v652 = vadd.f32 %v613, %v620
        %v653 = vadd.f32 %v614, %v620
        %v654 = vmax.f32 %v622, 0.0
        %v655 = vmax.f32 %v623, 0.0
        %v656 = vmax.f32 %v624, 0.0
        %v657 = vmax.f32 %v625, 0.0
        %v658 = vmax.f32 %v626, 0.0
        %v659 = vmax.f32 %v627, 0.0
        %v660 = vmax.f32 %v628, 0.0
        %v661 = vmax.f32 %v629, 0.0
        %v662 = vmax.f32 %v630, 0.0
        %v663 = vmax.f32 %v631, 0.0
        %v664 = vmax.f32 %v632, 0.0
        %v665 = vmax.f32 %v633, 0.0
        %v666 = vmax.f32 %v634, 0.0
        %v667 = vmax.f32 %v635, 0.0
        %v668 = vmax.f32 %v636, 0.0
        %v669 = vmax.f32 %v637, 0.0
        %v670 = vmax.f32 %v638, 0.0
        %v671 = vmax.f32 %v639, 0.0
        %v672 = vmax.f32 %v640, 0.0
        %v673 = vmax.f32 %v641, 0.0
        %v674 = vmax.f32 %v642, 0.0
        %v675 = vmax.f32 %v643, 0.0
        %v676 = vmax.f32 %v644, 0.0
        %v677 = vmax.f32 %v645, 0.0
        %v678 = vmax.f32 %v646, 0.0
        %v679 = vmax.f32 %v647, 0.0
        %v680 = vmax.f32 %v648, 0.0
        %v681 = vmax.f32 %v649, 0.0
        %v682 = vmax.f32 %v650, 0.0
        %v683 = vmax.f32 %v651, 0.0
        %v684 = vmax.f32 %v652, 0.0
        %v685 = vmax.f32 %v653, 0.0
        %vm686 = vcmask 130048
        %687 = vst.msk [vmem:[%s217] sm:$0xff] %vm686, %v654
        %688 = vst.msk [vmem:[%s217 + $0x8] sm:$0xff] %vm686, %v655
        %689 = vst.msk [vmem:[%s217 + $0x10] sm:$0xff] %vm686, %v656
        %690 = vst.msk [vmem:[%s217 + $0x18] sm:$0xff] %vm686, %v657
        %691 = vst.msk [vmem:[%s217 + $0x20] sm:$0xff] %vm686, %v658
        %692 = vst.msk [vmem:[%s217 + $0x28] sm:$0xff] %vm686, %v659
        %693 = vst.msk [vmem:[%s217 + $0x30] sm:$0xff] %vm686, %v660
        %694 = vst.msk [vmem:[%s217 + $0x38] sm:$0xff] %vm686, %v661
        %695 = vst.msk [vmem:[%s217 + $0x40] sm:$0xff] %vm686, %v662
        %696 = vst.msk [vmem:[%s217 + $0x48] sm:$0xff] %vm686, %v663
        %697 = vst.msk [vmem:[%s217 + $0x50] sm:$0xff] %vm686, %v664
        %698 = vst.msk [vmem:[%s217 + $0x58] sm:$0xff] %vm686, %v665
        %699 = vst.msk [vmem:[%s217 + $0x60] sm:$0xff] %vm686, %v666
        %700 = vst.msk [vmem:[%s217 + $0x68] sm:$0xff] %vm686, %v667
        %701 = vst.msk [vmem:[%s217 + $0x70] sm:$0xff] %vm686, %v668
        %702 = vst.msk [vmem:[%s217 + $0x78] sm:$0xff] %vm686, %v669
        %703 = vst.msk [vmem:[%s217 + $0x80] sm:$0xff] %vm686, %v670
        %704 = vst.msk [vmem:[%s217 + $0x88] sm:$0xff] %vm686, %v671
        %705 = vst.msk [vmem:[%s217 + $0x90] sm:$0xff] %vm686, %v672
        %706 = vst.msk [vmem:[%s217 + $0x98] sm:$0xff] %vm686, %v673
        %707 = vst.msk [vmem:[%s217 + $0xa0] sm:$0xff] %vm686, %v674
        %708 = vst.msk [vmem:[%s217 + $0xa8] sm:$0xff] %vm686, %v675
        %709 = vst.msk [vmem:[%s217 + $0xb0] sm:$0xff] %vm686, %v676
        %710 = vst.msk [vmem:[%s217 + $0xb8] sm:$0xff] %vm686, %v677
        %711 = vst.msk [vmem:[%s217 + $0xc0] sm:$0xff] %vm686, %v678
        %712 = vst.msk [vmem:[%s217 + $0xc8] sm:$0xff] %vm686, %v679
        %713 = vst.msk [vmem:[%s217 + $0xd0] sm:$0xff] %vm686, %v680
        %714 = vst.msk [vmem:[%s217 + $0xd8] sm:$0xff] %vm686, %v681
        %715 = vst.msk [vmem:[%s217 + $0xe0] sm:$0xff] %vm686, %v682
        %716 = vst.msk [vmem:[%s217 + $0xe8] sm:$0xff] %vm686, %v683
        %717 = vst.msk [vmem:[%s217 + $0xf0] sm:$0xff] %vm686, %v684
        %718 = vst.msk [vmem:[%s217 + $0xf8] sm:$0xff] %vm686, %v685
        %p719 = scmp.lt.s32.totalorder %s18, 1
        %s720 = scalar_select %p719, %s18, 1
        %s721 = smul.addr %s720, 32
        %s722 = smul.addr %s721, 8
        %s723 = scalar_lea.vmem %s4, %s722
        // Predicated region
        $region41: #{ffc_resnet_block_nchw.11} parent=35 // pred_check
          %p724 = pneg %p125
        $region42: #{ffc_resnet_block_nchw.11} parent=35 // pred_check_branch
          %726 = sbr.rel (%p724) target = $region44
        $region43: #{ffc_resnet_block_nchw.11} parent=35 // pred_region
          _
        $region44: #{ffc_resnet_block_nchw.11} parent=35 // pred_fallthru
          _
      $region36: #{ffc_resnet_block_nchw.11} parent=5 // pred_fallthru
        _
      %p727 = scmp.le.s32.totalorder 2, %s13
      // Predicated region
      $region45: #{ffc_resnet_block_nchw.11} parent=5 // pred_check
        %p728 = pneg %p727
      $region46: #{ffc_resnet_block_nchw.11} parent=5 // pred_check_branch
        %730 = sbr.rel (%p728) target = $region48
      $region47: #{ffc_resnet_block_nchw.11} parent=5 // pred_region
        %s731 = ssub.s32 %s13, 2
        // Predicated region
        $region49: #{ffc_resnet_block_nchw.11} parent=47 // pred_check
          %p732 = pneg %p131
        $region50: #{ffc_resnet_block_nchw.11} parent=47 // pred_check_branch
          %734 = sbr.rel (%p732) target = $region52
        $region51: #{ffc_resnet_block_nchw.11} parent=47 // pred_region
          %p735 = scmp.lt.s32.totalorder %s19, 1
          %s736 = scalar_select %p735, %s19, 1
          %s737 = smul.addr %s736, 32
          %s738 = smul.addr %s737, 8
          %s739 = scalar_lea.vmem %s4, %s738
        $region52: #{ffc_resnet_block_nchw.11} parent=47 // pred_fallthru
          _
      $region48: #{ffc_resnet_block_nchw.11} parent=5 // pred_fallthru
        _
    $region6: #{ffc_resnet_block_nchw.11} parent=1 // loop_footer
      %s17 = sadd.s32 1, %s13
    $region7: #{ffc_resnet_block_nchw.11} parent=1 // loop_footer_branch
      %12 = sbr.rel target = $region3
    $region8: #{ffc_resnet_block_nchw.11} parent=1 // loop_exit
      _
    %740 = vsyncpa [#allocation3], 1
    %s741 = scalar_lea.sflag [#allocation3], 1
    %742 = vsyncpa %s741, 1

// kernel: ffc_resnet_block_nchw.12
$region0: #{ffc_resnet_block_nchw.12}
  #allocation0 [shape = 'u32[]', space=smem, size = 0x4, offset = 0x4, fixed_abs, tag = 'smem constant byte address 0x4 - core index']
  #allocation1 [shape = 'u32[144,128]{1,0:T(1,128)}', space=vmem, size = 0x12000, scoped, tag = 'internal scratch']
  %s0 = inlined_call_operand.vmem [shape: f32[2,144,32], index: 0, kind: input, shape index: {}]
  %s1 = inlined_call_operand.vmem [shape: f32[32,32], index: 1, kind: input, shape index: {}]
  %s2 = inlined_call_operand.vmem [shape: f32[1,32], index: 2, kind: input, shape index: {}]
  %s3 = inlined_call_operand.vmem [shape: f32[1,32], index: 3, kind: input, shape index: {}]
  %s4 = inlined_call_operand.vmem [shape: f32[2,144,32], index: 4, kind: output, shape index: {}]
  %s5 = sld [smem:[#allocation0]]
  $region49: #{ffc_resnet_block_nchw.12} parent=0
    _
  %s7 = ssub.s32 1, %s5
  %s8 = scalar_select 0, %s7, %s5
  loop: start=0, step=1, limit=4
  $region2: #{ffc_resnet_block_nchw.12} parent=0 // loop_pre_header
    _
  $region3: #{ffc_resnet_block_nchw.12} parent=0 // loop_header
    %s10 = sphi 0, %s14
    %p11 = scmp.ge.s32.totalorder %s10, 4
    %s20 = sphi 0, %s22
    %s23 = sphi 0, %s20
    %s24 = sphi 0, %s23
    %s40 = sphi 0, %s24
    %s44 = sphi 0, %s44
    %s46 = sphi 0, %s44
    %s47 = sphi 0, %s46
    %s61 = sphi 0, %s47
    %s65 = sphi 0, %s65
    %s67 = sphi 0, %s65
    %s68 = sphi 0, %s67
    %s82 = sphi 0, %s68
    %s86 = sphi 0, %s86
    %s88 = sphi 0, %s86
    %s89 = sphi 0, %s88
    %s103 = sphi 0, %s89
    %s109 = sphi 0, %s111
    %s112 = sphi 0, %s109
    %s113 = sphi 0, %s112
    %s129 = sphi 0, %s113
  $region4: #{ffc_resnet_block_nchw.12} parent=0 // loop_header_branch
    %13 = sbr.rel (%p11) target = $region8
  $region5: #{ffc_resnet_block_nchw.12} parent=0 // loop_body
    %s15 = ssub.s32 %s10, 1
    %s16 = ssub.s32 %s10, 2
    %s17 = sadd.s32 %s10, 1
    %s18 = ssub.s32 %s10, %s17
    %p19 = scmp.eq.s32.totalorder %s18, 0
    %s21 = sadd.s32 %s20, 1
    %s22 = scalar_select %p19, %s20, %s21
    %p25 = pneg %p19
    %p26 = scmp.eq.s32.totalorder %s10, 1
    %p27 = por %p25, %p26
    %p28 = scmp.ne.s32.totalorder %s20, %s23
    %p29 = scmp.eq.s32.totalorder %s10, 0
    %p30 = por %p28, %p29
    %p31 = scmp.ne.s32.totalorder %s20, %s23
    %p32 = scmp.eq.s32.totalorder %s15, 1
    %p33 = por %p31, %p32
    %p34 = scmp.ne.s32.totalorder %s23, %s24
    %p35 = scmp.eq.s32.totalorder %s15, 0
    %p36 = por %p34, %p35
    %p37 = scmp.ne.s32.totalorder %s23, %s24
    %p38 = scmp.eq.s32.totalorder %s16, 1
    %p39 = por %p37, %p38
    %p41 = scmp.ne.s32.totalorder %s24, %s40
    %p42 = scmp.eq.s32.totalorder %s16, 0
    %p43 = por %p41, %p42
    %s45 = sadd.s32 %s44, 1
    %p48 = scmp.eq.s32.totalorder %s10, 1
    %p49 = scmp.ne.s32.totalorder %s44, %s46
    %p50 = scmp.eq.s32.totalorder %s10, 0
    %p51 = por %p49, %p50
    %p52 = scmp.ne.s32.totalorder %s44, %s46
    %p53 = scmp.eq.s32.totalorder %s15, 1
    %p54 = por %p52, %p53
    %p55 = scmp.ne.s32.totalorder %s46, %s47
    %p56 = scmp.eq.s32.totalorder %s15, 0
    %p57 = por %p55, %p56
    %p58 = scmp.ne.s32.totalorder %s46, %s47
    %p59 = scmp.eq.s32.totalorder %s16, 1
    %p60 = por %p58, %p59
    %p62 = scmp.ne.s32.totalorder %s47, %s61
    %p63 = scmp.eq.s32.totalorder %s16, 0
    %p64 = por %p62, %p63
    %s66 = sadd.s32 %s65, 1
    %p69 = scmp.eq.s32.totalorder %s10, 1
    %p70 = scmp.ne.s32.totalorder %s65, %s67
    %p71 = scmp.eq.s32.totalorder %s10, 0
    %p72 = por %p70, %p71
    %p73 = scmp.ne.s32.totalorder %s65, %s67
    %p74 = scmp.eq.s32.totalorder %s15, 1
    %p75 = por %p73, %p74
    %p76 = scmp.ne.s32.totalorder %s67, %s68
    %p77 = scmp.eq.s32.totalorder %s15, 0
    %p78 = por %p76, %p77
    %p79 = scmp.ne.s32.totalorder %s67, %s68
    %p80 = scmp.eq.s32.totalorder %s16, 1
    %p81 = por %p79, %p80
    %p83 = scmp.ne.s32.totalorder %s68, %s82
    %p84 = scmp.eq.s32.totalorder %s16, 0
    %p85 = por %p83, %p84
    %s87 = sadd.s32 %s86, 1
    %p90 = scmp.eq.s32.totalorder %s10, 1
    %p91 = scmp.ne.s32.totalorder %s86, %s88
    %p92 = scmp.eq.s32.totalorder %s10, 0
    %p93 = por %p91, %p92
    %p94 = scmp.ne.s32.totalorder %s86, %s88
    %p95 = scmp.eq.s32.totalorder %s15, 1
    %p96 = por %p94, %p95
    %p97 = scmp.ne.s32.totalorder %s88, %s89
    %p98 = scmp.eq.s32.totalorder %s15, 0
    %p99 = por %p97, %p98
    %p100 = scmp.ne.s32.totalorder %s88, %s89
    %p101 = scmp.eq.s32.totalorder %s16, 1
    %p102 = por %p100, %p101
    %p104 = scmp.ne.s32.totalorder %s89, %s103
    %p105 = scmp.eq.s32.totalorder %s16, 0
    %p106 = por %p104, %p105
    %s107 = ssub.s32 %s10, %s17
    %p108 = scmp.eq.s32.totalorder %s107, 0
    %s110 = sadd.s32 %s109, 1
    %s111 = scalar_select %p108, %s109, %s110
    %p114 = pneg %p108
    %p115 = scmp.eq.s32.totalorder %s10, 1
    %p116 = por %p114, %p115
    %p117 = scmp.ne.s32.totalorder %s109, %s112
    %p118 = scmp.eq.s32.totalorder %s10, 0
    %p119 = por %p117, %p118
    %p120 = scmp.ne.s32.totalorder %s109, %s112
    %p121 = scmp.eq.s32.totalorder %s15, 1
    %p122 = por %p120, %p121
    %p123 = scmp.ne.s32.totalorder %s112, %s113
    %p124 = scmp.eq.s32.totalorder %s15, 0
    %p125 = por %p123, %p124
    %p126 = scmp.ne.s32.totalorder %s112, %s113
    %p127 = scmp.eq.s32.totalorder %s16, 1
    %p128 = por %p126, %p127
    %p130 = scmp.ne.s32.totalorder %s113, %s129
    %p131 = scmp.eq.s32.totalorder %s16, 0
    %p132 = por %p130, %p131
    %p133 = scmp.le.s32.totalorder 1, %s10
    %p134 = scmp.lt.s32.totalorder %s10, 3
    %p135 = pnand %p133, %p134
    %p136 = pneg %p135
    // Predicated region
    $region9: #{ffc_resnet_block_nchw.12} parent=5 // pred_check
      _
    $region10: #{ffc_resnet_block_nchw.12} parent=5 // pred_check_branch
      %138 = sbr.rel (%p135) target = $region12
    $region11: #{ffc_resnet_block_nchw.12} parent=5 // pred_region
      %s139 = ssub.s32 %s10, 1
      // Predicated region
      $region13: #{ffc_resnet_block_nchw.12} parent=11 // pred_check
        %p140 = pneg %p57
      $region14: #{ffc_resnet_block_nchw.12} parent=11 // pred_check_branch
        %142 = sbr.rel (%p140) target = $region16
      $region15: #{ffc_resnet_block_nchw.12} parent=11 // pred_region
        _
      $region16: #{ffc_resnet_block_nchw.12} parent=11 // pred_fallthru
        _
      // Predicated region
      $region17: #{ffc_resnet_block_nchw.12} parent=11 // pred_check
        %p143 = pneg %p78
      $region18: #{ffc_resnet_block_nchw.12} parent=11 // pred_check_branch
        %145 = sbr.rel (%p143) target = $region20
      $region19: #{ffc_resnet_block_nchw.12} parent=11 // pred_region
        _
      $region20: #{ffc_resnet_block_nchw.12} parent=11 // pred_fallthru
        _
      // Predicated region
      $region21: #{ffc_resnet_block_nchw.12} parent=11 // pred_check
        %p146 = pneg %p99
      $region22: #{ffc_resnet_block_nchw.12} parent=11 // pred_check_branch
        %148 = sbr.rel (%p146) target = $region24
      $region23: #{ffc_resnet_block_nchw.12} parent=11 // pred_region
        _
      $region24: #{ffc_resnet_block_nchw.12} parent=11 // pred_fallthru
        _
    $region12: #{ffc_resnet_block_nchw.12} parent=5 // pred_fallthru
      _
    %p149 = scmp.lt.s32.totalorder %s10, 2
    // Predicated region
    $region25: #{ffc_resnet_block_nchw.12} parent=5 // pred_check
      %p150 = pneg %p149
    $region26: #{ffc_resnet_block_nchw.12} parent=5 // pred_check_branch
      %152 = sbr.rel (%p150) target = $region28
    $region27: #{ffc_resnet_block_nchw.12} parent=5 // pred_region
      // Predicated region
      $region29: #{ffc_resnet_block_nchw.12} parent=27 // pred_check
        %p153 = pneg %p30
      $region30: #{ffc_resnet_block_nchw.12} parent=27 // pred_check_branch
        %155 = sbr.rel (%p153) target = $region32
      $region31: #{ffc_resnet_block_nchw.12} parent=27 // pred_region
        %p156 = scmp.lt.s32.totalorder %s10, 1
        %s157 = scalar_select %p156, %s10, 1
        %s158 = smul.addr %s157, 18
        %s159 = smul.addr %s158, 8
        %s160 = scalar_lea.vmem %s0, %s159
      $region32: #{ffc_resnet_block_nchw.12} parent=27 // pred_fallthru
        _
    $region28: #{ffc_resnet_block_nchw.12} parent=5 // pred_fallthru
      _
    %p161 = scmp.le.s32.totalorder 1, %s10
    %p162 = scmp.lt.s32.totalorder %s10, 3
    %p163 = pnand %p161, %p162
    %p164 = pneg %p163
    // Predicated region
    $region33: #{ffc_resnet_block_nchw.12} parent=5 // pred_check
      _
    $region34: #{ffc_resnet_block_nchw.12} parent=5 // pred_check_branch
      %166 = sbr.rel (%p163) target = $region36
    $region35: #{ffc_resnet_block_nchw.12} parent=5 // pred_region
      %s167 = ssub.s32 %s10, 1
      %p168 = scmp.lt.s32.totalorder %s15, 1
      %s169 = scalar_select %p168, %s15, 1
      %s170 = smul.addr %s169, 18
      %s171 = smul.addr %s170, 8
      %s172 = scalar_lea.vmem %s0, %s171
      %p173 = pneg %p36
      %p174 = pneg %p33
      %p175 = pneg %p57
      %p176 = pneg %p54
      %p177 = pneg %p78
      %p178 = pneg %p75
      %p179 = pneg %p99
      %p180 = pneg %p96
      %p181 = pneg %p125
      %p182 = pneg %p122
      %p183 = scmp.lt.s32.totalorder %s15, 1
      %s184 = scalar_select %p183, %s15, 1
      %s185 = smul.addr %s184, 18
      %s186 = smul.addr %s185, 8
      %s187 = scalar_lea.vmem %s4, %s186
      %p188 = scmp.lt.s32.totalorder %s15, 1
      %s189 = scalar_select %p188, %s15, 1
      %s190 = smul.addr %s189, 18
      %s191 = smul.addr %s190, 8
      %s192 = scalar_lea.vmem %s0, %s191
      %p193 = scmp.lt.s32.totalorder %s15, 1
      %s194 = scalar_select %p193, %s15, 1
      %s195 = smul.addr %s194, 18
      %s196 = smul.addr %s195, 8
      %s197 = scalar_lea.vmem %s4, %s196
      %v198 = vld [vmem:[%s192] sm:$0xff]
      %v199 = vld [vmem:[%s192 + $0x8] sm:$0xff]
      %v200 = vld [vmem:[%s192 + $0x10] sm:$0xff]
      %v201 = vld [vmem:[%s192 + $0x18] sm:$0xff]
      %v202 = vld [vmem:[%s192 + $0x20] sm:$0xff]
      %v203 = vld [vmem:[%s192 + $0x28] sm:$0xff]
      %v204 = vld [vmem:[%s192 + $0x30] sm:$0xff]
      %v205 = vld [vmem:[%s192 + $0x38] sm:$0xff]
      %v206 = vld [vmem:[%s192 + $0x40] sm:$0xff]
      %v207 = vld [vmem:[%s192 + $0x48] sm:$0xff]
      %v208 = vld [vmem:[%s192 + $0x50] sm:$0xff]
      %v209 = vld [vmem:[%s192 + $0x58] sm:$0xff]
      %v210 = vld [vmem:[%s192 + $0x60] sm:$0xff]
      %v211 = vld [vmem:[%s192 + $0x68] sm:$0xff]
      %v212 = vld [vmem:[%s192 + $0x70] sm:$0xff]
      %v213 = vld [vmem:[%s192 + $0x78] sm:$0xff]
      %v214 = vld [vmem:[%s192 + $0x80] sm:$0xff]
      %v215 = vld [vmem:[%s192 + $0x88] sm:$0xff]
      %v216 = vld [vmem:[%s1] sm:$0xff]
      %v217 = vld [vmem:[%s1 + $0x8] sm:$0xff]
      %v218 = vld [vmem:[%s1 + $0x10] sm:$0xff]
      %v219 = vld [vmem:[%s1 + $0x18] sm:$0xff]
      %vm220 = vcmask 261120
      %v222 = vsel %vm220, %v198, 0
      %v225 = vsel %vm220, %v199, 0
      %v228 = vsel %vm220, %v200, 0
      %v231 = vsel %vm220, %v201, 0
      %v234 = vsel %vm220, %v202, 0
      %v237 = vsel %vm220, %v203, 0
      %v240 = vsel %vm220, %v204, 0
      %v243 = vsel %vm220, %v205, 0
      %v246 = vsel %vm220, %v206, 0
      %v249 = vsel %vm220, %v207, 0
      %v252 = vsel %vm220, %v208, 0
      %v255 = vsel %vm220, %v209, 0
      %v258 = vsel %vm220, %v210, 0
      %v261 = vsel %vm220, %v211, 0
      %v264 = vsel %vm220, %v212, 0
      %v267 = vsel %vm220, %v213, 0
      %v270 = vsel %vm220, %v214, 0
      %v273 = vsel %vm220, %v215, 0
      %275 = vmatprep.subr.mxu0 0.0
      %276 = vmatpush1.msra.mxu0 %v216
      %277 = vmatprep.subr.mxu0 0.0
      %278 = vmatpush1.msra.mxu0 %v217
      %279 = vmatprep.subr.mxu0 0.0
      %280 = vmatpush1.msra.mxu0 %v218
      %281 = vmatprep.subr.mxu0 0.0
      %282 = vmatpush1.msra.mxu0 %v219
      %283 = vmatprep.subr.mxu0 0.0
      %284 = vmatpush1.msra.mxu0 0.0
      %285 = vmatprep.subr.mxu0 0.0
      %286 = vmatpush1.msra.mxu0 0.0
      %287 = vmatprep.subr.mxu0 0.0
      %288 = vmatpush1.msra.mxu0 0.0
      %289 = vmatprep.subr.mxu0 0.0
      %290 = vmatpush1.msra.mxu0 0.0
      %291 = vmatprep.subr.mxu0 0.0
      %292 = vmatpush1.msra.mxu0 0.0
      %293 = vmatprep.subr.mxu0 0.0
      %294 = vmatpush1.msra.mxu0 0.0
      %295 = vmatprep.subr.mxu0 0.0
      %296 = vmatpush1.msra.mxu0 0.0
      %297 = vmatprep.subr.mxu0 0.0
      %298 = vmatpush1.msra.mxu0 0.0
      %299 = vmatprep.subr.mxu0 0.0
      %300 = vmatpush1.msra.mxu0 0.0
      %301 = vmatprep.subr.mxu0 0.0
      %302 = vmatpush1.msra.mxu0 0.0
      %303 = vmatprep.subr.mxu0 0.0
      %304 = vmatpush1.msra.mxu0 0.0
      %305 = vmatprep.subr.mxu0 0.0
      %306 = vmatpush1.msra.mxu0 0.0
      %307 = vmatprep.subr.mxu0 0.0
      %308 = vmatpush1.msra.mxu0 0.0
      %309 = vmatprep.subr.mxu0 0.0
      %310 = vmatpush1.msra.mxu0 0.0
      %311 = vmatprep.subr.mxu0 0.0
      %312 = vmatpush1.msra.mxu0 0.0
      %313 = vmatprep.subr.mxu0 0.0
      %314 = vmatpush1.msra.mxu0 0.0
      %315 = vmatprep.subr.mxu0 0.0
      %316 = vmatpush1.msra.mxu0 0.0
      %317 = vmatprep.subr.mxu0 0.0
      %318 = vmatpush1.msra.mxu0 0.0
      %319 = vmatprep.subr.mxu0 0.0
      %320 = vmatpush1.msra.mxu0 0.0
      %321 = vmatprep.subr.mxu0 0.0
      %322 = vmatpush1.msra.mxu0 0.0
      %323 = vmatprep.subr.mxu0 0.0
      %324 = vmatpush1.msra.mxu0 0.0
      %325 = vmatprep.subr.mxu0 0.0
      %326 = vmatpush1.msra.mxu0 0.0
      %327 = vmatprep.subr.mxu0 0.0
      %328 = vmatpush1.msra.mxu0 0.0
      %329 = vmatprep.subr.mxu0 0.0
      %330 = vmatpush1.msra.mxu0 0.0
      %331 = vmatprep.subr.mxu0 0.0
      %332 = vmatpush1.msra.mxu0 0.0
      %333 = vmatprep.subr.mxu0 0.0
      %334 = vmatpush1.msra.mxu0 0.0
      %335 = vmatprep.subr.mxu0 0.0
      %336 = vmatpush1.msra.mxu0 0.0
      %337 = vmatprep.subr.mxu0 0.0
      %338 = vmatpush1.msra.mxu0 0.0
      %339 = vmatprep.mubr.f32.mxu0 0.0
      %340 = vmatmul.mubr.f32.gmra.mrb[0].mxu0 %v222
      %v341 = vpop.f32.mrb[0].mxu0
      %v342 = vadd.f32 0.0, %v341
      %v343 = vpop.f32.mrb[0].mxu0
      %344 = vmatprep.mubr.f32.mxu0 0.0
      %345 = vmatmul.mubr.f32.gmra.mrb[0].mxu0 %v225
      %v346 = vpop.f32.mrb[0].mxu0
      %v347 = vadd.f32 0.0, %v346
      %v348 = vpop.f32.mrb[0].mxu0
      %349 = vmatprep.mubr.f32.mxu0 0.0
      %350 = vmatmul.mubr.f32.gmra.mrb[0].mxu0 %v228
      %v351 = vpop.f32.mrb[0].mxu0
      %v352 = vadd.f32 0.0, %v351
      %v353 = vpop.f32.mrb[0].mxu0
      %354 = vmatprep.mubr.f32.mxu0 0.0
      %355 = vmatmul.mubr.f32.gmra.mrb[0].mxu0 %v231
      %v356 = vpop.f32.mrb[0].mxu0
      %v357 = vadd.f32 0.0, %v356
      %v358 = vpop.f32.mrb[0].mxu0
      %359 = vmatprep.mubr.f32.mxu0 0.0
      %360 = vmatmul.mubr.f32.gmra.mrb[0].mxu0 %v234
      %v361 = vpop.f32.mrb[0].mxu0
      %v362 = vadd.f32 0.0, %v361
      %v363 = vpop.f32.mrb[0].mxu0
      %364 = vmatprep.mubr.f32.mxu0 0.0
      %365 = vmatmul.mubr.f32.gmra.mrb[0].mxu0 %v237
      %v366 = vpop.f32.mrb[0].mxu0
      %v367 = vadd.f32 0.0, %v366
      %v368 = vpop.f32.mrb[0].mxu0
      %369 = vmatprep.mubr.f32.mxu0 0.0
      %370 = vmatmul.mubr.f32.gmra.mrb[0].mxu0 %v240
      %v371 = vpop.f32.mrb[0].mxu0
      %v372 = vadd.f32 0.0, %v371
      %v373 = vpop.f32.mrb[0].mxu0
      %374 = vmatprep.mubr.f32.mxu0 0.0
      %375 = vmatmul.mubr.f32.gmra.mrb[0].mxu0 %v243
      %v376 = vpop.f32.mrb[0].mxu0
      %v377 = vadd.f32 0.0, %v376
      %v378 = vpop.f32.mrb[0].mxu0
      %379 = vmatprep.mubr.f32.mxu0 0.0
      %380 = vmatmul.mubr.f32.gmra.mrb[0].mxu0 %v246
      %v381 = vpop.f32.mrb[0].mxu0
      %v382 = vadd.f32 0.0, %v381
      %v383 = vpop.f32.mrb[0].mxu0
      %384 = vmatprep.mubr.f32.mxu0 0.0
      %385 = vmatmul.mubr.f32.gmra.mrb[0].mxu0 %v249
      %v386 = vpop.f32.mrb[0].mxu0
      %v387 = vadd.f32 0.0, %v386
      %v388 = vpop.f32.mrb[0].mxu0
      %389 = vmatprep.mubr.f32.mxu0 0.0
      %390 = vmatmul.mubr.f32.gmra.mrb[0].mxu0 %v252
      %v391 = vpop.f32.mrb[0].mxu0
      %v392 = vadd.f32 0.0, %v391
      %v393 = vpop.f32.mrb[0].mxu0
      %394 = vmatprep.mubr.f32.mxu0 0.0
      %395 = vmatmul.mubr.f32.gmra.mrb[0].mxu0 %v255
      %v396 = vpop.f32.mrb[0].mxu0
      %v397 = vadd.f32 0.0, %v396
      %v398 = vpop.f32.mrb[0].mxu0
      %399 = vmatprep.mubr.f32.mxu0 0.0
      %400 = vmatmul.mubr.f32.gmra.mrb[0].mxu0 %v258
      %v401 = vpop.f32.mrb[0].mxu0
      %v402 = vadd.f32 0.0, %v401
      %v403 = vpop.f32.mrb[0].mxu0
      %404 = vmatprep.mubr.f32.mxu0 0.0
      %405 = vmatmul.mubr.f32.gmra.mrb[0].mxu0 %v261
      %v406 = vpop.f32.mrb[0].mxu0
      %v407 = vadd.f32 0.0, %v406
      %v408 = vpop.f32.mrb[0].mxu0
      %409 = vmatprep.mubr.f32.mxu0 0.0
      %410 = vmatmul.mubr.f32.gmra.mrb[0].mxu0 %v264
      %v411 = vpop.f32.mrb[0].mxu0
      %v412 = vadd.f32 0.0, %v411
      %v413 = vpop.f32.mrb[0].mxu0
      %414 = vmatprep.mubr.f32.mxu0 0.0
      %415 = vmatmul.mubr.f32.gmra.mrb[0].mxu0 %v267
      %v416 = vpop.f32.mrb[0].mxu0
      %v417 = vadd.f32 0.0, %v416
      %v418 = vpop.f32.mrb[0].mxu0
      %419 = vmatprep.mubr.f32.mxu0 0.0
      %420 = vmatmul.mubr.f32.gmra.mrb[0].mxu0 %v270
      %v421 = vpop.f32.mrb[0].mxu0
      %v422 = vadd.f32 0.0, %v421
      %v423 = vpop.f32.mrb[0].mxu0
      %424 = vmatprep.mubr.f32.mxu0 0.0
      %425 = vmatmul.mubr.f32.gmra.mrb[0].mxu0 %v273
      %v426 = vpop.f32.mrb[0].mxu0
      %v427 = vadd.f32 0.0, %v426
      %v428 = vpop.f32.mrb[0].mxu0
      %429 = vdwg.mxu0
      %v430 = vld [vmem:[%s2] sm:$0x1]
      %v432 = vlaneseq
      %v433 = vshrl.u32 %v432, 7
      %v434 = vsub.s32 0, %v433
      %v435 = vrot.slane %v430, %v434
      %v437 = vmul.f32 %v342, %v435
      %v438 = vmul.f32 %v347, %v435
      %v439 = vmul.f32 %v352, %v435
      %v440 = vmul.f32 %v357, %v435
      %v441 = vmul.f32 %v362, %v435
      %v442 = vmul.f32 %v367, %v435
      %v443 = vmul.f32 %v372, %v435
      %v444 = vmul.f32 %v377, %v435
      %v445 = vmul.f32 %v382, %v435
      %v446 = vmul.f32 %v387, %v435
      %v447 = vmul.f32 %v392, %v435
      %v448 = vmul.f32 %v397, %v435
      %v449 = vmul.f32 %v402, %v435
      %v450 = vmul.f32 %v407, %v435
      %v451 = vmul.f32 %v412, %v435
      %v452 = vmul.f32 %v417, %v435
      %v453 = vmul.f32 %v422, %v435
      %v454 = vmul.f32 %v427, %v435
      %v455 = vld [vmem:[%s3] sm:$0x1]
      %v457 = vlaneseq
      %v458 = vshrl.u32 %v457, 7
      %v459 = vsub.s32 0, %v458
      %v460 = vrot.slane %v455, %v459
      %v462 = vadd.f32 %v437, %v460
      %v463 = vadd.f32 %v438, %v460
      %v464 = vadd.f32 %v439, %v460
      %v465 = vadd.f32 %v440, %v460
      %v466 = vadd.f32 %v441, %v460
      %v467 = vadd.f32 %v442, %v460
      %v468 = vadd.f32 %v443, %v460
      %v469 = vadd.f32 %v444, %v460
      %v470 = vadd.f32 %v445, %v460
      %v471 = vadd.f32 %v446, %v460
      %v472 = vadd.f32 %v447, %v460
      %v473 = vadd.f32 %v448, %v460
      %v474 = vadd.f32 %v449, %v460
      %v475 = vadd.f32 %v450, %v460
      %v476 = vadd.f32 %v451, %v460
      %v477 = vadd.f32 %v452, %v460
      %v478 = vadd.f32 %v453, %v460
      %v479 = vadd.f32 %v454, %v460
      %v480 = vmax.f32 %v462, 0.0
      %v481 = vmax.f32 %v463, 0.0
      %v482 = vmax.f32 %v464, 0.0
      %v483 = vmax.f32 %v465, 0.0
      %v484 = vmax.f32 %v466, 0.0
      %v485 = vmax.f32 %v467, 0.0
      %v486 = vmax.f32 %v468, 0.0
      %v487 = vmax.f32 %v469, 0.0
      %v488 = vmax.f32 %v470, 0.0
      %v489 = vmax.f32 %v471, 0.0
      %v490 = vmax.f32 %v472, 0.0
      %v491 = vmax.f32 %v473, 0.0
      %v492 = vmax.f32 %v474, 0.0
      %v493 = vmax.f32 %v475, 0.0
      %v494 = vmax.f32 %v476, 0.0
      %v495 = vmax.f32 %v477, 0.0
      %v496 = vmax.f32 %v478, 0.0
      %v497 = vmax.f32 %v479, 0.0
      %498 = vst.msk [vmem:[%s197] sm:$0xff] %vm220, %v480
      %499 = vst.msk [vmem:[%s197 + $0x8] sm:$0xff] %vm220, %v481
      %500 = vst.msk [vmem:[%s197 + $0x10] sm:$0xff] %vm220, %v482
      %501 = vst.msk [vmem:[%s197 + $0x18] sm:$0xff] %vm220, %v483
      %502 = vst.msk [vmem:[%s197 + $0x20] sm:$0xff] %vm220, %v484
      %503 = vst.msk [vmem:[%s197 + $0x28] sm:$0xff] %vm220, %v485
      %504 = vst.msk [vmem:[%s197 + $0x30] sm:$0xff] %vm220, %v486
      %505 = vst.msk [vmem:[%s197 + $0x38] sm:$0xff] %vm220, %v487
      %506 = vst.msk [vmem:[%s197 + $0x40] sm:$0xff] %vm220, %v488
      %507 = vst.msk [vmem:[%s197 + $0x48] sm:$0xff] %vm220, %v489
      %508 = vst.msk [vmem:[%s197 + $0x50] sm:$0xff] %vm220, %v490
      %509 = vst.msk [vmem:[%s197 + $0x58] sm:$0xff] %vm220, %v491
      %510 = vst.msk [vmem:[%s197 + $0x60] sm:$0xff] %vm220, %v492
      %511 = vst.msk [vmem:[%s197 + $0x68] sm:$0xff] %vm220, %v493
      %512 = vst.msk [vmem:[%s197 + $0x70] sm:$0xff] %vm220, %v494
      %513 = vst.msk [vmem:[%s197 + $0x78] sm:$0xff] %vm220, %v495
      %514 = vst.msk [vmem:[%s197 + $0x80] sm:$0xff] %vm220, %v496
      %515 = vst.msk [vmem:[%s197 + $0x88] sm:$0xff] %vm220, %v497
      %p516 = scmp.lt.s32.totalorder %s15, 1
      %s517 = scalar_select %p516, %s15, 1
      %s518 = smul.addr %s517, 18
      %s519 = smul.addr %s518, 8
      %s520 = scalar_lea.vmem %s4, %s519
      // Predicated region
      $region37: #{ffc_resnet_block_nchw.12} parent=35 // pred_check
        %p521 = pneg %p122
      $region38: #{ffc_resnet_block_nchw.12} parent=35 // pred_check_branch
        %523 = sbr.rel (%p521) target = $region40
      $region39: #{ffc_resnet_block_nchw.12} parent=35 // pred_region
        _
      $region40: #{ffc_resnet_block_nchw.12} parent=35 // pred_fallthru
        _
    $region36: #{ffc_resnet_block_nchw.12} parent=5 // pred_fallthru
      _
    %p524 = scmp.le.s32.totalorder 2, %s10
    // Predicated region
    $region41: #{ffc_resnet_block_nchw.12} parent=5 // pred_check
      %p525 = pneg %p524
    $region42: #{ffc_resnet_block_nchw.12} parent=5 // pred_check_branch
      %527 = sbr.rel (%p525) target = $region44
    $region43: #{ffc_resnet_block_nchw.12} parent=5 // pred_region
      %s528 = ssub.s32 %s10, 2
      // Predicated region
      $region45: #{ffc_resnet_block_nchw.12} parent=43 // pred_check
        %p529 = pneg %p128
      $region46: #{ffc_resnet_block_nchw.12} parent=43 // pred_check_branch
        %531 = sbr.rel (%p529) target = $region48
      $region47: #{ffc_resnet_block_nchw.12} parent=43 // pred_region
        %p532 = scmp.lt.s32.totalorder %s16, 1
        %s533 = scalar_select %p532, %s16, 1
        %s534 = smul.addr %s533, 18
        %s535 = smul.addr %s534, 8
        %s536 = scalar_lea.vmem %s4, %s535
      $region48: #{ffc_resnet_block_nchw.12} parent=43 // pred_fallthru
        _
    $region44: #{ffc_resnet_block_nchw.12} parent=5 // pred_fallthru
      _
  $region6: #{ffc_resnet_block_nchw.12} parent=0 // loop_footer
    %s14 = sadd.s32 1, %s10
  $region7: #{ffc_resnet_block_nchw.12} parent=0 // loop_footer_branch
    %9 = sbr.rel target = $region3
  $region8: #{ffc_resnet_block_nchw.12} parent=0 // loop_exit
    _

// kernel: reverse.8
$region0: #{reverse.8}
  #allocation0 [shape = 's32[1]{0}', space=sflag, size = 0x4, scoped, tag = 'scoped memory for reverse.8']
  %s0 = inlined_call_operand.vmem [shape: f32[2,16,16,7], index: 0, kind: input, shape index: {}]
  %s1 = inlined_call_operand.vmem [shape: f32[2,16,16,7], index: 1, kind: output, shape index: {}]
  %s2 = scalar_lea.vmem %s0, 96
  %v3 = vld [vmem:[%s2] sm:$0xff]
  %4 = vst [vmem:[%s1] sm:$0xff] %v3
  %s5 = scalar_lea.vmem %s0, 208
  %v6 = vld [vmem:[%s5] sm:$0xff]
  %s7 = scalar_lea.vmem %s1, 112
  %8 = vst [vmem:[%s7] sm:$0xff] %v6
  %s9 = scalar_lea.vmem %s0, 80
  %v10 = vld [vmem:[%s9] sm:$0xff]
  %s11 = scalar_lea.vmem %s1, 16
  %12 = vst [vmem:[%s11] sm:$0xff] %v10
  %s13 = scalar_lea.vmem %s0, 192
  %v14 = vld [vmem:[%s13] sm:$0xff]
  %s15 = scalar_lea.vmem %s1, 128
  %16 = vst [vmem:[%s15] sm:$0xff] %v14
  %s17 = scalar_lea.vmem %s0, 64
  %v18 = vld [vmem:[%s17] sm:$0xff]
  %s19 = scalar_lea.vmem %s1, 32
  %20 = vst [vmem:[%s19] sm:$0xff] %v18
  %s21 = scalar_lea.vmem %s0, 176
  %v22 = vld [vmem:[%s21] sm:$0xff]
  %s23 = scalar_lea.vmem %s1, 144
  %24 = vst [vmem:[%s23] sm:$0xff] %v22
  %s25 = scalar_lea.vmem %s0, 48
  %v26 = vld [vmem:[%s25] sm:$0xff]
  %s27 = scalar_lea.vmem %s1, 48
  %28 = vst [vmem:[%s27] sm:$0xff] %v26
  %s29 = scalar_lea.vmem %s0, 160
  %v30 = vld [vmem:[%s29] sm:$0xff]
  %s31 = scalar_lea.vmem %s1, 160
  %32 = vst [vmem:[%s31] sm:$0xff] %v30
  %s33 = scalar_lea.vmem %s0, 32
  %v34 = vld [vmem:[%s33] sm:$0xff]
  %s35 = scalar_lea.vmem %s1, 64
  %36 = vst [vmem:[%s35] sm:$0xff] %v34
  %s37 = scalar_lea.vmem %s0, 144
  %v38 = vld [vmem:[%s37] sm:$0xff]
  %s39 = scalar_lea.vmem %s1, 176
  %40 = vst [vmem:[%s39] sm:$0xff] %v38
  %s41 = scalar_lea.vmem %s0, 16
  %v42 = vld [vmem:[%s41] sm:$0xff]
  %s43 = scalar_lea.vmem %s1, 80
  %44 = vst [vmem:[%s43] sm:$0xff] %v42
  %s45 = scalar_lea.vmem %s0, 128
  %v46 = vld [vmem:[%s45] sm:$0xff]
  %s47 = scalar_lea.vmem %s1, 192
  %48 = vst [vmem:[%s47] sm:$0xff] %v46
  %v49 = vld [vmem:[%s0] sm:$0xff]
  %s50 = scalar_lea.vmem %s1, 96
  %51 = vst [vmem:[%s50] sm:$0xff] %v49
  %s52 = scalar_lea.vmem %s0, 112
  %v53 = vld [vmem:[%s52] sm:$0xff]
  %s54 = scalar_lea.vmem %s1, 208
  %55 = vst [vmem:[%s54] sm:$0xff] %v53
  %s56 = scalar_lea.vmem %s0, 104
  %v57 = vld [vmem:[%s56] sm:$0xff]
  %s58 = scalar_lea.vmem %s1, 8
  %59 = vst [vmem:[%s58] sm:$0xff] %v57
  %s60 = scalar_lea.vmem %s0, 216
  %v61 = vld [vmem:[%s60] sm:$0xff]
  %s62 = scalar_lea.vmem %s1, 120
  %63 = vst [vmem:[%s62] sm:$0xff] %v61
  %s64 = scalar_lea.vmem %s0, 88
  %v65 = vld [vmem:[%s64] sm:$0xff]
  %s66 = scalar_lea.vmem %s1, 24
  %67 = vst [vmem:[%s66] sm:$0xff] %v65
  %s68 = scalar_lea.vmem %s0, 200
  %v69 = vld [vmem:[%s68] sm:$0xff]
  %s70 = scalar_lea.vmem %s1, 136
  %71 = vst [vmem:[%s70] sm:$0xff] %v69
  %s72 = scalar_lea.vmem %s0, 72
  %v73 = vld [vmem:[%s72] sm:$0xff]
  %s74 = scalar_lea.vmem %s1, 40
  %75 = vst [vmem:[%s74] sm:$0xff] %v73
  %s76 = scalar_lea.vmem %s0, 184
  %v77 = vld [vmem:[%s76] sm:$0xff]
  %s78 = scalar_lea.vmem %s1, 152
  %79 = vst [vmem:[%s78] sm:$0xff] %v77
  %s80 = scalar_lea.vmem %s0, 56
  %v81 = vld [vmem:[%s80] sm:$0xff]
  %s82 = scalar_lea.vmem %s1, 56
  %83 = vst [vmem:[%s82] sm:$0xff] %v81
  %s84 = scalar_lea.vmem %s0, 168
  %v85 = vld [vmem:[%s84] sm:$0xff]
  %s86 = scalar_lea.vmem %s1, 168
  %87 = vst [vmem:[%s86] sm:$0xff] %v85
  %s88 = scalar_lea.vmem %s0, 40
  %v89 = vld [vmem:[%s88] sm:$0xff]
  %s90 = scalar_lea.vmem %s1, 72
  %91 = vst [vmem:[%s90] sm:$0xff] %v89
  %s92 = scalar_lea.vmem %s0, 152
  %v93 = vld [vmem:[%s92] sm:$0xff]
  %s94 = scalar_lea.vmem %s1, 184
  %95 = vst [vmem:[%s94] sm:$0xff] %v93
  %s96 = scalar_lea.vmem %s0, 24
  %v97 = vld [vmem:[%s96] sm:$0xff]
  %s98 = scalar_lea.vmem %s1, 88
  %99 = vst [vmem:[%s98] sm:$0xff] %v97
  %s100 = scalar_lea.vmem %s0, 136
  %v101 = vld [vmem:[%s100] sm:$0xff]
  %s102 = scalar_lea.vmem %s1, 200
  %103 = vst [vmem:[%s102] sm:$0xff] %v101
  %s104 = scalar_lea.vmem %s0, 8
  %v105 = vld [vmem:[%s104] sm:$0xff]
  %s106 = scalar_lea.vmem %s1, 104
  %107 = vst [vmem:[%s106] sm:$0xff] %v105
  %s108 = scalar_lea.vmem %s0, 120
  %v109 = vld [vmem:[%s108] sm:$0xff]
  %s110 = scalar_lea.vmem %s1, 216
  %111 = vst [vmem:[%s110] sm:$0xff] %v109

// kernel: ffc_resnet_block_nchw.13
$region0: #{ffc_resnet_block_nchw.13}
  #allocation0 [shape = 'u32[]', space=smem, size = 0x4, offset = 0x4, fixed_abs, tag = 'smem constant byte address 0x4 - core index']
  #allocation1 [shape = 'u32[144,128]{1,0:T(1,128)}', space=vmem, size = 0x12000, scoped, tag = 'internal scratch']
  %s0 = inlined_call_operand.vmem [shape: f32[2,40,32], index: 0, kind: input, shape index: {}]
  %s1 = inlined_call_operand.vmem [shape: f32[32,32], index: 1, kind: input, shape index: {}]
  %s2 = inlined_call_operand.vmem [shape: f32[1,32], index: 2, kind: input, shape index: {}]
  %s3 = inlined_call_operand.vmem [shape: f32[1,32], index: 3, kind: input, shape index: {}]
  %s4 = inlined_call_operand.vmem [shape: f32[2,40,32], index: 4, kind: output, shape index: {}]
  %s5 = sld [smem:[#allocation0]]
  $region49: #{ffc_resnet_block_nchw.13} parent=0
    _
  %s7 = ssub.s32 1, %s5
  %s8 = scalar_select 0, %s7, %s5
  loop: start=0, step=1, limit=4
  $region2: #{ffc_resnet_block_nchw.13} parent=0 // loop_pre_header
    _
  $region3: #{ffc_resnet_block_nchw.13} parent=0 // loop_header
    %s10 = sphi 0, %s14
    %p11 = scmp.ge.s32.totalorder %s10, 4
    %s20 = sphi 0, %s22
    %s23 = sphi 0, %s20
    %s24 = sphi 0, %s23
    %s40 = sphi 0, %s24
    %s44 = sphi 0, %s44
    %s46 = sphi 0, %s44
    %s47 = sphi 0, %s46
    %s61 = sphi 0, %s47
    %s65 = sphi 0, %s65
    %s67 = sphi 0, %s65
    %s68 = sphi 0, %s67
    %s82 = sphi 0, %s68
    %s86 = sphi 0, %s86
    %s88 = sphi 0, %s86
    %s89 = sphi 0, %s88
    %s103 = sphi 0, %s89
    %s109 = sphi 0, %s111
    %s112 = sphi 0, %s109
    %s113 = sphi 0, %s112
    %s129 = sphi 0, %s113
  $region4: #{ffc_resnet_block_nchw.13} parent=0 // loop_header_branch
    %13 = sbr.rel (%p11) target = $region8
  $region5: #{ffc_resnet_block_nchw.13} parent=0 // loop_body
    %s15 = ssub.s32 %s10, 1
    %s16 = ssub.s32 %s10, 2
    %s17 = sadd.s32 %s10, 1
    %s18 = ssub.s32 %s10, %s17
    %p19 = scmp.eq.s32.totalorder %s18, 0
    %s21 = sadd.s32 %s20, 1
    %s22 = scalar_select %p19, %s20, %s21
    %p25 = pneg %p19
    %p26 = scmp.eq.s32.totalorder %s10, 1
    %p27 = por %p25, %p26
    %p28 = scmp.ne.s32.totalorder %s20, %s23
    %p29 = scmp.eq.s32.totalorder %s10, 0
    %p30 = por %p28, %p29
    %p31 = scmp.ne.s32.totalorder %s20, %s23
    %p32 = scmp.eq.s32.totalorder %s15, 1
    %p33 = por %p31, %p32
    %p34 = scmp.ne.s32.totalorder %s23, %s24
    %p35 = scmp.eq.s32.totalorder %s15, 0
    %p36 = por %p34, %p35
    %p37 = scmp.ne.s32.totalorder %s23, %s24
    %p38 = scmp.eq.s32.totalorder %s16, 1
    %p39 = por %p37, %p38
    %p41 = scmp.ne.s32.totalorder %s24, %s40
    %p42 = scmp.eq.s32.totalorder %s16, 0
    %p43 = por %p41, %p42
    %s45 = sadd.s32 %s44, 1
    %p48 = scmp.eq.s32.totalorder %s10, 1
    %p49 = scmp.ne.s32.totalorder %s44, %s46
    %p50 = scmp.eq.s32.totalorder %s10, 0
    %p51 = por %p49, %p50
    %p52 = scmp.ne.s32.totalorder %s44, %s46
    %p53 = scmp.eq.s32.totalorder %s15, 1
    %p54 = por %p52, %p53
    %p55 = scmp.ne.s32.totalorder %s46, %s47
    %p56 = scmp.eq.s32.totalorder %s15, 0
    %p57 = por %p55, %p56
    %p58 = scmp.ne.s32.totalorder %s46, %s47
    %p59 = scmp.eq.s32.totalorder %s16, 1
    %p60 = por %p58, %p59
    %p62 = scmp.ne.s32.totalorder %s47, %s61
    %p63 = scmp.eq.s32.totalorder %s16, 0
    %p64 = por %p62, %p63
    %s66 = sadd.s32 %s65, 1
    %p69 = scmp.eq.s32.totalorder %s10, 1
    %p70 = scmp.ne.s32.totalorder %s65, %s67
    %p71 = scmp.eq.s32.totalorder %s10, 0
    %p72 = por %p70, %p71
    %p73 = scmp.ne.s32.totalorder %s65, %s67
    %p74 = scmp.eq.s32.totalorder %s15, 1
    %p75 = por %p73, %p74
    %p76 = scmp.ne.s32.totalorder %s67, %s68
    %p77 = scmp.eq.s32.totalorder %s15, 0
    %p78 = por %p76, %p77
    %p79 = scmp.ne.s32.totalorder %s67, %s68
    %p80 = scmp.eq.s32.totalorder %s16, 1
    %p81 = por %p79, %p80
    %p83 = scmp.ne.s32.totalorder %s68, %s82
    %p84 = scmp.eq.s32.totalorder %s16, 0
    %p85 = por %p83, %p84
    %s87 = sadd.s32 %s86, 1
    %p90 = scmp.eq.s32.totalorder %s10, 1
    %p91 = scmp.ne.s32.totalorder %s86, %s88
    %p92 = scmp.eq.s32.totalorder %s10, 0
    %p93 = por %p91, %p92
    %p94 = scmp.ne.s32.totalorder %s86, %s88
    %p95 = scmp.eq.s32.totalorder %s15, 1
    %p96 = por %p94, %p95
    %p97 = scmp.ne.s32.totalorder %s88, %s89
    %p98 = scmp.eq.s32.totalorder %s15, 0
    %p99 = por %p97, %p98
    %p100 = scmp.ne.s32.totalorder %s88, %s89
    %p101 = scmp.eq.s32.totalorder %s16, 1
    %p102 = por %p100, %p101
    %p104 = scmp.ne.s32.totalorder %s89, %s103
    %p105 = scmp.eq.s32.totalorder %s16, 0
    %p106 = por %p104, %p105
    %s107 = ssub.s32 %s10, %s17
    %p108 = scmp.eq.s32.totalorder %s107, 0
    %s110 = sadd.s32 %s109, 1
    %s111 = scalar_select %p108, %s109, %s110
    %p114 = pneg %p108
    %p115 = scmp.eq.s32.totalorder %s10, 1
    %p116 = por %p114, %p115
    %p117 = scmp.ne.s32.totalorder %s109, %s112
    %p118 = scmp.eq.s32.totalorder %s10, 0
    %p119 = por %p117, %p118
    %p120 = scmp.ne.s32.totalorder %s109, %s112
    %p121 = scmp.eq.s32.totalorder %s15, 1
    %p122 = por %p120, %p121
    %p123 = scmp.ne.s32.totalorder %s112, %s113
    %p124 = scmp.eq.s32.totalorder %s15, 0
    %p125 = por %p123, %p124
    %p126 = scmp.ne.s32.totalorder %s112, %s113
    %p127 = scmp.eq.s32.totalorder %s16, 1
    %p128 = por %p126, %p127
    %p130 = scmp.ne.s32.totalorder %s113, %s129
    %p131 = scmp.eq.s32.totalorder %s16, 0
    %p132 = por %p130, %p131
    %p133 = scmp.le.s32.totalorder 1, %s10
    %p134 = scmp.lt.s32.totalorder %s10, 3
    %p135 = pnand %p133, %p134
    %p136 = pneg %p135
    // Predicated region
    $region9: #{ffc_resnet_block_nchw.13} parent=5 // pred_check
      _
    $region10: #{ffc_resnet_block_nchw.13} parent=5 // pred_check_branch
      %138 = sbr.rel (%p135) target = $region12
    $region11: #{ffc_resnet_block_nchw.13} parent=5 // pred_region
      %s139 = ssub.s32 %s10, 1
      // Predicated region
      $region13: #{ffc_resnet_block_nchw.13} parent=11 // pred_check
        %p140 = pneg %p57
      $region14: #{ffc_resnet_block_nchw.13} parent=11 // pred_check_branch
        %142 = sbr.rel (%p140) target = $region16
      $region15: #{ffc_resnet_block_nchw.13} parent=11 // pred_region
        _
      $region16: #{ffc_resnet_block_nchw.13} parent=11 // pred_fallthru
        _
      // Predicated region
      $region17: #{ffc_resnet_block_nchw.13} parent=11 // pred_check
        %p143 = pneg %p78
      $region18: #{ffc_resnet_block_nchw.13} parent=11 // pred_check_branch
        %145 = sbr.rel (%p143) target = $region20
      $region19: #{ffc_resnet_block_nchw.13} parent=11 // pred_region
        _
      $region20: #{ffc_resnet_block_nchw.13} parent=11 // pred_fallthru
        _
      // Predicated region
      $region21: #{ffc_resnet_block_nchw.13} parent=11 // pred_check
        %p146 = pneg %p99
      $region22: #{ffc_resnet_block_nchw.13} parent=11 // pred_check_branch
        %148 = sbr.rel (%p146) target = $region24
      $region23: #{ffc_resnet_block_nchw.13} parent=11 // pred_region
        _
      $region24: #{ffc_resnet_block_nchw.13} parent=11 // pred_fallthru
        _
    $region12: #{ffc_resnet_block_nchw.13} parent=5 // pred_fallthru
      _
    %p149 = scmp.lt.s32.totalorder %s10, 2
    // Predicated region
    $region25: #{ffc_resnet_block_nchw.13} parent=5 // pred_check
      %p150 = pneg %p149
    $region26: #{ffc_resnet_block_nchw.13} parent=5 // pred_check_branch
      %152 = sbr.rel (%p150) target = $region28
    $region27: #{ffc_resnet_block_nchw.13} parent=5 // pred_region
      // Predicated region
      $region29: #{ffc_resnet_block_nchw.13} parent=27 // pred_check
        %p153 = pneg %p30
      $region30: #{ffc_resnet_block_nchw.13} parent=27 // pred_check_branch
        %155 = sbr.rel (%p153) target = $region32
      $region31: #{ffc_resnet_block_nchw.13} parent=27 // pred_region
        %p156 = scmp.lt.s32.totalorder %s10, 1
        %s157 = scalar_select %p156, %s10, 1
        %s158 = smul.addr %s157, 5
        %s159 = smul.addr %s158, 8
        %s160 = scalar_lea.vmem %s0, %s159
      $region32: #{ffc_resnet_block_nchw.13} parent=27 // pred_fallthru
        _
    $region28: #{ffc_resnet_block_nchw.13} parent=5 // pred_fallthru
      _
    %p161 = scmp.le.s32.totalorder 1, %s10
    %p162 = scmp.lt.s32.totalorder %s10, 3
    %p163 = pnand %p161, %p162
    %p164 = pneg %p163
    // Predicated region
    $region33: #{ffc_resnet_block_nchw.13} parent=5 // pred_check
      _
    $region34: #{ffc_resnet_block_nchw.13} parent=5 // pred_check_branch
      %166 = sbr.rel (%p163) target = $region36
    $region35: #{ffc_resnet_block_nchw.13} parent=5 // pred_region
      %s167 = ssub.s32 %s10, 1
      %p168 = scmp.lt.s32.totalorder %s15, 1
      %s169 = scalar_select %p168, %s15, 1
      %s170 = smul.addr %s169, 5
      %s171 = smul.addr %s170, 8
      %s172 = scalar_lea.vmem %s0, %s171
      %p173 = pneg %p36
      %p174 = pneg %p33
      %p175 = pneg %p57
      %p176 = pneg %p54
      %p177 = pneg %p78
      %p178 = pneg %p75
      %p179 = pneg %p99
      %p180 = pneg %p96
      %p181 = pneg %p125
      %p182 = pneg %p122
      %p183 = scmp.lt.s32.totalorder %s15, 1
      %s184 = scalar_select %p183, %s15, 1
      %s185 = smul.addr %s184, 5
      %s186 = smul.addr %s185, 8
      %s187 = scalar_lea.vmem %s4, %s186
      %p188 = scmp.lt.s32.totalorder %s15, 1
      %s189 = scalar_select %p188, %s15, 1
      %s190 = smul.addr %s189, 5
      %s191 = smul.addr %s190, 8
      %s192 = scalar_lea.vmem %s0, %s191
      %p193 = scmp.lt.s32.totalorder %s15, 1
      %s194 = scalar_select %p193, %s15, 1
      %s195 = smul.addr %s194, 5
      %s196 = smul.addr %s195, 8
      %s197 = scalar_lea.vmem %s4, %s196
      %v198 = vld [vmem:[%s192] sm:$0xff]
      %v199 = vld [vmem:[%s192 + $0x8] sm:$0xff]
      %v200 = vld [vmem:[%s192 + $0x10] sm:$0xff]
      %v201 = vld [vmem:[%s192 + $0x18] sm:$0xff]
      %v202 = vld [vmem:[%s192 + $0x20] sm:$0xff]
      %v203 = vld [vmem:[%s1] sm:$0xff]
      %v204 = vld [vmem:[%s1 + $0x8] sm:$0xff]
      %v205 = vld [vmem:[%s1 + $0x10] sm:$0xff]
      %v206 = vld [vmem:[%s1 + $0x18] sm:$0xff]
      %vm207 = vcmask 261120
      %v209 = vsel %vm207, %v198, 0
      %v212 = vsel %vm207, %v199, 0
      %v215 = vsel %vm207, %v200, 0
      %v218 = vsel %vm207, %v201, 0
      %v221 = vsel %vm207, %v202, 0
      %223 = vmatprep.subr.mxu0 0.0
      %224 = vmatpush1.msra.mxu0 %v203
      %225 = vmatprep.subr.mxu0 0.0
      %226 = vmatpush1.msra.mxu0 %v204
      %227 = vmatprep.subr.mxu0 0.0
      %228 = vmatpush1.msra.mxu0 %v205
      %229 = vmatprep.subr.mxu0 0.0
      %230 = vmatpush1.msra.mxu0 %v206
      %231 = vmatprep.subr.mxu0 0.0
      %232 = vmatpush1.msra.mxu0 0.0
      %233 = vmatprep.subr.mxu0 0.0
      %234 = vmatpush1.msra.mxu0 0.0
      %235 = vmatprep.subr.mxu0 0.0
      %236 = vmatpush1.msra.mxu0 0.0
      %237 = vmatprep.subr.mxu0 0.0
      %238 = vmatpush1.msra.mxu0 0.0
      %239 = vmatprep.subr.mxu0 0.0
      %240 = vmatpush1.msra.mxu0 0.0
      %241 = vmatprep.subr.mxu0 0.0
      %242 = vmatpush1.msra.mxu0 0.0
      %243 = vmatprep.subr.mxu0 0.0
      %244 = vmatpush1.msra.mxu0 0.0
      %245 = vmatprep.subr.mxu0 0.0
      %246 = vmatpush1.msra.mxu0 0.0
      %247 = vmatprep.subr.mxu0 0.0
      %248 = vmatpush1.msra.mxu0 0.0
      %249 = vmatprep.subr.mxu0 0.0
      %250 = vmatpush1.msra.mxu0 0.0
      %251 = vmatprep.subr.mxu0 0.0
      %252 = vmatpush1.msra.mxu0 0.0
      %253 = vmatprep.subr.mxu0 0.0
      %254 = vmatpush1.msra.mxu0 0.0
      %255 = vmatprep.subr.mxu0 0.0
      %256 = vmatpush1.msra.mxu0 0.0
      %257 = vmatprep.subr.mxu0 0.0
      %258 = vmatpush1.msra.mxu0 0.0
      %259 = vmatprep.subr.mxu0 0.0
      %260 = vmatpush1.msra.mxu0 0.0
      %261 = vmatprep.subr.mxu0 0.0
      %262 = vmatpush1.msra.mxu0 0.0
      %263 = vmatprep.subr.mxu0 0.0
      %264 = vmatpush1.msra.mxu0 0.0
      %265 = vmatprep.subr.mxu0 0.0
      %266 = vmatpush1.msra.mxu0 0.0
      %267 = vmatprep.subr.mxu0 0.0
      %268 = vmatpush1.msra.mxu0 0.0
      %269 = vmatprep.subr.mxu0 0.0
      %270 = vmatpush1.msra.mxu0 0.0
      %271 = vmatprep.subr.mxu0 0.0
      %272 = vmatpush1.msra.mxu0 0.0
      %273 = vmatprep.subr.mxu0 0.0
      %274 = vmatpush1.msra.mxu0 0.0
      %275 = vmatprep.subr.mxu0 0.0
      %276 = vmatpush1.msra.mxu0 0.0
      %277 = vmatprep.subr.mxu0 0.0
      %278 = vmatpush1.msra.mxu0 0.0
      %279 = vmatprep.subr.mxu0 0.0
      %280 = vmatpush1.msra.mxu0 0.0
      %281 = vmatprep.subr.mxu0 0.0
      %282 = vmatpush1.msra.mxu0 0.0
      %283 = vmatprep.subr.mxu0 0.0
      %284 = vmatpush1.msra.mxu0 0.0
      %285 = vmatprep.subr.mxu0 0.0
      %286 = vmatpush1.msra.mxu0 0.0
      %287 = vmatprep.mubr.f32.mxu0 0.0
      %288 = vmatmul.mubr.f32.gmra.mrb[0].mxu0 %v209
      %v289 = vpop.f32.mrb[0].mxu0
      %v290 = vadd.f32 0.0, %v289
      %v291 = vpop.f32.mrb[0].mxu0
      %292 = vmatprep.mubr.f32.mxu0 0.0
      %293 = vmatmul.mubr.f32.gmra.mrb[0].mxu0 %v212
      %v294 = vpop.f32.mrb[0].mxu0
      %v295 = vadd.f32 0.0, %v294
      %v296 = vpop.f32.mrb[0].mxu0
      %297 = vmatprep.mubr.f32.mxu0 0.0
      %298 = vmatmul.mubr.f32.gmra.mrb[0].mxu0 %v215
      %v299 = vpop.f32.mrb[0].mxu0
      %v300 = vadd.f32 0.0, %v299
      %v301 = vpop.f32.mrb[0].mxu0
      %302 = vmatprep.mubr.f32.mxu0 0.0
      %303 = vmatmul.mubr.f32.gmra.mrb[0].mxu0 %v218
      %v304 = vpop.f32.mrb[0].mxu0
      %v305 = vadd.f32 0.0, %v304
      %v306 = vpop.f32.mrb[0].mxu0
      %307 = vmatprep.mubr.f32.mxu0 0.0
      %308 = vmatmul.mubr.f32.gmra.mrb[0].mxu0 %v221
      %v309 = vpop.f32.mrb[0].mxu0
      %v310 = vadd.f32 0.0, %v309
      %v311 = vpop.f32.mrb[0].mxu0
      %312 = vdwg.mxu0
      %v313 = vld [vmem:[%s2] sm:$0x1]
      %v315 = vlaneseq
      %v316 = vshrl.u32 %v315, 7
      %v317 = vsub.s32 0, %v316
      %v318 = vrot.slane %v313, %v317
      %v320 = vmul.f32 %v290, %v318
      %v321 = vmul.f32 %v295, %v318
      %v322 = vmul.f32 %v300, %v318
      %v323 = vmul.f32 %v305, %v318
      %v324 = vmul.f32 %v310, %v318
      %v325 = vld [vmem:[%s3] sm:$0x1]
      %v327 = vlaneseq
      %v328 = vshrl.u32 %v327, 7
      %v329 = vsub.s32 0, %v328
      %v330 = vrot.slane %v325, %v329
      %v332 = vadd.f32 %v320, %v330
      %v333 = vadd.f32 %v321, %v330
      %v334 = vadd.f32 %v322, %v330
      %v335 = vadd.f32 %v323, %v330
      %v336 = vadd.f32 %v324, %v330
      %v337 = vmax.f32 %v332, 0.0
      %v338 = vmax.f32 %v333, 0.0
      %v339 = vmax.f32 %v334, 0.0
      %v340 = vmax.f32 %v335, 0.0
      %v341 = vmax.f32 %v336, 0.0
      %342 = vst.msk [vmem:[%s197] sm:$0xff] %vm207, %v337
      %343 = vst.msk [vmem:[%s197 + $0x8] sm:$0xff] %vm207, %v338
      %344 = vst.msk [vmem:[%s197 + $0x10] sm:$0xff] %vm207, %v339
      %345 = vst.msk [vmem:[%s197 + $0x18] sm:$0xff] %vm207, %v340
      %346 = vst.msk [vmem:[%s197 + $0x20] sm:$0xff] %vm207, %v341
      %p347 = scmp.lt.s32.totalorder %s15, 1
      %s348 = scalar_select %p347, %s15, 1
      %s349 = smul.addr %s348, 5
      %s350 = smul.addr %s349, 8
      %s351 = scalar_lea.vmem %s4, %s350
      // Predicated region
      $region37: #{ffc_resnet_block_nchw.13} parent=35 // pred_check
        %p352 = pneg %p122
      $region38: #{ffc_resnet_block_nchw.13} parent=35 // pred_check_branch
        %354 = sbr.rel (%p352) target = $region40
      $region39: #{ffc_resnet_block_nchw.13} parent=35 // pred_region
        _
      $region40: #{ffc_resnet_block_nchw.13} parent=35 // pred_fallthru
        _
    $region36: #{ffc_resnet_block_nchw.13} parent=5 // pred_fallthru
      _
    %p355 = scmp.le.s32.totalorder 2, %s10
    // Predicated region
    $region41: #{ffc_resnet_block_nchw.13} parent=5 // pred_check
      %p356 = pneg %p355
    $region42: #{ffc_resnet_block_nchw.13} parent=5 // pred_check_branch
      %358 = sbr.rel (%p356) target = $region44
    $region43: #{ffc_resnet_block_nchw.13} parent=5 // pred_region
      %s359 = ssub.s32 %s10, 2
      // Predicated region
      $region45: #{ffc_resnet_block_nchw.13} parent=43 // pred_check
        %p360 = pneg %p128
      $region46: #{ffc_resnet_block_nchw.13} parent=43 // pred_check_branch
        %362 = sbr.rel (%p360) target = $region48
      $region47: #{ffc_resnet_block_nchw.13} parent=43 // pred_region
        %p363 = scmp.lt.s32.totalorder %s16, 1
        %s364 = scalar_select %p363, %s16, 1
        %s365 = smul.addr %s364, 5
        %s366 = smul.addr %s365, 8
        %s367 = scalar_lea.vmem %s4, %s366
      $region48: #{ffc_resnet_block_nchw.13} parent=43 // pred_fallthru
        _
    $region44: #{ffc_resnet_block_nchw.13} parent=5 // pred_fallthru
      _
  $region6: #{ffc_resnet_block_nchw.13} parent=0 // loop_footer
    %s14 = sadd.s32 1, %s10
  $region7: #{ffc_resnet_block_nchw.13} parent=0 // loop_footer_branch
    %9 = sbr.rel target = $region3
  $region8: #{ffc_resnet_block_nchw.13} parent=0 // loop_exit
    _

// kernel: reverse.10
$region0: #{reverse.10}
  #allocation0 [shape = 's32[1]{0}', space=sflag, size = 0x4, scoped, tag = 'scoped memory for reverse.10']
  %s0 = inlined_call_operand.vmem [shape: f32[2,16,8,3], index: 0, kind: input, shape index: {}]
  %s1 = inlined_call_operand.vmem [shape: f32[2,16,8,3], index: 1, kind: output, shape index: {}]
  %s2 = scalar_lea.vmem %s0, 16
  %v3 = vld [vmem:[%s2] sm:$0xff]
  %4 = vst [vmem:[%s1] sm:$0xff] %v3
  %s5 = scalar_lea.vmem %s0, 40
  %v6 = vld [vmem:[%s5] sm:$0xff]
  %s7 = scalar_lea.vmem %s1, 24
  %8 = vst [vmem:[%s7] sm:$0xff] %v6
  %s9 = scalar_lea.vmem %s0, 8
  %v10 = vld [vmem:[%s9] sm:$0xff]
  %s11 = scalar_lea.vmem %s1, 8
  %12 = vst [vmem:[%s11] sm:$0xff] %v10
  %s13 = scalar_lea.vmem %s0, 32
  %v14 = vld [vmem:[%s13] sm:$0xff]
  %s15 = scalar_lea.vmem %s1, 32
  %16 = vst [vmem:[%s15] sm:$0xff] %v14
  %v17 = vld [vmem:[%s0] sm:$0xff]
  %s18 = scalar_lea.vmem %s1, 16
  %19 = vst [vmem:[%s18] sm:$0xff] %v17
  %s20 = scalar_lea.vmem %s0, 24
  %v21 = vld [vmem:[%s20] sm:$0xff]
  %s22 = scalar_lea.vmem %s1, 40
  %23 = vst [vmem:[%s22] sm:$0xff] %v21

// kernel: ffc_resnet_block_nchw.10
$region0: #{ffc_resnet_block_nchw.10}
  #allocation0 [shape = 'u32[]', space=smem, size = 0x4, offset = 0x4, fixed_abs, tag = 'smem constant byte address 0x4 - core index']
  #allocation1 [shape = 'u32[144,128]{1,0:T(1,128)}', space=vmem, size = 0x12000, scoped, tag = 'internal scratch']
  %s0 = inlined_call_operand.vmem [shape: f32[2,326,64], index: 0, kind: input, shape index: {}]
  %s1 = inlined_call_operand.vmem [shape: f32[9,64,64], index: 1, kind: input, shape index: {}]
  %s2 = inlined_call_operand.vmem [shape: f32[2,288,64], index: 2, kind: output, shape index: {}]
  %s3 = sld [smem:[#allocation0]]
  $region41: #{ffc_resnet_block_nchw.10} parent=0
    _
  %s5 = ssub.s32 1, %s3
  %s6 = scalar_select 0, %s5, %s3
  loop: start=0, step=1, limit=4
  $region2: #{ffc_resnet_block_nchw.10} parent=0 // loop_pre_header
    _
  $region3: #{ffc_resnet_block_nchw.10} parent=0 // loop_header
    %s8 = sphi 0, %s12
    %p9 = scmp.ge.s32.totalorder %s8, 4
    %s18 = sphi 0, %s20
    %s21 = sphi 0, %s18
    %s22 = sphi 0, %s21
    %s38 = sphi 0, %s22
    %s42 = sphi 0, %s42
    %s44 = sphi 0, %s42
    %s45 = sphi 0, %s44
    %s59 = sphi 0, %s45
    %s65 = sphi 0, %s67
    %s68 = sphi 0, %s65
    %s69 = sphi 0, %s68
    %s85 = sphi 0, %s69
  $region4: #{ffc_resnet_block_nchw.10} parent=0 // loop_header_branch
    %11 = sbr.rel (%p9) target = $region8
  $region5: #{ffc_resnet_block_nchw.10} parent=0 // loop_body
    %s13 = ssub.s32 %s8, 1
    %s14 = ssub.s32 %s8, 2
    %s15 = sadd.s32 %s8, 1
    %s16 = ssub.s32 %s8, %s15
    %p17 = scmp.eq.s32.totalorder %s16, 0
    %s19 = sadd.s32 %s18, 1
    %s20 = scalar_select %p17, %s18, %s19
    %p23 = pneg %p17
    %p24 = scmp.eq.s32.totalorder %s8, 1
    %p25 = por %p23, %p24
    %p26 = scmp.ne.s32.totalorder %s18, %s21
    %p27 = scmp.eq.s32.totalorder %s8, 0
    %p28 = por %p26, %p27
    %p29 = scmp.ne.s32.totalorder %s18, %s21
    %p30 = scmp.eq.s32.totalorder %s13, 1
    %p31 = por %p29, %p30
    %p32 = scmp.ne.s32.totalorder %s21, %s22
    %p33 = scmp.eq.s32.totalorder %s13, 0
    %p34 = por %p32, %p33
    %p35 = scmp.ne.s32.totalorder %s21, %s22
    %p36 = scmp.eq.s32.totalorder %s14, 1
    %p37 = por %p35, %p36
    %p39 = scmp.ne.s32.totalorder %s22, %s38
    %p40 = scmp.eq.s32.totalorder %s14, 0
    %p41 = por %p39, %p40
    %s43 = sadd.s32 %s42, 1
    %p46 = scmp.eq.s32.totalorder %s8, 1
    %p47 = scmp.ne.s32.totalorder %s42, %s44
    %p48 = scmp.eq.s32.totalorder %s8, 0
    %p49 = por %p47, %p48
    %p50 = scmp.ne.s32.totalorder %s42, %s44
    %p51 = scmp.eq.s32.totalorder %s13, 1
    %p52 = por %p50, %p51
    %p53 = scmp.ne.s32.totalorder %s44, %s45
    %p54 = scmp.eq.s32.totalorder %s13, 0
    %p55 = por %p53, %p54
    %p56 = scmp.ne.s32.totalorder %s44, %s45
    %p57 = scmp.eq.s32.totalorder %s14, 1
    %p58 = por %p56, %p57
    %p60 = scmp.ne.s32.totalorder %s45, %s59
    %p61 = scmp.eq.s32.totalorder %s14, 0
    %p62 = por %p60, %p61
    %s63 = ssub.s32 %s8, %s15
    %p64 = scmp.eq.s32.totalorder %s63, 0
    %s66 = sadd.s32 %s65, 1
    %s67 = scalar_select %p64, %s65, %s66
    %p70 = pneg %p64
    %p71 = scmp.eq.s32.totalorder %s8, 1
    %p72 = por %p70, %p71
    %p73 = scmp.ne.s32.totalorder %s65, %s68
    %p74 = scmp.eq.s32.totalorder %s8, 0
    %p75 = por %p73, %p74
    %p76 = scmp.ne.s32.totalorder %s65, %s68
    %p77 = scmp.eq.s32.totalorder %s13, 1
    %p78 = por %p76, %p77
    %p79 = scmp.ne.s32.totalorder %s68, %s69
    %p80 = scmp.eq.s32.totalorder %s13, 0
    %p81 = por %p79, %p80
    %p82 = scmp.ne.s32.totalorder %s68, %s69
    %p83 = scmp.eq.s32.totalorder %s14, 1
    %p84 = por %p82, %p83
    %p86 = scmp.ne.s32.totalorder %s69, %s85
    %p87 = scmp.eq.s32.totalorder %s14, 0
    %p88 = por %p86, %p87
    %p89 = scmp.le.s32.totalorder 1, %s8
    %p90 = scmp.lt.s32.totalorder %s8, 3
    %p91 = pnand %p89, %p90
    %p92 = pneg %p91
    // Predicated region
    $region9: #{ffc_resnet_block_nchw.10} parent=5 // pred_check
      _
    $region10: #{ffc_resnet_block_nchw.10} parent=5 // pred_check_branch
      %94 = sbr.rel (%p91) target = $region12
    $region11: #{ffc_resnet_block_nchw.10} parent=5 // pred_region
      %s95 = ssub.s32 %s8, 1
      // Predicated region
      $region13: #{ffc_resnet_block_nchw.10} parent=11 // pred_check
        %p96 = pneg %p55
      $region14: #{ffc_resnet_block_nchw.10} parent=11 // pred_check_branch
        %98 = sbr.rel (%p96) target = $region16
      $region15: #{ffc_resnet_block_nchw.10} parent=11 // pred_region
        _
      $region16: #{ffc_resnet_block_nchw.10} parent=11 // pred_fallthru
        _
    $region12: #{ffc_resnet_block_nchw.10} parent=5 // pred_fallthru
      _
    %p99 = scmp.lt.s32.totalorder %s8, 2
    // Predicated region
    $region17: #{ffc_resnet_block_nchw.10} parent=5 // pred_check
      %p100 = pneg %p99
    $region18: #{ffc_resnet_block_nchw.10} parent=5 // pred_check_branch
      %102 = sbr.rel (%p100) target = $region20
    $region19: #{ffc_resnet_block_nchw.10} parent=5 // pred_region
      // Predicated region
      $region21: #{ffc_resnet_block_nchw.10} parent=19 // pred_check
        %p103 = pneg %p28
      $region22: #{ffc_resnet_block_nchw.10} parent=19 // pred_check_branch
        %105 = sbr.rel (%p103) target = $region24
      $region23: #{ffc_resnet_block_nchw.10} parent=19 // pred_region
        %p106 = scmp.lt.s32.totalorder %s8, 1
        %s107 = scalar_select %p106, %s8, 1
        %s108 = smul.addr %s107, 41
        %s109 = smul.addr %s108, 8
        %s110 = scalar_lea.vmem %s0, %s109
      $region24: #{ffc_resnet_block_nchw.10} parent=19 // pred_fallthru
        _
    $region20: #{ffc_resnet_block_nchw.10} parent=5 // pred_fallthru
      _
    %p111 = scmp.le.s32.totalorder 1, %s8
    %p112 = scmp.lt.s32.totalorder %s8, 3
    %p113 = pnand %p111, %p112
    %p114 = pneg %p113
    // Predicated region
    $region25: #{ffc_resnet_block_nchw.10} parent=5 // pred_check
      _
    $region26: #{ffc_resnet_block_nchw.10} parent=5 // pred_check_branch
      %116 = sbr.rel (%p113) target = $region28
    $region27: #{ffc_resnet_block_nchw.10} parent=5 // pred_region
      %s117 = ssub.s32 %s8, 1
      %p118 = scmp.lt.s32.totalorder %s13, 1
      %s119 = scalar_select %p118, %s13, 1
      %s120 = smul.addr %s119, 41
      %s121 = smul.addr %s120, 8
      %s122 = scalar_lea.vmem %s0, %s121
      %p123 = pneg %p34
      %p124 = pneg %p31
      %p125 = pneg %p55
      %p126 = pneg %p52
      %p127 = pneg %p81
      %p128 = pneg %p78
      %p129 = scmp.lt.s32.totalorder %s13, 1
      %s130 = scalar_select %p129, %s13, 1
      %s131 = smul.addr %s130, 36
      %s132 = smul.addr %s131, 8
      %s133 = scalar_lea.vmem %s2, %s132
      %p134 = scmp.lt.s32.totalorder %s13, 1
      %s135 = scalar_select %p134, %s13, 1
      %s136 = smul.addr %s135, 41
      %s137 = smul.addr %s136, 8
      %s138 = scalar_lea.vmem %s0, %s137
      %p139 = scmp.lt.s32.totalorder %s13, 1
      %s140 = scalar_select %p139, %s13, 1
      %s141 = smul.addr %s140, 36
      %s142 = smul.addr %s141, 8
      %s143 = scalar_lea.vmem %s2, %s142
      %v144 = vld [vmem:[%s138] sm:$0xff]
      %v145 = vld [vmem:[%s138 + $0x8] sm:$0xff]
      %v146 = vld [vmem:[%s138 + $0x10] sm:$0xff]
      %v147 = vld [vmem:[%s138 + $0x18] sm:$0xff]
      %v148 = vld [vmem:[%s138 + $0x20] sm:$0xff]
      %v149 = vld [vmem:[%s138 + $0x28] sm:$0xff]
      %v150 = vld [vmem:[%s138 + $0x30] sm:$0xff]
      %v151 = vld [vmem:[%s138 + $0x38] sm:$0xff]
      %v152 = vld [vmem:[%s138 + $0x40] sm:$0xff]
      %v153 = vld [vmem:[%s138 + $0x48] sm:$0xff]
      %v154 = vld [vmem:[%s138 + $0x50] sm:$0xff]
      %v155 = vld [vmem:[%s138 + $0x58] sm:$0xff]
      %v156 = vld [vmem:[%s138 + $0x60] sm:$0xff]
      %v157 = vld [vmem:[%s138 + $0x68] sm:$0xff]
      %v158 = vld [vmem:[%s138 + $0x70] sm:$0xff]
      %v159 = vld [vmem:[%s138 + $0x78] sm:$0xff]
      %v160 = vld [vmem:[%s138 + $0x80] sm:$0xff]
      %v161 = vld [vmem:[%s138 + $0x88] sm:$0xff]
      %v162 = vld [vmem:[%s138 + $0x90] sm:$0xff]
      %v163 = vld [vmem:[%s138 + $0x98] sm:$0xff]
      %v164 = vld [vmem:[%s138 + $0xa0] sm:$0xff]
      %v165 = vld [vmem:[%s138 + $0xa8] sm:$0xff]
      %v166 = vld [vmem:[%s138 + $0xb0] sm:$0xff]
      %v167 = vld [vmem:[%s138 + $0xb8] sm:$0xff]
      %v168 = vld [vmem:[%s138 + $0xc0] sm:$0xff]
      %v169 = vld [vmem:[%s138 + $0xc8] sm:$0xff]
      %v170 = vld [vmem:[%s138 + $0xd0] sm:$0xff]
      %v171 = vld [vmem:[%s138 + $0xd8] sm:$0xff]
      %v172 = vld [vmem:[%s138 + $0xe0] sm:$0xff]
      %v173 = vld [vmem:[%s138 + $0xe8] sm:$0xff]
      %v174 = vld [vmem:[%s138 + $0xf0] sm:$0xff]
      %v175 = vld [vmem:[%s138 + $0xf8] sm:$0xff]
      %v176 = vld [vmem:[%s138 + $0x100] sm:$0xff]
      %v177 = vld [vmem:[%s138 + $0x108] sm:$0xff]
      %v178 = vld [vmem:[%s138 + $0x110] sm:$0xff]
      %v179 = vld [vmem:[%s138 + $0x118] sm:$0xff]
      %v180 = vld [vmem:[%s1] sm:$0xff]
      %v181 = vld [vmem:[%s1 + $0x8] sm:$0xff]
      %v182 = vld [vmem:[%s1 + $0x10] sm:$0xff]
      %v183 = vld [vmem:[%s1 + $0x18] sm:$0xff]
      %v184 = vld [vmem:[%s1 + $0x20] sm:$0xff]
      %v185 = vld [vmem:[%s1 + $0x28] sm:$0xff]
      %v186 = vld [vmem:[%s1 + $0x30] sm:$0xff]
      %v187 = vld [vmem:[%s1 + $0x38] sm:$0xff]
      %v188 = vld [vmem:[%s138 + $0x1] sm:$0xff]
      %v189 = vld [vmem:[%s138 + $0x9] sm:$0xff]
      %v190 = vld [vmem:[%s138 + $0x11] sm:$0xff]
      %v191 = vld [vmem:[%s138 + $0x19] sm:$0xff]
      %v192 = vld [vmem:[%s138 + $0x21] sm:$0xff]
      %v193 = vld [vmem:[%s138 + $0x29] sm:$0xff]
      %v194 = vld [vmem:[%s138 + $0x31] sm:$0xff]
      %v195 = vld [vmem:[%s138 + $0x39] sm:$0xff]
      %v196 = vld [vmem:[%s138 + $0x41] sm:$0xff]
      %v197 = vld [vmem:[%s138 + $0x49] sm:$0xff]
      %v198 = vld [vmem:[%s138 + $0x51] sm:$0xff]
      %v199 = vld [vmem:[%s138 + $0x59] sm:$0xff]
      %v200 = vld [vmem:[%s138 + $0x61] sm:$0xff]
      %v201 = vld [vmem:[%s138 + $0x69] sm:$0xff]
      %v202 = vld [vmem:[%s138 + $0x71] sm:$0xff]
      %v203 = vld [vmem:[%s138 + $0x79] sm:$0xff]
      %v204 = vld [vmem:[%s138 + $0x81] sm:$0xff]
      %v205 = vld [vmem:[%s138 + $0x89] sm:$0xff]
      %v206 = vld [vmem:[%s138 + $0x91] sm:$0xff]
      %v207 = vld [vmem:[%s138 + $0x99] sm:$0xff]
      %v208 = vld [vmem:[%s138 + $0xa1] sm:$0xff]
      %v209 = vld [vmem:[%s138 + $0xa9] sm:$0xff]
      %v210 = vld [vmem:[%s138 + $0xb1] sm:$0xff]
      %v211 = vld [vmem:[%s138 + $0xb9] sm:$0xff]
      %v212 = vld [vmem:[%s138 + $0xc1] sm:$0xff]
      %v213 = vld [vmem:[%s138 + $0xc9] sm:$0xff]
      %v214 = vld [vmem:[%s138 + $0xd1] sm:$0xff]
      %v215 = vld [vmem:[%s138 + $0xd9] sm:$0xff]
      %v216 = vld [vmem:[%s138 + $0xe1] sm:$0xff]
      %v217 = vld [vmem:[%s138 + $0xe9] sm:$0xff]
      %v218 = vld [vmem:[%s138 + $0xf1] sm:$0xff]
      %v219 = vld [vmem:[%s138 + $0xf9] sm:$0xff]
      %v220 = vld [vmem:[%s138 + $0x101] sm:$0xff]
      %v221 = vld [vmem:[%s138 + $0x109] sm:$0xff]
      %v222 = vld [vmem:[%s138 + $0x111] sm:$0xff]
      %v223 = vld [vmem:[%s138 + $0x119] sm:$0xff]
      %s224 = scalar_lea.vmem %s1, 64
      %v225 = vld [vmem:[%s224] sm:$0xff]
      %v226 = vld [vmem:[%s224 + $0x8] sm:$0xff]
      %v227 = vld [vmem:[%s224 + $0x10] sm:$0xff]
      %v228 = vld [vmem:[%s224 + $0x18] sm:$0xff]
      %v229 = vld [vmem:[%s224 + $0x20] sm:$0xff]
      %v230 = vld [vmem:[%s224 + $0x28] sm:$0xff]
      %v231 = vld [vmem:[%s224 + $0x30] sm:$0xff]
      %v232 = vld [vmem:[%s224 + $0x38] sm:$0xff]
      %vm233 = vcmask 523264
      %v235 = vsel %vm233, %v188, 0
      %v238 = vsel %vm233, %v189, 0
      %v241 = vsel %vm233, %v190, 0
      %v244 = vsel %vm233, %v191, 0
      %v247 = vsel %vm233, %v192, 0
      %v250 = vsel %vm233, %v193, 0
      %v253 = vsel %vm233, %v194, 0
      %v256 = vsel %vm233, %v195, 0
      %v259 = vsel %vm233, %v196, 0
      %v262 = vsel %vm233, %v197, 0
      %v265 = vsel %vm233, %v198, 0
      %v268 = vsel %vm233, %v199, 0
      %v271 = vsel %vm233, %v200, 0
      %v274 = vsel %vm233, %v201, 0
      %v277 = vsel %vm233, %v202, 0
      %v280 = vsel %vm233, %v203, 0
      %v283 = vsel %vm233, %v204, 0
      %v286 = vsel %vm233, %v205, 0
      %v289 = vsel %vm233, %v206, 0
      %v292 = vsel %vm233, %v207, 0
      %v295 = vsel %vm233, %v208, 0
      %v298 = vsel %vm233, %v209, 0
      %v301 = vsel %vm233, %v210, 0
      %v304 = vsel %vm233, %v211, 0
      %v307 = vsel %vm233, %v212, 0
      %v310 = vsel %vm233, %v213, 0
      %v313 = vsel %vm233, %v214, 0
      %v316 = vsel %vm233, %v215, 0
      %v319 = vsel %vm233, %v216, 0
      %v322 = vsel %vm233, %v217, 0
      %v325 = vsel %vm233, %v218, 0
      %v328 = vsel %vm233, %v219, 0
      %v331 = vsel %vm233, %v220, 0
      %v334 = vsel %vm233, %v221, 0
      %v337 = vsel %vm233, %v222, 0
      %v340 = vsel %vm233, %v223, 0
      %342 = vmatprep.subr.mxu0 0.0
      %343 = vmatpush1.msra.mxu0 %v225
      %344 = vmatprep.subr.mxu0 0.0
      %345 = vmatpush1.msra.mxu0 %v226
      %346 = vmatprep.subr.mxu0 0.0
      %347 = vmatpush1.msra.mxu0 %v227
      %348 = vmatprep.subr.mxu0 0.0
      %349 = vmatpush1.msra.mxu0 %v228
      %350 = vmatprep.subr.mxu0 0.0
      %351 = vmatpush1.msra.mxu0 %v229
      %352 = vmatprep.subr.mxu0 0.0
      %353 = vmatpush1.msra.mxu0 %v230
      %354 = vmatprep.subr.mxu0 0.0
      %355 = vmatpush1.msra.mxu0 %v231
      %356 = vmatprep.subr.mxu0 0.0
      %357 = vmatpush1.msra.mxu0 %v232
      %358 = vmatprep.subr.mxu0 0.0
      %359 = vmatpush1.msra.mxu0 0.0
      %360 = vmatprep.subr.mxu0 0.0
      %361 = vmatpush1.msra.mxu0 0.0
      %362 = vmatprep.subr.mxu0 0.0
      %363 = vmatpush1.msra.mxu0 0.0
      %364 = vmatprep.subr.mxu0 0.0
      %365 = vmatpush1.msra.mxu0 0.0
      %366 = vmatprep.subr.mxu0 0.0
      %367 = vmatpush1.msra.mxu0 0.0
      %368 = vmatprep.subr.mxu0 0.0
      %369 = vmatpush1.msra.mxu0 0.0
      %370 = vmatprep.subr.mxu0 0.0
      %371 = vmatpush1.msra.mxu0 0.0
      %372 = vmatprep.subr.mxu0 0.0
      %373 = vmatpush1.msra.mxu0 0.0
      %374 = vmatprep.subr.mxu0 0.0
      %375 = vmatpush1.msra.mxu0 0.0
      %376 = vmatprep.subr.mxu0 0.0
      %377 = vmatpush1.msra.mxu0 0.0
      %378 = vmatprep.subr.mxu0 0.0
      %379 = vmatpush1.msra.mxu0 0.0
      %380 = vmatprep.subr.mxu0 0.0
      %381 = vmatpush1.msra.mxu0 0.0
      %382 = vmatprep.subr.mxu0 0.0
      %383 = vmatpush1.msra.mxu0 0.0
      %384 = vmatprep.subr.mxu0 0.0
      %385 = vmatpush1.msra.mxu0 0.0
      %386 = vmatprep.subr.mxu0 0.0
      %387 = vmatpush1.msra.mxu0 0.0
      %388 = vmatprep.subr.mxu0 0.0
      %389 = vmatpush1.msra.mxu0 0.0
      %390 = vmatprep.subr.mxu0 0.0
      %391 = vmatpush1.msra.mxu0 0.0
      %392 = vmatprep.subr.mxu0 0.0
      %393 = vmatpush1.msra.mxu0 0.0
      %394 = vmatprep.subr.mxu0 0.0
      %395 = vmatpush1.msra.mxu0 0.0
      %396 = vmatprep.subr.mxu0 0.0
      %397 = vmatpush1.msra.mxu0 0.0
      %398 = vmatprep.subr.mxu0 0.0
      %399 = vmatpush1.msra.mxu0 0.0
      %400 = vmatprep.subr.mxu0 0.0
      %401 = vmatpush1.msra.mxu0 0.0
      %402 = vmatprep.subr.mxu0 0.0
      %403 = vmatpush1.msra.mxu0 0.0
      %404 = vmatprep.subr.mxu0 0.0
      %405 = vmatpush1.msra.mxu0 0.0
      %406 = vmatprep.mubr.f32.mxu0 0.0
      %407 = vmatmul.mubr.f32.gmra.mrb[0].mxu0 %v235
      %v408 = vpop.f32.mrb[0].mxu0
      %v409 = vadd.f32 0.0, %v408
      %v410 = vpop.f32.mrb[0].mxu0
      %411 = vmatprep.mubr.f32.mxu0 0.0
      %412 = vmatmul.mubr.f32.gmra.mrb[0].mxu0 %v238
      %v413 = vpop.f32.mrb[0].mxu0
      %v414 = vadd.f32 0.0, %v413
      %v415 = vpop.f32.mrb[0].mxu0
      %416 = vmatprep.mubr.f32.mxu0 0.0
      %417 = vmatmul.mubr.f32.gmra.mrb[0].mxu0 %v241
      %v418 = vpop.f32.mrb[0].mxu0
      %v419 = vadd.f32 0.0, %v418
      %v420 = vpop.f32.mrb[0].mxu0
      %421 = vmatprep.mubr.f32.mxu0 0.0
      %422 = vmatmul.mubr.f32.gmra.mrb[0].mxu0 %v244
      %v423 = vpop.f32.mrb[0].mxu0
      %v424 = vadd.f32 0.0, %v423
      %v425 = vpop.f32.mrb[0].mxu0
      %426 = vmatprep.mubr.f32.mxu0 0.0
      %427 = vmatmul.mubr.f32.gmra.mrb[0].mxu0 %v247
      %v428 = vpop.f32.mrb[0].mxu0
      %v429 = vadd.f32 0.0, %v428
      %v430 = vpop.f32.mrb[0].mxu0
      %431 = vmatprep.mubr.f32.mxu0 0.0
      %432 = vmatmul.mubr.f32.gmra.mrb[0].mxu0 %v250
      %v433 = vpop.f32.mrb[0].mxu0
      %v434 = vadd.f32 0.0, %v433
      %v435 = vpop.f32.mrb[0].mxu0
      %436 = vmatprep.mubr.f32.mxu0 0.0
      %437 = vmatmul.mubr.f32.gmra.mrb[0].mxu0 %v253
      %v438 = vpop.f32.mrb[0].mxu0
      %v439 = vadd.f32 0.0, %v438
      %v440 = vpop.f32.mrb[0].mxu0
      %441 = vmatprep.mubr.f32.mxu0 0.0
      %442 = vmatmul.mubr.f32.gmra.mrb[0].mxu0 %v256
      %v443 = vpop.f32.mrb[0].mxu0
      %v444 = vadd.f32 0.0, %v443
      %v445 = vpop.f32.mrb[0].mxu0
      %446 = vmatprep.mubr.f32.mxu0 0.0
      %447 = vmatmul.mubr.f32.gmra.mrb[0].mxu0 %v259
      %v448 = vpop.f32.mrb[0].mxu0
      %v449 = vadd.f32 0.0, %v448
      %v450 = vpop.f32.mrb[0].mxu0
      %451 = vmatprep.mubr.f32.mxu0 0.0
      %452 = vmatmul.mubr.f32.gmra.mrb[0].mxu0 %v262
      %v453 = vpop.f32.mrb[0].mxu0
      %v454 = vadd.f32 0.0, %v453
      %v455 = vpop.f32.mrb[0].mxu0
      %456 = vmatprep.mubr.f32.mxu0 0.0
      %457 = vmatmul.mubr.f32.gmra.mrb[0].mxu0 %v265
      %v458 = vpop.f32.mrb[0].mxu0
      %v459 = vadd.f32 0.0, %v458
      %v460 = vpop.f32.mrb[0].mxu0
      %461 = vmatprep.mubr.f32.mxu0 0.0
      %462 = vmatmul.mubr.f32.gmra.mrb[0].mxu0 %v268
      %v463 = vpop.f32.mrb[0].mxu0
      %v464 = vadd.f32 0.0, %v463
      %v465 = vpop.f32.mrb[0].mxu0
      %466 = vmatprep.mubr.f32.mxu0 0.0
      %467 = vmatmul.mubr.f32.gmra.mrb[0].mxu0 %v271
      %v468 = vpop.f32.mrb[0].mxu0
      %v469 = vadd.f32 0.0, %v468
      %v470 = vpop.f32.mrb[0].mxu0
      %471 = vmatprep.mubr.f32.mxu0 0.0
      %472 = vmatmul.mubr.f32.gmra.mrb[0].mxu0 %v274
      %v473 = vpop.f32.mrb[0].mxu0
      %v474 = vadd.f32 0.0, %v473
      %v475 = vpop.f32.mrb[0].mxu0
      %476 = vmatprep.mubr.f32.mxu0 0.0
      %477 = vmatmul.mubr.f32.gmra.mrb[0].mxu0 %v277
      %v478 = vpop.f32.mrb[0].mxu0
      %v479 = vadd.f32 0.0, %v478
      %v480 = vpop.f32.mrb[0].mxu0
      %481 = vmatprep.mubr.f32.mxu0 0.0
      %482 = vmatmul.mubr.f32.gmra.mrb[0].mxu0 %v280
      %v483 = vpop.f32.mrb[0].mxu0
      %v484 = vadd.f32 0.0, %v483
      %v485 = vpop.f32.mrb[0].mxu0
      %486 = vmatprep.mubr.f32.mxu0 0.0
      %487 = vmatmul.mubr.f32.gmra.mrb[0].mxu0 %v283
      %v488 = vpop.f32.mrb[0].mxu0
      %v489 = vadd.f32 0.0, %v488
      %v490 = vpop.f32.mrb[0].mxu0
      %491 = vmatprep.mubr.f32.mxu0 0.0
      %492 = vmatmul.mubr.f32.gmra.mrb[0].mxu0 %v286
      %v493 = vpop.f32.mrb[0].mxu0
      %v494 = vadd.f32 0.0, %v493
      %v495 = vpop.f32.mrb[0].mxu0
      %496 = vmatprep.mubr.f32.mxu0 0.0
      %497 = vmatmul.mubr.f32.gmra.mrb[0].mxu0 %v289
      %v498 = vpop.f32.mrb[0].mxu0
      %v499 = vadd.f32 0.0, %v498
      %v500 = vpop.f32.mrb[0].mxu0
      %501 = vmatprep.mubr.f32.mxu0 0.0
      %502 = vmatmul.mubr.f32.gmra.mrb[0].mxu0 %v292
      %v503 = vpop.f32.mrb[0].mxu0
      %v504 = vadd.f32 0.0, %v503
      %v505 = vpop.f32.mrb[0].mxu0
      %506 = vmatprep.mubr.f32.mxu0 0.0
      %507 = vmatmul.mubr.f32.gmra.mrb[0].mxu0 %v295
      %v508 = vpop.f32.mrb[0].mxu0
      %v509 = vadd.f32 0.0, %v508
      %v510 = vpop.f32.mrb[0].mxu0
      %511 = vmatprep.mubr.f32.mxu0 0.0
      %512 = vmatmul.mubr.f32.gmra.mrb[0].mxu0 %v298
      %v513 = vpop.f32.mrb[0].mxu0
      %v514 = vadd.f32 0.0, %v513
      %v515 = vpop.f32.mrb[0].mxu0
      %516 = vmatprep.mubr.f32.mxu0 0.0
      %517 = vmatmul.mubr.f32.gmra.mrb[0].mxu0 %v301
      %v518 = vpop.f32.mrb[0].mxu0
      %v519 = vadd.f32 0.0, %v518
      %v520 = vpop.f32.mrb[0].mxu0
      %521 = vmatprep.mubr.f32.mxu0 0.0
      %522 = vmatmul.mubr.f32.gmra.mrb[0].mxu0 %v304
      %v523 = vpop.f32.mrb[0].mxu0
      %v524 = vadd.f32 0.0, %v523
      %v525 = vpop.f32.mrb[0].mxu0
      %526 = vmatprep.mubr.f32.mxu0 0.0
      %527 = vmatmul.mubr.f32.gmra.mrb[0].mxu0 %v307
      %v528 = vpop.f32.mrb[0].mxu0
      %v529 = vadd.f32 0.0, %v528
      %v530 = vpop.f32.mrb[0].mxu0
      %531 = vmatprep.mubr.f32.mxu0 0.0
      %532 = vmatmul.mubr.f32.gmra.mrb[0].mxu0 %v310
      %v533 = vpop.f32.mrb[0].mxu0
      %v534 = vadd.f32 0.0, %v533
      %v535 = vpop.f32.mrb[0].mxu0
      %536 = vmatprep.mubr.f32.mxu0 0.0
      %537 = vmatmul.mubr.f32.gmra.mrb[0].mxu0 %v313
      %v538 = vpop.f32.mrb[0].mxu0
      %v539 = vadd.f32 0.0, %v538
      %v540 = vpop.f32.mrb[0].mxu0
      %541 = vmatprep.mubr.f32.mxu0 0.0
      %542 = vmatmul.mubr.f32.gmra.mrb[0].mxu0 %v316
      %v543 = vpop.f32.mrb[0].mxu0
      %v544 = vadd.f32 0.0, %v543
      %v545 = vpop.f32.mrb[0].mxu0
      %546 = vmatprep.mubr.f32.mxu0 0.0
      %547 = vmatmul.mubr.f32.gmra.mrb[0].mxu0 %v319
      %v548 = vpop.f32.mrb[0].mxu0
      %v549 = vadd.f32 0.0, %v548
      %v550 = vpop.f32.mrb[0].mxu0
      %551 = vmatprep.mubr.f32.mxu0 0.0
      %552 = vmatmul.mubr.f32.gmra.mrb[0].mxu0 %v322
      %v553 = vpop.f32.mrb[0].mxu0
      %v554 = vadd.f32 0.0, %v553
      %v555 = vpop.f32.mrb[0].mxu0
      %556 = vmatprep.mubr.f32.mxu0 0.0
      %557 = vmatmul.mubr.f32.gmra.mrb[0].mxu0 %v325
      %v558 = vpop.f32.mrb[0].mxu0
      %v559 = vadd.f32 0.0, %v558
      %v560 = vpop.f32.mrb[0].mxu0
      %561 = vmatprep.mubr.f32.mxu0 0.0
      %562 = vmatmul.mubr.f32.gmra.mrb[0].mxu0 %v328
      %v563 = vpop.f32.mrb[0].mxu0
      %v564 = vadd.f32 0.0, %v563
      %v565 = vpop.f32.mrb[0].mxu0
      %566 = vmatprep.mubr.f32.mxu0 0.0
      %567 = vmatmul.mubr.f32.gmra.mrb[0].mxu0 %v331
      %v568 = vpop.f32.mrb[0].mxu0
      %v569 = vadd.f32 0.0, %v568
      %v570 = vpop.f32.mrb[0].mxu0
      %571 = vmatprep.mubr.f32.mxu0 0.0
      %572 = vmatmul.mubr.f32.gmra.mrb[0].mxu0 %v334
      %v573 = vpop.f32.mrb[0].mxu0
      %v574 = vadd.f32 0.0, %v573
      %v575 = vpop.f32.mrb[0].mxu0
      %576 = vmatprep.mubr.f32.mxu0 0.0
      %577 = vmatmul.mubr.f32.gmra.mrb[0].mxu0 %v337
      %v578 = vpop.f32.mrb[0].mxu0
      %v579 = vadd.f32 0.0, %v578
      %v580 = vpop.f32.mrb[0].mxu0
      %581 = vmatprep.mubr.f32.mxu0 0.0
      %582 = vmatmul.mubr.f32.gmra.mrb[0].mxu0 %v340
      %v583 = vpop.f32.mrb[0].mxu0
      %v584 = vadd.f32 0.0, %v583
      %v585 = vpop.f32.mrb[0].mxu0
      %586 = vdwg.mxu0
      %v588 = vsel %vm233, %v144, 0
      %v591 = vsel %vm233, %v145, 0
      %v594 = vsel %vm233, %v146, 0
      %v597 = vsel %vm233, %v147, 0
      %v600 = vsel %vm233, %v148, 0
      %v603 = vsel %vm233, %v149, 0
      %v606 = vsel %vm233, %v150, 0
      %v609 = vsel %vm233, %v151, 0
      %v612 = vsel %vm233, %v152, 0
      %v615 = vsel %vm233, %v153, 0
      %v618 = vsel %vm233, %v154, 0
      %v621 = vsel %vm233, %v155, 0
      %v624 = vsel %vm233, %v156, 0
      %v627 = vsel %vm233, %v157, 0
      %v630 = vsel %vm233, %v158, 0
      %v633 = vsel %vm233, %v159, 0
      %v636 = vsel %vm233, %v160, 0
      %v639 = vsel %vm233, %v161, 0
      %v642 = vsel %vm233, %v162, 0
      %v645 = vsel %vm233, %v163, 0
      %v648 = vsel %vm233, %v164, 0
      %v651 = vsel %vm233, %v165, 0
      %v654 = vsel %vm233, %v166, 0
      %v657 = vsel %vm233, %v167, 0
      %v660 = vsel %vm233, %v168, 0
      %v663 = vsel %vm233, %v169, 0
      %v666 = vsel %vm233, %v170, 0
      %v669 = vsel %vm233, %v171, 0
      %v672 = vsel %vm233, %v172, 0
      %v675 = vsel %vm233, %v173, 0
      %v678 = vsel %vm233, %v174, 0
      %v681 = vsel %vm233, %v175, 0
      %v684 = vsel %vm233, %v176, 0
      %v687 = vsel %vm233, %v177, 0
      %v690 = vsel %vm233, %v178, 0
      %v693 = vsel %vm233, %v179, 0
      %695 = vmatprep.subr.mxu0 0.0
      %696 = vmatpush1.msra.mxu0 %v180
      %697 = vmatprep.subr.mxu0 0.0
      %698 = vmatpush1.msra.mxu0 %v181
      %699 = vmatprep.subr.mxu0 0.0
      %700 = vmatpush1.msra.mxu0 %v182
      %701 = vmatprep.subr.mxu0 0.0
      %702 = vmatpush1.msra.mxu0 %v183
      %703 = vmatprep.subr.mxu0 0.0
      %704 = vmatpush1.msra.mxu0 %v184
      %705 = vmatprep.subr.mxu0 0.0
      %706 = vmatpush1.msra.mxu0 %v185
      %707 = vmatprep.subr.mxu0 0.0
      %708 = vmatpush1.msra.mxu0 %v186
      %709 = vmatprep.subr.mxu0 0.0
      %710 = vmatpush1.msra.mxu0 %v187
      %711 = vmatprep.subr.mxu0 0.0
      %712 = vmatpush1.msra.mxu0 0.0
      %713 = vmatprep.subr.mxu0 0.0
      %714 = vmatpush1.msra.mxu0 0.0
      %715 = vmatprep.subr.mxu0 0.0
      %716 = vmatpush1.msra.mxu0 0.0
      %717 = vmatprep.subr.mxu0 0.0
      %718 = vmatpush1.msra.mxu0 0.0
      %719 = vmatprep.subr.mxu0 0.0
      %720 = vmatpush1.msra.mxu0 0.0
      %721 = vmatprep.subr.mxu0 0.0
      %722 = vmatpush1.msra.mxu0 0.0
      %723 = vmatprep.subr.mxu0 0.0
      %724 = vmatpush1.msra.mxu0 0.0
      %725 = vmatprep.subr.mxu0 0.0
      %726 = vmatpush1.msra.mxu0 0.0
      %727 = vmatprep.subr.mxu0 0.0
      %728 = vmatpush1.msra.mxu0 0.0
      %729 = vmatprep.subr.mxu0 0.0
      %730 = vmatpush1.msra.mxu0 0.0
      %731 = vmatprep.subr.mxu0 0.0
      %732 = vmatpush1.msra.mxu0 0.0
      %733 = vmatprep.subr.mxu0 0.0
      %734 = vmatpush1.msra.mxu0 0.0
      %735 = vmatprep.subr.mxu0 0.0
      %736 = vmatpush1.msra.mxu0 0.0
      %737 = vmatprep.subr.mxu0 0.0
      %738 = vmatpush1.msra.mxu0 0.0
      %739 = vmatprep.subr.mxu0 0.0
      %740 = vmatpush1.msra.mxu0 0.0
      %741 = vmatprep.subr.mxu0 0.0
      %742 = vmatpush1.msra.mxu0 0.0
      %743 = vmatprep.subr.mxu0 0.0
      %744 = vmatpush1.msra.mxu0 0.0
      %745 = vmatprep.subr.mxu0 0.0
      %746 = vmatpush1.msra.mxu0 0.0
      %747 = vmatprep.subr.mxu0 0.0
      %748 = vmatpush1.msra.mxu0 0.0
      %749 = vmatprep.subr.mxu0 0.0
      %750 = vmatpush1.msra.mxu0 0.0
      %751 = vmatprep.subr.mxu0 0.0
      %752 = vmatpush1.msra.mxu0 0.0
      %753 = vmatprep.subr.mxu0 0.0
      %754 = vmatpush1.msra.mxu0 0.0
      %755 = vmatprep.subr.mxu0 0.0
      %756 = vmatpush1.msra.mxu0 0.0
      %757 = vmatprep.subr.mxu0 0.0
      %758 = vmatpush1.msra.mxu0 0.0
      %759 = vmatprep.mubr.f32.mxu0 0.0
      %760 = vmatmul.mubr.f32.gmra.mrb[0].mxu0 %v588
      %v761 = vpop.f32.mrb[0].mxu0
      %v762 = vadd.f32 %v409, %v761
      %v763 = vpop.f32.mrb[0].mxu0
      %764 = vmatprep.mubr.f32.mxu0 0.0
      %765 = vmatmul.mubr.f32.gmra.mrb[0].mxu0 %v591
      %v766 = vpop.f32.mrb[0].mxu0
      %v767 = vadd.f32 %v414, %v766
      %v768 = vpop.f32.mrb[0].mxu0
      %769 = vmatprep.mubr.f32.mxu0 0.0
      %770 = vmatmul.mubr.f32.gmra.mrb[0].mxu0 %v594
      %v771 = vpop.f32.mrb[0].mxu0
      %v772 = vadd.f32 %v419, %v771
      %v773 = vpop.f32.mrb[0].mxu0
      %774 = vmatprep.mubr.f32.mxu0 0.0
      %775 = vmatmul.mubr.f32.gmra.mrb[0].mxu0 %v597
      %v776 = vpop.f32.mrb[0].mxu0
      %v777 = vadd.f32 %v424, %v776
      %v778 = vpop.f32.mrb[0].mxu0
      %779 = vmatprep.mubr.f32.mxu0 0.0
      %780 = vmatmul.mubr.f32.gmra.mrb[0].mxu0 %v600
      %v781 = vpop.f32.mrb[0].mxu0
      %v782 = vadd.f32 %v429, %v781
      %v783 = vpop.f32.mrb[0].mxu0
      %784 = vmatprep.mubr.f32.mxu0 0.0
      %785 = vmatmul.mubr.f32.gmra.mrb[0].mxu0 %v603
      %v786 = vpop.f32.mrb[0].mxu0
      %v787 = vadd.f32 %v434, %v786
      %v788 = vpop.f32.mrb[0].mxu0
      %789 = vmatprep.mubr.f32.mxu0 0.0
      %790 = vmatmul.mubr.f32.gmra.mrb[0].mxu0 %v606
      %v791 = vpop.f32.mrb[0].mxu0
      %v792 = vadd.f32 %v439, %v791
      %v793 = vpop.f32.mrb[0].mxu0
      %794 = vmatprep.mubr.f32.mxu0 0.0
      %795 = vmatmul.mubr.f32.gmra.mrb[0].mxu0 %v609
      %v796 = vpop.f32.mrb[0].mxu0
      %v797 = vadd.f32 %v444, %v796
      %v798 = vpop.f32.mrb[0].mxu0
      %799 = vmatprep.mubr.f32.mxu0 0.0
      %800 = vmatmul.mubr.f32.gmra.mrb[0].mxu0 %v612
      %v801 = vpop.f32.mrb[0].mxu0
      %v802 = vadd.f32 %v449, %v801
      %v803 = vpop.f32.mrb[0].mxu0
      %804 = vmatprep.mubr.f32.mxu0 0.0
      %805 = vmatmul.mubr.f32.gmra.mrb[0].mxu0 %v615
      %v806 = vpop.f32.mrb[0].mxu0
      %v807 = vadd.f32 %v454, %v806
      %v808 = vpop.f32.mrb[0].mxu0
      %809 = vmatprep.mubr.f32.mxu0 0.0
      %810 = vmatmul.mubr.f32.gmra.mrb[0].mxu0 %v618
      %v811 = vpop.f32.mrb[0].mxu0
      %v812 = vadd.f32 %v459, %v811
      %v813 = vpop.f32.mrb[0].mxu0
      %814 = vmatprep.mubr.f32.mxu0 0.0
      %815 = vmatmul.mubr.f32.gmra.mrb[0].mxu0 %v621
      %v816 = vpop.f32.mrb[0].mxu0
      %v817 = vadd.f32 %v464, %v816
      %v818 = vpop.f32.mrb[0].mxu0
      %819 = vmatprep.mubr.f32.mxu0 0.0
      %820 = vmatmul.mubr.f32.gmra.mrb[0].mxu0 %v624
      %v821 = vpop.f32.mrb[0].mxu0
      %v822 = vadd.f32 %v469, %v821
      %v823 = vpop.f32.mrb[0].mxu0
      %824 = vmatprep.mubr.f32.mxu0 0.0
      %825 = vmatmul.mubr.f32.gmra.mrb[0].mxu0 %v627
      %v826 = vpop.f32.mrb[0].mxu0
      %v827 = vadd.f32 %v474, %v826
      %v828 = vpop.f32.mrb[0].mxu0
      %829 = vmatprep.mubr.f32.mxu0 0.0
      %830 = vmatmul.mubr.f32.gmra.mrb[0].mxu0 %v630
      %v831 = vpop.f32.mrb[0].mxu0
      %v832 = vadd.f32 %v479, %v831
      %v833 = vpop.f32.mrb[0].mxu0
      %834 = vmatprep.mubr.f32.mxu0 0.0
      %835 = vmatmul.mubr.f32.gmra.mrb[0].mxu0 %v633
      %v836 = vpop.f32.mrb[0].mxu0
      %v837 = vadd.f32 %v484, %v836
      %v838 = vpop.f32.mrb[0].mxu0
      %839 = vmatprep.mubr.f32.mxu0 0.0
      %840 = vmatmul.mubr.f32.gmra.mrb[0].mxu0 %v636
      %v841 = vpop.f32.mrb[0].mxu0
      %v842 = vadd.f32 %v489, %v841
      %v843 = vpop.f32.mrb[0].mxu0
      %844 = vmatprep.mubr.f32.mxu0 0.0
      %845 = vmatmul.mubr.f32.gmra.mrb[0].mxu0 %v639
      %v846 = vpop.f32.mrb[0].mxu0
      %v847 = vadd.f32 %v494, %v846
      %v848 = vpop.f32.mrb[0].mxu0
      %849 = vmatprep.mubr.f32.mxu0 0.0
      %850 = vmatmul.mubr.f32.gmra.mrb[0].mxu0 %v642
      %v851 = vpop.f32.mrb[0].mxu0
      %v852 = vadd.f32 %v499, %v851
      %v853 = vpop.f32.mrb[0].mxu0
      %854 = vmatprep.mubr.f32.mxu0 0.0
      %855 = vmatmul.mubr.f32.gmra.mrb[0].mxu0 %v645
      %v856 = vpop.f32.mrb[0].mxu0
      %v857 = vadd.f32 %v504, %v856
      %v858 = vpop.f32.mrb[0].mxu0
      %859 = vmatprep.mubr.f32.mxu0 0.0
      %860 = vmatmul.mubr.f32.gmra.mrb[0].mxu0 %v648
      %v861 = vpop.f32.mrb[0].mxu0
      %v862 = vadd.f32 %v509, %v861
      %v863 = vpop.f32.mrb[0].mxu0
      %864 = vmatprep.mubr.f32.mxu0 0.0
      %865 = vmatmul.mubr.f32.gmra.mrb[0].mxu0 %v651
      %v866 = vpop.f32.mrb[0].mxu0
      %v867 = vadd.f32 %v514, %v866
      %v868 = vpop.f32.mrb[0].mxu0
      %869 = vmatprep.mubr.f32.mxu0 0.0
      %870 = vmatmul.mubr.f32.gmra.mrb[0].mxu0 %v654
      %v871 = vpop.f32.mrb[0].mxu0
      %v872 = vadd.f32 %v519, %v871
      %v873 = vpop.f32.mrb[0].mxu0
      %874 = vmatprep.mubr.f32.mxu0 0.0
      %875 = vmatmul.mubr.f32.gmra.mrb[0].mxu0 %v657
      %v876 = vpop.f32.mrb[0].mxu0
      %v877 = vadd.f32 %v524, %v876
      %v878 = vpop.f32.mrb[0].mxu0
      %879 = vmatprep.mubr.f32.mxu0 0.0
      %880 = vmatmul.mubr.f32.gmra.mrb[0].mxu0 %v660
      %v881 = vpop.f32.mrb[0].mxu0
      %v882 = vadd.f32 %v529, %v881
      %v883 = vpop.f32.mrb[0].mxu0
      %884 = vmatprep.mubr.f32.mxu0 0.0
      %885 = vmatmul.mubr.f32.gmra.mrb[0].mxu0 %v663
      %v886 = vpop.f32.mrb[0].mxu0
      %v887 = vadd.f32 %v534, %v886
      %v888 = vpop.f32.mrb[0].mxu0
      %889 = vmatprep.mubr.f32.mxu0 0.0
      %890 = vmatmul.mubr.f32.gmra.mrb[0].mxu0 %v666
      %v891 = vpop.f32.mrb[0].mxu0
      %v892 = vadd.f32 %v539, %v891
      %v893 = vpop.f32.mrb[0].mxu0
      %894 = vmatprep.mubr.f32.mxu0 0.0
      %895 = vmatmul.mubr.f32.gmra.mrb[0].mxu0 %v669
      %v896 = vpop.f32.mrb[0].mxu0
      %v897 = vadd.f32 %v544, %v896
      %v898 = vpop.f32.mrb[0].mxu0
      %899 = vmatprep.mubr.f32.mxu0 0.0
      %900 = vmatmul.mubr.f32.gmra.mrb[0].mxu0 %v672
      %v901 = vpop.f32.mrb[0].mxu0
      %v902 = vadd.f32 %v549, %v901
      %v903 = vpop.f32.mrb[0].mxu0
      %904 = vmatprep.mubr.f32.mxu0 0.0
      %905 = vmatmul.mubr.f32.gmra.mrb[0].mxu0 %v675
      %v906 = vpop.f32.mrb[0].mxu0
      %v907 = vadd.f32 %v554, %v906
      %v908 = vpop.f32.mrb[0].mxu0
      %909 = vmatprep.mubr.f32.mxu0 0.0
      %910 = vmatmul.mubr.f32.gmra.mrb[0].mxu0 %v678
      %v911 = vpop.f32.mrb[0].mxu0
      %v912 = vadd.f32 %v559, %v911
      %v913 = vpop.f32.mrb[0].mxu0
      %914 = vmatprep.mubr.f32.mxu0 0.0
      %915 = vmatmul.mubr.f32.gmra.mrb[0].mxu0 %v681
      %v916 = vpop.f32.mrb[0].mxu0
      %v917 = vadd.f32 %v564, %v916
      %v918 = vpop.f32.mrb[0].mxu0
      %919 = vmatprep.mubr.f32.mxu0 0.0
      %920 = vmatmul.mubr.f32.gmra.mrb[0].mxu0 %v684
      %v921 = vpop.f32.mrb[0].mxu0
      %v922 = vadd.f32 %v569, %v921
      %v923 = vpop.f32.mrb[0].mxu0
      %924 = vmatprep.mubr.f32.mxu0 0.0
      %925 = vmatmul.mubr.f32.gmra.mrb[0].mxu0 %v687
      %v926 = vpop.f32.mrb[0].mxu0
      %v927 = vadd.f32 %v574, %v926
      %v928 = vpop.f32.mrb[0].mxu0
      %929 = vmatprep.mubr.f32.mxu0 0.0
      %930 = vmatmul.mubr.f32.gmra.mrb[0].mxu0 %v690
      %v931 = vpop.f32.mrb[0].mxu0
      %v932 = vadd.f32 %v579, %v931
      %v933 = vpop.f32.mrb[0].mxu0
      %934 = vmatprep.mubr.f32.mxu0 0.0
      %935 = vmatmul.mubr.f32.gmra.mrb[0].mxu0 %v693
      %v936 = vpop.f32.mrb[0].mxu0
      %v937 = vadd.f32 %v584, %v936
      %v938 = vpop.f32.mrb[0].mxu0
      %939 = vdwg.mxu0
      %v940 = vld [vmem:[%s138 + $0x2] sm:$0xff]
      %v941 = vld [vmem:[%s138 + $0xa] sm:$0xff]
      %v942 = vld [vmem:[%s138 + $0x12] sm:$0xff]
      %v943 = vld [vmem:[%s138 + $0x1a] sm:$0xff]
      %v944 = vld [vmem:[%s138 + $0x22] sm:$0xff]
      %v945 = vld [vmem:[%s138 + $0x2a] sm:$0xff]
      %v946 = vld [vmem:[%s138 + $0x32] sm:$0xff]
      %v947 = vld [vmem:[%s138 + $0x3a] sm:$0xff]
      %v948 = vld [vmem:[%s138 + $0x42] sm:$0xff]
      %v949 = vld [vmem:[%s138 + $0x4a] sm:$0xff]
      %v950 = vld [vmem:[%s138 + $0x52] sm:$0xff]
      %v951 = vld [vmem:[%s138 + $0x5a] sm:$0xff]
      %v952 = vld [vmem:[%s138 + $0x62] sm:$0xff]
      %v953 = vld [vmem:[%s138 + $0x6a] sm:$0xff]
      %v954 = vld [vmem:[%s138 + $0x72] sm:$0xff]
      %v955 = vld [vmem:[%s138 + $0x7a] sm:$0xff]
      %v956 = vld [vmem:[%s138 + $0x82] sm:$0xff]
      %v957 = vld [vmem:[%s138 + $0x8a] sm:$0xff]
      %v958 = vld [vmem:[%s138 + $0x92] sm:$0xff]
      %v959 = vld [vmem:[%s138 + $0x9a] sm:$0xff]
      %v960 = vld [vmem:[%s138 + $0xa2] sm:$0xff]
      %v961 = vld [vmem:[%s138 + $0xaa] sm:$0xff]
      %v962 = vld [vmem:[%s138 + $0xb2] sm:$0xff]
      %v963 = vld [vmem:[%s138 + $0xba] sm:$0xff]
      %v964 = vld [vmem:[%s138 + $0xc2] sm:$0xff]
      %v965 = vld [vmem:[%s138 + $0xca] sm:$0xff]
      %v966 = vld [vmem:[%s138 + $0xd2] sm:$0xff]
      %v967 = vld [vmem:[%s138 + $0xda] sm:$0xff]
      %v968 = vld [vmem:[%s138 + $0xe2] sm:$0xff]
      %v969 = vld [vmem:[%s138 + $0xea] sm:$0xff]
      %v970 = vld [vmem:[%s138 + $0xf2] sm:$0xff]
      %v971 = vld [vmem:[%s138 + $0xfa] sm:$0xff]
      %v972 = vld [vmem:[%s138 + $0x102] sm:$0xff]
      %v973 = vld [vmem:[%s138 + $0x10a] sm:$0xff]
      %v974 = vld [vmem:[%s138 + $0x112] sm:$0xff]
      %v975 = vld [vmem:[%s138 + $0x11a] sm:$0xff]
      %s976 = scalar_lea.vmem %s1, 128
      %v977 = vld [vmem:[%s976] sm:$0xff]
      %v978 = vld [vmem:[%s976 + $0x8] sm:$0xff]
      %v979 = vld [vmem:[%s976 + $0x10] sm:$0xff]
      %v980 = vld [vmem:[%s976 + $0x18] sm:$0xff]
      %v981 = vld [vmem:[%s976 + $0x20] sm:$0xff]
      %v982 = vld [vmem:[%s976 + $0x28] sm:$0xff]
      %v983 = vld [vmem:[%s976 + $0x30] sm:$0xff]
      %v984 = vld [vmem:[%s976 + $0x38] sm:$0xff]
      %v986 = vsel %vm233, %v940, 0
      %v989 = vsel %vm233, %v941, 0
      %v992 = vsel %vm233, %v942, 0
      %v995 = vsel %vm233, %v943, 0
      %v998 = vsel %vm233, %v944, 0
      %v1001 = vsel %vm233, %v945, 0
      %v1004 = vsel %vm233, %v946, 0
      %v1007 = vsel %vm233, %v947, 0
      %v1010 = vsel %vm233, %v948, 0
      %v1013 = vsel %vm233, %v949, 0
      %v1016 = vsel %vm233, %v950, 0
      %v1019 = vsel %vm233, %v951, 0
      %v1022 = vsel %vm233, %v952, 0
      %v1025 = vsel %vm233, %v953, 0
      %v1028 = vsel %vm233, %v954, 0
      %v1031 = vsel %vm233, %v955, 0
      %v1034 = vsel %vm233, %v956, 0
      %v1037 = vsel %vm233, %v957, 0
      %v1040 = vsel %vm233, %v958, 0
      %v1043 = vsel %vm233, %v959, 0
      %v1046 = vsel %vm233, %v960, 0
      %v1049 = vsel %vm233, %v961, 0
      %v1052 = vsel %vm233, %v962, 0
      %v1055 = vsel %vm233, %v963, 0
      %v1058 = vsel %vm233, %v964, 0
      %v1061 = vsel %vm233, %v965, 0
      %v1064 = vsel %vm233, %v966, 0
      %v1067 = vsel %vm233, %v967, 0
      %v1070 = vsel %vm233, %v968, 0
      %v1073 = vsel %vm233, %v969, 0
      %v1076 = vsel %vm233, %v970, 0
      %v1079 = vsel %vm233, %v971, 0
      %v1082 = vsel %vm233, %v972, 0
      %v1085 = vsel %vm233, %v973, 0
      %v1088 = vsel %vm233, %v974, 0
      %v1091 = vsel %vm233, %v975, 0
      %1093 = vmatprep.subr.mxu0 0.0
      %1094 = vmatpush1.msra.mxu0 %v977
      %1095 = vmatprep.subr.mxu0 0.0
      %1096 = vmatpush1.msra.mxu0 %v978
      %1097 = vmatprep.subr.mxu0 0.0
      %1098 = vmatpush1.msra.mxu0 %v979
      %1099 = vmatprep.subr.mxu0 0.0
      %1100 = vmatpush1.msra.mxu0 %v980
      %1101 = vmatprep.subr.mxu0 0.0
      %1102 = vmatpush1.msra.mxu0 %v981
      %1103 = vmatprep.subr.mxu0 0.0
      %1104 = vmatpush1.msra.mxu0 %v982
      %1105 = vmatprep.subr.mxu0 0.0
      %1106 = vmatpush1.msra.mxu0 %v983
      %1107 = vmatprep.subr.mxu0 0.0
      %1108 = vmatpush1.msra.mxu0 %v984
      %1109 = vmatprep.subr.mxu0 0.0
      %1110 = vmatpush1.msra.mxu0 0.0
      %1111 = vmatprep.subr.mxu0 0.0
      %1112 = vmatpush1.msra.mxu0 0.0
      %1113 = vmatprep.subr.mxu0 0.0
      %1114 = vmatpush1.msra.mxu0 0.0
      %1115 = vmatprep.subr.mxu0 0.0
      %1116 = vmatpush1.msra.mxu0 0.0
      %1117 = vmatprep.subr.mxu0 0.0
      %1118 = vmatpush1.msra.mxu0 0.0
      %1119 = vmatprep.subr.mxu0 0.0
      %1120 = vmatpush1.msra.mxu0 0.0
      %1121 = vmatprep.subr.mxu0 0.0
      %1122 = vmatpush1.msra.mxu0 0.0
      %1123 = vmatprep.subr.mxu0 0.0
      %1124 = vmatpush1.msra.mxu0 0.0
      %1125 = vmatprep.subr.mxu0 0.0
      %1126 = vmatpush1.msra.mxu0 0.0
      %1127 = vmatprep.subr.mxu0 0.0
      %1128 = vmatpush1.msra.mxu0 0.0
      %1129 = vmatprep.subr.mxu0 0.0
      %1130 = vmatpush1.msra.mxu0 0.0
      %1131 = vmatprep.subr.mxu0 0.0
      %1132 = vmatpush1.msra.mxu0 0.0
      %1133 = vmatprep.subr.mxu0 0.0
      %1134 = vmatpush1.msra.mxu0 0.0
      %1135 = vmatprep.subr.mxu0 0.0
      %1136 = vmatpush1.msra.mxu0 0.0
      %1137 = vmatprep.subr.mxu0 0.0
      %1138 = vmatpush1.msra.mxu0 0.0
      %1139 = vmatprep.subr.mxu0 0.0
      %1140 = vmatpush1.msra.mxu0 0.0
      %1141 = vmatprep.subr.mxu0 0.0
      %1142 = vmatpush1.msra.mxu0 0.0
      %1143 = vmatprep.subr.mxu0 0.0
      %1144 = vmatpush1.msra.mxu0 0.0
      %1145 = vmatprep.subr.mxu0 0.0
      %1146 = vmatpush1.msra.mxu0 0.0
      %1147 = vmatprep.subr.mxu0 0.0
      %1148 = vmatpush1.msra.mxu0 0.0
      %1149 = vmatprep.subr.mxu0 0.0
      %1150 = vmatpush1.msra.mxu0 0.0
      %1151 = vmatprep.subr.mxu0 0.0
      %1152 = vmatpush1.msra.mxu0 0.0
      %1153 = vmatprep.subr.mxu0 0.0
      %1154 = vmatpush1.msra.mxu0 0.0
      %1155 = vmatprep.subr.mxu0 0.0
      %1156 = vmatpush1.msra.mxu0 0.0
      %1157 = vmatprep.mubr.f32.mxu0 0.0
      %1158 = vmatmul.mubr.f32.gmra.mrb[0].mxu0 %v986
      %v1159 = vpop.f32.mrb[0].mxu0
      %v1160 = vadd.f32 0.0, %v1159
      %v1161 = vpop.f32.mrb[0].mxu0
      %1162 = vmatprep.mubr.f32.mxu0 0.0
      %1163 = vmatmul.mubr.f32.gmra.mrb[0].mxu0 %v989
      %v1164 = vpop.f32.mrb[0].mxu0
      %v1165 = vadd.f32 0.0, %v1164
      %v1166 = vpop.f32.mrb[0].mxu0
      %1167 = vmatprep.mubr.f32.mxu0 0.0
      %1168 = vmatmul.mubr.f32.gmra.mrb[0].mxu0 %v992
      %v1169 = vpop.f32.mrb[0].mxu0
      %v1170 = vadd.f32 0.0, %v1169
      %v1171 = vpop.f32.mrb[0].mxu0
      %1172 = vmatprep.mubr.f32.mxu0 0.0
      %1173 = vmatmul.mubr.f32.gmra.mrb[0].mxu0 %v995
      %v1174 = vpop.f32.mrb[0].mxu0
      %v1175 = vadd.f32 0.0, %v1174
      %v1176 = vpop.f32.mrb[0].mxu0
      %1177 = vmatprep.mubr.f32.mxu0 0.0
      %1178 = vmatmul.mubr.f32.gmra.mrb[0].mxu0 %v998
      %v1179 = vpop.f32.mrb[0].mxu0
      %v1180 = vadd.f32 0.0, %v1179
      %v1181 = vpop.f32.mrb[0].mxu0
      %1182 = vmatprep.mubr.f32.mxu0 0.0
      %1183 = vmatmul.mubr.f32.gmra.mrb[0].mxu0 %v1001
      %v1184 = vpop.f32.mrb[0].mxu0
      %v1185 = vadd.f32 0.0, %v1184
      %v1186 = vpop.f32.mrb[0].mxu0
      %1187 = vmatprep.mubr.f32.mxu0 0.0
      %1188 = vmatmul.mubr.f32.gmra.mrb[0].mxu0 %v1004
      %v1189 = vpop.f32.mrb[0].mxu0
      %v1190 = vadd.f32 0.0, %v1189
      %v1191 = vpop.f32.mrb[0].mxu0
      %1192 = vmatprep.mubr.f32.mxu0 0.0
      %1193 = vmatmul.mubr.f32.gmra.mrb[0].mxu0 %v1007
      %v1194 = vpop.f32.mrb[0].mxu0
      %v1195 = vadd.f32 0.0, %v1194
      %v1196 = vpop.f32.mrb[0].mxu0
      %1197 = vmatprep.mubr.f32.mxu0 0.0
      %1198 = vmatmul.mubr.f32.gmra.mrb[0].mxu0 %v1010
      %v1199 = vpop.f32.mrb[0].mxu0
      %v1200 = vadd.f32 0.0, %v1199
      %v1201 = vpop.f32.mrb[0].mxu0
      %1202 = vmatprep.mubr.f32.mxu0 0.0
      %1203 = vmatmul.mubr.f32.gmra.mrb[0].mxu0 %v1013
      %v1204 = vpop.f32.mrb[0].mxu0
      %v1205 = vadd.f32 0.0, %v1204
      %v1206 = vpop.f32.mrb[0].mxu0
      %1207 = vmatprep.mubr.f32.mxu0 0.0
      %1208 = vmatmul.mubr.f32.gmra.mrb[0].mxu0 %v1016
      %v1209 = vpop.f32.mrb[0].mxu0
      %v1210 = vadd.f32 0.0, %v1209
      %v1211 = vpop.f32.mrb[0].mxu0
      %1212 = vmatprep.mubr.f32.mxu0 0.0
      %1213 = vmatmul.mubr.f32.gmra.mrb[0].mxu0 %v1019
      %v1214 = vpop.f32.mrb[0].mxu0
      %v1215 = vadd.f32 0.0, %v1214
      %v1216 = vpop.f32.mrb[0].mxu0
      %1217 = vmatprep.mubr.f32.mxu0 0.0
      %1218 = vmatmul.mubr.f32.gmra.mrb[0].mxu0 %v1022
      %v1219 = vpop.f32.mrb[0].mxu0
      %v1220 = vadd.f32 0.0, %v1219
      %v1221 = vpop.f32.mrb[0].mxu0
      %1222 = vmatprep.mubr.f32.mxu0 0.0
      %1223 = vmatmul.mubr.f32.gmra.mrb[0].mxu0 %v1025
      %v1224 = vpop.f32.mrb[0].mxu0
      %v1225 = vadd.f32 0.0, %v1224
      %v1226 = vpop.f32.mrb[0].mxu0
      %1227 = vmatprep.mubr.f32.mxu0 0.0
      %1228 = vmatmul.mubr.f32.gmra.mrb[0].mxu0 %v1028
      %v1229 = vpop.f32.mrb[0].mxu0
      %v1230 = vadd.f32 0.0, %v1229
      %v1231 = vpop.f32.mrb[0].mxu0
      %1232 = vmatprep.mubr.f32.mxu0 0.0
      %1233 = vmatmul.mubr.f32.gmra.mrb[0].mxu0 %v1031
      %v1234 = vpop.f32.mrb[0].mxu0
      %v1235 = vadd.f32 0.0, %v1234
      %v1236 = vpop.f32.mrb[0].mxu0
      %1237 = vmatprep.mubr.f32.mxu0 0.0
      %1238 = vmatmul.mubr.f32.gmra.mrb[0].mxu0 %v1034
      %v1239 = vpop.f32.mrb[0].mxu0
      %v1240 = vadd.f32 0.0, %v1239
      %v1241 = vpop.f32.mrb[0].mxu0
      %1242 = vmatprep.mubr.f32.mxu0 0.0
      %1243 = vmatmul.mubr.f32.gmra.mrb[0].mxu0 %v1037
      %v1244 = vpop.f32.mrb[0].mxu0
      %v1245 = vadd.f32 0.0, %v1244
      %v1246 = vpop.f32.mrb[0].mxu0
      %1247 = vmatprep.mubr.f32.mxu0 0.0
      %1248 = vmatmul.mubr.f32.gmra.mrb[0].mxu0 %v1040
      %v1249 = vpop.f32.mrb[0].mxu0
      %v1250 = vadd.f32 0.0, %v1249
      %v1251 = vpop.f32.mrb[0].mxu0
      %1252 = vmatprep.mubr.f32.mxu0 0.0
      %1253 = vmatmul.mubr.f32.gmra.mrb[0].mxu0 %v1043
      %v1254 = vpop.f32.mrb[0].mxu0
      %v1255 = vadd.f32 0.0, %v1254
      %v1256 = vpop.f32.mrb[0].mxu0
      %1257 = vmatprep.mubr.f32.mxu0 0.0
      %1258 = vmatmul.mubr.f32.gmra.mrb[0].mxu0 %v1046
      %v1259 = vpop.f32.mrb[0].mxu0
      %v1260 = vadd.f32 0.0, %v1259
      %v1261 = vpop.f32.mrb[0].mxu0
      %1262 = vmatprep.mubr.f32.mxu0 0.0
      %1263 = vmatmul.mubr.f32.gmra.mrb[0].mxu0 %v1049
      %v1264 = vpop.f32.mrb[0].mxu0
      %v1265 = vadd.f32 0.0, %v1264
      %v1266 = vpop.f32.mrb[0].mxu0
      %1267 = vmatprep.mubr.f32.mxu0 0.0
      %1268 = vmatmul.mubr.f32.gmra.mrb[0].mxu0 %v1052
      %v1269 = vpop.f32.mrb[0].mxu0
      %v1270 = vadd.f32 0.0, %v1269
      %v1271 = vpop.f32.mrb[0].mxu0
      %1272 = vmatprep.mubr.f32.mxu0 0.0
      %1273 = vmatmul.mubr.f32.gmra.mrb[0].mxu0 %v1055
      %v1274 = vpop.f32.mrb[0].mxu0
      %v1275 = vadd.f32 0.0, %v1274
      %v1276 = vpop.f32.mrb[0].mxu0
      %1277 = vmatprep.mubr.f32.mxu0 0.0
      %1278 = vmatmul.mubr.f32.gmra.mrb[0].mxu0 %v1058
      %v1279 = vpop.f32.mrb[0].mxu0
      %v1280 = vadd.f32 0.0, %v1279
      %v1281 = vpop.f32.mrb[0].mxu0
      %1282 = vmatprep.mubr.f32.mxu0 0.0
      %1283 = vmatmul.mubr.f32.gmra.mrb[0].mxu0 %v1061
      %v1284 = vpop.f32.mrb[0].mxu0
      %v1285 = vadd.f32 0.0, %v1284
      %v1286 = vpop.f32.mrb[0].mxu0
      %1287 = vmatprep.mubr.f32.mxu0 0.0
      %1288 = vmatmul.mubr.f32.gmra.mrb[0].mxu0 %v1064
      %v1289 = vpop.f32.mrb[0].mxu0
      %v1290 = vadd.f32 0.0, %v1289
      %v1291 = vpop.f32.mrb[0].mxu0
      %1292 = vmatprep.mubr.f32.mxu0 0.0
      %1293 = vmatmul.mubr.f32.gmra.mrb[0].mxu0 %v1067
      %v1294 = vpop.f32.mrb[0].mxu0
      %v1295 = vadd.f32 0.0, %v1294
      %v1296 = vpop.f32.mrb[0].mxu0
      %1297 = vmatprep.mubr.f32.mxu0 0.0
      %1298 = vmatmul.mubr.f32.gmra.mrb[0].mxu0 %v1070
      %v1299 = vpop.f32.mrb[0].mxu0
      %v1300 = vadd.f32 0.0, %v1299
      %v1301 = vpop.f32.mrb[0].mxu0
      %1302 = vmatprep.mubr.f32.mxu0 0.0
      %1303 = vmatmul.mubr.f32.gmra.mrb[0].mxu0 %v1073
      %v1304 = vpop.f32.mrb[0].mxu0
      %v1305 = vadd.f32 0.0, %v1304
      %v1306 = vpop.f32.mrb[0].mxu0
      %1307 = vmatprep.mubr.f32.mxu0 0.0
      %1308 = vmatmul.mubr.f32.gmra.mrb[0].mxu0 %v1076
      %v1309 = vpop.f32.mrb[0].mxu0
      %v1310 = vadd.f32 0.0, %v1309
      %v1311 = vpop.f32.mrb[0].mxu0
      %1312 = vmatprep.mubr.f32.mxu0 0.0
      %1313 = vmatmul.mubr.f32.gmra.mrb[0].mxu0 %v1079
      %v1314 = vpop.f32.mrb[0].mxu0
      %v1315 = vadd.f32 0.0, %v1314
      %v1316 = vpop.f32.mrb[0].mxu0
      %1317 = vmatprep.mubr.f32.mxu0 0.0
      %1318 = vmatmul.mubr.f32.gmra.mrb[0].mxu0 %v1082
      %v1319 = vpop.f32.mrb[0].mxu0
      %v1320 = vadd.f32 0.0, %v1319
      %v1321 = vpop.f32.mrb[0].mxu0
      %1322 = vmatprep.mubr.f32.mxu0 0.0
      %1323 = vmatmul.mubr.f32.gmra.mrb[0].mxu0 %v1085
      %v1324 = vpop.f32.mrb[0].mxu0
      %v1325 = vadd.f32 0.0, %v1324
      %v1326 = vpop.f32.mrb[0].mxu0
      %1327 = vmatprep.mubr.f32.mxu0 0.0
      %1328 = vmatmul.mubr.f32.gmra.mrb[0].mxu0 %v1088
      %v1329 = vpop.f32.mrb[0].mxu0
      %v1330 = vadd.f32 0.0, %v1329
      %v1331 = vpop.f32.mrb[0].mxu0
      %1332 = vmatprep.mubr.f32.mxu0 0.0
      %1333 = vmatmul.mubr.f32.gmra.mrb[0].mxu0 %v1091
      %v1334 = vpop.f32.mrb[0].mxu0
      %v1335 = vadd.f32 0.0, %v1334
      %v1336 = vpop.f32.mrb[0].mxu0
      %1337 = vdwg.mxu0
      %v1338 = vadd.f32 %v762, %v1160
      %v1339 = vadd.f32 %v767, %v1165
      %v1340 = vadd.f32 %v772, %v1170
      %v1341 = vadd.f32 %v777, %v1175
      %v1342 = vadd.f32 %v782, %v1180
      %v1343 = vadd.f32 %v787, %v1185
      %v1344 = vadd.f32 %v792, %v1190
      %v1345 = vadd.f32 %v797, %v1195
      %v1346 = vadd.f32 %v802, %v1200
      %v1347 = vadd.f32 %v807, %v1205
      %v1348 = vadd.f32 %v812, %v1210
      %v1349 = vadd.f32 %v817, %v1215
      %v1350 = vadd.f32 %v822, %v1220
      %v1351 = vadd.f32 %v827, %v1225
      %v1352 = vadd.f32 %v832, %v1230
      %v1353 = vadd.f32 %v837, %v1235
      %v1354 = vadd.f32 %v842, %v1240
      %v1355 = vadd.f32 %v847, %v1245
      %v1356 = vadd.f32 %v852, %v1250
      %v1357 = vadd.f32 %v857, %v1255
      %v1358 = vadd.f32 %v862, %v1260
      %v1359 = vadd.f32 %v867, %v1265
      %v1360 = vadd.f32 %v872, %v1270
      %v1361 = vadd.f32 %v877, %v1275
      %v1362 = vadd.f32 %v882, %v1280
      %v1363 = vadd.f32 %v887, %v1285
      %v1364 = vadd.f32 %v892, %v1290
      %v1365 = vadd.f32 %v897, %v1295
      %v1366 = vadd.f32 %v902, %v1300
      %v1367 = vadd.f32 %v907, %v1305
      %v1368 = vadd.f32 %v912, %v1310
      %v1369 = vadd.f32 %v917, %v1315
      %v1370 = vadd.f32 %v922, %v1320
      %v1371 = vadd.f32 %v927, %v1325
      %v1372 = vadd.f32 %v932, %v1330
      %v1373 = vadd.f32 %v937, %v1335
      %v1374 = vld [vmem:[%s138 + $0x12] sm:$0xff]
      %v1375 = vld [vmem:[%s138 + $0x1a] sm:$0xff]
      %v1376 = vld [vmem:[%s138 + $0x22] sm:$0xff]
      %v1377 = vld [vmem:[%s138 + $0x2a] sm:$0xff]
      %v1378 = vld [vmem:[%s138 + $0x32] sm:$0xff]
      %v1379 = vld [vmem:[%s138 + $0x3a] sm:$0xff]
      %v1380 = vld [vmem:[%s138 + $0x42] sm:$0xff]
      %v1381 = vld [vmem:[%s138 + $0x4a] sm:$0xff]
      %v1382 = vld [vmem:[%s138 + $0x52] sm:$0xff]
      %v1383 = vld [vmem:[%s138 + $0x5a] sm:$0xff]
      %v1384 = vld [vmem:[%s138 + $0x62] sm:$0xff]
      %v1385 = vld [vmem:[%s138 + $0x6a] sm:$0xff]
      %v1386 = vld [vmem:[%s138 + $0x72] sm:$0xff]
      %v1387 = vld [vmem:[%s138 + $0x7a] sm:$0xff]
      %v1388 = vld [vmem:[%s138 + $0x82] sm:$0xff]
      %v1389 = vld [vmem:[%s138 + $0x8a] sm:$0xff]
      %v1390 = vld [vmem:[%s138 + $0x92] sm:$0xff]
      %v1391 = vld [vmem:[%s138 + $0x9a] sm:$0xff]
      %v1392 = vld [vmem:[%s138 + $0xa2] sm:$0xff]
      %v1393 = vld [vmem:[%s138 + $0xaa] sm:$0xff]
      %v1394 = vld [vmem:[%s138 + $0xb2] sm:$0xff]
      %v1395 = vld [vmem:[%s138 + $0xba] sm:$0xff]
      %v1396 = vld [vmem:[%s138 + $0xc2] sm:$0xff]
      %v1397 = vld [vmem:[%s138 + $0xca] sm:$0xff]
      %v1398 = vld [vmem:[%s138 + $0xd2] sm:$0xff]
      %v1399 = vld [vmem:[%s138 + $0xda] sm:$0xff]
      %v1400 = vld [vmem:[%s138 + $0xe2] sm:$0xff]
      %v1401 = vld [vmem:[%s138 + $0xea] sm:$0xff]
      %v1402 = vld [vmem:[%s138 + $0xf2] sm:$0xff]
      %v1403 = vld [vmem:[%s138 + $0xfa] sm:$0xff]
      %v1404 = vld [vmem:[%s138 + $0x102] sm:$0xff]
      %v1405 = vld [vmem:[%s138 + $0x10a] sm:$0xff]
      %v1406 = vld [vmem:[%s138 + $0x112] sm:$0xff]
      %v1407 = vld [vmem:[%s138 + $0x11a] sm:$0xff]
      %v1408 = vld [vmem:[%s138 + $0x122] sm:$0xff]
      %v1409 = vld [vmem:[%s138 + $0x12a] sm:$0xff]
      %s1410 = scalar_lea.vmem %s1, 192
      %v1411 = vld [vmem:[%s1410] sm:$0xff]
      %v1412 = vld [vmem:[%s1410 + $0x8] sm:$0xff]
      %v1413 = vld [vmem:[%s1410 + $0x10] sm:$0xff]
      %v1414 = vld [vmem:[%s1410 + $0x18] sm:$0xff]
      %v1415 = vld [vmem:[%s1410 + $0x20] sm:$0xff]
      %v1416 = vld [vmem:[%s1410 + $0x28] sm:$0xff]
      %v1417 = vld [vmem:[%s1410 + $0x30] sm:$0xff]
      %v1418 = vld [vmem:[%s1410 + $0x38] sm:$0xff]
      %v1420 = vsel %vm233, %v1374, 0
      %v1423 = vsel %vm233, %v1375, 0
      %v1426 = vsel %vm233, %v1376, 0
      %v1429 = vsel %vm233, %v1377, 0
      %v1432 = vsel %vm233, %v1378, 0
      %v1435 = vsel %vm233, %v1379, 0
      %v1438 = vsel %vm233, %v1380, 0
      %v1441 = vsel %vm233, %v1381, 0
      %v1444 = vsel %vm233, %v1382, 0
      %v1447 = vsel %vm233, %v1383, 0
      %v1450 = vsel %vm233, %v1384, 0
      %v1453 = vsel %vm233, %v1385, 0
      %v1456 = vsel %vm233, %v1386, 0
      %v1459 = vsel %vm233, %v1387, 0
      %v1462 = vsel %vm233, %v1388, 0
      %v1465 = vsel %vm233, %v1389, 0
      %v1468 = vsel %vm233, %v1390, 0
      %v1471 = vsel %vm233, %v1391, 0
      %v1474 = vsel %vm233, %v1392, 0
      %v1477 = vsel %vm233, %v1393, 0
      %v1480 = vsel %vm233, %v1394, 0
      %v1483 = vsel %vm233, %v1395, 0
      %v1486 = vsel %vm233, %v1396, 0
      %v1489 = vsel %vm233, %v1397, 0
      %v1492 = vsel %vm233, %v1398, 0
      %v1495 = vsel %vm233, %v1399, 0
      %v1498 = vsel %vm233, %v1400, 0
      %v1501 = vsel %vm233, %v1401, 0
      %v1504 = vsel %vm233, %v1402, 0
      %v1507 = vsel %vm233, %v1403, 0
      %v1510 = vsel %vm233, %v1404, 0
      %v1513 = vsel %vm233, %v1405, 0
      %v1516 = vsel %vm233, %v1406, 0
      %v1519 = vsel %vm233, %v1407, 0
      %v1522 = vsel %vm233, %v1408, 0
      %v1525 = vsel %vm233, %v1409, 0
      %1527 = vmatprep.subr.mxu0 0.0
      %1528 = vmatpush1.msra.mxu0 %v1411
      %1529 = vmatprep.subr.mxu0 0.0
      %1530 = vmatpush1.msra.mxu0 %v1412
      %1531 = vmatprep.subr.mxu0 0.0
      %1532 = vmatpush1.msra.mxu0 %v1413
      %1533 = vmatprep.subr.mxu0 0.0
      %1534 = vmatpush1.msra.mxu0 %v1414
      %1535 = vmatprep.subr.mxu0 0.0
      %1536 = vmatpush1.msra.mxu0 %v1415
      %1537 = vmatprep.subr.mxu0 0.0
      %1538 = vmatpush1.msra.mxu0 %v1416
      %1539 = vmatprep.subr.mxu0 0.0
      %1540 = vmatpush1.msra.mxu0 %v1417
      %1541 = vmatprep.subr.mxu0 0.0
      %1542 = vmatpush1.msra.mxu0 %v1418
      %1543 = vmatprep.subr.mxu0 0.0
      %1544 = vmatpush1.msra.mxu0 0.0
      %1545 = vmatprep.subr.mxu0 0.0
      %1546 = vmatpush1.msra.mxu0 0.0
      %1547 = vmatprep.subr.mxu0 0.0
      %1548 = vmatpush1.msra.mxu0 0.0
      %1549 = vmatprep.subr.mxu0 0.0
      %1550 = vmatpush1.msra.mxu0 0.0
      %1551 = vmatprep.subr.mxu0 0.0
      %1552 = vmatpush1.msra.mxu0 0.0
      %1553 = vmatprep.subr.mxu0 0.0
      %1554 = vmatpush1.msra.mxu0 0.0
      %1555 = vmatprep.subr.mxu0 0.0
      %1556 = vmatpush1.msra.mxu0 0.0
      %1557 = vmatprep.subr.mxu0 0.0
      %1558 = vmatpush1.msra.mxu0 0.0
      %1559 = vmatprep.subr.mxu0 0.0
      %1560 = vmatpush1.msra.mxu0 0.0
      %1561 = vmatprep.subr.mxu0 0.0
      %1562 = vmatpush1.msra.mxu0 0.0
      %1563 = vmatprep.subr.mxu0 0.0
      %1564 = vmatpush1.msra.mxu0 0.0
      %1565 = vmatprep.subr.mxu0 0.0
      %1566 = vmatpush1.msra.mxu0 0.0
      %1567 = vmatprep.subr.mxu0 0.0
      %1568 = vmatpush1.msra.mxu0 0.0
      %1569 = vmatprep.subr.mxu0 0.0
      %1570 = vmatpush1.msra.mxu0 0.0
      %1571 = vmatprep.subr.mxu0 0.0
      %1572 = vmatpush1.msra.mxu0 0.0
      %1573 = vmatprep.subr.mxu0 0.0
      %1574 = vmatpush1.msra.mxu0 0.0
      %1575 = vmatprep.subr.mxu0 0.0
      %1576 = vmatpush1.msra.mxu0 0.0
      %1577 = vmatprep.subr.mxu0 0.0
      %1578 = vmatpush1.msra.mxu0 0.0
      %1579 = vmatprep.subr.mxu0 0.0
      %1580 = vmatpush1.msra.mxu0 0.0
      %1581 = vmatprep.subr.mxu0 0.0
      %1582 = vmatpush1.msra.mxu0 0.0
      %1583 = vmatprep.subr.mxu0 0.0
      %1584 = vmatpush1.msra.mxu0 0.0
      %1585 = vmatprep.subr.mxu0 0.0
      %1586 = vmatpush1.msra.mxu0 0.0
      %1587 = vmatprep.subr.mxu0 0.0
      %1588 = vmatpush1.msra.mxu0 0.0
      %1589 = vmatprep.subr.mxu0 0.0
      %1590 = vmatpush1.msra.mxu0 0.0
      %1591 = vmatprep.mubr.f32.mxu0 0.0
      %1592 = vmatmul.mubr.f32.gmra.mrb[0].mxu0 %v1420
      %v1593 = vpop.f32.mrb[0].mxu0
      %v1594 = vadd.f32 0.0, %v1593
      %v1595 = vpop.f32.mrb[0].mxu0
      %1596 = vmatprep.mubr.f32.mxu0 0.0
      %1597 = vmatmul.mubr.f32.gmra.mrb[0].mxu0 %v1423
      %v1598 = vpop.f32.mrb[0].mxu0
      %v1599 = vadd.f32 0.0, %v1598
      %v1600 = vpop.f32.mrb[0].mxu0
      %1601 = vmatprep.mubr.f32.mxu0 0.0
      %1602 = vmatmul.mubr.f32.gmra.mrb[0].mxu0 %v1426
      %v1603 = vpop.f32.mrb[0].mxu0
      %v1604 = vadd.f32 0.0, %v1603
      %v1605 = vpop.f32.mrb[0].mxu0
      %1606 = vmatprep.mubr.f32.mxu0 0.0
      %1607 = vmatmul.mubr.f32.gmra.mrb[0].mxu0 %v1429
      %v1608 = vpop.f32.mrb[0].mxu0
      %v1609 = vadd.f32 0.0, %v1608
      %v1610 = vpop.f32.mrb[0].mxu0
      %1611 = vmatprep.mubr.f32.mxu0 0.0
      %1612 = vmatmul.mubr.f32.gmra.mrb[0].mxu0 %v1432
      %v1613 = vpop.f32.mrb[0].mxu0
      %v1614 = vadd.f32 0.0, %v1613
      %v1615 = vpop.f32.mrb[0].mxu0
      %1616 = vmatprep.mubr.f32.mxu0 0.0
      %1617 = vmatmul.mubr.f32.gmra.mrb[0].mxu0 %v1435
      %v1618 = vpop.f32.mrb[0].mxu0
      %v1619 = vadd.f32 0.0, %v1618
      %v1620 = vpop.f32.mrb[0].mxu0
      %1621 = vmatprep.mubr.f32.mxu0 0.0
      %1622 = vmatmul.mubr.f32.gmra.mrb[0].mxu0 %v1438
      %v1623 = vpop.f32.mrb[0].mxu0
      %v1624 = vadd.f32 0.0, %v1623
      %v1625 = vpop.f32.mrb[0].mxu0
      %1626 = vmatprep.mubr.f32.mxu0 0.0
      %1627 = vmatmul.mubr.f32.gmra.mrb[0].mxu0 %v1441
      %v1628 = vpop.f32.mrb[0].mxu0
      %v1629 = vadd.f32 0.0, %v1628
      %v1630 = vpop.f32.mrb[0].mxu0
      %1631 = vmatprep.mubr.f32.mxu0 0.0
      %1632 = vmatmul.mubr.f32.gmra.mrb[0].mxu0 %v1444
      %v1633 = vpop.f32.mrb[0].mxu0
      %v1634 = vadd.f32 0.0, %v1633
      %v1635 = vpop.f32.mrb[0].mxu0
      %1636 = vmatprep.mubr.f32.mxu0 0.0
      %1637 = vmatmul.mubr.f32.gmra.mrb[0].mxu0 %v1447
      %v1638 = vpop.f32.mrb[0].mxu0
      %v1639 = vadd.f32 0.0, %v1638
      %v1640 = vpop.f32.mrb[0].mxu0
      %1641 = vmatprep.mubr.f32.mxu0 0.0
      %1642 = vmatmul.mubr.f32.gmra.mrb[0].mxu0 %v1450
      %v1643 = vpop.f32.mrb[0].mxu0
      %v1644 = vadd.f32 0.0, %v1643
      %v1645 = vpop.f32.mrb[0].mxu0
      %1646 = vmatprep.mubr.f32.mxu0 0.0
      %1647 = vmatmul.mubr.f32.gmra.mrb[0].mxu0 %v1453
      %v1648 = vpop.f32.mrb[0].mxu0
      %v1649 = vadd.f32 0.0, %v1648
      %v1650 = vpop.f32.mrb[0].mxu0
      %1651 = vmatprep.mubr.f32.mxu0 0.0
      %1652 = vmatmul.mubr.f32.gmra.mrb[0].mxu0 %v1456
      %v1653 = vpop.f32.mrb[0].mxu0
      %v1654 = vadd.f32 0.0, %v1653
      %v1655 = vpop.f32.mrb[0].mxu0
      %1656 = vmatprep.mubr.f32.mxu0 0.0
      %1657 = vmatmul.mubr.f32.gmra.mrb[0].mxu0 %v1459
      %v1658 = vpop.f32.mrb[0].mxu0
      %v1659 = vadd.f32 0.0, %v1658
      %v1660 = vpop.f32.mrb[0].mxu0
      %1661 = vmatprep.mubr.f32.mxu0 0.0
      %1662 = vmatmul.mubr.f32.gmra.mrb[0].mxu0 %v1462
      %v1663 = vpop.f32.mrb[0].mxu0
      %v1664 = vadd.f32 0.0, %v1663
      %v1665 = vpop.f32.mrb[0].mxu0
      %1666 = vmatprep.mubr.f32.mxu0 0.0
      %1667 = vmatmul.mubr.f32.gmra.mrb[0].mxu0 %v1465
      %v1668 = vpop.f32.mrb[0].mxu0
      %v1669 = vadd.f32 0.0, %v1668
      %v1670 = vpop.f32.mrb[0].mxu0
      %1671 = vmatprep.mubr.f32.mxu0 0.0
      %1672 = vmatmul.mubr.f32.gmra.mrb[0].mxu0 %v1468
      %v1673 = vpop.f32.mrb[0].mxu0
      %v1674 = vadd.f32 0.0, %v1673
      %v1675 = vpop.f32.mrb[0].mxu0
      %1676 = vmatprep.mubr.f32.mxu0 0.0
      %1677 = vmatmul.mubr.f32.gmra.mrb[0].mxu0 %v1471
      %v1678 = vpop.f32.mrb[0].mxu0
      %v1679 = vadd.f32 0.0, %v1678
      %v1680 = vpop.f32.mrb[0].mxu0
      %1681 = vmatprep.mubr.f32.mxu0 0.0
      %1682 = vmatmul.mubr.f32.gmra.mrb[0].mxu0 %v1474
      %v1683 = vpop.f32.mrb[0].mxu0
      %v1684 = vadd.f32 0.0, %v1683
      %v1685 = vpop.f32.mrb[0].mxu0
      %1686 = vmatprep.mubr.f32.mxu0 0.0
      %1687 = vmatmul.mubr.f32.gmra.mrb[0].mxu0 %v1477
      %v1688 = vpop.f32.mrb[0].mxu0
      %v1689 = vadd.f32 0.0, %v1688
      %v1690 = vpop.f32.mrb[0].mxu0
      %1691 = vmatprep.mubr.f32.mxu0 0.0
      %1692 = vmatmul.mubr.f32.gmra.mrb[0].mxu0 %v1480
      %v1693 = vpop.f32.mrb[0].mxu0
      %v1694 = vadd.f32 0.0, %v1693
      %v1695 = vpop.f32.mrb[0].mxu0
      %1696 = vmatprep.mubr.f32.mxu0 0.0
      %1697 = vmatmul.mubr.f32.gmra.mrb[0].mxu0 %v1483
      %v1698 = vpop.f32.mrb[0].mxu0
      %v1699 = vadd.f32 0.0, %v1698
      %v1700 = vpop.f32.mrb[0].mxu0
      %1701 = vmatprep.mubr.f32.mxu0 0.0
      %1702 = vmatmul.mubr.f32.gmra.mrb[0].mxu0 %v1486
      %v1703 = vpop.f32.mrb[0].mxu0
      %v1704 = vadd.f32 0.0, %v1703
      %v1705 = vpop.f32.mrb[0].mxu0
      %1706 = vmatprep.mubr.f32.mxu0 0.0
      %1707 = vmatmul.mubr.f32.gmra.mrb[0].mxu0 %v1489
      %v1708 = vpop.f32.mrb[0].mxu0
      %v1709 = vadd.f32 0.0, %v1708
      %v1710 = vpop.f32.mrb[0].mxu0
      %1711 = vmatprep.mubr.f32.mxu0 0.0
      %1712 = vmatmul.mubr.f32.gmra.mrb[0].mxu0 %v1492
      %v1713 = vpop.f32.mrb[0].mxu0
      %v1714 = vadd.f32 0.0, %v1713
      %v1715 = vpop.f32.mrb[0].mxu0
      %1716 = vmatprep.mubr.f32.mxu0 0.0
      %1717 = vmatmul.mubr.f32.gmra.mrb[0].mxu0 %v1495
      %v1718 = vpop.f32.mrb[0].mxu0
      %v1719 = vadd.f32 0.0, %v1718
      %v1720 = vpop.f32.mrb[0].mxu0
      %1721 = vmatprep.mubr.f32.mxu0 0.0
      %1722 = vmatmul.mubr.f32.gmra.mrb[0].mxu0 %v1498
      %v1723 = vpop.f32.mrb[0].mxu0
      %v1724 = vadd.f32 0.0, %v1723
      %v1725 = vpop.f32.mrb[0].mxu0
      %1726 = vmatprep.mubr.f32.mxu0 0.0
      %1727 = vmatmul.mubr.f32.gmra.mrb[0].mxu0 %v1501
      %v1728 = vpop.f32.mrb[0].mxu0
      %v1729 = vadd.f32 0.0, %v1728
      %v1730 = vpop.f32.mrb[0].mxu0
      %1731 = vmatprep.mubr.f32.mxu0 0.0
      %1732 = vmatmul.mubr.f32.gmra.mrb[0].mxu0 %v1504
      %v1733 = vpop.f32.mrb[0].mxu0
      %v1734 = vadd.f32 0.0, %v1733
      %v1735 = vpop.f32.mrb[0].mxu0
      %1736 = vmatprep.mubr.f32.mxu0 0.0
      %1737 = vmatmul.mubr.f32.gmra.mrb[0].mxu0 %v1507
      %v1738 = vpop.f32.mrb[0].mxu0
      %v1739 = vadd.f32 0.0, %v1738
      %v1740 = vpop.f32.mrb[0].mxu0
      %1741 = vmatprep.mubr.f32.mxu0 0.0
      %1742 = vmatmul.mubr.f32.gmra.mrb[0].mxu0 %v1510
      %v1743 = vpop.f32.mrb[0].mxu0
      %v1744 = vadd.f32 0.0, %v1743
      %v1745 = vpop.f32.mrb[0].mxu0
      %1746 = vmatprep.mubr.f32.mxu0 0.0
      %1747 = vmatmul.mubr.f32.gmra.mrb[0].mxu0 %v1513
      %v1748 = vpop.f32.mrb[0].mxu0
      %v1749 = vadd.f32 0.0, %v1748
      %v1750 = vpop.f32.mrb[0].mxu0
      %1751 = vmatprep.mubr.f32.mxu0 0.0
      %1752 = vmatmul.mubr.f32.gmra.mrb[0].mxu0 %v1516
      %v1753 = vpop.f32.mrb[0].mxu0
      %v1754 = vadd.f32 0.0, %v1753
      %v1755 = vpop.f32.mrb[0].mxu0
      %1756 = vmatprep.mubr.f32.mxu0 0.0
      %1757 = vmatmul.mubr.f32.gmra.mrb[0].mxu0 %v1519
      %v1758 = vpop.f32.mrb[0].mxu0
      %v1759 = vadd.f32 0.0, %v1758
      %v1760 = vpop.f32.mrb[0].mxu0
      %1761 = vmatprep.mubr.f32.mxu0 0.0
      %1762 = vmatmul.mubr.f32.gmra.mrb[0].mxu0 %v1522
      %v1763 = vpop.f32.mrb[0].mxu0
      %v1764 = vadd.f32 0.0, %v1763
      %v1765 = vpop.f32.mrb[0].mxu0
      %1766 = vmatprep.mubr.f32.mxu0 0.0
      %1767 = vmatmul.mubr.f32.gmra.mrb[0].mxu0 %v1525
      %v1768 = vpop.f32.mrb[0].mxu0
      %v1769 = vadd.f32 0.0, %v1768
      %v1770 = vpop.f32.mrb[0].mxu0
      %1771 = vdwg.mxu0
      %v1772 = vadd.f32 %v1338, %v1594
      %v1773 = vadd.f32 %v1339, %v1599
      %v1774 = vadd.f32 %v1340, %v1604
      %v1775 = vadd.f32 %v1341, %v1609
      %v1776 = vadd.f32 %v1342, %v1614
      %v1777 = vadd.f32 %v1343, %v1619
      %v1778 = vadd.f32 %v1344, %v1624
      %v1779 = vadd.f32 %v1345, %v1629
      %v1780 = vadd.f32 %v1346, %v1634
      %v1781 = vadd.f32 %v1347, %v1639
      %v1782 = vadd.f32 %v1348, %v1644
      %v1783 = vadd.f32 %v1349, %v1649
      %v1784 = vadd.f32 %v1350, %v1654
      %v1785 = vadd.f32 %v1351, %v1659
      %v1786 = vadd.f32 %v1352, %v1664
      %v1787 = vadd.f32 %v1353, %v1669
      %v1788 = vadd.f32 %v1354, %v1674
      %v1789 = vadd.f32 %v1355, %v1679
      %v1790 = vadd.f32 %v1356, %v1684
      %v1791 = vadd.f32 %v1357, %v1689
      %v1792 = vadd.f32 %v1358, %v1694
      %v1793 = vadd.f32 %v1359, %v1699
      %v1794 = vadd.f32 %v1360, %v1704
      %v1795 = vadd.f32 %v1361, %v1709
      %v1796 = vadd.f32 %v1362, %v1714
      %v1797 = vadd.f32 %v1363, %v1719
      %v1798 = vadd.f32 %v1364, %v1724
      %v1799 = vadd.f32 %v1365, %v1729
      %v1800 = vadd.f32 %v1366, %v1734
      %v1801 = vadd.f32 %v1367, %v1739
      %v1802 = vadd.f32 %v1368, %v1744
      %v1803 = vadd.f32 %v1369, %v1749
      %v1804 = vadd.f32 %v1370, %v1754
      %v1805 = vadd.f32 %v1371, %v1759
      %v1806 = vadd.f32 %v1372, %v1764
      %v1807 = vadd.f32 %v1373, %v1769
      %v1808 = vld [vmem:[%s138 + $0x13] sm:$0xff]
      %v1809 = vld [vmem:[%s138 + $0x1b] sm:$0xff]
      %v1810 = vld [vmem:[%s138 + $0x23] sm:$0xff]
      %v1811 = vld [vmem:[%s138 + $0x2b] sm:$0xff]
      %v1812 = vld [vmem:[%s138 + $0x33] sm:$0xff]
      %v1813 = vld [vmem:[%s138 + $0x3b] sm:$0xff]
      %v1814 = vld [vmem:[%s138 + $0x43] sm:$0xff]
      %v1815 = vld [vmem:[%s138 + $0x4b] sm:$0xff]
      %v1816 = vld [vmem:[%s138 + $0x53] sm:$0xff]
      %v1817 = vld [vmem:[%s138 + $0x5b] sm:$0xff]
      %v1818 = vld [vmem:[%s138 + $0x63] sm:$0xff]
      %v1819 = vld [vmem:[%s138 + $0x6b] sm:$0xff]
      %v1820 = vld [vmem:[%s138 + $0x73] sm:$0xff]
      %v1821 = vld [vmem:[%s138 + $0x7b] sm:$0xff]
      %v1822 = vld [vmem:[%s138 + $0x83] sm:$0xff]
      %v1823 = vld [vmem:[%s138 + $0x8b] sm:$0xff]
      %v1824 = vld [vmem:[%s138 + $0x93] sm:$0xff]
      %v1825 = vld [vmem:[%s138 + $0x9b] sm:$0xff]
      %v1826 = vld [vmem:[%s138 + $0xa3] sm:$0xff]
      %v1827 = vld [vmem:[%s138 + $0xab] sm:$0xff]
      %v1828 = vld [vmem:[%s138 + $0xb3] sm:$0xff]
      %v1829 = vld [vmem:[%s138 + $0xbb] sm:$0xff]
      %v1830 = vld [vmem:[%s138 + $0xc3] sm:$0xff]
      %v1831 = vld [vmem:[%s138 + $0xcb] sm:$0xff]
      %v1832 = vld [vmem:[%s138 + $0xd3] sm:$0xff]
      %v1833 = vld [vmem:[%s138 + $0xdb] sm:$0xff]
      %v1834 = vld [vmem:[%s138 + $0xe3] sm:$0xff]
      %v1835 = vld [vmem:[%s138 + $0xeb] sm:$0xff]
      %v1836 = vld [vmem:[%s138 + $0xf3] sm:$0xff]
      %v1837 = vld [vmem:[%s138 + $0xfb] sm:$0xff]
      %v1838 = vld [vmem:[%s138 + $0x103] sm:$0xff]
      %v1839 = vld [vmem:[%s138 + $0x10b] sm:$0xff]
      %v1840 = vld [vmem:[%s138 + $0x113] sm:$0xff]
      %v1841 = vld [vmem:[%s138 + $0x11b] sm:$0xff]
      %v1842 = vld [vmem:[%s138 + $0x123] sm:$0xff]
      %v1843 = vld [vmem:[%s138 + $0x12b] sm:$0xff]
      %s1844 = scalar_lea.vmem %s1, 256
      %v1845 = vld [vmem:[%s1844] sm:$0xff]
      %v1846 = vld [vmem:[%s1844 + $0x8] sm:$0xff]
      %v1847 = vld [vmem:[%s1844 + $0x10] sm:$0xff]
      %v1848 = vld [vmem:[%s1844 + $0x18] sm:$0xff]
      %v1849 = vld [vmem:[%s1844 + $0x20] sm:$0xff]
      %v1850 = vld [vmem:[%s1844 + $0x28] sm:$0xff]
      %v1851 = vld [vmem:[%s1844 + $0x30] sm:$0xff]
      %v1852 = vld [vmem:[%s1844 + $0x38] sm:$0xff]
      %v1854 = vsel %vm233, %v1808, 0
      %v1857 = vsel %vm233, %v1809, 0
      %v1860 = vsel %vm233, %v1810, 0
      %v1863 = vsel %vm233, %v1811, 0
      %v1866 = vsel %vm233, %v1812, 0
      %v1869 = vsel %vm233, %v1813, 0
      %v1872 = vsel %vm233, %v1814, 0
      %v1875 = vsel %vm233, %v1815, 0
      %v1878 = vsel %vm233, %v1816, 0
      %v1881 = vsel %vm233, %v1817, 0
      %v1884 = vsel %vm233, %v1818, 0
      %v1887 = vsel %vm233, %v1819, 0
      %v1890 = vsel %vm233, %v1820, 0
      %v1893 = vsel %vm233, %v1821, 0
      %v1896 = vsel %vm233, %v1822, 0
      %v1899 = vsel %vm233, %v1823, 0
      %v1902 = vsel %vm233, %v1824, 0
      %v1905 = vsel %vm233, %v1825, 0
      %v1908 = vsel %vm233, %v1826, 0
      %v1911 = vsel %vm233, %v1827, 0
      %v1914 = vsel %vm233, %v1828, 0
      %v1917 = vsel %vm233, %v1829, 0
      %v1920 = vsel %vm233, %v1830, 0
      %v1923 = vsel %vm233, %v1831, 0
      %v1926 = vsel %vm233, %v1832, 0
      %v1929 = vsel %vm233, %v1833, 0
      %v1932 = vsel %vm233, %v1834, 0
      %v1935 = vsel %vm233, %v1835, 0
      %v1938 = vsel %vm233, %v1836, 0
      %v1941 = vsel %vm233, %v1837, 0
      %v1944 = vsel %vm233, %v1838, 0
      %v1947 = vsel %vm233, %v1839, 0
      %v1950 = vsel %vm233, %v1840, 0
      %v1953 = vsel %vm233, %v1841, 0
      %v1956 = vsel %vm233, %v1842, 0
      %v1959 = vsel %vm233, %v1843, 0
      %1961 = vmatprep.subr.mxu0 0.0
      %1962 = vmatpush1.msra.mxu0 %v1845
      %1963 = vmatprep.subr.mxu0 0.0
      %1964 = vmatpush1.msra.mxu0 %v1846
      %1965 = vmatprep.subr.mxu0 0.0
      %1966 = vmatpush1.msra.mxu0 %v1847
      %1967 = vmatprep.subr.mxu0 0.0
      %1968 = vmatpush1.msra.mxu0 %v1848
      %1969 = vmatprep.subr.mxu0 0.0
      %1970 = vmatpush1.msra.mxu0 %v1849
      %1971 = vmatprep.subr.mxu0 0.0
      %1972 = vmatpush1.msra.mxu0 %v1850
      %1973 = vmatprep.subr.mxu0 0.0
      %1974 = vmatpush1.msra.mxu0 %v1851
      %1975 = vmatprep.subr.mxu0 0.0
      %1976 = vmatpush1.msra.mxu0 %v1852
      %1977 = vmatprep.subr.mxu0 0.0
      %1978 = vmatpush1.msra.mxu0 0.0
      %1979 = vmatprep.subr.mxu0 0.0
      %1980 = vmatpush1.msra.mxu0 0.0
      %1981 = vmatprep.subr.mxu0 0.0
      %1982 = vmatpush1.msra.mxu0 0.0
      %1983 = vmatprep.subr.mxu0 0.0
      %1984 = vmatpush1.msra.mxu0 0.0
      %1985 = vmatprep.subr.mxu0 0.0
      %1986 = vmatpush1.msra.mxu0 0.0
      %1987 = vmatprep.subr.mxu0 0.0
      %1988 = vmatpush1.msra.mxu0 0.0
      %1989 = vmatprep.subr.mxu0 0.0
      %1990 = vmatpush1.msra.mxu0 0.0
      %1991 = vmatprep.subr.mxu0 0.0
      %1992 = vmatpush1.msra.mxu0 0.0
      %1993 = vmatprep.subr.mxu0 0.0
      %1994 = vmatpush1.msra.mxu0 0.0
      %1995 = vmatprep.subr.mxu0 0.0
      %1996 = vmatpush1.msra.mxu0 0.0
      %1997 = vmatprep.subr.mxu0 0.0
      %1998 = vmatpush1.msra.mxu0 0.0
      %1999 = vmatprep.subr.mxu0 0.0
      %2000 = vmatpush1.msra.mxu0 0.0
      %2001 = vmatprep.subr.mxu0 0.0
      %2002 = vmatpush1.msra.mxu0 0.0
      %2003 = vmatprep.subr.mxu0 0.0
      %2004 = vmatpush1.msra.mxu0 0.0
      %2005 = vmatprep.subr.mxu0 0.0
      %2006 = vmatpush1.msra.mxu0 0.0
      %2007 = vmatprep.subr.mxu0 0.0
      %2008 = vmatpush1.msra.mxu0 0.0
      %2009 = vmatprep.subr.mxu0 0.0
      %2010 = vmatpush1.msra.mxu0 0.0
      %2011 = vmatprep.subr.mxu0 0.0
      %2012 = vmatpush1.msra.mxu0 0.0
      %2013 = vmatprep.subr.mxu0 0.0
      %2014 = vmatpush1.msra.mxu0 0.0
      %2015 = vmatprep.subr.mxu0 0.0
      %2016 = vmatpush1.msra.mxu0 0.0
      %2017 = vmatprep.subr.mxu0 0.0
      %2018 = vmatpush1.msra.mxu0 0.0
      %2019 = vmatprep.subr.mxu0 0.0
      %2020 = vmatpush1.msra.mxu0 0.0
      %2021 = vmatprep.subr.mxu0 0.0
      %2022 = vmatpush1.msra.mxu0 0.0
      %2023 = vmatprep.subr.mxu0 0.0
      %2024 = vmatpush1.msra.mxu0 0.0
      %2025 = vmatprep.mubr.f32.mxu0 0.0
      %2026 = vmatmul.mubr.f32.gmra.mrb[0].mxu0 %v1854
      %v2027 = vpop.f32.mrb[0].mxu0
      %v2028 = vadd.f32 0.0, %v2027
      %v2029 = vpop.f32.mrb[0].mxu0
      %2030 = vmatprep.mubr.f32.mxu0 0.0
      %2031 = vmatmul.mubr.f32.gmra.mrb[0].mxu0 %v1857
      %v2032 = vpop.f32.mrb[0].mxu0
      %v2033 = vadd.f32 0.0, %v2032
      %v2034 = vpop.f32.mrb[0].mxu0
      %2035 = vmatprep.mubr.f32.mxu0 0.0
      %2036 = vmatmul.mubr.f32.gmra.mrb[0].mxu0 %v1860
      %v2037 = vpop.f32.mrb[0].mxu0
      %v2038 = vadd.f32 0.0, %v2037
      %v2039 = vpop.f32.mrb[0].mxu0
      %2040 = vmatprep.mubr.f32.mxu0 0.0
      %2041 = vmatmul.mubr.f32.gmra.mrb[0].mxu0 %v1863
      %v2042 = vpop.f32.mrb[0].mxu0
      %v2043 = vadd.f32 0.0, %v2042
      %v2044 = vpop.f32.mrb[0].mxu0
      %2045 = vmatprep.mubr.f32.mxu0 0.0
      %2046 = vmatmul.mubr.f32.gmra.mrb[0].mxu0 %v1866
      %v2047 = vpop.f32.mrb[0].mxu0
      %v2048 = vadd.f32 0.0, %v2047
      %v2049 = vpop.f32.mrb[0].mxu0
      %2050 = vmatprep.mubr.f32.mxu0 0.0
      %2051 = vmatmul.mubr.f32.gmra.mrb[0].mxu0 %v1869
      %v2052 = vpop.f32.mrb[0].mxu0
      %v2053 = vadd.f32 0.0, %v2052
      %v2054 = vpop.f32.mrb[0].mxu0
      %2055 = vmatprep.mubr.f32.mxu0 0.0
      %2056 = vmatmul.mubr.f32.gmra.mrb[0].mxu0 %v1872
      %v2057 = vpop.f32.mrb[0].mxu0
      %v2058 = vadd.f32 0.0, %v2057
      %v2059 = vpop.f32.mrb[0].mxu0
      %2060 = vmatprep.mubr.f32.mxu0 0.0
      %2061 = vmatmul.mubr.f32.gmra.mrb[0].mxu0 %v1875
      %v2062 = vpop.f32.mrb[0].mxu0
      %v2063 = vadd.f32 0.0, %v2062
      %v2064 = vpop.f32.mrb[0].mxu0
      %2065 = vmatprep.mubr.f32.mxu0 0.0
      %2066 = vmatmul.mubr.f32.gmra.mrb[0].mxu0 %v1878
      %v2067 = vpop.f32.mrb[0].mxu0
      %v2068 = vadd.f32 0.0, %v2067
      %v2069 = vpop.f32.mrb[0].mxu0
      %2070 = vmatprep.mubr.f32.mxu0 0.0
      %2071 = vmatmul.mubr.f32.gmra.mrb[0].mxu0 %v1881
      %v2072 = vpop.f32.mrb[0].mxu0
      %v2073 = vadd.f32 0.0, %v2072
      %v2074 = vpop.f32.mrb[0].mxu0
      %2075 = vmatprep.mubr.f32.mxu0 0.0
      %2076 = vmatmul.mubr.f32.gmra.mrb[0].mxu0 %v1884
      %v2077 = vpop.f32.mrb[0].mxu0
      %v2078 = vadd.f32 0.0, %v2077
      %v2079 = vpop.f32.mrb[0].mxu0
      %2080 = vmatprep.mubr.f32.mxu0 0.0
      %2081 = vmatmul.mubr.f32.gmra.mrb[0].mxu0 %v1887
      %v2082 = vpop.f32.mrb[0].mxu0
      %v2083 = vadd.f32 0.0, %v2082
      %v2084 = vpop.f32.mrb[0].mxu0
      %2085 = vmatprep.mubr.f32.mxu0 0.0
      %2086 = vmatmul.mubr.f32.gmra.mrb[0].mxu0 %v1890
      %v2087 = vpop.f32.mrb[0].mxu0
      %v2088 = vadd.f32 0.0, %v2087
      %v2089 = vpop.f32.mrb[0].mxu0
      %2090 = vmatprep.mubr.f32.mxu0 0.0
      %2091 = vmatmul.mubr.f32.gmra.mrb[0].mxu0 %v1893
      %v2092 = vpop.f32.mrb[0].mxu0
      %v2093 = vadd.f32 0.0, %v2092
      %v2094 = vpop.f32.mrb[0].mxu0
      %2095 = vmatprep.mubr.f32.mxu0 0.0
      %2096 = vmatmul.mubr.f32.gmra.mrb[0].mxu0 %v1896
      %v2097 = vpop.f32.mrb[0].mxu0
      %v2098 = vadd.f32 0.0, %v2097
      %v2099 = vpop.f32.mrb[0].mxu0
      %2100 = vmatprep.mubr.f32.mxu0 0.0
      %2101 = vmatmul.mubr.f32.gmra.mrb[0].mxu0 %v1899
      %v2102 = vpop.f32.mrb[0].mxu0
      %v2103 = vadd.f32 0.0, %v2102
      %v2104 = vpop.f32.mrb[0].mxu0
      %2105 = vmatprep.mubr.f32.mxu0 0.0
      %2106 = vmatmul.mubr.f32.gmra.mrb[0].mxu0 %v1902
      %v2107 = vpop.f32.mrb[0].mxu0
      %v2108 = vadd.f32 0.0, %v2107
      %v2109 = vpop.f32.mrb[0].mxu0
      %2110 = vmatprep.mubr.f32.mxu0 0.0
      %2111 = vmatmul.mubr.f32.gmra.mrb[0].mxu0 %v1905
      %v2112 = vpop.f32.mrb[0].mxu0
      %v2113 = vadd.f32 0.0, %v2112
      %v2114 = vpop.f32.mrb[0].mxu0
      %2115 = vmatprep.mubr.f32.mxu0 0.0
      %2116 = vmatmul.mubr.f32.gmra.mrb[0].mxu0 %v1908
      %v2117 = vpop.f32.mrb[0].mxu0
      %v2118 = vadd.f32 0.0, %v2117
      %v2119 = vpop.f32.mrb[0].mxu0
      %2120 = vmatprep.mubr.f32.mxu0 0.0
      %2121 = vmatmul.mubr.f32.gmra.mrb[0].mxu0 %v1911
      %v2122 = vpop.f32.mrb[0].mxu0
      %v2123 = vadd.f32 0.0, %v2122
      %v2124 = vpop.f32.mrb[0].mxu0
      %2125 = vmatprep.mubr.f32.mxu0 0.0
      %2126 = vmatmul.mubr.f32.gmra.mrb[0].mxu0 %v1914
      %v2127 = vpop.f32.mrb[0].mxu0
      %v2128 = vadd.f32 0.0, %v2127
      %v2129 = vpop.f32.mrb[0].mxu0
      %2130 = vmatprep.mubr.f32.mxu0 0.0
      %2131 = vmatmul.mubr.f32.gmra.mrb[0].mxu0 %v1917
      %v2132 = vpop.f32.mrb[0].mxu0
      %v2133 = vadd.f32 0.0, %v2132
      %v2134 = vpop.f32.mrb[0].mxu0
      %2135 = vmatprep.mubr.f32.mxu0 0.0
      %2136 = vmatmul.mubr.f32.gmra.mrb[0].mxu0 %v1920
      %v2137 = vpop.f32.mrb[0].mxu0
      %v2138 = vadd.f32 0.0, %v2137
      %v2139 = vpop.f32.mrb[0].mxu0
      %2140 = vmatprep.mubr.f32.mxu0 0.0
      %2141 = vmatmul.mubr.f32.gmra.mrb[0].mxu0 %v1923
      %v2142 = vpop.f32.mrb[0].mxu0
      %v2143 = vadd.f32 0.0, %v2142
      %v2144 = vpop.f32.mrb[0].mxu0
      %2145 = vmatprep.mubr.f32.mxu0 0.0
      %2146 = vmatmul.mubr.f32.gmra.mrb[0].mxu0 %v1926
      %v2147 = vpop.f32.mrb[0].mxu0
      %v2148 = vadd.f32 0.0, %v2147
      %v2149 = vpop.f32.mrb[0].mxu0
      %2150 = vmatprep.mubr.f32.mxu0 0.0
      %2151 = vmatmul.mubr.f32.gmra.mrb[0].mxu0 %v1929
      %v2152 = vpop.f32.mrb[0].mxu0
      %v2153 = vadd.f32 0.0, %v2152
      %v2154 = vpop.f32.mrb[0].mxu0
      %2155 = vmatprep.mubr.f32.mxu0 0.0
      %2156 = vmatmul.mubr.f32.gmra.mrb[0].mxu0 %v1932
      %v2157 = vpop.f32.mrb[0].mxu0
      %v2158 = vadd.f32 0.0, %v2157
      %v2159 = vpop.f32.mrb[0].mxu0
      %2160 = vmatprep.mubr.f32.mxu0 0.0
      %2161 = vmatmul.mubr.f32.gmra.mrb[0].mxu0 %v1935
      %v2162 = vpop.f32.mrb[0].mxu0
      %v2163 = vadd.f32 0.0, %v2162
      %v2164 = vpop.f32.mrb[0].mxu0
      %2165 = vmatprep.mubr.f32.mxu0 0.0
      %2166 = vmatmul.mubr.f32.gmra.mrb[0].mxu0 %v1938
      %v2167 = vpop.f32.mrb[0].mxu0
      %v2168 = vadd.f32 0.0, %v2167
      %v2169 = vpop.f32.mrb[0].mxu0
      %2170 = vmatprep.mubr.f32.mxu0 0.0
      %2171 = vmatmul.mubr.f32.gmra.mrb[0].mxu0 %v1941
      %v2172 = vpop.f32.mrb[0].mxu0
      %v2173 = vadd.f32 0.0, %v2172
      %v2174 = vpop.f32.mrb[0].mxu0
      %2175 = vmatprep.mubr.f32.mxu0 0.0
      %2176 = vmatmul.mubr.f32.gmra.mrb[0].mxu0 %v1944
      %v2177 = vpop.f32.mrb[0].mxu0
      %v2178 = vadd.f32 0.0, %v2177
      %v2179 = vpop.f32.mrb[0].mxu0
      %2180 = vmatprep.mubr.f32.mxu0 0.0
      %2181 = vmatmul.mubr.f32.gmra.mrb[0].mxu0 %v1947
      %v2182 = vpop.f32.mrb[0].mxu0
      %v2183 = vadd.f32 0.0, %v2182
      %v2184 = vpop.f32.mrb[0].mxu0
      %2185 = vmatprep.mubr.f32.mxu0 0.0
      %2186 = vmatmul.mubr.f32.gmra.mrb[0].mxu0 %v1950
      %v2187 = vpop.f32.mrb[0].mxu0
      %v2188 = vadd.f32 0.0, %v2187
      %v2189 = vpop.f32.mrb[0].mxu0
      %2190 = vmatprep.mubr.f32.mxu0 0.0
      %2191 = vmatmul.mubr.f32.gmra.mrb[0].mxu0 %v1953
      %v2192 = vpop.f32.mrb[0].mxu0
      %v2193 = vadd.f32 0.0, %v2192
      %v2194 = vpop.f32.mrb[0].mxu0
      %2195 = vmatprep.mubr.f32.mxu0 0.0
      %2196 = vmatmul.mubr.f32.gmra.mrb[0].mxu0 %v1956
      %v2197 = vpop.f32.mrb[0].mxu0
      %v2198 = vadd.f32 0.0, %v2197
      %v2199 = vpop.f32.mrb[0].mxu0
      %2200 = vmatprep.mubr.f32.mxu0 0.0
      %2201 = vmatmul.mubr.f32.gmra.mrb[0].mxu0 %v1959
      %v2202 = vpop.f32.mrb[0].mxu0
      %v2203 = vadd.f32 0.0, %v2202
      %v2204 = vpop.f32.mrb[0].mxu0
      %2205 = vdwg.mxu0
      %v2206 = vadd.f32 %v1772, %v2028
      %v2207 = vadd.f32 %v1773, %v2033
      %v2208 = vadd.f32 %v1774, %v2038
      %v2209 = vadd.f32 %v1775, %v2043
      %v2210 = vadd.f32 %v1776, %v2048
      %v2211 = vadd.f32 %v1777, %v2053
      %v2212 = vadd.f32 %v1778, %v2058
      %v2213 = vadd.f32 %v1779, %v2063
      %v2214 = vadd.f32 %v1780, %v2068
      %v2215 = vadd.f32 %v1781, %v2073
      %v2216 = vadd.f32 %v1782, %v2078
      %v2217 = vadd.f32 %v1783, %v2083
      %v2218 = vadd.f32 %v1784, %v2088
      %v2219 = vadd.f32 %v1785, %v2093
      %v2220 = vadd.f32 %v1786, %v2098
      %v2221 = vadd.f32 %v1787, %v2103
      %v2222 = vadd.f32 %v1788, %v2108
      %v2223 = vadd.f32 %v1789, %v2113
      %v2224 = vadd.f32 %v1790, %v2118
      %v2225 = vadd.f32 %v1791, %v2123
      %v2226 = vadd.f32 %v1792, %v2128
      %v2227 = vadd.f32 %v1793, %v2133
      %v2228 = vadd.f32 %v1794, %v2138
      %v2229 = vadd.f32 %v1795, %v2143
      %v2230 = vadd.f32 %v1796, %v2148
      %v2231 = vadd.f32 %v1797, %v2153
      %v2232 = vadd.f32 %v1798, %v2158
      %v2233 = vadd.f32 %v1799, %v2163
      %v2234 = vadd.f32 %v1800, %v2168
      %v2235 = vadd.f32 %v1801, %v2173
      %v2236 = vadd.f32 %v1802, %v2178
      %v2237 = vadd.f32 %v1803, %v2183
      %v2238 = vadd.f32 %v1804, %v2188
      %v2239 = vadd.f32 %v1805, %v2193
      %v2240 = vadd.f32 %v1806, %v2198
      %v2241 = vadd.f32 %v1807, %v2203
      %v2242 = vld [vmem:[%s138 + $0x14] sm:$0xff]
      %v2243 = vld [vmem:[%s138 + $0x1c] sm:$0xff]
      %v2244 = vld [vmem:[%s138 + $0x24] sm:$0xff]
      %v2245 = vld [vmem:[%s138 + $0x2c] sm:$0xff]
      %v2246 = vld [vmem:[%s138 + $0x34] sm:$0xff]
      %v2247 = vld [vmem:[%s138 + $0x3c] sm:$0xff]
      %v2248 = vld [vmem:[%s138 + $0x44] sm:$0xff]
      %v2249 = vld [vmem:[%s138 + $0x4c] sm:$0xff]
      %v2250 = vld [vmem:[%s138 + $0x54] sm:$0xff]
      %v2251 = vld [vmem:[%s138 + $0x5c] sm:$0xff]
      %v2252 = vld [vmem:[%s138 + $0x64] sm:$0xff]
      %v2253 = vld [vmem:[%s138 + $0x6c] sm:$0xff]
      %v2254 = vld [vmem:[%s138 + $0x74] sm:$0xff]
      %v2255 = vld [vmem:[%s138 + $0x7c] sm:$0xff]
      %v2256 = vld [vmem:[%s138 + $0x84] sm:$0xff]
      %v2257 = vld [vmem:[%s138 + $0x8c] sm:$0xff]
      %v2258 = vld [vmem:[%s138 + $0x94] sm:$0xff]
      %v2259 = vld [vmem:[%s138 + $0x9c] sm:$0xff]
      %v2260 = vld [vmem:[%s138 + $0xa4] sm:$0xff]
      %v2261 = vld [vmem:[%s138 + $0xac] sm:$0xff]
      %v2262 = vld [vmem:[%s138 + $0xb4] sm:$0xff]
      %v2263 = vld [vmem:[%s138 + $0xbc] sm:$0xff]
      %v2264 = vld [vmem:[%s138 + $0xc4] sm:$0xff]
      %v2265 = vld [vmem:[%s138 + $0xcc] sm:$0xff]
      %v2266 = vld [vmem:[%s138 + $0xd4] sm:$0xff]
      %v2267 = vld [vmem:[%s138 + $0xdc] sm:$0xff]
      %v2268 = vld [vmem:[%s138 + $0xe4] sm:$0xff]
      %v2269 = vld [vmem:[%s138 + $0xec] sm:$0xff]
      %v2270 = vld [vmem:[%s138 + $0xf4] sm:$0xff]
      %v2271 = vld [vmem:[%s138 + $0xfc] sm:$0xff]
      %v2272 = vld [vmem:[%s138 + $0x104] sm:$0xff]
      %v2273 = vld [vmem:[%s138 + $0x10c] sm:$0xff]
      %v2274 = vld [vmem:[%s138 + $0x114] sm:$0xff]
      %v2275 = vld [vmem:[%s138 + $0x11c] sm:$0xff]
      %v2276 = vld [vmem:[%s138 + $0x124] sm:$0xff]
      %v2277 = vld [vmem:[%s138 + $0x12c] sm:$0xff]
      %s2278 = scalar_lea.vmem %s1, 320
      %v2279 = vld [vmem:[%s2278] sm:$0xff]
      %v2280 = vld [vmem:[%s2278 + $0x8] sm:$0xff]
      %v2281 = vld [vmem:[%s2278 + $0x10] sm:$0xff]
      %v2282 = vld [vmem:[%s2278 + $0x18] sm:$0xff]
      %v2283 = vld [vmem:[%s2278 + $0x20] sm:$0xff]
      %v2284 = vld [vmem:[%s2278 + $0x28] sm:$0xff]
      %v2285 = vld [vmem:[%s2278 + $0x30] sm:$0xff]
      %v2286 = vld [vmem:[%s2278 + $0x38] sm:$0xff]
      %v2288 = vsel %vm233, %v2242, 0
      %v2291 = vsel %vm233, %v2243, 0
      %v2294 = vsel %vm233, %v2244, 0
      %v2297 = vsel %vm233, %v2245, 0
      %v2300 = vsel %vm233, %v2246, 0
      %v2303 = vsel %vm233, %v2247, 0
      %v2306 = vsel %vm233, %v2248, 0
      %v2309 = vsel %vm233, %v2249, 0
      %v2312 = vsel %vm233, %v2250, 0
      %v2315 = vsel %vm233, %v2251, 0
      %v2318 = vsel %vm233, %v2252, 0
      %v2321 = vsel %vm233, %v2253, 0
      %v2324 = vsel %vm233, %v2254, 0
      %v2327 = vsel %vm233, %v2255, 0
      %v2330 = vsel %vm233, %v2256, 0
      %v2333 = vsel %vm233, %v2257, 0
      %v2336 = vsel %vm233, %v2258, 0
      %v2339 = vsel %vm233, %v2259, 0
      %v2342 = vsel %vm233, %v2260, 0
      %v2345 = vsel %vm233, %v2261, 0
      %v2348 = vsel %vm233, %v2262, 0
      %v2351 = vsel %vm233, %v2263, 0
      %v2354 = vsel %vm233, %v2264, 0
      %v2357 = vsel %vm233, %v2265, 0
      %v2360 = vsel %vm233, %v2266, 0
      %v2363 = vsel %vm233, %v2267, 0
      %v2366 = vsel %vm233, %v2268, 0
      %v2369 = vsel %vm233, %v2269, 0
      %v2372 = vsel %vm233, %v2270, 0
      %v2375 = vsel %vm233, %v2271, 0
      %v2378 = vsel %vm233, %v2272, 0
      %v2381 = vsel %vm233, %v2273, 0
      %v2384 = vsel %vm233, %v2274, 0
      %v2387 = vsel %vm233, %v2275, 0
      %v2390 = vsel %vm233, %v2276, 0
      %v2393 = vsel %vm233, %v2277, 0
      %2395 = vmatprep.subr.mxu0 0.0
      %2396 = vmatpush1.msra.mxu0 %v2279
      %2397 = vmatprep.subr.mxu0 0.0
      %2398 = vmatpush1.msra.mxu0 %v2280
      %2399 = vmatprep.subr.mxu0 0.0
      %2400 = vmatpush1.msra.mxu0 %v2281
      %2401 = vmatprep.subr.mxu0 0.0
      %2402 = vmatpush1.msra.mxu0 %v2282
      %2403 = vmatprep.subr.mxu0 0.0
      %2404 = vmatpush1.msra.mxu0 %v2283
      %2405 = vmatprep.subr.mxu0 0.0
      %2406 = vmatpush1.msra.mxu0 %v2284
      %2407 = vmatprep.subr.mxu0 0.0
      %2408 = vmatpush1.msra.mxu0 %v2285
      %2409 = vmatprep.subr.mxu0 0.0
      %2410 = vmatpush1.msra.mxu0 %v2286
      %2411 = vmatprep.subr.mxu0 0.0
      %2412 = vmatpush1.msra.mxu0 0.0
      %2413 = vmatprep.subr.mxu0 0.0
      %2414 = vmatpush1.msra.mxu0 0.0
      %2415 = vmatprep.subr.mxu0 0.0
      %2416 = vmatpush1.msra.mxu0 0.0
      %2417 = vmatprep.subr.mxu0 0.0
      %2418 = vmatpush1.msra.mxu0 0.0
      %2419 = vmatprep.subr.mxu0 0.0
      %2420 = vmatpush1.msra.mxu0 0.0
      %2421 = vmatprep.subr.mxu0 0.0
      %2422 = vmatpush1.msra.mxu0 0.0
      %2423 = vmatprep.subr.mxu0 0.0
      %2424 = vmatpush1.msra.mxu0 0.0
      %2425 = vmatprep.subr.mxu0 0.0
      %2426 = vmatpush1.msra.mxu0 0.0
      %2427 = vmatprep.subr.mxu0 0.0
      %2428 = vmatpush1.msra.mxu0 0.0
      %2429 = vmatprep.subr.mxu0 0.0
      %2430 = vmatpush1.msra.mxu0 0.0
      %2431 = vmatprep.subr.mxu0 0.0
      %2432 = vmatpush1.msra.mxu0 0.0
      %2433 = vmatprep.subr.mxu0 0.0
      %2434 = vmatpush1.msra.mxu0 0.0
      %2435 = vmatprep.subr.mxu0 0.0
      %2436 = vmatpush1.msra.mxu0 0.0
      %2437 = vmatprep.subr.mxu0 0.0
      %2438 = vmatpush1.msra.mxu0 0.0
      %2439 = vmatprep.subr.mxu0 0.0
      %2440 = vmatpush1.msra.mxu0 0.0
      %2441 = vmatprep.subr.mxu0 0.0
      %2442 = vmatpush1.msra.mxu0 0.0
      %2443 = vmatprep.subr.mxu0 0.0
      %2444 = vmatpush1.msra.mxu0 0.0
      %2445 = vmatprep.subr.mxu0 0.0
      %2446 = vmatpush1.msra.mxu0 0.0
      %2447 = vmatprep.subr.mxu0 0.0
      %2448 = vmatpush1.msra.mxu0 0.0
      %2449 = vmatprep.subr.mxu0 0.0
      %2450 = vmatpush1.msra.mxu0 0.0
      %2451 = vmatprep.subr.mxu0 0.0
      %2452 = vmatpush1.msra.mxu0 0.0
      %2453 = vmatprep.subr.mxu0 0.0
      %2454 = vmatpush1.msra.mxu0 0.0
      %2455 = vmatprep.subr.mxu0 0.0
      %2456 = vmatpush1.msra.mxu0 0.0
      %2457 = vmatprep.subr.mxu0 0.0
      %2458 = vmatpush1.msra.mxu0 0.0
      %2459 = vmatprep.mubr.f32.mxu0 0.0
      %2460 = vmatmul.mubr.f32.gmra.mrb[0].mxu0 %v2288
      %v2461 = vpop.f32.mrb[0].mxu0
      %v2462 = vadd.f32 0.0, %v2461
      %v2463 = vpop.f32.mrb[0].mxu0
      %2464 = vmatprep.mubr.f32.mxu0 0.0
      %2465 = vmatmul.mubr.f32.gmra.mrb[0].mxu0 %v2291
      %v2466 = vpop.f32.mrb[0].mxu0
      %v2467 = vadd.f32 0.0, %v2466
      %v2468 = vpop.f32.mrb[0].mxu0
      %2469 = vmatprep.mubr.f32.mxu0 0.0
      %2470 = vmatmul.mubr.f32.gmra.mrb[0].mxu0 %v2294
      %v2471 = vpop.f32.mrb[0].mxu0
      %v2472 = vadd.f32 0.0, %v2471
      %v2473 = vpop.f32.mrb[0].mxu0
      %2474 = vmatprep.mubr.f32.mxu0 0.0
      %2475 = vmatmul.mubr.f32.gmra.mrb[0].mxu0 %v2297
      %v2476 = vpop.f32.mrb[0].mxu0
      %v2477 = vadd.f32 0.0, %v2476
      %v2478 = vpop.f32.mrb[0].mxu0
      %2479 = vmatprep.mubr.f32.mxu0 0.0
      %2480 = vmatmul.mubr.f32.gmra.mrb[0].mxu0 %v2300
      %v2481 = vpop.f32.mrb[0].mxu0
      %v2482 = vadd.f32 0.0, %v2481
      %v2483 = vpop.f32.mrb[0].mxu0
      %2484 = vmatprep.mubr.f32.mxu0 0.0
      %2485 = vmatmul.mubr.f32.gmra.mrb[0].mxu0 %v2303
      %v2486 = vpop.f32.mrb[0].mxu0
      %v2487 = vadd.f32 0.0, %v2486
      %v2488 = vpop.f32.mrb[0].mxu0
      %2489 = vmatprep.mubr.f32.mxu0 0.0
      %2490 = vmatmul.mubr.f32.gmra.mrb[0].mxu0 %v2306
      %v2491 = vpop.f32.mrb[0].mxu0
      %v2492 = vadd.f32 0.0, %v2491
      %v2493 = vpop.f32.mrb[0].mxu0
      %2494 = vmatprep.mubr.f32.mxu0 0.0
      %2495 = vmatmul.mubr.f32.gmra.mrb[0].mxu0 %v2309
      %v2496 = vpop.f32.mrb[0].mxu0
      %v2497 = vadd.f32 0.0, %v2496
      %v2498 = vpop.f32.mrb[0].mxu0
      %2499 = vmatprep.mubr.f32.mxu0 0.0
      %2500 = vmatmul.mubr.f32.gmra.mrb[0].mxu0 %v2312
      %v2501 = vpop.f32.mrb[0].mxu0
      %v2502 = vadd.f32 0.0, %v2501
      %v2503 = vpop.f32.mrb[0].mxu0
      %2504 = vmatprep.mubr.f32.mxu0 0.0
      %2505 = vmatmul.mubr.f32.gmra.mrb[0].mxu0 %v2315
      %v2506 = vpop.f32.mrb[0].mxu0
      %v2507 = vadd.f32 0.0, %v2506
      %v2508 = vpop.f32.mrb[0].mxu0
      %2509 = vmatprep.mubr.f32.mxu0 0.0
      %2510 = vmatmul.mubr.f32.gmra.mrb[0].mxu0 %v2318
      %v2511 = vpop.f32.mrb[0].mxu0
      %v2512 = vadd.f32 0.0, %v2511
      %v2513 = vpop.f32.mrb[0].mxu0
      %2514 = vmatprep.mubr.f32.mxu0 0.0
      %2515 = vmatmul.mubr.f32.gmra.mrb[0].mxu0 %v2321
      %v2516 = vpop.f32.mrb[0].mxu0
      %v2517 = vadd.f32 0.0, %v2516
      %v2518 = vpop.f32.mrb[0].mxu0
      %2519 = vmatprep.mubr.f32.mxu0 0.0
      %2520 = vmatmul.mubr.f32.gmra.mrb[0].mxu0 %v2324
      %v2521 = vpop.f32.mrb[0].mxu0
      %v2522 = vadd.f32 0.0, %v2521
      %v2523 = vpop.f32.mrb[0].mxu0
      %2524 = vmatprep.mubr.f32.mxu0 0.0
      %2525 = vmatmul.mubr.f32.gmra.mrb[0].mxu0 %v2327
      %v2526 = vpop.f32.mrb[0].mxu0
      %v2527 = vadd.f32 0.0, %v2526
      %v2528 = vpop.f32.mrb[0].mxu0
      %2529 = vmatprep.mubr.f32.mxu0 0.0
      %2530 = vmatmul.mubr.f32.gmra.mrb[0].mxu0 %v2330
      %v2531 = vpop.f32.mrb[0].mxu0
      %v2532 = vadd.f32 0.0, %v2531
      %v2533 = vpop.f32.mrb[0].mxu0
      %2534 = vmatprep.mubr.f32.mxu0 0.0
      %2535 = vmatmul.mubr.f32.gmra.mrb[0].mxu0 %v2333
      %v2536 = vpop.f32.mrb[0].mxu0
      %v2537 = vadd.f32 0.0, %v2536
      %v2538 = vpop.f32.mrb[0].mxu0
      %2539 = vmatprep.mubr.f32.mxu0 0.0
      %2540 = vmatmul.mubr.f32.gmra.mrb[0].mxu0 %v2336
      %v2541 = vpop.f32.mrb[0].mxu0
      %v2542 = vadd.f32 0.0, %v2541
      %v2543 = vpop.f32.mrb[0].mxu0
      %2544 = vmatprep.mubr.f32.mxu0 0.0
      %2545 = vmatmul.mubr.f32.gmra.mrb[0].mxu0 %v2339
      %v2546 = vpop.f32.mrb[0].mxu0
      %v2547 = vadd.f32 0.0, %v2546
      %v2548 = vpop.f32.mrb[0].mxu0
      %2549 = vmatprep.mubr.f32.mxu0 0.0
      %2550 = vmatmul.mubr.f32.gmra.mrb[0].mxu0 %v2342
      %v2551 = vpop.f32.mrb[0].mxu0
      %v2552 = vadd.f32 0.0, %v2551
      %v2553 = vpop.f32.mrb[0].mxu0
      %2554 = vmatprep.mubr.f32.mxu0 0.0
      %2555 = vmatmul.mubr.f32.gmra.mrb[0].mxu0 %v2345
      %v2556 = vpop.f32.mrb[0].mxu0
      %v2557 = vadd.f32 0.0, %v2556
      %v2558 = vpop.f32.mrb[0].mxu0
      %2559 = vmatprep.mubr.f32.mxu0 0.0
      %2560 = vmatmul.mubr.f32.gmra.mrb[0].mxu0 %v2348
      %v2561 = vpop.f32.mrb[0].mxu0
      %v2562 = vadd.f32 0.0, %v2561
      %v2563 = vpop.f32.mrb[0].mxu0
      %2564 = vmatprep.mubr.f32.mxu0 0.0
      %2565 = vmatmul.mubr.f32.gmra.mrb[0].mxu0 %v2351
      %v2566 = vpop.f32.mrb[0].mxu0
      %v2567 = vadd.f32 0.0, %v2566
      %v2568 = vpop.f32.mrb[0].mxu0
      %2569 = vmatprep.mubr.f32.mxu0 0.0
      %2570 = vmatmul.mubr.f32.gmra.mrb[0].mxu0 %v2354
      %v2571 = vpop.f32.mrb[0].mxu0
      %v2572 = vadd.f32 0.0, %v2571
      %v2573 = vpop.f32.mrb[0].mxu0
      %2574 = vmatprep.mubr.f32.mxu0 0.0
      %2575 = vmatmul.mubr.f32.gmra.mrb[0].mxu0 %v2357
      %v2576 = vpop.f32.mrb[0].mxu0
      %v2577 = vadd.f32 0.0, %v2576
      %v2578 = vpop.f32.mrb[0].mxu0
      %2579 = vmatprep.mubr.f32.mxu0 0.0
      %2580 = vmatmul.mubr.f32.gmra.mrb[0].mxu0 %v2360
      %v2581 = vpop.f32.mrb[0].mxu0
      %v2582 = vadd.f32 0.0, %v2581
      %v2583 = vpop.f32.mrb[0].mxu0
      %2584 = vmatprep.mubr.f32.mxu0 0.0
      %2585 = vmatmul.mubr.f32.gmra.mrb[0].mxu0 %v2363
      %v2586 = vpop.f32.mrb[0].mxu0
      %v2587 = vadd.f32 0.0, %v2586
      %v2588 = vpop.f32.mrb[0].mxu0
      %2589 = vmatprep.mubr.f32.mxu0 0.0
      %2590 = vmatmul.mubr.f32.gmra.mrb[0].mxu0 %v2366
      %v2591 = vpop.f32.mrb[0].mxu0
      %v2592 = vadd.f32 0.0, %v2591
      %v2593 = vpop.f32.mrb[0].mxu0
      %2594 = vmatprep.mubr.f32.mxu0 0.0
      %2595 = vmatmul.mubr.f32.gmra.mrb[0].mxu0 %v2369
      %v2596 = vpop.f32.mrb[0].mxu0
      %v2597 = vadd.f32 0.0, %v2596
      %v2598 = vpop.f32.mrb[0].mxu0
      %2599 = vmatprep.mubr.f32.mxu0 0.0
      %2600 = vmatmul.mubr.f32.gmra.mrb[0].mxu0 %v2372
      %v2601 = vpop.f32.mrb[0].mxu0
      %v2602 = vadd.f32 0.0, %v2601
      %v2603 = vpop.f32.mrb[0].mxu0
      %2604 = vmatprep.mubr.f32.mxu0 0.0
      %2605 = vmatmul.mubr.f32.gmra.mrb[0].mxu0 %v2375
      %v2606 = vpop.f32.mrb[0].mxu0
      %v2607 = vadd.f32 0.0, %v2606
      %v2608 = vpop.f32.mrb[0].mxu0
      %2609 = vmatprep.mubr.f32.mxu0 0.0
      %2610 = vmatmul.mubr.f32.gmra.mrb[0].mxu0 %v2378
      %v2611 = vpop.f32.mrb[0].mxu0
      %v2612 = vadd.f32 0.0, %v2611
      %v2613 = vpop.f32.mrb[0].mxu0
      %2614 = vmatprep.mubr.f32.mxu0 0.0
      %2615 = vmatmul.mubr.f32.gmra.mrb[0].mxu0 %v2381
      %v2616 = vpop.f32.mrb[0].mxu0
      %v2617 = vadd.f32 0.0, %v2616
      %v2618 = vpop.f32.mrb[0].mxu0
      %2619 = vmatprep.mubr.f32.mxu0 0.0
      %2620 = vmatmul.mubr.f32.gmra.mrb[0].mxu0 %v2384
      %v2621 = vpop.f32.mrb[0].mxu0
      %v2622 = vadd.f32 0.0, %v2621
      %v2623 = vpop.f32.mrb[0].mxu0
      %2624 = vmatprep.mubr.f32.mxu0 0.0
      %2625 = vmatmul.mubr.f32.gmra.mrb[0].mxu0 %v2387
      %v2626 = vpop.f32.mrb[0].mxu0
      %v2627 = vadd.f32 0.0, %v2626
      %v2628 = vpop.f32.mrb[0].mxu0
      %2629 = vmatprep.mubr.f32.mxu0 0.0
      %2630 = vmatmul.mubr.f32.gmra.mrb[0].mxu0 %v2390
      %v2631 = vpop.f32.mrb[0].mxu0
      %v2632 = vadd.f32 0.0, %v2631
      %v2633 = vpop.f32.mrb[0].mxu0
      %2634 = vmatprep.mubr.f32.mxu0 0.0
      %2635 = vmatmul.mubr.f32.gmra.mrb[0].mxu0 %v2393
      %v2636 = vpop.f32.mrb[0].mxu0
      %v2637 = vadd.f32 0.0, %v2636
      %v2638 = vpop.f32.mrb[0].mxu0
      %2639 = vdwg.mxu0
      %v2640 = vadd.f32 %v2206, %v2462
      %v2641 = vadd.f32 %v2207, %v2467
      %v2642 = vadd.f32 %v2208, %v2472
      %v2643 = vadd.f32 %v2209, %v2477
      %v2644 = vadd.f32 %v2210, %v2482
      %v2645 = vadd.f32 %v2211, %v2487
      %v2646 = vadd.f32 %v2212, %v2492
      %v2647 = vadd.f32 %v2213, %v2497
      %v2648 = vadd.f32 %v2214, %v2502
      %v2649 = vadd.f32 %v2215, %v2507
      %v2650 = vadd.f32 %v2216, %v2512
      %v2651 = vadd.f32 %v2217, %v2517
      %v2652 = vadd.f32 %v2218, %v2522
      %v2653 = vadd.f32 %v2219, %v2527
      %v2654 = vadd.f32 %v2220, %v2532
      %v2655 = vadd.f32 %v2221, %v2537
      %v2656 = vadd.f32 %v2222, %v2542
      %v2657 = vadd.f32 %v2223, %v2547
      %v2658 = vadd.f32 %v2224, %v2552
      %v2659 = vadd.f32 %v2225, %v2557
      %v2660 = vadd.f32 %v2226, %v2562
      %v2661 = vadd.f32 %v2227, %v2567
      %v2662 = vadd.f32 %v2228, %v2572
      %v2663 = vadd.f32 %v2229, %v2577
      %v2664 = vadd.f32 %v2230, %v2582
      %v2665 = vadd.f32 %v2231, %v2587
      %v2666 = vadd.f32 %v2232, %v2592
      %v2667 = vadd.f32 %v2233, %v2597
      %v2668 = vadd.f32 %v2234, %v2602
      %v2669 = vadd.f32 %v2235, %v2607
      %v2670 = vadd.f32 %v2236, %v2612
      %v2671 = vadd.f32 %v2237, %v2617
      %v2672 = vadd.f32 %v2238, %v2622
      %v2673 = vadd.f32 %v2239, %v2627
      %v2674 = vadd.f32 %v2240, %v2632
      %v2675 = vadd.f32 %v2241, %v2637
      %v2676 = vld [vmem:[%s138 + $0x24] sm:$0xff]
      %v2677 = vld [vmem:[%s138 + $0x2c] sm:$0xff]
      %v2678 = vld [vmem:[%s138 + $0x34] sm:$0xff]
      %v2679 = vld [vmem:[%s138 + $0x3c] sm:$0xff]
      %v2680 = vld [vmem:[%s138 + $0x44] sm:$0xff]
      %v2681 = vld [vmem:[%s138 + $0x4c] sm:$0xff]
      %v2682 = vld [vmem:[%s138 + $0x54] sm:$0xff]
      %v2683 = vld [vmem:[%s138 + $0x5c] sm:$0xff]
      %v2684 = vld [vmem:[%s138 + $0x64] sm:$0xff]
      %v2685 = vld [vmem:[%s138 + $0x6c] sm:$0xff]
      %v2686 = vld [vmem:[%s138 + $0x74] sm:$0xff]
      %v2687 = vld [vmem:[%s138 + $0x7c] sm:$0xff]
      %v2688 = vld [vmem:[%s138 + $0x84] sm:$0xff]
      %v2689 = vld [vmem:[%s138 + $0x8c] sm:$0xff]
      %v2690 = vld [vmem:[%s138 + $0x94] sm:$0xff]
      %v2691 = vld [vmem:[%s138 + $0x9c] sm:$0xff]
      %v2692 = vld [vmem:[%s138 + $0xa4] sm:$0xff]
      %v2693 = vld [vmem:[%s138 + $0xac] sm:$0xff]
      %v2694 = vld [vmem:[%s138 + $0xb4] sm:$0xff]
      %v2695 = vld [vmem:[%s138 + $0xbc] sm:$0xff]
      %v2696 = vld [vmem:[%s138 + $0xc4] sm:$0xff]
      %v2697 = vld [vmem:[%s138 + $0xcc] sm:$0xff]
      %v2698 = vld [vmem:[%s138 + $0xd4] sm:$0xff]
      %v2699 = vld [vmem:[%s138 + $0xdc] sm:$0xff]
      %v2700 = vld [vmem:[%s138 + $0xe4] sm:$0xff]
      %v2701 = vld [vmem:[%s138 + $0xec] sm:$0xff]
      %v2702 = vld [vmem:[%s138 + $0xf4] sm:$0xff]
      %v2703 = vld [vmem:[%s138 + $0xfc] sm:$0xff]
      %v2704 = vld [vmem:[%s138 + $0x104] sm:$0xff]
      %v2705 = vld [vmem:[%s138 + $0x10c] sm:$0xff]
      %v2706 = vld [vmem:[%s138 + $0x114] sm:$0xff]
      %v2707 = vld [vmem:[%s138 + $0x11c] sm:$0xff]
      %v2708 = vld [vmem:[%s138 + $0x124] sm:$0xff]
      %v2709 = vld [vmem:[%s138 + $0x12c] sm:$0xff]
      %v2710 = vld [vmem:[%s138 + $0x134] sm:$0xff]
      %v2711 = vld [vmem:[%s138 + $0x13c] sm:$0xff]
      %s2712 = scalar_lea.vmem %s1, 384
      %v2713 = vld [vmem:[%s2712] sm:$0xff]
      %v2714 = vld [vmem:[%s2712 + $0x8] sm:$0xff]
      %v2715 = vld [vmem:[%s2712 + $0x10] sm:$0xff]
      %v2716 = vld [vmem:[%s2712 + $0x18] sm:$0xff]
      %v2717 = vld [vmem:[%s2712 + $0x20] sm:$0xff]
      %v2718 = vld [vmem:[%s2712 + $0x28] sm:$0xff]
      %v2719 = vld [vmem:[%s2712 + $0x30] sm:$0xff]
      %v2720 = vld [vmem:[%s2712 + $0x38] sm:$0xff]
      %v2722 = vsel %vm233, %v2676, 0
      %v2725 = vsel %vm233, %v2677, 0
      %v2728 = vsel %vm233, %v2678, 0
      %v2731 = vsel %vm233, %v2679, 0
      %v2734 = vsel %vm233, %v2680, 0
      %v2737 = vsel %vm233, %v2681, 0
      %v2740 = vsel %vm233, %v2682, 0
      %v2743 = vsel %vm233, %v2683, 0
      %v2746 = vsel %vm233, %v2684, 0
      %v2749 = vsel %vm233, %v2685, 0
      %v2752 = vsel %vm233, %v2686, 0
      %v2755 = vsel %vm233, %v2687, 0
      %v2758 = vsel %vm233, %v2688, 0
      %v2761 = vsel %vm233, %v2689, 0
      %v2764 = vsel %vm233, %v2690, 0
      %v2767 = vsel %vm233, %v2691, 0
      %v2770 = vsel %vm233, %v2692, 0
      %v2773 = vsel %vm233, %v2693, 0
      %v2776 = vsel %vm233, %v2694, 0
      %v2779 = vsel %vm233, %v2695, 0
      %v2782 = vsel %vm233, %v2696, 0
      %v2785 = vsel %vm233, %v2697, 0
      %v2788 = vsel %vm233, %v2698, 0
      %v2791 = vsel %vm233, %v2699, 0
      %v2794 = vsel %vm233, %v2700, 0
      %v2797 = vsel %vm233, %v2701, 0
      %v2800 = vsel %vm233, %v2702, 0
      %v2803 = vsel %vm233, %v2703, 0
      %v2806 = vsel %vm233, %v2704, 0
      %v2809 = vsel %vm233, %v2705, 0
      %v2812 = vsel %vm233, %v2706, 0
      %v2815 = vsel %vm233, %v2707, 0
      %v2818 = vsel %vm233, %v2708, 0
      %v2821 = vsel %vm233, %v2709, 0
      %v2824 = vsel %vm233, %v2710, 0
      %v2827 = vsel %vm233, %v2711, 0
      %2829 = vmatprep.subr.mxu0 0.0
      %2830 = vmatpush1.msra.mxu0 %v2713
      %2831 = vmatprep.subr.mxu0 0.0
      %2832 = vmatpush1.msra.mxu0 %v2714
      %2833 = vmatprep.subr.mxu0 0.0
      %2834 = vmatpush1.msra.mxu0 %v2715
      %2835 = vmatprep.subr.mxu0 0.0
      %2836 = vmatpush1.msra.mxu0 %v2716
      %2837 = vmatprep.subr.mxu0 0.0
      %2838 = vmatpush1.msra.mxu0 %v2717
      %2839 = vmatprep.subr.mxu0 0.0
      %2840 = vmatpush1.msra.mxu0 %v2718
      %2841 = vmatprep.subr.mxu0 0.0
      %2842 = vmatpush1.msra.mxu0 %v2719
      %2843 = vmatprep.subr.mxu0 0.0
      %2844 = vmatpush1.msra.mxu0 %v2720
      %2845 = vmatprep.subr.mxu0 0.0
      %2846 = vmatpush1.msra.mxu0 0.0
      %2847 = vmatprep.subr.mxu0 0.0
      %2848 = vmatpush1.msra.mxu0 0.0
      %2849 = vmatprep.subr.mxu0 0.0
      %2850 = vmatpush1.msra.mxu0 0.0
      %2851 = vmatprep.subr.mxu0 0.0
      %2852 = vmatpush1.msra.mxu0 0.0
      %2853 = vmatprep.subr.mxu0 0.0
      %2854 = vmatpush1.msra.mxu0 0.0
      %2855 = vmatprep.subr.mxu0 0.0
      %2856 = vmatpush1.msra.mxu0 0.0
      %2857 = vmatprep.subr.mxu0 0.0
      %2858 = vmatpush1.msra.mxu0 0.0
      %2859 = vmatprep.subr.mxu0 0.0
      %2860 = vmatpush1.msra.mxu0 0.0
      %2861 = vmatprep.subr.mxu0 0.0
      %2862 = vmatpush1.msra.mxu0 0.0
      %2863 = vmatprep.subr.mxu0 0.0
      %2864 = vmatpush1.msra.mxu0 0.0
      %2865 = vmatprep.subr.mxu0 0.0
      %2866 = vmatpush1.msra.mxu0 0.0
      %2867 = vmatprep.subr.mxu0 0.0
      %2868 = vmatpush1.msra.mxu0 0.0
      %2869 = vmatprep.subr.mxu0 0.0
      %2870 = vmatpush1.msra.mxu0 0.0
      %2871 = vmatprep.subr.mxu0 0.0
      %2872 = vmatpush1.msra.mxu0 0.0
      %2873 = vmatprep.subr.mxu0 0.0
      %2874 = vmatpush1.msra.mxu0 0.0
      %2875 = vmatprep.subr.mxu0 0.0
      %2876 = vmatpush1.msra.mxu0 0.0
      %2877 = vmatprep.subr.mxu0 0.0
      %2878 = vmatpush1.msra.mxu0 0.0
      %2879 = vmatprep.subr.mxu0 0.0
      %2880 = vmatpush1.msra.mxu0 0.0
      %2881 = vmatprep.subr.mxu0 0.0
      %2882 = vmatpush1.msra.mxu0 0.0
      %2883 = vmatprep.subr.mxu0 0.0
      %2884 = vmatpush1.msra.mxu0 0.0
      %2885 = vmatprep.subr.mxu0 0.0
      %2886 = vmatpush1.msra.mxu0 0.0
      %2887 = vmatprep.subr.mxu0 0.0
      %2888 = vmatpush1.msra.mxu0 0.0
      %2889 = vmatprep.subr.mxu0 0.0
      %2890 = vmatpush1.msra.mxu0 0.0
      %2891 = vmatprep.subr.mxu0 0.0
      %2892 = vmatpush1.msra.mxu0 0.0
      %2893 = vmatprep.mubr.f32.mxu0 0.0
      %2894 = vmatmul.mubr.f32.gmra.mrb[0].mxu0 %v2722
      %v2895 = vpop.f32.mrb[0].mxu0
      %v2896 = vadd.f32 0.0, %v2895
      %v2897 = vpop.f32.mrb[0].mxu0
      %2898 = vmatprep.mubr.f32.mxu0 0.0
      %2899 = vmatmul.mubr.f32.gmra.mrb[0].mxu0 %v2725
      %v2900 = vpop.f32.mrb[0].mxu0
      %v2901 = vadd.f32 0.0, %v2900
      %v2902 = vpop.f32.mrb[0].mxu0
      %2903 = vmatprep.mubr.f32.mxu0 0.0
      %2904 = vmatmul.mubr.f32.gmra.mrb[0].mxu0 %v2728
      %v2905 = vpop.f32.mrb[0].mxu0
      %v2906 = vadd.f32 0.0, %v2905
      %v2907 = vpop.f32.mrb[0].mxu0
      %2908 = vmatprep.mubr.f32.mxu0 0.0
      %2909 = vmatmul.mubr.f32.gmra.mrb[0].mxu0 %v2731
      %v2910 = vpop.f32.mrb[0].mxu0
      %v2911 = vadd.f32 0.0, %v2910
      %v2912 = vpop.f32.mrb[0].mxu0
      %2913 = vmatprep.mubr.f32.mxu0 0.0
      %2914 = vmatmul.mubr.f32.gmra.mrb[0].mxu0 %v2734
      %v2915 = vpop.f32.mrb[0].mxu0
      %v2916 = vadd.f32 0.0, %v2915
      %v2917 = vpop.f32.mrb[0].mxu0
      %2918 = vmatprep.mubr.f32.mxu0 0.0
      %2919 = vmatmul.mubr.f32.gmra.mrb[0].mxu0 %v2737
      %v2920 = vpop.f32.mrb[0].mxu0
      %v2921 = vadd.f32 0.0, %v2920
      %v2922 = vpop.f32.mrb[0].mxu0
      %2923 = vmatprep.mubr.f32.mxu0 0.0
      %2924 = vmatmul.mubr.f32.gmra.mrb[0].mxu0 %v2740
      %v2925 = vpop.f32.mrb[0].mxu0
      %v2926 = vadd.f32 0.0, %v2925
      %v2927 = vpop.f32.mrb[0].mxu0
      %2928 = vmatprep.mubr.f32.mxu0 0.0
      %2929 = vmatmul.mubr.f32.gmra.mrb[0].mxu0 %v2743
      %v2930 = vpop.f32.mrb[0].mxu0
      %v2931 = vadd.f32 0.0, %v2930
      %v2932 = vpop.f32.mrb[0].mxu0
      %2933 = vmatprep.mubr.f32.mxu0 0.0
      %2934 = vmatmul.mubr.f32.gmra.mrb[0].mxu0 %v2746
      %v2935 = vpop.f32.mrb[0].mxu0
      %v2936 = vadd.f32 0.0, %v2935
      %v2937 = vpop.f32.mrb[0].mxu0
      %2938 = vmatprep.mubr.f32.mxu0 0.0
      %2939 = vmatmul.mubr.f32.gmra.mrb[0].mxu0 %v2749
      %v2940 = vpop.f32.mrb[0].mxu0
      %v2941 = vadd.f32 0.0, %v2940
      %v2942 = vpop.f32.mrb[0].mxu0
      %2943 = vmatprep.mubr.f32.mxu0 0.0
      %2944 = vmatmul.mubr.f32.gmra.mrb[0].mxu0 %v2752
      %v2945 = vpop.f32.mrb[0].mxu0
      %v2946 = vadd.f32 0.0, %v2945
      %v2947 = vpop.f32.mrb[0].mxu0
      %2948 = vmatprep.mubr.f32.mxu0 0.0
      %2949 = vmatmul.mubr.f32.gmra.mrb[0].mxu0 %v2755
      %v2950 = vpop.f32.mrb[0].mxu0
      %v2951 = vadd.f32 0.0, %v2950
      %v2952 = vpop.f32.mrb[0].mxu0
      %2953 = vmatprep.mubr.f32.mxu0 0.0
      %2954 = vmatmul.mubr.f32.gmra.mrb[0].mxu0 %v2758
      %v2955 = vpop.f32.mrb[0].mxu0
      %v2956 = vadd.f32 0.0, %v2955
      %v2957 = vpop.f32.mrb[0].mxu0
      %2958 = vmatprep.mubr.f32.mxu0 0.0
      %2959 = vmatmul.mubr.f32.gmra.mrb[0].mxu0 %v2761
      %v2960 = vpop.f32.mrb[0].mxu0
      %v2961 = vadd.f32 0.0, %v2960
      %v2962 = vpop.f32.mrb[0].mxu0
      %2963 = vmatprep.mubr.f32.mxu0 0.0
      %2964 = vmatmul.mubr.f32.gmra.mrb[0].mxu0 %v2764
      %v2965 = vpop.f32.mrb[0].mxu0
      %v2966 = vadd.f32 0.0, %v2965
      %v2967 = vpop.f32.mrb[0].mxu0
      %2968 = vmatprep.mubr.f32.mxu0 0.0
      %2969 = vmatmul.mubr.f32.gmra.mrb[0].mxu0 %v2767
      %v2970 = vpop.f32.mrb[0].mxu0
      %v2971 = vadd.f32 0.0, %v2970
      %v2972 = vpop.f32.mrb[0].mxu0
      %2973 = vmatprep.mubr.f32.mxu0 0.0
      %2974 = vmatmul.mubr.f32.gmra.mrb[0].mxu0 %v2770
      %v2975 = vpop.f32.mrb[0].mxu0
      %v2976 = vadd.f32 0.0, %v2975
      %v2977 = vpop.f32.mrb[0].mxu0
      %2978 = vmatprep.mubr.f32.mxu0 0.0
      %2979 = vmatmul.mubr.f32.gmra.mrb[0].mxu0 %v2773
      %v2980 = vpop.f32.mrb[0].mxu0
      %v2981 = vadd.f32 0.0, %v2980
      %v2982 = vpop.f32.mrb[0].mxu0
      %2983 = vmatprep.mubr.f32.mxu0 0.0
      %2984 = vmatmul.mubr.f32.gmra.mrb[0].mxu0 %v2776
      %v2985 = vpop.f32.mrb[0].mxu0
      %v2986 = vadd.f32 0.0, %v2985
      %v2987 = vpop.f32.mrb[0].mxu0
      %2988 = vmatprep.mubr.f32.mxu0 0.0
      %2989 = vmatmul.mubr.f32.gmra.mrb[0].mxu0 %v2779
      %v2990 = vpop.f32.mrb[0].mxu0
      %v2991 = vadd.f32 0.0, %v2990
      %v2992 = vpop.f32.mrb[0].mxu0
      %2993 = vmatprep.mubr.f32.mxu0 0.0
      %2994 = vmatmul.mubr.f32.gmra.mrb[0].mxu0 %v2782
      %v2995 = vpop.f32.mrb[0].mxu0
      %v2996 = vadd.f32 0.0, %v2995
      %v2997 = vpop.f32.mrb[0].mxu0
      %2998 = vmatprep.mubr.f32.mxu0 0.0
      %2999 = vmatmul.mubr.f32.gmra.mrb[0].mxu0 %v2785
      %v3000 = vpop.f32.mrb[0].mxu0
      %v3001 = vadd.f32 0.0, %v3000
      %v3002 = vpop.f32.mrb[0].mxu0
      %3003 = vmatprep.mubr.f32.mxu0 0.0
      %3004 = vmatmul.mubr.f32.gmra.mrb[0].mxu0 %v2788
      %v3005 = vpop.f32.mrb[0].mxu0
      %v3006 = vadd.f32 0.0, %v3005
      %v3007 = vpop.f32.mrb[0].mxu0
      %3008 = vmatprep.mubr.f32.mxu0 0.0
      %3009 = vmatmul.mubr.f32.gmra.mrb[0].mxu0 %v2791
      %v3010 = vpop.f32.mrb[0].mxu0
      %v3011 = vadd.f32 0.0, %v3010
      %v3012 = vpop.f32.mrb[0].mxu0
      %3013 = vmatprep.mubr.f32.mxu0 0.0
      %3014 = vmatmul.mubr.f32.gmra.mrb[0].mxu0 %v2794
      %v3015 = vpop.f32.mrb[0].mxu0
      %v3016 = vadd.f32 0.0, %v3015
      %v3017 = vpop.f32.mrb[0].mxu0
      %3018 = vmatprep.mubr.f32.mxu0 0.0
      %3019 = vmatmul.mubr.f32.gmra.mrb[0].mxu0 %v2797
      %v3020 = vpop.f32.mrb[0].mxu0
      %v3021 = vadd.f32 0.0, %v3020
      %v3022 = vpop.f32.mrb[0].mxu0
      %3023 = vmatprep.mubr.f32.mxu0 0.0
      %3024 = vmatmul.mubr.f32.gmra.mrb[0].mxu0 %v2800
      %v3025 = vpop.f32.mrb[0].mxu0
      %v3026 = vadd.f32 0.0, %v3025
      %v3027 = vpop.f32.mrb[0].mxu0
      %3028 = vmatprep.mubr.f32.mxu0 0.0
      %3029 = vmatmul.mubr.f32.gmra.mrb[0].mxu0 %v2803
      %v3030 = vpop.f32.mrb[0].mxu0
      %v3031 = vadd.f32 0.0, %v3030
      %v3032 = vpop.f32.mrb[0].mxu0
      %3033 = vmatprep.mubr.f32.mxu0 0.0
      %3034 = vmatmul.mubr.f32.gmra.mrb[0].mxu0 %v2806
      %v3035 = vpop.f32.mrb[0].mxu0
      %v3036 = vadd.f32 0.0, %v3035
      %v3037 = vpop.f32.mrb[0].mxu0
      %3038 = vmatprep.mubr.f32.mxu0 0.0
      %3039 = vmatmul.mubr.f32.gmra.mrb[0].mxu0 %v2809
      %v3040 = vpop.f32.mrb[0].mxu0
      %v3041 = vadd.f32 0.0, %v3040
      %v3042 = vpop.f32.mrb[0].mxu0
      %3043 = vmatprep.mubr.f32.mxu0 0.0
      %3044 = vmatmul.mubr.f32.gmra.mrb[0].mxu0 %v2812
      %v3045 = vpop.f32.mrb[0].mxu0
      %v3046 = vadd.f32 0.0, %v3045
      %v3047 = vpop.f32.mrb[0].mxu0
      %3048 = vmatprep.mubr.f32.mxu0 0.0
      %3049 = vmatmul.mubr.f32.gmra.mrb[0].mxu0 %v2815
      %v3050 = vpop.f32.mrb[0].mxu0
      %v3051 = vadd.f32 0.0, %v3050
      %v3052 = vpop.f32.mrb[0].mxu0
      %3053 = vmatprep.mubr.f32.mxu0 0.0
      %3054 = vmatmul.mubr.f32.gmra.mrb[0].mxu0 %v2818
      %v3055 = vpop.f32.mrb[0].mxu0
      %v3056 = vadd.f32 0.0, %v3055
      %v3057 = vpop.f32.mrb[0].mxu0
      %3058 = vmatprep.mubr.f32.mxu0 0.0
      %3059 = vmatmul.mubr.f32.gmra.mrb[0].mxu0 %v2821
      %v3060 = vpop.f32.mrb[0].mxu0
      %v3061 = vadd.f32 0.0, %v3060
      %v3062 = vpop.f32.mrb[0].mxu0
      %3063 = vmatprep.mubr.f32.mxu0 0.0
      %3064 = vmatmul.mubr.f32.gmra.mrb[0].mxu0 %v2824
      %v3065 = vpop.f32.mrb[0].mxu0
      %v3066 = vadd.f32 0.0, %v3065
      %v3067 = vpop.f32.mrb[0].mxu0
      %3068 = vmatprep.mubr.f32.mxu0 0.0
      %3069 = vmatmul.mubr.f32.gmra.mrb[0].mxu0 %v2827
      %v3070 = vpop.f32.mrb[0].mxu0
      %v3071 = vadd.f32 0.0, %v3070
      %v3072 = vpop.f32.mrb[0].mxu0
      %3073 = vdwg.mxu0
      %v3074 = vadd.f32 %v2640, %v2896
      %v3075 = vadd.f32 %v2641, %v2901
      %v3076 = vadd.f32 %v2642, %v2906
      %v3077 = vadd.f32 %v2643, %v2911
      %v3078 = vadd.f32 %v2644, %v2916
      %v3079 = vadd.f32 %v2645, %v2921
      %v3080 = vadd.f32 %v2646, %v2926
      %v3081 = vadd.f32 %v2647, %v2931
      %v3082 = vadd.f32 %v2648, %v2936
      %v3083 = vadd.f32 %v2649, %v2941
      %v3084 = vadd.f32 %v2650, %v2946
      %v3085 = vadd.f32 %v2651, %v2951
      %v3086 = vadd.f32 %v2652, %v2956
      %v3087 = vadd.f32 %v2653, %v2961
      %v3088 = vadd.f32 %v2654, %v2966
      %v3089 = vadd.f32 %v2655, %v2971
      %v3090 = vadd.f32 %v2656, %v2976
      %v3091 = vadd.f32 %v2657, %v2981
      %v3092 = vadd.f32 %v2658, %v2986
      %v3093 = vadd.f32 %v2659, %v2991
      %v3094 = vadd.f32 %v2660, %v2996
      %v3095 = vadd.f32 %v2661, %v3001
      %v3096 = vadd.f32 %v2662, %v3006
      %v3097 = vadd.f32 %v2663, %v3011
      %v3098 = vadd.f32 %v2664, %v3016
      %v3099 = vadd.f32 %v2665, %v3021
      %v3100 = vadd.f32 %v2666, %v3026
      %v3101 = vadd.f32 %v2667, %v3031
      %v3102 = vadd.f32 %v2668, %v3036
      %v3103 = vadd.f32 %v2669, %v3041
      %v3104 = vadd.f32 %v2670, %v3046
      %v3105 = vadd.f32 %v2671, %v3051
      %v3106 = vadd.f32 %v2672, %v3056
      %v3107 = vadd.f32 %v2673, %v3061
      %v3108 = vadd.f32 %v2674, %v3066
      %v3109 = vadd.f32 %v2675, %v3071
      %v3110 = vld [vmem:[%s138 + $0x25] sm:$0xff]
      %v3111 = vld [vmem:[%s138 + $0x2d] sm:$0xff]
      %v3112 = vld [vmem:[%s138 + $0x35] sm:$0xff]
      %v3113 = vld [vmem:[%s138 + $0x3d] sm:$0xff]
      %v3114 = vld [vmem:[%s138 + $0x45] sm:$0xff]
      %v3115 = vld [vmem:[%s138 + $0x4d] sm:$0xff]
      %v3116 = vld [vmem:[%s138 + $0x55] sm:$0xff]
      %v3117 = vld [vmem:[%s138 + $0x5d] sm:$0xff]
      %v3118 = vld [vmem:[%s138 + $0x65] sm:$0xff]
      %v3119 = vld [vmem:[%s138 + $0x6d] sm:$0xff]
      %v3120 = vld [vmem:[%s138 + $0x75] sm:$0xff]
      %v3121 = vld [vmem:[%s138 + $0x7d] sm:$0xff]
      %v3122 = vld [vmem:[%s138 + $0x85] sm:$0xff]
      %v3123 = vld [vmem:[%s138 + $0x8d] sm:$0xff]
      %v3124 = vld [vmem:[%s138 + $0x95] sm:$0xff]
      %v3125 = vld [vmem:[%s138 + $0x9d] sm:$0xff]
      %v3126 = vld [vmem:[%s138 + $0xa5] sm:$0xff]
      %v3127 = vld [vmem:[%s138 + $0xad] sm:$0xff]
      %v3128 = vld [vmem:[%s138 + $0xb5] sm:$0xff]
      %v3129 = vld [vmem:[%s138 + $0xbd] sm:$0xff]
      %v3130 = vld [vmem:[%s138 + $0xc5] sm:$0xff]
      %v3131 = vld [vmem:[%s138 + $0xcd] sm:$0xff]
      %v3132 = vld [vmem:[%s138 + $0xd5] sm:$0xff]
      %v3133 = vld [vmem:[%s138 + $0xdd] sm:$0xff]
      %v3134 = vld [vmem:[%s138 + $0xe5] sm:$0xff]
      %v3135 = vld [vmem:[%s138 + $0xed] sm:$0xff]
      %v3136 = vld [vmem:[%s138 + $0xf5] sm:$0xff]
      %v3137 = vld [vmem:[%s138 + $0xfd] sm:$0xff]
      %v3138 = vld [vmem:[%s138 + $0x105] sm:$0xff]
      %v3139 = vld [vmem:[%s138 + $0x10d] sm:$0xff]
      %v3140 = vld [vmem:[%s138 + $0x115] sm:$0xff]
      %v3141 = vld [vmem:[%s138 + $0x11d] sm:$0xff]
      %v3142 = vld [vmem:[%s138 + $0x125] sm:$0xff]
      %v3143 = vld [vmem:[%s138 + $0x12d] sm:$0xff]
      %v3144 = vld [vmem:[%s138 + $0x135] sm:$0xff]
      %v3145 = vld [vmem:[%s138 + $0x13d] sm:$0xff]
      %s3146 = scalar_lea.vmem %s1, 448
      %v3147 = vld [vmem:[%s3146] sm:$0xff]
      %v3148 = vld [vmem:[%s3146 + $0x8] sm:$0xff]
      %v3149 = vld [vmem:[%s3146 + $0x10] sm:$0xff]
      %v3150 = vld [vmem:[%s3146 + $0x18] sm:$0xff]
      %v3151 = vld [vmem:[%s3146 + $0x20] sm:$0xff]
      %v3152 = vld [vmem:[%s3146 + $0x28] sm:$0xff]
      %v3153 = vld [vmem:[%s3146 + $0x30] sm:$0xff]
      %v3154 = vld [vmem:[%s3146 + $0x38] sm:$0xff]
      %v3156 = vsel %vm233, %v3110, 0
      %v3159 = vsel %vm233, %v3111, 0
      %v3162 = vsel %vm233, %v3112, 0
      %v3165 = vsel %vm233, %v3113, 0
      %v3168 = vsel %vm233, %v3114, 0
      %v3171 = vsel %vm233, %v3115, 0
      %v3174 = vsel %vm233, %v3116, 0
      %v3177 = vsel %vm233, %v3117, 0
      %v3180 = vsel %vm233, %v3118, 0
      %v3183 = vsel %vm233, %v3119, 0
      %v3186 = vsel %vm233, %v3120, 0
      %v3189 = vsel %vm233, %v3121, 0
      %v3192 = vsel %vm233, %v3122, 0
      %v3195 = vsel %vm233, %v3123, 0
      %v3198 = vsel %vm233, %v3124, 0
      %v3201 = vsel %vm233, %v3125, 0
      %v3204 = vsel %vm233, %v3126, 0
      %v3207 = vsel %vm233, %v3127, 0
      %v3210 = vsel %vm233, %v3128, 0
      %v3213 = vsel %vm233, %v3129, 0
      %v3216 = vsel %vm233, %v3130, 0
      %v3219 = vsel %vm233, %v3131, 0
      %v3222 = vsel %vm233, %v3132, 0
      %v3225 = vsel %vm233, %v3133, 0
      %v3228 = vsel %vm233, %v3134, 0
      %v3231 = vsel %vm233, %v3135, 0
      %v3234 = vsel %vm233, %v3136, 0
      %v3237 = vsel %vm233, %v3137, 0
      %v3240 = vsel %vm233, %v3138, 0
      %v3243 = vsel %vm233, %v3139, 0
      %v3246 = vsel %vm233, %v3140, 0
      %v3249 = vsel %vm233, %v3141, 0
      %v3252 = vsel %vm233, %v3142, 0
      %v3255 = vsel %vm233, %v3143, 0
      %v3258 = vsel %vm233, %v3144, 0
      %v3261 = vsel %vm233, %v3145, 0
      %3263 = vmatprep.subr.mxu0 0.0
      %3264 = vmatpush1.msra.mxu0 %v3147
      %3265 = vmatprep.subr.mxu0 0.0
      %3266 = vmatpush1.msra.mxu0 %v3148
      %3267 = vmatprep.subr.mxu0 0.0
      %3268 = vmatpush1.msra.mxu0 %v3149
      %3269 = vmatprep.subr.mxu0 0.0
      %3270 = vmatpush1.msra.mxu0 %v3150
      %3271 = vmatprep.subr.mxu0 0.0
      %3272 = vmatpush1.msra.mxu0 %v3151
      %3273 = vmatprep.subr.mxu0 0.0
      %3274 = vmatpush1.msra.mxu0 %v3152
      %3275 = vmatprep.subr.mxu0 0.0
      %3276 = vmatpush1.msra.mxu0 %v3153
      %3277 = vmatprep.subr.mxu0 0.0
      %3278 = vmatpush1.msra.mxu0 %v3154
      %3279 = vmatprep.subr.mxu0 0.0
      %3280 = vmatpush1.msra.mxu0 0.0
      %3281 = vmatprep.subr.mxu0 0.0
      %3282 = vmatpush1.msra.mxu0 0.0
      %3283 = vmatprep.subr.mxu0 0.0
      %3284 = vmatpush1.msra.mxu0 0.0
      %3285 = vmatprep.subr.mxu0 0.0
      %3286 = vmatpush1.msra.mxu0 0.0
      %3287 = vmatprep.subr.mxu0 0.0
      %3288 = vmatpush1.msra.mxu0 0.0
      %3289 = vmatprep.subr.mxu0 0.0
      %3290 = vmatpush1.msra.mxu0 0.0
      %3291 = vmatprep.subr.mxu0 0.0
      %3292 = vmatpush1.msra.mxu0 0.0
      %3293 = vmatprep.subr.mxu0 0.0
      %3294 = vmatpush1.msra.mxu0 0.0
      %3295 = vmatprep.subr.mxu0 0.0
      %3296 = vmatpush1.msra.mxu0 0.0
      %3297 = vmatprep.subr.mxu0 0.0
      %3298 = vmatpush1.msra.mxu0 0.0
      %3299 = vmatprep.subr.mxu0 0.0
      %3300 = vmatpush1.msra.mxu0 0.0
      %3301 = vmatprep.subr.mxu0 0.0
      %3302 = vmatpush1.msra.mxu0 0.0
      %3303 = vmatprep.subr.mxu0 0.0
      %3304 = vmatpush1.msra.mxu0 0.0
      %3305 = vmatprep.subr.mxu0 0.0
      %3306 = vmatpush1.msra.mxu0 0.0
      %3307 = vmatprep.subr.mxu0 0.0
      %3308 = vmatpush1.msra.mxu0 0.0
      %3309 = vmatprep.subr.mxu0 0.0
      %3310 = vmatpush1.msra.mxu0 0.0
      %3311 = vmatprep.subr.mxu0 0.0
      %3312 = vmatpush1.msra.mxu0 0.0
      %3313 = vmatprep.subr.mxu0 0.0
      %3314 = vmatpush1.msra.mxu0 0.0
      %3315 = vmatprep.subr.mxu0 0.0
      %3316 = vmatpush1.msra.mxu0 0.0
      %3317 = vmatprep.subr.mxu0 0.0
      %3318 = vmatpush1.msra.mxu0 0.0
      %3319 = vmatprep.subr.mxu0 0.0
      %3320 = vmatpush1.msra.mxu0 0.0
      %3321 = vmatprep.subr.mxu0 0.0
      %3322 = vmatpush1.msra.mxu0 0.0
      %3323 = vmatprep.subr.mxu0 0.0
      %3324 = vmatpush1.msra.mxu0 0.0
      %3325 = vmatprep.subr.mxu0 0.0
      %3326 = vmatpush1.msra.mxu0 0.0
      %3327 = vmatprep.mubr.f32.mxu0 0.0
      %3328 = vmatmul.mubr.f32.gmra.mrb[0].mxu0 %v3156
      %v3329 = vpop.f32.mrb[0].mxu0
      %v3330 = vadd.f32 0.0, %v3329
      %v3331 = vpop.f32.mrb[0].mxu0
      %3332 = vmatprep.mubr.f32.mxu0 0.0
      %3333 = vmatmul.mubr.f32.gmra.mrb[0].mxu0 %v3159
      %v3334 = vpop.f32.mrb[0].mxu0
      %v3335 = vadd.f32 0.0, %v3334
      %v3336 = vpop.f32.mrb[0].mxu0
      %3337 = vmatprep.mubr.f32.mxu0 0.0
      %3338 = vmatmul.mubr.f32.gmra.mrb[0].mxu0 %v3162
      %v3339 = vpop.f32.mrb[0].mxu0
      %v3340 = vadd.f32 0.0, %v3339
      %v3341 = vpop.f32.mrb[0].mxu0
      %3342 = vmatprep.mubr.f32.mxu0 0.0
      %3343 = vmatmul.mubr.f32.gmra.mrb[0].mxu0 %v3165
      %v3344 = vpop.f32.mrb[0].mxu0
      %v3345 = vadd.f32 0.0, %v3344
      %v3346 = vpop.f32.mrb[0].mxu0
      %3347 = vmatprep.mubr.f32.mxu0 0.0
      %3348 = vmatmul.mubr.f32.gmra.mrb[0].mxu0 %v3168
      %v3349 = vpop.f32.mrb[0].mxu0
      %v3350 = vadd.f32 0.0, %v3349
      %v3351 = vpop.f32.mrb[0].mxu0
      %3352 = vmatprep.mubr.f32.mxu0 0.0
      %3353 = vmatmul.mubr.f32.gmra.mrb[0].mxu0 %v3171
      %v3354 = vpop.f32.mrb[0].mxu0
      %v3355 = vadd.f32 0.0, %v3354
      %v3356 = vpop.f32.mrb[0].mxu0
      %3357 = vmatprep.mubr.f32.mxu0 0.0
      %3358 = vmatmul.mubr.f32.gmra.mrb[0].mxu0 %v3174
      %v3359 = vpop.f32.mrb[0].mxu0
      %v3360 = vadd.f32 0.0, %v3359
      %v3361 = vpop.f32.mrb[0].mxu0
      %3362 = vmatprep.mubr.f32.mxu0 0.0
      %3363 = vmatmul.mubr.f32.gmra.mrb[0].mxu0 %v3177
      %v3364 = vpop.f32.mrb[0].mxu0
      %v3365 = vadd.f32 0.0, %v3364
      %v3366 = vpop.f32.mrb[0].mxu0
      %3367 = vmatprep.mubr.f32.mxu0 0.0
      %3368 = vmatmul.mubr.f32.gmra.mrb[0].mxu0 %v3180
      %v3369 = vpop.f32.mrb[0].mxu0
      %v3370 = vadd.f32 0.0, %v3369
      %v3371 = vpop.f32.mrb[0].mxu0
      %3372 = vmatprep.mubr.f32.mxu0 0.0
      %3373 = vmatmul.mubr.f32.gmra.mrb[0].mxu0 %v3183
      %v3374 = vpop.f32.mrb[0].mxu0
      %v3375 = vadd.f32 0.0, %v3374
      %v3376 = vpop.f32.mrb[0].mxu0
      %3377 = vmatprep.mubr.f32.mxu0 0.0
      %3378 = vmatmul.mubr.f32.gmra.mrb[0].mxu0 %v3186
      %v3379 = vpop.f32.mrb[0].mxu0
      %v3380 = vadd.f32 0.0, %v3379
      %v3381 = vpop.f32.mrb[0].mxu0
      %3382 = vmatprep.mubr.f32.mxu0 0.0
      %3383 = vmatmul.mubr.f32.gmra.mrb[0].mxu0 %v3189
      %v3384 = vpop.f32.mrb[0].mxu0
      %v3385 = vadd.f32 0.0, %v3384
      %v3386 = vpop.f32.mrb[0].mxu0
      %3387 = vmatprep.mubr.f32.mxu0 0.0
      %3388 = vmatmul.mubr.f32.gmra.mrb[0].mxu0 %v3192
      %v3389 = vpop.f32.mrb[0].mxu0
      %v3390 = vadd.f32 0.0, %v3389
      %v3391 = vpop.f32.mrb[0].mxu0
      %3392 = vmatprep.mubr.f32.mxu0 0.0
      %3393 = vmatmul.mubr.f32.gmra.mrb[0].mxu0 %v3195
      %v3394 = vpop.f32.mrb[0].mxu0
      %v3395 = vadd.f32 0.0, %v3394
      %v3396 = vpop.f32.mrb[0].mxu0
      %3397 = vmatprep.mubr.f32.mxu0 0.0
      %3398 = vmatmul.mubr.f32.gmra.mrb[0].mxu0 %v3198
      %v3399 = vpop.f32.mrb[0].mxu0
      %v3400 = vadd.f32 0.0, %v3399
      %v3401 = vpop.f32.mrb[0].mxu0
      %3402 = vmatprep.mubr.f32.mxu0 0.0
      %3403 = vmatmul.mubr.f32.gmra.mrb[0].mxu0 %v3201
      %v3404 = vpop.f32.mrb[0].mxu0
      %v3405 = vadd.f32 0.0, %v3404
      %v3406 = vpop.f32.mrb[0].mxu0
      %3407 = vmatprep.mubr.f32.mxu0 0.0
      %3408 = vmatmul.mubr.f32.gmra.mrb[0].mxu0 %v3204
      %v3409 = vpop.f32.mrb[0].mxu0
      %v3410 = vadd.f32 0.0, %v3409
      %v3411 = vpop.f32.mrb[0].mxu0
      %3412 = vmatprep.mubr.f32.mxu0 0.0
      %3413 = vmatmul.mubr.f32.gmra.mrb[0].mxu0 %v3207
      %v3414 = vpop.f32.mrb[0].mxu0
      %v3415 = vadd.f32 0.0, %v3414
      %v3416 = vpop.f32.mrb[0].mxu0
      %3417 = vmatprep.mubr.f32.mxu0 0.0
      %3418 = vmatmul.mubr.f32.gmra.mrb[0].mxu0 %v3210
      %v3419 = vpop.f32.mrb[0].mxu0
      %v3420 = vadd.f32 0.0, %v3419
      %v3421 = vpop.f32.mrb[0].mxu0
      %3422 = vmatprep.mubr.f32.mxu0 0.0
      %3423 = vmatmul.mubr.f32.gmra.mrb[0].mxu0 %v3213
      %v3424 = vpop.f32.mrb[0].mxu0
      %v3425 = vadd.f32 0.0, %v3424
      %v3426 = vpop.f32.mrb[0].mxu0
      %3427 = vmatprep.mubr.f32.mxu0 0.0
      %3428 = vmatmul.mubr.f32.gmra.mrb[0].mxu0 %v3216
      %v3429 = vpop.f32.mrb[0].mxu0
      %v3430 = vadd.f32 0.0, %v3429
      %v3431 = vpop.f32.mrb[0].mxu0
      %3432 = vmatprep.mubr.f32.mxu0 0.0
      %3433 = vmatmul.mubr.f32.gmra.mrb[0].mxu0 %v3219
      %v3434 = vpop.f32.mrb[0].mxu0
      %v3435 = vadd.f32 0.0, %v3434
      %v3436 = vpop.f32.mrb[0].mxu0
      %3437 = vmatprep.mubr.f32.mxu0 0.0
      %3438 = vmatmul.mubr.f32.gmra.mrb[0].mxu0 %v3222
      %v3439 = vpop.f32.mrb[0].mxu0
      %v3440 = vadd.f32 0.0, %v3439
      %v3441 = vpop.f32.mrb[0].mxu0
      %3442 = vmatprep.mubr.f32.mxu0 0.0
      %3443 = vmatmul.mubr.f32.gmra.mrb[0].mxu0 %v3225
      %v3444 = vpop.f32.mrb[0].mxu0
      %v3445 = vadd.f32 0.0, %v3444
      %v3446 = vpop.f32.mrb[0].mxu0
      %3447 = vmatprep.mubr.f32.mxu0 0.0
      %3448 = vmatmul.mubr.f32.gmra.mrb[0].mxu0 %v3228
      %v3449 = vpop.f32.mrb[0].mxu0
      %v3450 = vadd.f32 0.0, %v3449
      %v3451 = vpop.f32.mrb[0].mxu0
      %3452 = vmatprep.mubr.f32.mxu0 0.0
      %3453 = vmatmul.mubr.f32.gmra.mrb[0].mxu0 %v3231
      %v3454 = vpop.f32.mrb[0].mxu0
      %v3455 = vadd.f32 0.0, %v3454
      %v3456 = vpop.f32.mrb[0].mxu0
      %3457 = vmatprep.mubr.f32.mxu0 0.0
      %3458 = vmatmul.mubr.f32.gmra.mrb[0].mxu0 %v3234
      %v3459 = vpop.f32.mrb[0].mxu0
      %v3460 = vadd.f32 0.0, %v3459
      %v3461 = vpop.f32.mrb[0].mxu0
      %3462 = vmatprep.mubr.f32.mxu0 0.0
      %3463 = vmatmul.mubr.f32.gmra.mrb[0].mxu0 %v3237
      %v3464 = vpop.f32.mrb[0].mxu0
      %v3465 = vadd.f32 0.0, %v3464
      %v3466 = vpop.f32.mrb[0].mxu0
      %3467 = vmatprep.mubr.f32.mxu0 0.0
      %3468 = vmatmul.mubr.f32.gmra.mrb[0].mxu0 %v3240
      %v3469 = vpop.f32.mrb[0].mxu0
      %v3470 = vadd.f32 0.0, %v3469
      %v3471 = vpop.f32.mrb[0].mxu0
      %3472 = vmatprep.mubr.f32.mxu0 0.0
      %3473 = vmatmul.mubr.f32.gmra.mrb[0].mxu0 %v3243
      %v3474 = vpop.f32.mrb[0].mxu0
      %v3475 = vadd.f32 0.0, %v3474
      %v3476 = vpop.f32.mrb[0].mxu0
      %3477 = vmatprep.mubr.f32.mxu0 0.0
      %3478 = vmatmul.mubr.f32.gmra.mrb[0].mxu0 %v3246
      %v3479 = vpop.f32.mrb[0].mxu0
      %v3480 = vadd.f32 0.0, %v3479
      %v3481 = vpop.f32.mrb[0].mxu0
      %3482 = vmatprep.mubr.f32.mxu0 0.0
      %3483 = vmatmul.mubr.f32.gmra.mrb[0].mxu0 %v3249
      %v3484 = vpop.f32.mrb[0].mxu0
      %v3485 = vadd.f32 0.0, %v3484
      %v3486 = vpop.f32.mrb[0].mxu0
      %3487 = vmatprep.mubr.f32.mxu0 0.0
      %3488 = vmatmul.mubr.f32.gmra.mrb[0].mxu0 %v3252
      %v3489 = vpop.f32.mrb[0].mxu0
      %v3490 = vadd.f32 0.0, %v3489
      %v3491 = vpop.f32.mrb[0].mxu0
      %3492 = vmatprep.mubr.f32.mxu0 0.0
      %3493 = vmatmul.mubr.f32.gmra.mrb[0].mxu0 %v3255
      %v3494 = vpop.f32.mrb[0].mxu0
      %v3495 = vadd.f32 0.0, %v3494
      %v3496 = vpop.f32.mrb[0].mxu0
      %3497 = vmatprep.mubr.f32.mxu0 0.0
      %3498 = vmatmul.mubr.f32.gmra.mrb[0].mxu0 %v3258
      %v3499 = vpop.f32.mrb[0].mxu0
      %v3500 = vadd.f32 0.0, %v3499
      %v3501 = vpop.f32.mrb[0].mxu0
      %3502 = vmatprep.mubr.f32.mxu0 0.0
      %3503 = vmatmul.mubr.f32.gmra.mrb[0].mxu0 %v3261
      %v3504 = vpop.f32.mrb[0].mxu0
      %v3505 = vadd.f32 0.0, %v3504
      %v3506 = vpop.f32.mrb[0].mxu0
      %3507 = vdwg.mxu0
      %v3508 = vadd.f32 %v3074, %v3330
      %v3509 = vadd.f32 %v3075, %v3335
      %v3510 = vadd.f32 %v3076, %v3340
      %v3511 = vadd.f32 %v3077, %v3345
      %v3512 = vadd.f32 %v3078, %v3350
      %v3513 = vadd.f32 %v3079, %v3355
      %v3514 = vadd.f32 %v3080, %v3360
      %v3515 = vadd.f32 %v3081, %v3365
      %v3516 = vadd.f32 %v3082, %v3370
      %v3517 = vadd.f32 %v3083, %v3375
      %v3518 = vadd.f32 %v3084, %v3380
      %v3519 = vadd.f32 %v3085, %v3385
      %v3520 = vadd.f32 %v3086, %v3390
      %v3521 = vadd.f32 %v3087, %v3395
      %v3522 = vadd.f32 %v3088, %v3400
      %v3523 = vadd.f32 %v3089, %v3405
      %v3524 = vadd.f32 %v3090, %v3410
      %v3525 = vadd.f32 %v3091, %v3415
      %v3526 = vadd.f32 %v3092, %v3420
      %v3527 = vadd.f32 %v3093, %v3425
      %v3528 = vadd.f32 %v3094, %v3430
      %v3529 = vadd.f32 %v3095, %v3435
      %v3530 = vadd.f32 %v3096, %v3440
      %v3531 = vadd.f32 %v3097, %v3445
      %v3532 = vadd.f32 %v3098, %v3450
      %v3533 = vadd.f32 %v3099, %v3455
      %v3534 = vadd.f32 %v3100, %v3460
      %v3535 = vadd.f32 %v3101, %v3465
      %v3536 = vadd.f32 %v3102, %v3470
      %v3537 = vadd.f32 %v3103, %v3475
      %v3538 = vadd.f32 %v3104, %v3480
      %v3539 = vadd.f32 %v3105, %v3485
      %v3540 = vadd.f32 %v3106, %v3490
      %v3541 = vadd.f32 %v3107, %v3495
      %v3542 = vadd.f32 %v3108, %v3500
      %v3543 = vadd.f32 %v3109, %v3505
      %v3544 = vld [vmem:[%s138 + $0x26] sm:$0xff]
      %v3545 = vld [vmem:[%s138 + $0x2e] sm:$0xff]
      %v3546 = vld [vmem:[%s138 + $0x36] sm:$0xff]
      %v3547 = vld [vmem:[%s138 + $0x3e] sm:$0xff]
      %v3548 = vld [vmem:[%s138 + $0x46] sm:$0xff]
      %v3549 = vld [vmem:[%s138 + $0x4e] sm:$0xff]
      %v3550 = vld [vmem:[%s138 + $0x56] sm:$0xff]
      %v3551 = vld [vmem:[%s138 + $0x5e] sm:$0xff]
      %v3552 = vld [vmem:[%s138 + $0x66] sm:$0xff]
      %v3553 = vld [vmem:[%s138 + $0x6e] sm:$0xff]
      %v3554 = vld [vmem:[%s138 + $0x76] sm:$0xff]
      %v3555 = vld [vmem:[%s138 + $0x7e] sm:$0xff]
      %v3556 = vld [vmem:[%s138 + $0x86] sm:$0xff]
      %v3557 = vld [vmem:[%s138 + $0x8e] sm:$0xff]
      %v3558 = vld [vmem:[%s138 + $0x96] sm:$0xff]
      %v3559 = vld [vmem:[%s138 + $0x9e] sm:$0xff]
      %v3560 = vld [vmem:[%s138 + $0xa6] sm:$0xff]
      %v3561 = vld [vmem:[%s138 + $0xae] sm:$0xff]
      %v3562 = vld [vmem:[%s138 + $0xb6] sm:$0xff]
      %v3563 = vld [vmem:[%s138 + $0xbe] sm:$0xff]
      %v3564 = vld [vmem:[%s138 + $0xc6] sm:$0xff]
      %v3565 = vld [vmem:[%s138 + $0xce] sm:$0xff]
      %v3566 = vld [vmem:[%s138 + $0xd6] sm:$0xff]
      %v3567 = vld [vmem:[%s138 + $0xde] sm:$0xff]
      %v3568 = vld [vmem:[%s138 + $0xe6] sm:$0xff]
      %v3569 = vld [vmem:[%s138 + $0xee] sm:$0xff]
      %v3570 = vld [vmem:[%s138 + $0xf6] sm:$0xff]
      %v3571 = vld [vmem:[%s138 + $0xfe] sm:$0xff]
      %v3572 = vld [vmem:[%s138 + $0x106] sm:$0xff]
      %v3573 = vld [vmem:[%s138 + $0x10e] sm:$0xff]
      %v3574 = vld [vmem:[%s138 + $0x116] sm:$0xff]
      %v3575 = vld [vmem:[%s138 + $0x11e] sm:$0xff]
      %v3576 = vld [vmem:[%s138 + $0x126] sm:$0xff]
      %v3577 = vld [vmem:[%s138 + $0x12e] sm:$0xff]
      %v3578 = vld [vmem:[%s138 + $0x136] sm:$0xff]
      %v3579 = vld [vmem:[%s138 + $0x13e] sm:$0xff]
      %s3580 = scalar_lea.vmem %s1, 512
      %v3581 = vld [vmem:[%s3580] sm:$0xff]
      %v3582 = vld [vmem:[%s3580 + $0x8] sm:$0xff]
      %v3583 = vld [vmem:[%s3580 + $0x10] sm:$0xff]
      %v3584 = vld [vmem:[%s3580 + $0x18] sm:$0xff]
      %v3585 = vld [vmem:[%s3580 + $0x20] sm:$0xff]
      %v3586 = vld [vmem:[%s3580 + $0x28] sm:$0xff]
      %v3587 = vld [vmem:[%s3580 + $0x30] sm:$0xff]
      %v3588 = vld [vmem:[%s3580 + $0x38] sm:$0xff]
      %v3590 = vsel %vm233, %v3544, 0
      %v3593 = vsel %vm233, %v3545, 0
      %v3596 = vsel %vm233, %v3546, 0
      %v3599 = vsel %vm233, %v3547, 0
      %v3602 = vsel %vm233, %v3548, 0
      %v3605 = vsel %vm233, %v3549, 0
      %v3608 = vsel %vm233, %v3550, 0
      %v3611 = vsel %vm233, %v3551, 0
      %v3614 = vsel %vm233, %v3552, 0
      %v3617 = vsel %vm233, %v3553, 0
      %v3620 = vsel %vm233, %v3554, 0
      %v3623 = vsel %vm233, %v3555, 0
      %v3626 = vsel %vm233, %v3556, 0
      %v3629 = vsel %vm233, %v3557, 0
      %v3632 = vsel %vm233, %v3558, 0
      %v3635 = vsel %vm233, %v3559, 0
      %v3638 = vsel %vm233, %v3560, 0
      %v3641 = vsel %vm233, %v3561, 0
      %v3644 = vsel %vm233, %v3562, 0
      %v3647 = vsel %vm233, %v3563, 0
      %v3650 = vsel %vm233, %v3564, 0
      %v3653 = vsel %vm233, %v3565, 0
      %v3656 = vsel %vm233, %v3566, 0
      %v3659 = vsel %vm233, %v3567, 0
      %v3662 = vsel %vm233, %v3568, 0
      %v3665 = vsel %vm233, %v3569, 0
      %v3668 = vsel %vm233, %v3570, 0
      %v3671 = vsel %vm233, %v3571, 0
      %v3674 = vsel %vm233, %v3572, 0
      %v3677 = vsel %vm233, %v3573, 0
      %v3680 = vsel %vm233, %v3574, 0
      %v3683 = vsel %vm233, %v3575, 0
      %v3686 = vsel %vm233, %v3576, 0
      %v3689 = vsel %vm233, %v3577, 0
      %v3692 = vsel %vm233, %v3578, 0
      %v3695 = vsel %vm233, %v3579, 0
      %3697 = vmatprep.subr.mxu0 0.0
      %3698 = vmatpush1.msra.mxu0 %v3581
      %3699 = vmatprep.subr.mxu0 0.0
      %3700 = vmatpush1.msra.mxu0 %v3582
      %3701 = vmatprep.subr.mxu0 0.0
      %3702 = vmatpush1.msra.mxu0 %v3583
      %3703 = vmatprep.subr.mxu0 0.0
      %3704 = vmatpush1.msra.mxu0 %v3584
      %3705 = vmatprep.subr.mxu0 0.0
      %3706 = vmatpush1.msra.mxu0 %v3585
      %3707 = vmatprep.subr.mxu0 0.0
      %3708 = vmatpush1.msra.mxu0 %v3586
      %3709 = vmatprep.subr.mxu0 0.0
      %3710 = vmatpush1.msra.mxu0 %v3587
      %3711 = vmatprep.subr.mxu0 0.0
      %3712 = vmatpush1.msra.mxu0 %v3588
      %3713 = vmatprep.subr.mxu0 0.0
      %3714 = vmatpush1.msra.mxu0 0.0
      %3715 = vmatprep.subr.mxu0 0.0
      %3716 = vmatpush1.msra.mxu0 0.0
      %3717 = vmatprep.subr.mxu0 0.0
      %3718 = vmatpush1.msra.mxu0 0.0
      %3719 = vmatprep.subr.mxu0 0.0
      %3720 = vmatpush1.msra.mxu0 0.0
      %3721 = vmatprep.subr.mxu0 0.0
      %3722 = vmatpush1.msra.mxu0 0.0
      %3723 = vmatprep.subr.mxu0 0.0
      %3724 = vmatpush1.msra.mxu0 0.0
      %3725 = vmatprep.subr.mxu0 0.0
      %3726 = vmatpush1.msra.mxu0 0.0
      %3727 = vmatprep.subr.mxu0 0.0
      %3728 = vmatpush1.msra.mxu0 0.0
      %3729 = vmatprep.subr.mxu0 0.0
      %3730 = vmatpush1.msra.mxu0 0.0
      %3731 = vmatprep.subr.mxu0 0.0
      %3732 = vmatpush1.msra.mxu0 0.0
      %3733 = vmatprep.subr.mxu0 0.0
      %3734 = vmatpush1.msra.mxu0 0.0
      %3735 = vmatprep.subr.mxu0 0.0
      %3736 = vmatpush1.msra.mxu0 0.0
      %3737 = vmatprep.subr.mxu0 0.0
      %3738 = vmatpush1.msra.mxu0 0.0
      %3739 = vmatprep.subr.mxu0 0.0
      %3740 = vmatpush1.msra.mxu0 0.0
      %3741 = vmatprep.subr.mxu0 0.0
      %3742 = vmatpush1.msra.mxu0 0.0
      %3743 = vmatprep.subr.mxu0 0.0
      %3744 = vmatpush1.msra.mxu0 0.0
      %3745 = vmatprep.subr.mxu0 0.0
      %3746 = vmatpush1.msra.mxu0 0.0
      %3747 = vmatprep.subr.mxu0 0.0
      %3748 = vmatpush1.msra.mxu0 0.0
      %3749 = vmatprep.subr.mxu0 0.0
      %3750 = vmatpush1.msra.mxu0 0.0
      %3751 = vmatprep.subr.mxu0 0.0
      %3752 = vmatpush1.msra.mxu0 0.0
      %3753 = vmatprep.subr.mxu0 0.0
      %3754 = vmatpush1.msra.mxu0 0.0
      %3755 = vmatprep.subr.mxu0 0.0
      %3756 = vmatpush1.msra.mxu0 0.0
      %3757 = vmatprep.subr.mxu0 0.0
      %3758 = vmatpush1.msra.mxu0 0.0
      %3759 = vmatprep.subr.mxu0 0.0
      %3760 = vmatpush1.msra.mxu0 0.0
      %3761 = vmatprep.mubr.f32.mxu0 0.0
      %3762 = vmatmul.mubr.f32.gmra.mrb[0].mxu0 %v3590
      %v3763 = vpop.f32.mrb[0].mxu0
      %v3764 = vadd.f32 0.0, %v3763
      %v3765 = vpop.f32.mrb[0].mxu0
      %3766 = vmatprep.mubr.f32.mxu0 0.0
      %3767 = vmatmul.mubr.f32.gmra.mrb[0].mxu0 %v3593
      %v3768 = vpop.f32.mrb[0].mxu0
      %v3769 = vadd.f32 0.0, %v3768
      %v3770 = vpop.f32.mrb[0].mxu0
      %3771 = vmatprep.mubr.f32.mxu0 0.0
      %3772 = vmatmul.mubr.f32.gmra.mrb[0].mxu0 %v3596
      %v3773 = vpop.f32.mrb[0].mxu0
      %v3774 = vadd.f32 0.0, %v3773
      %v3775 = vpop.f32.mrb[0].mxu0
      %3776 = vmatprep.mubr.f32.mxu0 0.0
      %3777 = vmatmul.mubr.f32.gmra.mrb[0].mxu0 %v3599
      %v3778 = vpop.f32.mrb[0].mxu0
      %v3779 = vadd.f32 0.0, %v3778
      %v3780 = vpop.f32.mrb[0].mxu0
      %3781 = vmatprep.mubr.f32.mxu0 0.0
      %3782 = vmatmul.mubr.f32.gmra.mrb[0].mxu0 %v3602
      %v3783 = vpop.f32.mrb[0].mxu0
      %v3784 = vadd.f32 0.0, %v3783
      %v3785 = vpop.f32.mrb[0].mxu0
      %3786 = vmatprep.mubr.f32.mxu0 0.0
      %3787 = vmatmul.mubr.f32.gmra.mrb[0].mxu0 %v3605
      %v3788 = vpop.f32.mrb[0].mxu0
      %v3789 = vadd.f32 0.0, %v3788
      %v3790 = vpop.f32.mrb[0].mxu0
      %3791 = vmatprep.mubr.f32.mxu0 0.0
      %3792 = vmatmul.mubr.f32.gmra.mrb[0].mxu0 %v3608
      %v3793 = vpop.f32.mrb[0].mxu0
      %v3794 = vadd.f32 0.0, %v3793
      %v3795 = vpop.f32.mrb[0].mxu0
      %3796 = vmatprep.mubr.f32.mxu0 0.0
      %3797 = vmatmul.mubr.f32.gmra.mrb[0].mxu0 %v3611
      %v3798 = vpop.f32.mrb[0].mxu0
      %v3799 = vadd.f32 0.0, %v3798
      %v3800 = vpop.f32.mrb[0].mxu0
      %3801 = vmatprep.mubr.f32.mxu0 0.0
      %3802 = vmatmul.mubr.f32.gmra.mrb[0].mxu0 %v3614
      %v3803 = vpop.f32.mrb[0].mxu0
      %v3804 = vadd.f32 0.0, %v3803
      %v3805 = vpop.f32.mrb[0].mxu0
      %3806 = vmatprep.mubr.f32.mxu0 0.0
      %3807 = vmatmul.mubr.f32.gmra.mrb[0].mxu0 %v3617
      %v3808 = vpop.f32.mrb[0].mxu0
      %v3809 = vadd.f32 0.0, %v3808
      %v3810 = vpop.f32.mrb[0].mxu0
      %3811 = vmatprep.mubr.f32.mxu0 0.0
      %3812 = vmatmul.mubr.f32.gmra.mrb[0].mxu0 %v3620
      %v3813 = vpop.f32.mrb[0].mxu0
      %v3814 = vadd.f32 0.0, %v3813
      %v3815 = vpop.f32.mrb[0].mxu0
      %3816 = vmatprep.mubr.f32.mxu0 0.0
      %3817 = vmatmul.mubr.f32.gmra.mrb[0].mxu0 %v3623
      %v3818 = vpop.f32.mrb[0].mxu0
      %v3819 = vadd.f32 0.0, %v3818
      %v3820 = vpop.f32.mrb[0].mxu0
      %3821 = vmatprep.mubr.f32.mxu0 0.0
      %3822 = vmatmul.mubr.f32.gmra.mrb[0].mxu0 %v3626
      %v3823 = vpop.f32.mrb[0].mxu0
      %v3824 = vadd.f32 0.0, %v3823
      %v3825 = vpop.f32.mrb[0].mxu0
      %3826 = vmatprep.mubr.f32.mxu0 0.0
      %3827 = vmatmul.mubr.f32.gmra.mrb[0].mxu0 %v3629
      %v3828 = vpop.f32.mrb[0].mxu0
      %v3829 = vadd.f32 0.0, %v3828
      %v3830 = vpop.f32.mrb[0].mxu0
      %3831 = vmatprep.mubr.f32.mxu0 0.0
      %3832 = vmatmul.mubr.f32.gmra.mrb[0].mxu0 %v3632
      %v3833 = vpop.f32.mrb[0].mxu0
      %v3834 = vadd.f32 0.0, %v3833
      %v3835 = vpop.f32.mrb[0].mxu0
      %3836 = vmatprep.mubr.f32.mxu0 0.0
      %3837 = vmatmul.mubr.f32.gmra.mrb[0].mxu0 %v3635
      %v3838 = vpop.f32.mrb[0].mxu0
      %v3839 = vadd.f32 0.0, %v3838
      %v3840 = vpop.f32.mrb[0].mxu0
      %3841 = vmatprep.mubr.f32.mxu0 0.0
      %3842 = vmatmul.mubr.f32.gmra.mrb[0].mxu0 %v3638
      %v3843 = vpop.f32.mrb[0].mxu0
      %v3844 = vadd.f32 0.0, %v3843
      %v3845 = vpop.f32.mrb[0].mxu0
      %3846 = vmatprep.mubr.f32.mxu0 0.0
      %3847 = vmatmul.mubr.f32.gmra.mrb[0].mxu0 %v3641
      %v3848 = vpop.f32.mrb[0].mxu0
      %v3849 = vadd.f32 0.0, %v3848
      %v3850 = vpop.f32.mrb[0].mxu0
      %3851 = vmatprep.mubr.f32.mxu0 0.0
      %3852 = vmatmul.mubr.f32.gmra.mrb[0].mxu0 %v3644
      %v3853 = vpop.f32.mrb[0].mxu0
      %v3854 = vadd.f32 0.0, %v3853
      %v3855 = vpop.f32.mrb[0].mxu0
      %3856 = vmatprep.mubr.f32.mxu0 0.0
      %3857 = vmatmul.mubr.f32.gmra.mrb[0].mxu0 %v3647
      %v3858 = vpop.f32.mrb[0].mxu0
      %v3859 = vadd.f32 0.0, %v3858
      %v3860 = vpop.f32.mrb[0].mxu0
      %3861 = vmatprep.mubr.f32.mxu0 0.0
      %3862 = vmatmul.mubr.f32.gmra.mrb[0].mxu0 %v3650
      %v3863 = vpop.f32.mrb[0].mxu0
      %v3864 = vadd.f32 0.0, %v3863
      %v3865 = vpop.f32.mrb[0].mxu0
      %3866 = vmatprep.mubr.f32.mxu0 0.0
      %3867 = vmatmul.mubr.f32.gmra.mrb[0].mxu0 %v3653
      %v3868 = vpop.f32.mrb[0].mxu0
      %v3869 = vadd.f32 0.0, %v3868
      %v3870 = vpop.f32.mrb[0].mxu0
      %3871 = vmatprep.mubr.f32.mxu0 0.0
      %3872 = vmatmul.mubr.f32.gmra.mrb[0].mxu0 %v3656
      %v3873 = vpop.f32.mrb[0].mxu0
      %v3874 = vadd.f32 0.0, %v3873
      %v3875 = vpop.f32.mrb[0].mxu0
      %3876 = vmatprep.mubr.f32.mxu0 0.0
      %3877 = vmatmul.mubr.f32.gmra.mrb[0].mxu0 %v3659
      %v3878 = vpop.f32.mrb[0].mxu0
      %v3879 = vadd.f32 0.0, %v3878
      %v3880 = vpop.f32.mrb[0].mxu0
      %3881 = vmatprep.mubr.f32.mxu0 0.0
      %3882 = vmatmul.mubr.f32.gmra.mrb[0].mxu0 %v3662
      %v3883 = vpop.f32.mrb[0].mxu0
      %v3884 = vadd.f32 0.0, %v3883
      %v3885 = vpop.f32.mrb[0].mxu0
      %3886 = vmatprep.mubr.f32.mxu0 0.0
      %3887 = vmatmul.mubr.f32.gmra.mrb[0].mxu0 %v3665
      %v3888 = vpop.f32.mrb[0].mxu0
      %v3889 = vadd.f32 0.0, %v3888
      %v3890 = vpop.f32.mrb[0].mxu0
      %3891 = vmatprep.mubr.f32.mxu0 0.0
      %3892 = vmatmul.mubr.f32.gmra.mrb[0].mxu0 %v3668
      %v3893 = vpop.f32.mrb[0].mxu0
      %v3894 = vadd.f32 0.0, %v3893
      %v3895 = vpop.f32.mrb[0].mxu0
      %3896 = vmatprep.mubr.f32.mxu0 0.0
      %3897 = vmatmul.mubr.f32.gmra.mrb[0].mxu0 %v3671
      %v3898 = vpop.f32.mrb[0].mxu0
      %v3899 = vadd.f32 0.0, %v3898
      %v3900 = vpop.f32.mrb[0].mxu0
      %3901 = vmatprep.mubr.f32.mxu0 0.0
      %3902 = vmatmul.mubr.f32.gmra.mrb[0].mxu0 %v3674
      %v3903 = vpop.f32.mrb[0].mxu0
      %v3904 = vadd.f32 0.0, %v3903
      %v3905 = vpop.f32.mrb[0].mxu0
      %3906 = vmatprep.mubr.f32.mxu0 0.0
      %3907 = vmatmul.mubr.f32.gmra.mrb[0].mxu0 %v3677
      %v3908 = vpop.f32.mrb[0].mxu0
      %v3909 = vadd.f32 0.0, %v3908
      %v3910 = vpop.f32.mrb[0].mxu0
      %3911 = vmatprep.mubr.f32.mxu0 0.0
      %3912 = vmatmul.mubr.f32.gmra.mrb[0].mxu0 %v3680
      %v3913 = vpop.f32.mrb[0].mxu0
      %v3914 = vadd.f32 0.0, %v3913
      %v3915 = vpop.f32.mrb[0].mxu0
      %3916 = vmatprep.mubr.f32.mxu0 0.0
      %3917 = vmatmul.mubr.f32.gmra.mrb[0].mxu0 %v3683
      %v3918 = vpop.f32.mrb[0].mxu0
      %v3919 = vadd.f32 0.0, %v3918
      %v3920 = vpop.f32.mrb[0].mxu0
      %3921 = vmatprep.mubr.f32.mxu0 0.0
      %3922 = vmatmul.mubr.f32.gmra.mrb[0].mxu0 %v3686
      %v3923 = vpop.f32.mrb[0].mxu0
      %v3924 = vadd.f32 0.0, %v3923
      %v3925 = vpop.f32.mrb[0].mxu0
      %3926 = vmatprep.mubr.f32.mxu0 0.0
      %3927 = vmatmul.mubr.f32.gmra.mrb[0].mxu0 %v3689
      %v3928 = vpop.f32.mrb[0].mxu0
      %v3929 = vadd.f32 0.0, %v3928
      %v3930 = vpop.f32.mrb[0].mxu0
      %3931 = vmatprep.mubr.f32.mxu0 0.0
      %3932 = vmatmul.mubr.f32.gmra.mrb[0].mxu0 %v3692
      %v3933 = vpop.f32.mrb[0].mxu0
      %v3934 = vadd.f32 0.0, %v3933
      %v3935 = vpop.f32.mrb[0].mxu0
      %3936 = vmatprep.mubr.f32.mxu0 0.0
      %3937 = vmatmul.mubr.f32.gmra.mrb[0].mxu0 %v3695
      %v3938 = vpop.f32.mrb[0].mxu0
      %v3939 = vadd.f32 0.0, %v3938
      %v3940 = vpop.f32.mrb[0].mxu0
      %3941 = vdwg.mxu0
      %v3942 = vadd.f32 %v3508, %v3764
      %v3943 = vadd.f32 %v3509, %v3769
      %v3944 = vadd.f32 %v3510, %v3774
      %v3945 = vadd.f32 %v3511, %v3779
      %v3946 = vadd.f32 %v3512, %v3784
      %v3947 = vadd.f32 %v3513, %v3789
      %v3948 = vadd.f32 %v3514, %v3794
      %v3949 = vadd.f32 %v3515, %v3799
      %v3950 = vadd.f32 %v3516, %v3804
      %v3951 = vadd.f32 %v3517, %v3809
      %v3952 = vadd.f32 %v3518, %v3814
      %v3953 = vadd.f32 %v3519, %v3819
      %v3954 = vadd.f32 %v3520, %v3824
      %v3955 = vadd.f32 %v3521, %v3829
      %v3956 = vadd.f32 %v3522, %v3834
      %v3957 = vadd.f32 %v3523, %v3839
      %v3958 = vadd.f32 %v3524, %v3844
      %v3959 = vadd.f32 %v3525, %v3849
      %v3960 = vadd.f32 %v3526, %v3854
      %v3961 = vadd.f32 %v3527, %v3859
      %v3962 = vadd.f32 %v3528, %v3864
      %v3963 = vadd.f32 %v3529, %v3869
      %v3964 = vadd.f32 %v3530, %v3874
      %v3965 = vadd.f32 %v3531, %v3879
      %v3966 = vadd.f32 %v3532, %v3884
      %v3967 = vadd.f32 %v3533, %v3889
      %v3968 = vadd.f32 %v3534, %v3894
      %v3969 = vadd.f32 %v3535, %v3899
      %v3970 = vadd.f32 %v3536, %v3904
      %v3971 = vadd.f32 %v3537, %v3909
      %v3972 = vadd.f32 %v3538, %v3914
      %v3973 = vadd.f32 %v3539, %v3919
      %v3974 = vadd.f32 %v3540, %v3924
      %v3975 = vadd.f32 %v3541, %v3929
      %v3976 = vadd.f32 %v3542, %v3934
      %v3977 = vadd.f32 %v3543, %v3939
      %3978 = vst.msk [vmem:[%s143] sm:$0xff] %vm233, %v3942
      %3979 = vst.msk [vmem:[%s143 + $0x8] sm:$0xff] %vm233, %v3943
      %3980 = vst.msk [vmem:[%s143 + $0x10] sm:$0xff] %vm233, %v3944
      %3981 = vst.msk [vmem:[%s143 + $0x18] sm:$0xff] %vm233, %v3945
      %3982 = vst.msk [vmem:[%s143 + $0x20] sm:$0xff] %vm233, %v3946
      %3983 = vst.msk [vmem:[%s143 + $0x28] sm:$0xff] %vm233, %v3947
      %3984 = vst.msk [vmem:[%s143 + $0x30] sm:$0xff] %vm233, %v3948
      %3985 = vst.msk [vmem:[%s143 + $0x38] sm:$0xff] %vm233, %v3949
      %3986 = vst.msk [vmem:[%s143 + $0x40] sm:$0xff] %vm233, %v3950
      %3987 = vst.msk [vmem:[%s143 + $0x48] sm:$0xff] %vm233, %v3951
      %3988 = vst.msk [vmem:[%s143 + $0x50] sm:$0xff] %vm233, %v3952
      %3989 = vst.msk [vmem:[%s143 + $0x58] sm:$0xff] %vm233, %v3953
      %3990 = vst.msk [vmem:[%s143 + $0x60] sm:$0xff] %vm233, %v3954
      %3991 = vst.msk [vmem:[%s143 + $0x68] sm:$0xff] %vm233, %v3955
      %3992 = vst.msk [vmem:[%s143 + $0x70] sm:$0xff] %vm233, %v3956
      %3993 = vst.msk [vmem:[%s143 + $0x78] sm:$0xff] %vm233, %v3957
      %3994 = vst.msk [vmem:[%s143 + $0x80] sm:$0xff] %vm233, %v3958
      %3995 = vst.msk [vmem:[%s143 + $0x88] sm:$0xff] %vm233, %v3959
      %3996 = vst.msk [vmem:[%s143 + $0x90] sm:$0xff] %vm233, %v3960
      %3997 = vst.msk [vmem:[%s143 + $0x98] sm:$0xff] %vm233, %v3961
      %3998 = vst.msk [vmem:[%s143 + $0xa0] sm:$0xff] %vm233, %v3962
      %3999 = vst.msk [vmem:[%s143 + $0xa8] sm:$0xff] %vm233, %v3963
      %4000 = vst.msk [vmem:[%s143 + $0xb0] sm:$0xff] %vm233, %v3964
      %4001 = vst.msk [vmem:[%s143 + $0xb8] sm:$0xff] %vm233, %v3965
      %4002 = vst.msk [vmem:[%s143 + $0xc0] sm:$0xff] %vm233, %v3966
      %4003 = vst.msk [vmem:[%s143 + $0xc8] sm:$0xff] %vm233, %v3967
      %4004 = vst.msk [vmem:[%s143 + $0xd0] sm:$0xff] %vm233, %v3968
      %4005 = vst.msk [vmem:[%s143 + $0xd8] sm:$0xff] %vm233, %v3969
      %4006 = vst.msk [vmem:[%s143 + $0xe0] sm:$0xff] %vm233, %v3970
      %4007 = vst.msk [vmem:[%s143 + $0xe8] sm:$0xff] %vm233, %v3971
      %4008 = vst.msk [vmem:[%s143 + $0xf0] sm:$0xff] %vm233, %v3972
      %4009 = vst.msk [vmem:[%s143 + $0xf8] sm:$0xff] %vm233, %v3973
      %4010 = vst.msk [vmem:[%s143 + $0x100] sm:$0xff] %vm233, %v3974
      %4011 = vst.msk [vmem:[%s143 + $0x108] sm:$0xff] %vm233, %v3975
      %4012 = vst.msk [vmem:[%s143 + $0x110] sm:$0xff] %vm233, %v3976
      %4013 = vst.msk [vmem:[%s143 + $0x118] sm:$0xff] %vm233, %v3977
      %p4014 = scmp.lt.s32.totalorder %s13, 1
      %s4015 = scalar_select %p4014, %s13, 1
      %s4016 = smul.addr %s4015, 36
      %s4017 = smul.addr %s4016, 8
      %s4018 = scalar_lea.vmem %s2, %s4017
      // Predicated region
      $region29: #{ffc_resnet_block_nchw.10} parent=27 // pred_check
        %p4019 = pneg %p78
      $region30: #{ffc_resnet_block_nchw.10} parent=27 // pred_check_branch
        %4021 = sbr.rel (%p4019) target = $region32
      $region31: #{ffc_resnet_block_nchw.10} parent=27 // pred_region
        _
      $region32: #{ffc_resnet_block_nchw.10} parent=27 // pred_fallthru
        _
    $region28: #{ffc_resnet_block_nchw.10} parent=5 // pred_fallthru
      _
    %p4022 = scmp.le.s32.totalorder 2, %s8
    // Predicated region
    $region33: #{ffc_resnet_block_nchw.10} parent=5 // pred_check
      %p4023 = pneg %p4022
    $region34: #{ffc_resnet_block_nchw.10} parent=5 // pred_check_branch
      %4025 = sbr.rel (%p4023) target = $region36
    $region35: #{ffc_resnet_block_nchw.10} parent=5 // pred_region
      %s4026 = ssub.s32 %s8, 2
      // Predicated region
      $region37: #{ffc_resnet_block_nchw.10} parent=35 // pred_check
        %p4027 = pneg %p84
      $region38: #{ffc_resnet_block_nchw.10} parent=35 // pred_check_branch
        %4029 = sbr.rel (%p4027) target = $region40
      $region39: #{ffc_resnet_block_nchw.10} parent=35 // pred_region
        %p4030 = scmp.lt.s32.totalorder %s14, 1
        %s4031 = scalar_select %p4030, %s14, 1
        %s4032 = smul.addr %s4031, 36
        %s4033 = smul.addr %s4032, 8
        %s4034 = scalar_lea.vmem %s2, %s4033
      $region40: #{ffc_resnet_block_nchw.10} parent=35 // pred_fallthru
        _
    $region36: #{ffc_resnet_block_nchw.10} parent=5 // pred_fallthru
      _
  $region6: #{ffc_resnet_block_nchw.10} parent=0 // loop_footer
    %s12 = sadd.s32 1, %s8
  $region7: #{ffc_resnet_block_nchw.10} parent=0 // loop_footer_branch
    %7 = sbr.rel target = $region3
  $region8: #{ffc_resnet_block_nchw.10} parent=0 // loop_exit
    _

// kernel: ffc_resnet_block_nchw.14
$region0: #{ffc_resnet_block_nchw.14}
  #allocation0 [shape = 'u32[]', space=smem, size = 0x4, offset = 0x4, fixed_abs, tag = 'smem constant byte address 0x4 - core index']
  #allocation1 [shape = 'u32[144,128]{1,0:T(1,128)}', space=vmem, size = 0x12000, scoped, tag = 'internal scratch']
  %s0 = inlined_call_operand.vmem [shape: f32[2,256,64], index: 0, kind: input, shape index: {}]
  %s1 = inlined_call_operand.vmem [shape: f32[2,256,16], index: 1, kind: input, shape index: {}]
  %s2 = inlined_call_operand.vmem [shape: f32[16,64], index: 2, kind: input, shape index: {}]
  %s3 = inlined_call_operand.vmem [shape: f32[1,64], index: 3, kind: input, shape index: {}]
  %s4 = inlined_call_operand.vmem [shape: f32[1,64], index: 4, kind: input, shape index: {}]
  %s5 = inlined_call_operand.vmem [shape: f32[2,256,64], index: 5, kind: output, shape index: {}]
  %s6 = sld [smem:[#allocation0]]
  $region53: #{ffc_resnet_block_nchw.14} parent=0
    _
  %s8 = ssub.s32 1, %s6
  %s9 = scalar_select 0, %s8, %s6
  loop: start=0, step=1, limit=4
  $region2: #{ffc_resnet_block_nchw.14} parent=0 // loop_pre_header
    _
  $region3: #{ffc_resnet_block_nchw.14} parent=0 // loop_header
    %s11 = sphi 0, %s15
    %p12 = scmp.ge.s32.totalorder %s11, 4
    %s21 = sphi 0, %s23
    %s24 = sphi 0, %s21
    %s25 = sphi 0, %s24
    %s41 = sphi 0, %s25
    %s47 = sphi 0, %s49
    %s50 = sphi 0, %s47
    %s51 = sphi 0, %s50
    %s67 = sphi 0, %s51
    %s71 = sphi 0, %s71
    %s73 = sphi 0, %s71
    %s74 = sphi 0, %s73
    %s88 = sphi 0, %s74
    %s92 = sphi 0, %s92
    %s94 = sphi 0, %s92
    %s95 = sphi 0, %s94
    %s109 = sphi 0, %s95
    %s113 = sphi 0, %s113
    %s115 = sphi 0, %s113
    %s116 = sphi 0, %s115
    %s130 = sphi 0, %s116
    %s136 = sphi 0, %s138
    %s139 = sphi 0, %s136
    %s140 = sphi 0, %s139
    %s156 = sphi 0, %s140
  $region4: #{ffc_resnet_block_nchw.14} parent=0 // loop_header_branch
    %14 = sbr.rel (%p12) target = $region8
  $region5: #{ffc_resnet_block_nchw.14} parent=0 // loop_body
    %s16 = ssub.s32 %s11, 1
    %s17 = ssub.s32 %s11, 2
    %s18 = sadd.s32 %s11, 1
    %s19 = ssub.s32 %s11, %s18
    %p20 = scmp.eq.s32.totalorder %s19, 0
    %s22 = sadd.s32 %s21, 1
    %s23 = scalar_select %p20, %s21, %s22
    %p26 = pneg %p20
    %p27 = scmp.eq.s32.totalorder %s11, 1
    %p28 = por %p26, %p27
    %p29 = scmp.ne.s32.totalorder %s21, %s24
    %p30 = scmp.eq.s32.totalorder %s11, 0
    %p31 = por %p29, %p30
    %p32 = scmp.ne.s32.totalorder %s21, %s24
    %p33 = scmp.eq.s32.totalorder %s16, 1
    %p34 = por %p32, %p33
    %p35 = scmp.ne.s32.totalorder %s24, %s25
    %p36 = scmp.eq.s32.totalorder %s16, 0
    %p37 = por %p35, %p36
    %p38 = scmp.ne.s32.totalorder %s24, %s25
    %p39 = scmp.eq.s32.totalorder %s17, 1
    %p40 = por %p38, %p39
    %p42 = scmp.ne.s32.totalorder %s25, %s41
    %p43 = scmp.eq.s32.totalorder %s17, 0
    %p44 = por %p42, %p43
    %s45 = ssub.s32 %s11, %s18
    %p46 = scmp.eq.s32.totalorder %s45, 0
    %s48 = sadd.s32 %s47, 1
    %s49 = scalar_select %p46, %s47, %s48
    %p52 = pneg %p46
    %p53 = scmp.eq.s32.totalorder %s11, 1
    %p54 = por %p52, %p53
    %p55 = scmp.ne.s32.totalorder %s47, %s50
    %p56 = scmp.eq.s32.totalorder %s11, 0
    %p57 = por %p55, %p56
    %p58 = scmp.ne.s32.totalorder %s47, %s50
    %p59 = scmp.eq.s32.totalorder %s16, 1
    %p60 = por %p58, %p59
    %p61 = scmp.ne.s32.totalorder %s50, %s51
    %p62 = scmp.eq.s32.totalorder %s16, 0
    %p63 = por %p61, %p62
    %p64 = scmp.ne.s32.totalorder %s50, %s51
    %p65 = scmp.eq.s32.totalorder %s17, 1
    %p66 = por %p64, %p65
    %p68 = scmp.ne.s32.totalorder %s51, %s67
    %p69 = scmp.eq.s32.totalorder %s17, 0
    %p70 = por %p68, %p69
    %s72 = sadd.s32 %s71, 1
    %p75 = scmp.eq.s32.totalorder %s11, 1
    %p76 = scmp.ne.s32.totalorder %s71, %s73
    %p77 = scmp.eq.s32.totalorder %s11, 0
    %p78 = por %p76, %p77
    %p79 = scmp.ne.s32.totalorder %s71, %s73
    %p80 = scmp.eq.s32.totalorder %s16, 1
    %p81 = por %p79, %p80
    %p82 = scmp.ne.s32.totalorder %s73, %s74
    %p83 = scmp.eq.s32.totalorder %s16, 0
    %p84 = por %p82, %p83
    %p85 = scmp.ne.s32.totalorder %s73, %s74
    %p86 = scmp.eq.s32.totalorder %s17, 1
    %p87 = por %p85, %p86
    %p89 = scmp.ne.s32.totalorder %s74, %s88
    %p90 = scmp.eq.s32.totalorder %s17, 0
    %p91 = por %p89, %p90
    %s93 = sadd.s32 %s92, 1
    %p96 = scmp.eq.s32.totalorder %s11, 1
    %p97 = scmp.ne.s32.totalorder %s92, %s94
    %p98 = scmp.eq.s32.totalorder %s11, 0
    %p99 = por %p97, %p98
    %p100 = scmp.ne.s32.totalorder %s92, %s94
    %p101 = scmp.eq.s32.totalorder %s16, 1
    %p102 = por %p100, %p101
    %p103 = scmp.ne.s32.totalorder %s94, %s95
    %p104 = scmp.eq.s32.totalorder %s16, 0
    %p105 = por %p103, %p104
    %p106 = scmp.ne.s32.totalorder %s94, %s95
    %p107 = scmp.eq.s32.totalorder %s17, 1
    %p108 = por %p106, %p107
    %p110 = scmp.ne.s32.totalorder %s95, %s109
    %p111 = scmp.eq.s32.totalorder %s17, 0
    %p112 = por %p110, %p111
    %s114 = sadd.s32 %s113, 1
    %p117 = scmp.eq.s32.totalorder %s11, 1
    %p118 = scmp.ne.s32.totalorder %s113, %s115
    %p119 = scmp.eq.s32.totalorder %s11, 0
    %p120 = por %p118, %p119
    %p121 = scmp.ne.s32.totalorder %s113, %s115
    %p122 = scmp.eq.s32.totalorder %s16, 1
    %p123 = por %p121, %p122
    %p124 = scmp.ne.s32.totalorder %s115, %s116
    %p125 = scmp.eq.s32.totalorder %s16, 0
    %p126 = por %p124, %p125
    %p127 = scmp.ne.s32.totalorder %s115, %s116
    %p128 = scmp.eq.s32.totalorder %s17, 1
    %p129 = por %p127, %p128
    %p131 = scmp.ne.s32.totalorder %s116, %s130
    %p132 = scmp.eq.s32.totalorder %s17, 0
    %p133 = por %p131, %p132
    %s134 = ssub.s32 %s11, %s18
    %p135 = scmp.eq.s32.totalorder %s134, 0
    %s137 = sadd.s32 %s136, 1
    %s138 = scalar_select %p135, %s136, %s137
    %p141 = pneg %p135
    %p142 = scmp.eq.s32.totalorder %s11, 1
    %p143 = por %p141, %p142
    %p144 = scmp.ne.s32.totalorder %s136, %s139
    %p145 = scmp.eq.s32.totalorder %s11, 0
    %p146 = por %p144, %p145
    %p147 = scmp.ne.s32.totalorder %s136, %s139
    %p148 = scmp.eq.s32.totalorder %s16, 1
    %p149 = por %p147, %p148
    %p150 = scmp.ne.s32.totalorder %s139, %s140
    %p151 = scmp.eq.s32.totalorder %s16, 0
    %p152 = por %p150, %p151
    %p153 = scmp.ne.s32.totalorder %s139, %s140
    %p154 = scmp.eq.s32.totalorder %s17, 1
    %p155 = por %p153, %p154
    %p157 = scmp.ne.s32.totalorder %s140, %s156
    %p158 = scmp.eq.s32.totalorder %s17, 0
    %p159 = por %p157, %p158
    %p160 = scmp.le.s32.totalorder 1, %s11
    %p161 = scmp.lt.s32.totalorder %s11, 3
    %p162 = pnand %p160, %p161
    %p163 = pneg %p162
    // Predicated region
    $region9: #{ffc_resnet_block_nchw.14} parent=5 // pred_check
      _
    $region10: #{ffc_resnet_block_nchw.14} parent=5 // pred_check_branch
      %165 = sbr.rel (%p162) target = $region12
    $region11: #{ffc_resnet_block_nchw.14} parent=5 // pred_region
      %s166 = ssub.s32 %s11, 1
      // Predicated region
      $region13: #{ffc_resnet_block_nchw.14} parent=11 // pred_check
        %p167 = pneg %p84
      $region14: #{ffc_resnet_block_nchw.14} parent=11 // pred_check_branch
        %169 = sbr.rel (%p167) target = $region16
      $region15: #{ffc_resnet_block_nchw.14} parent=11 // pred_region
        _
      $region16: #{ffc_resnet_block_nchw.14} parent=11 // pred_fallthru
        _
      // Predicated region
      $region17: #{ffc_resnet_block_nchw.14} parent=11 // pred_check
        %p170 = pneg %p105
      $region18: #{ffc_resnet_block_nchw.14} parent=11 // pred_check_branch
        %172 = sbr.rel (%p170) target = $region20
      $region19: #{ffc_resnet_block_nchw.14} parent=11 // pred_region
        _
      $region20: #{ffc_resnet_block_nchw.14} parent=11 // pred_fallthru
        _
      // Predicated region
      $region21: #{ffc_resnet_block_nchw.14} parent=11 // pred_check
        %p173 = pneg %p126
      $region22: #{ffc_resnet_block_nchw.14} parent=11 // pred_check_branch
        %175 = sbr.rel (%p173) target = $region24
      $region23: #{ffc_resnet_block_nchw.14} parent=11 // pred_region
        _
      $region24: #{ffc_resnet_block_nchw.14} parent=11 // pred_fallthru
        _
    $region12: #{ffc_resnet_block_nchw.14} parent=5 // pred_fallthru
      _
    %p176 = scmp.lt.s32.totalorder %s11, 2
    // Predicated region
    $region25: #{ffc_resnet_block_nchw.14} parent=5 // pred_check
      %p177 = pneg %p176
    $region26: #{ffc_resnet_block_nchw.14} parent=5 // pred_check_branch
      %179 = sbr.rel (%p177) target = $region28
    $region27: #{ffc_resnet_block_nchw.14} parent=5 // pred_region
      // Predicated region
      $region29: #{ffc_resnet_block_nchw.14} parent=27 // pred_check
        %p180 = pneg %p31
      $region30: #{ffc_resnet_block_nchw.14} parent=27 // pred_check_branch
        %182 = sbr.rel (%p180) target = $region32
      $region31: #{ffc_resnet_block_nchw.14} parent=27 // pred_region
        %p183 = scmp.lt.s32.totalorder %s11, 1
        %s184 = scalar_select %p183, %s11, 1
        %s185 = smul.addr %s184, 32
        %s186 = smul.addr %s185, 8
        %s187 = scalar_lea.vmem %s0, %s186
      $region32: #{ffc_resnet_block_nchw.14} parent=27 // pred_fallthru
        _
      // Predicated region
      $region33: #{ffc_resnet_block_nchw.14} parent=27 // pred_check
        %p188 = pneg %p57
      $region34: #{ffc_resnet_block_nchw.14} parent=27 // pred_check_branch
        %190 = sbr.rel (%p188) target = $region36
      $region35: #{ffc_resnet_block_nchw.14} parent=27 // pred_region
        %p191 = scmp.lt.s32.totalorder %s11, 1
        %s192 = scalar_select %p191, %s11, 1
        %s193 = smul.addr %s192, 32
        %s194 = smul.addr %s193, 8
        %s195 = scalar_lea.vmem %s1, %s194
      $region36: #{ffc_resnet_block_nchw.14} parent=27 // pred_fallthru
        _
    $region28: #{ffc_resnet_block_nchw.14} parent=5 // pred_fallthru
      _
    %p196 = scmp.le.s32.totalorder 1, %s11
    %p197 = scmp.lt.s32.totalorder %s11, 3
    %p198 = pnand %p196, %p197
    %p199 = pneg %p198
    // Predicated region
    $region37: #{ffc_resnet_block_nchw.14} parent=5 // pred_check
      _
    $region38: #{ffc_resnet_block_nchw.14} parent=5 // pred_check_branch
      %201 = sbr.rel (%p198) target = $region40
    $region39: #{ffc_resnet_block_nchw.14} parent=5 // pred_region
      %s202 = ssub.s32 %s11, 1
      %p203 = scmp.lt.s32.totalorder %s16, 1
      %s204 = scalar_select %p203, %s16, 1
      %s205 = smul.addr %s204, 32
      %s206 = smul.addr %s205, 8
      %s207 = scalar_lea.vmem %s0, %s206
      %p208 = pneg %p37
      %p209 = pneg %p34
      %p210 = scmp.lt.s32.totalorder %s16, 1
      %s211 = scalar_select %p210, %s16, 1
      %s212 = smul.addr %s211, 32
      %s213 = smul.addr %s212, 8
      %s214 = scalar_lea.vmem %s1, %s213
      %p215 = pneg %p63
      %p216 = pneg %p60
      %p217 = pneg %p84
      %p218 = pneg %p81
      %p219 = pneg %p105
      %p220 = pneg %p102
      %p221 = pneg %p126
      %p222 = pneg %p123
      %p223 = pneg %p152
      %p224 = pneg %p149
      %p225 = scmp.lt.s32.totalorder %s16, 1
      %s226 = scalar_select %p225, %s16, 1
      %s227 = smul.addr %s226, 32
      %s228 = smul.addr %s227, 8
      %s229 = scalar_lea.vmem %s5, %s228
      %p230 = scmp.lt.s32.totalorder %s16, 1
      %s231 = scalar_select %p230, %s16, 1
      %s232 = smul.addr %s231, 32
      %s233 = smul.addr %s232, 8
      %s234 = scalar_lea.vmem %s0, %s233
      %p235 = scmp.lt.s32.totalorder %s16, 1
      %s236 = scalar_select %p235, %s16, 1
      %s237 = smul.addr %s236, 32
      %s238 = smul.addr %s237, 8
      %s239 = scalar_lea.vmem %s1, %s238
      %p240 = scmp.lt.s32.totalorder %s16, 1
      %s241 = scalar_select %p240, %s16, 1
      %s242 = smul.addr %s241, 32
      %s243 = smul.addr %s242, 8
      %s244 = scalar_lea.vmem %s5, %s243
      %v245 = vld [vmem:[%s234] sm:$0xff]
      %v246 = vld [vmem:[%s234 + $0x8] sm:$0xff]
      %v247 = vld [vmem:[%s234 + $0x10] sm:$0xff]
      %v248 = vld [vmem:[%s234 + $0x18] sm:$0xff]
      %v249 = vld [vmem:[%s234 + $0x20] sm:$0xff]
      %v250 = vld [vmem:[%s234 + $0x28] sm:$0xff]
      %v251 = vld [vmem:[%s234 + $0x30] sm:$0xff]
      %v252 = vld [vmem:[%s234 + $0x38] sm:$0xff]
      %v253 = vld [vmem:[%s234 + $0x40] sm:$0xff]
      %v254 = vld [vmem:[%s234 + $0x48] sm:$0xff]
      %v255 = vld [vmem:[%s234 + $0x50] sm:$0xff]
      %v256 = vld [vmem:[%s234 + $0x58] sm:$0xff]
      %v257 = vld [vmem:[%s234 + $0x60] sm:$0xff]
      %v258 = vld [vmem:[%s234 + $0x68] sm:$0xff]
      %v259 = vld [vmem:[%s234 + $0x70] sm:$0xff]
      %v260 = vld [vmem:[%s234 + $0x78] sm:$0xff]
      %v261 = vld [vmem:[%s234 + $0x80] sm:$0xff]
      %v262 = vld [vmem:[%s234 + $0x88] sm:$0xff]
      %v263 = vld [vmem:[%s234 + $0x90] sm:$0xff]
      %v264 = vld [vmem:[%s234 + $0x98] sm:$0xff]
      %v265 = vld [vmem:[%s234 + $0xa0] sm:$0xff]
      %v266 = vld [vmem:[%s234 + $0xa8] sm:$0xff]
      %v267 = vld [vmem:[%s234 + $0xb0] sm:$0xff]
      %v268 = vld [vmem:[%s234 + $0xb8] sm:$0xff]
      %v269 = vld [vmem:[%s234 + $0xc0] sm:$0xff]
      %v270 = vld [vmem:[%s234 + $0xc8] sm:$0xff]
      %v271 = vld [vmem:[%s234 + $0xd0] sm:$0xff]
      %v272 = vld [vmem:[%s234 + $0xd8] sm:$0xff]
      %v273 = vld [vmem:[%s234 + $0xe0] sm:$0xff]
      %v274 = vld [vmem:[%s234 + $0xe8] sm:$0xff]
      %v275 = vld [vmem:[%s234 + $0xf0] sm:$0xff]
      %v276 = vld [vmem:[%s234 + $0xf8] sm:$0xff]
      %v277 = vld [vmem:[%s239] sm:$0xff]
      %v278 = vld [vmem:[%s239 + $0x8] sm:$0xff]
      %v279 = vld [vmem:[%s239 + $0x10] sm:$0xff]
      %v280 = vld [vmem:[%s239 + $0x18] sm:$0xff]
      %v281 = vld [vmem:[%s239 + $0x20] sm:$0xff]
      %v282 = vld [vmem:[%s239 + $0x28] sm:$0xff]
      %v283 = vld [vmem:[%s239 + $0x30] sm:$0xff]
      %v284 = vld [vmem:[%s239 + $0x38] sm:$0xff]
      %v285 = vld [vmem:[%s239 + $0x40] sm:$0xff]
      %v286 = vld [vmem:[%s239 + $0x48] sm:$0xff]
      %v287 = vld [vmem:[%s239 + $0x50] sm:$0xff]
      %v288 = vld [vmem:[%s239 + $0x58] sm:$0xff]
      %v289 = vld [vmem:[%s239 + $0x60] sm:$0xff]
      %v290 = vld [vmem:[%s239 + $0x68] sm:$0xff]
      %v291 = vld [vmem:[%s239 + $0x70] sm:$0xff]
      %v292 = vld [vmem:[%s239 + $0x78] sm:$0xff]
      %v293 = vld [vmem:[%s239 + $0x80] sm:$0xff]
      %v294 = vld [vmem:[%s239 + $0x88] sm:$0xff]
      %v295 = vld [vmem:[%s239 + $0x90] sm:$0xff]
      %v296 = vld [vmem:[%s239 + $0x98] sm:$0xff]
      %v297 = vld [vmem:[%s239 + $0xa0] sm:$0xff]
      %v298 = vld [vmem:[%s239 + $0xa8] sm:$0xff]
      %v299 = vld [vmem:[%s239 + $0xb0] sm:$0xff]
      %v300 = vld [vmem:[%s239 + $0xb8] sm:$0xff]
      %v301 = vld [vmem:[%s239 + $0xc0] sm:$0xff]
      %v302 = vld [vmem:[%s239 + $0xc8] sm:$0xff]
      %v303 = vld [vmem:[%s239 + $0xd0] sm:$0xff]
      %v304 = vld [vmem:[%s239 + $0xd8] sm:$0xff]
      %v305 = vld [vmem:[%s239 + $0xe0] sm:$0xff]
      %v306 = vld [vmem:[%s239 + $0xe8] sm:$0xff]
      %v307 = vld [vmem:[%s239 + $0xf0] sm:$0xff]
      %v308 = vld [vmem:[%s239 + $0xf8] sm:$0xff]
      %v309 = vld [vmem:[%s2] sm:$0xff]
      %v310 = vld [vmem:[%s2 + $0x8] sm:$0xff]
      %vm311 = vcmask 130048
      %v313 = vsel %vm311, %v277, 0
      %v316 = vsel %vm311, %v278, 0
      %v319 = vsel %vm311, %v279, 0
      %v322 = vsel %vm311, %v280, 0
      %v325 = vsel %vm311, %v281, 0
      %v328 = vsel %vm311, %v282, 0
      %v331 = vsel %vm311, %v283, 0
      %v334 = vsel %vm311, %v284, 0
      %v337 = vsel %vm311, %v285, 0
      %v340 = vsel %vm311, %v286, 0
      %v343 = vsel %vm311, %v287, 0
      %v346 = vsel %vm311, %v288, 0
      %v349 = vsel %vm311, %v289, 0
      %v352 = vsel %vm311, %v290, 0
      %v355 = vsel %vm311, %v291, 0
      %v358 = vsel %vm311, %v292, 0
      %v361 = vsel %vm311, %v293, 0
      %v364 = vsel %vm311, %v294, 0
      %v367 = vsel %vm311, %v295, 0
      %v370 = vsel %vm311, %v296, 0
      %v373 = vsel %vm311, %v297, 0
      %v376 = vsel %vm311, %v298, 0
      %v379 = vsel %vm311, %v299, 0
      %v382 = vsel %vm311, %v300, 0
      %v385 = vsel %vm311, %v301, 0
      %v388 = vsel %vm311, %v302, 0
      %v391 = vsel %vm311, %v303, 0
      %v394 = vsel %vm311, %v304, 0
      %v397 = vsel %vm311, %v305, 0
      %v400 = vsel %vm311, %v306, 0
      %v403 = vsel %vm311, %v307, 0
      %v406 = vsel %vm311, %v308, 0
      %408 = vmatprep.subr.mxu0 0.0
      %409 = vmatpush1.msra.mxu0 %v309
      %410 = vmatprep.subr.mxu0 0.0
      %411 = vmatpush1.msra.mxu0 %v310
      %412 = vmatprep.subr.mxu0 0.0
      %413 = vmatpush1.msra.mxu0 0.0
      %414 = vmatprep.subr.mxu0 0.0
      %415 = vmatpush1.msra.mxu0 0.0
      %416 = vmatprep.subr.mxu0 0.0
      %417 = vmatpush1.msra.mxu0 0.0
      %418 = vmatprep.subr.mxu0 0.0
      %419 = vmatpush1.msra.mxu0 0.0
      %420 = vmatprep.subr.mxu0 0.0
      %421 = vmatpush1.msra.mxu0 0.0
      %422 = vmatprep.subr.mxu0 0.0
      %423 = vmatpush1.msra.mxu0 0.0
      %424 = vmatprep.subr.mxu0 0.0
      %425 = vmatpush1.msra.mxu0 0.0
      %426 = vmatprep.subr.mxu0 0.0
      %427 = vmatpush1.msra.mxu0 0.0
      %428 = vmatprep.subr.mxu0 0.0
      %429 = vmatpush1.msra.mxu0 0.0
      %430 = vmatprep.subr.mxu0 0.0
      %431 = vmatpush1.msra.mxu0 0.0
      %432 = vmatprep.subr.mxu0 0.0
      %433 = vmatpush1.msra.mxu0 0.0
      %434 = vmatprep.subr.mxu0 0.0
      %435 = vmatpush1.msra.mxu0 0.0
      %436 = vmatprep.subr.mxu0 0.0
      %437 = vmatpush1.msra.mxu0 0.0
      %438 = vmatprep.subr.mxu0 0.0
      %439 = vmatpush1.msra.mxu0 0.0
      %440 = vmatprep.subr.mxu0 0.0
      %441 = vmatpush1.msra.mxu0 0.0
      %442 = vmatprep.subr.mxu0 0.0
      %443 = vmatpush1.msra.mxu0 0.0
      %444 = vmatprep.subr.mxu0 0.0
      %445 = vmatpush1.msra.mxu0 0.0
      %446 = vmatprep.subr.mxu0 0.0
      %447 = vmatpush1.msra.mxu0 0.0
      %448 = vmatprep.subr.mxu0 0.0
      %449 = vmatpush1.msra.mxu0 0.0
      %450 = vmatprep.subr.mxu0 0.0
      %451 = vmatpush1.msra.mxu0 0.0
      %452 = vmatprep.subr.mxu0 0.0
      %453 = vmatpush1.msra.mxu0 0.0
      %454 = vmatprep.subr.mxu0 0.0
      %455 = vmatpush1.msra.mxu0 0.0
      %456 = vmatprep.subr.mxu0 0.0
      %457 = vmatpush1.msra.mxu0 0.0
      %458 = vmatprep.subr.mxu0 0.0
      %459 = vmatpush1.msra.mxu0 0.0
      %460 = vmatprep.subr.mxu0 0.0
      %461 = vmatpush1.msra.mxu0 0.0
      %462 = vmatprep.subr.mxu0 0.0
      %463 = vmatpush1.msra.mxu0 0.0
      %464 = vmatprep.subr.mxu0 0.0
      %465 = vmatpush1.msra.mxu0 0.0
      %466 = vmatprep.subr.mxu0 0.0
      %467 = vmatpush1.msra.mxu0 0.0
      %468 = vmatprep.subr.mxu0 0.0
      %469 = vmatpush1.msra.mxu0 0.0
      %470 = vmatprep.subr.mxu0 0.0
      %471 = vmatpush1.msra.mxu0 0.0
      %472 = vmatprep.mubr.f32.mxu0 0.0
      %473 = vmatmul.mubr.f32.gmra.mrb[0].mxu0 %v313
      %v474 = vpop.f32.mrb[0].mxu0
      %v475 = vadd.f32 0.0, %v474
      %v476 = vpop.f32.mrb[0].mxu0
      %477 = vmatprep.mubr.f32.mxu0 0.0
      %478 = vmatmul.mubr.f32.gmra.mrb[0].mxu0 %v316
      %v479 = vpop.f32.mrb[0].mxu0
      %v480 = vadd.f32 0.0, %v479
      %v481 = vpop.f32.mrb[0].mxu0
      %482 = vmatprep.mubr.f32.mxu0 0.0
      %483 = vmatmul.mubr.f32.gmra.mrb[0].mxu0 %v319
      %v484 = vpop.f32.mrb[0].mxu0
      %v485 = vadd.f32 0.0, %v484
      %v486 = vpop.f32.mrb[0].mxu0
      %487 = vmatprep.mubr.f32.mxu0 0.0
      %488 = vmatmul.mubr.f32.gmra.mrb[0].mxu0 %v322
      %v489 = vpop.f32.mrb[0].mxu0
      %v490 = vadd.f32 0.0, %v489
      %v491 = vpop.f32.mrb[0].mxu0
      %492 = vmatprep.mubr.f32.mxu0 0.0
      %493 = vmatmul.mubr.f32.gmra.mrb[0].mxu0 %v325
      %v494 = vpop.f32.mrb[0].mxu0
      %v495 = vadd.f32 0.0, %v494
      %v496 = vpop.f32.mrb[0].mxu0
      %497 = vmatprep.mubr.f32.mxu0 0.0
      %498 = vmatmul.mubr.f32.gmra.mrb[0].mxu0 %v328
      %v499 = vpop.f32.mrb[0].mxu0
      %v500 = vadd.f32 0.0, %v499
      %v501 = vpop.f32.mrb[0].mxu0
      %502 = vmatprep.mubr.f32.mxu0 0.0
      %503 = vmatmul.mubr.f32.gmra.mrb[0].mxu0 %v331
      %v504 = vpop.f32.mrb[0].mxu0
      %v505 = vadd.f32 0.0, %v504
      %v506 = vpop.f32.mrb[0].mxu0
      %507 = vmatprep.mubr.f32.mxu0 0.0
      %508 = vmatmul.mubr.f32.gmra.mrb[0].mxu0 %v334
      %v509 = vpop.f32.mrb[0].mxu0
      %v510 = vadd.f32 0.0, %v509
      %v511 = vpop.f32.mrb[0].mxu0
      %512 = vmatprep.mubr.f32.mxu0 0.0
      %513 = vmatmul.mubr.f32.gmra.mrb[0].mxu0 %v337
      %v514 = vpop.f32.mrb[0].mxu0
      %v515 = vadd.f32 0.0, %v514
      %v516 = vpop.f32.mrb[0].mxu0
      %517 = vmatprep.mubr.f32.mxu0 0.0
      %518 = vmatmul.mubr.f32.gmra.mrb[0].mxu0 %v340
      %v519 = vpop.f32.mrb[0].mxu0
      %v520 = vadd.f32 0.0, %v519
      %v521 = vpop.f32.mrb[0].mxu0
      %522 = vmatprep.mubr.f32.mxu0 0.0
      %523 = vmatmul.mubr.f32.gmra.mrb[0].mxu0 %v343
      %v524 = vpop.f32.mrb[0].mxu0
      %v525 = vadd.f32 0.0, %v524
      %v526 = vpop.f32.mrb[0].mxu0
      %527 = vmatprep.mubr.f32.mxu0 0.0
      %528 = vmatmul.mubr.f32.gmra.mrb[0].mxu0 %v346
      %v529 = vpop.f32.mrb[0].mxu0
      %v530 = vadd.f32 0.0, %v529
      %v531 = vpop.f32.mrb[0].mxu0
      %532 = vmatprep.mubr.f32.mxu0 0.0
      %533 = vmatmul.mubr.f32.gmra.mrb[0].mxu0 %v349
      %v534 = vpop.f32.mrb[0].mxu0
      %v535 = vadd.f32 0.0, %v534
      %v536 = vpop.f32.mrb[0].mxu0
      %537 = vmatprep.mubr.f32.mxu0 0.0
      %538 = vmatmul.mubr.f32.gmra.mrb[0].mxu0 %v352
      %v539 = vpop.f32.mrb[0].mxu0
      %v540 = vadd.f32 0.0, %v539
      %v541 = vpop.f32.mrb[0].mxu0
      %542 = vmatprep.mubr.f32.mxu0 0.0
      %543 = vmatmul.mubr.f32.gmra.mrb[0].mxu0 %v355
      %v544 = vpop.f32.mrb[0].mxu0
      %v545 = vadd.f32 0.0, %v544
      %v546 = vpop.f32.mrb[0].mxu0
      %547 = vmatprep.mubr.f32.mxu0 0.0
      %548 = vmatmul.mubr.f32.gmra.mrb[0].mxu0 %v358
      %v549 = vpop.f32.mrb[0].mxu0
      %v550 = vadd.f32 0.0, %v549
      %v551 = vpop.f32.mrb[0].mxu0
      %552 = vmatprep.mubr.f32.mxu0 0.0
      %553 = vmatmul.mubr.f32.gmra.mrb[0].mxu0 %v361
      %v554 = vpop.f32.mrb[0].mxu0
      %v555 = vadd.f32 0.0, %v554
      %v556 = vpop.f32.mrb[0].mxu0
      %557 = vmatprep.mubr.f32.mxu0 0.0
      %558 = vmatmul.mubr.f32.gmra.mrb[0].mxu0 %v364
      %v559 = vpop.f32.mrb[0].mxu0
      %v560 = vadd.f32 0.0, %v559
      %v561 = vpop.f32.mrb[0].mxu0
      %562 = vmatprep.mubr.f32.mxu0 0.0
      %563 = vmatmul.mubr.f32.gmra.mrb[0].mxu0 %v367
      %v564 = vpop.f32.mrb[0].mxu0
      %v565 = vadd.f32 0.0, %v564
      %v566 = vpop.f32.mrb[0].mxu0
      %567 = vmatprep.mubr.f32.mxu0 0.0
      %568 = vmatmul.mubr.f32.gmra.mrb[0].mxu0 %v370
      %v569 = vpop.f32.mrb[0].mxu0
      %v570 = vadd.f32 0.0, %v569
      %v571 = vpop.f32.mrb[0].mxu0
      %572 = vmatprep.mubr.f32.mxu0 0.0
      %573 = vmatmul.mubr.f32.gmra.mrb[0].mxu0 %v373
      %v574 = vpop.f32.mrb[0].mxu0
      %v575 = vadd.f32 0.0, %v574
      %v576 = vpop.f32.mrb[0].mxu0
      %577 = vmatprep.mubr.f32.mxu0 0.0
      %578 = vmatmul.mubr.f32.gmra.mrb[0].mxu0 %v376
      %v579 = vpop.f32.mrb[0].mxu0
      %v580 = vadd.f32 0.0, %v579
      %v581 = vpop.f32.mrb[0].mxu0
      %582 = vmatprep.mubr.f32.mxu0 0.0
      %583 = vmatmul.mubr.f32.gmra.mrb[0].mxu0 %v379
      %v584 = vpop.f32.mrb[0].mxu0
      %v585 = vadd.f32 0.0, %v584
      %v586 = vpop.f32.mrb[0].mxu0
      %587 = vmatprep.mubr.f32.mxu0 0.0
      %588 = vmatmul.mubr.f32.gmra.mrb[0].mxu0 %v382
      %v589 = vpop.f32.mrb[0].mxu0
      %v590 = vadd.f32 0.0, %v589
      %v591 = vpop.f32.mrb[0].mxu0
      %592 = vmatprep.mubr.f32.mxu0 0.0
      %593 = vmatmul.mubr.f32.gmra.mrb[0].mxu0 %v385
      %v594 = vpop.f32.mrb[0].mxu0
      %v595 = vadd.f32 0.0, %v594
      %v596 = vpop.f32.mrb[0].mxu0
      %597 = vmatprep.mubr.f32.mxu0 0.0
      %598 = vmatmul.mubr.f32.gmra.mrb[0].mxu0 %v388
      %v599 = vpop.f32.mrb[0].mxu0
      %v600 = vadd.f32 0.0, %v599
      %v601 = vpop.f32.mrb[0].mxu0
      %602 = vmatprep.mubr.f32.mxu0 0.0
      %603 = vmatmul.mubr.f32.gmra.mrb[0].mxu0 %v391
      %v604 = vpop.f32.mrb[0].mxu0
      %v605 = vadd.f32 0.0, %v604
      %v606 = vpop.f32.mrb[0].mxu0
      %607 = vmatprep.mubr.f32.mxu0 0.0
      %608 = vmatmul.mubr.f32.gmra.mrb[0].mxu0 %v394
      %v609 = vpop.f32.mrb[0].mxu0
      %v610 = vadd.f32 0.0, %v609
      %v611 = vpop.f32.mrb[0].mxu0
      %612 = vmatprep.mubr.f32.mxu0 0.0
      %613 = vmatmul.mubr.f32.gmra.mrb[0].mxu0 %v397
      %v614 = vpop.f32.mrb[0].mxu0
      %v615 = vadd.f32 0.0, %v614
      %v616 = vpop.f32.mrb[0].mxu0
      %617 = vmatprep.mubr.f32.mxu0 0.0
      %618 = vmatmul.mubr.f32.gmra.mrb[0].mxu0 %v400
      %v619 = vpop.f32.mrb[0].mxu0
      %v620 = vadd.f32 0.0, %v619
      %v621 = vpop.f32.mrb[0].mxu0
      %622 = vmatprep.mubr.f32.mxu0 0.0
      %623 = vmatmul.mubr.f32.gmra.mrb[0].mxu0 %v403
      %v624 = vpop.f32.mrb[0].mxu0
      %v625 = vadd.f32 0.0, %v624
      %v626 = vpop.f32.mrb[0].mxu0
      %627 = vmatprep.mubr.f32.mxu0 0.0
      %628 = vmatmul.mubr.f32.gmra.mrb[0].mxu0 %v406
      %v629 = vpop.f32.mrb[0].mxu0
      %v630 = vadd.f32 0.0, %v629
      %v631 = vpop.f32.mrb[0].mxu0
      %632 = vdwg.mxu0
      %v633 = vadd.f32 %v245, %v475
      %v634 = vadd.f32 %v246, %v480
      %v635 = vadd.f32 %v247, %v485
      %v636 = vadd.f32 %v248, %v490
      %v637 = vadd.f32 %v249, %v495
      %v638 = vadd.f32 %v250, %v500
      %v639 = vadd.f32 %v251, %v505
      %v640 = vadd.f32 %v252, %v510
      %v641 = vadd.f32 %v253, %v515
      %v642 = vadd.f32 %v254, %v520
      %v643 = vadd.f32 %v255, %v525
      %v644 = vadd.f32 %v256, %v530
      %v645 = vadd.f32 %v257, %v535
      %v646 = vadd.f32 %v258, %v540
      %v647 = vadd.f32 %v259, %v545
      %v648 = vadd.f32 %v260, %v550
      %v649 = vadd.f32 %v261, %v555
      %v650 = vadd.f32 %v262, %v560
      %v651 = vadd.f32 %v263, %v565
      %v652 = vadd.f32 %v264, %v570
      %v653 = vadd.f32 %v265, %v575
      %v654 = vadd.f32 %v266, %v580
      %v655 = vadd.f32 %v267, %v585
      %v656 = vadd.f32 %v268, %v590
      %v657 = vadd.f32 %v269, %v595
      %v658 = vadd.f32 %v270, %v600
      %v659 = vadd.f32 %v271, %v605
      %v660 = vadd.f32 %v272, %v610
      %v661 = vadd.f32 %v273, %v615
      %v662 = vadd.f32 %v274, %v620
      %v663 = vadd.f32 %v275, %v625
      %v664 = vadd.f32 %v276, %v630
      %v665 = vld [vmem:[%s3] sm:$0x1]
      %v667 = vlaneseq
      %v668 = vshrl.u32 %v667, 7
      %v669 = vsub.s32 0, %v668
      %v670 = vrot.slane %v665, %v669
      %v672 = vmul.f32 %v633, %v670
      %v673 = vmul.f32 %v634, %v670
      %v674 = vmul.f32 %v635, %v670
      %v675 = vmul.f32 %v636, %v670
      %v676 = vmul.f32 %v637, %v670
      %v677 = vmul.f32 %v638, %v670
      %v678 = vmul.f32 %v639, %v670
      %v679 = vmul.f32 %v640, %v670
      %v680 = vmul.f32 %v641, %v670
      %v681 = vmul.f32 %v642, %v670
      %v682 = vmul.f32 %v643, %v670
      %v683 = vmul.f32 %v644, %v670
      %v684 = vmul.f32 %v645, %v670
      %v685 = vmul.f32 %v646, %v670
      %v686 = vmul.f32 %v647, %v670
      %v687 = vmul.f32 %v648, %v670
      %v688 = vmul.f32 %v649, %v670
      %v689 = vmul.f32 %v650, %v670
      %v690 = vmul.f32 %v651, %v670
      %v691 = vmul.f32 %v652, %v670
      %v692 = vmul.f32 %v653, %v670
      %v693 = vmul.f32 %v654, %v670
      %v694 = vmul.f32 %v655, %v670
      %v695 = vmul.f32 %v656, %v670
      %v696 = vmul.f32 %v657, %v670
      %v697 = vmul.f32 %v658, %v670
      %v698 = vmul.f32 %v659, %v670
      %v699 = vmul.f32 %v660, %v670
      %v700 = vmul.f32 %v661, %v670
      %v701 = vmul.f32 %v662, %v670
      %v702 = vmul.f32 %v663, %v670
      %v703 = vmul.f32 %v664, %v670
      %v704 = vld [vmem:[%s4] sm:$0x1]
      %v706 = vlaneseq
      %v707 = vshrl.u32 %v706, 7
      %v708 = vsub.s32 0, %v707
      %v709 = vrot.slane %v704, %v708
      %v711 = vadd.f32 %v672, %v709
      %v712 = vadd.f32 %v673, %v709
      %v713 = vadd.f32 %v674, %v709
      %v714 = vadd.f32 %v675, %v709
      %v715 = vadd.f32 %v676, %v709
      %v716 = vadd.f32 %v677, %v709
      %v717 = vadd.f32 %v678, %v709
      %v718 = vadd.f32 %v679, %v709
      %v719 = vadd.f32 %v680, %v709
      %v720 = vadd.f32 %v681, %v709
      %v721 = vadd.f32 %v682, %v709
      %v722 = vadd.f32 %v683, %v709
      %v723 = vadd.f32 %v684, %v709
      %v724 = vadd.f32 %v685, %v709
      %v725 = vadd.f32 %v686, %v709
      %v726 = vadd.f32 %v687, %v709
      %v727 = vadd.f32 %v688, %v709
      %v728 = vadd.f32 %v689, %v709
      %v729 = vadd.f32 %v690, %v709
      %v730 = vadd.f32 %v691, %v709
      %v731 = vadd.f32 %v692, %v709
      %v732 = vadd.f32 %v693, %v709
      %v733 = vadd.f32 %v694, %v709
      %v734 = vadd.f32 %v695, %v709
      %v735 = vadd.f32 %v696, %v709
      %v736 = vadd.f32 %v697, %v709
      %v737 = vadd.f32 %v698, %v709
      %v738 = vadd.f32 %v699, %v709
      %v739 = vadd.f32 %v700, %v709
      %v740 = vadd.f32 %v701, %v709
      %v741 = vadd.f32 %v702, %v709
      %v742 = vadd.f32 %v703, %v709
      %v743 = vmax.f32 %v711, 0.0
      %v744 = vmax.f32 %v712, 0.0
      %v745 = vmax.f32 %v713, 0.0
      %v746 = vmax.f32 %v714, 0.0
      %v747 = vmax.f32 %v715, 0.0
      %v748 = vmax.f32 %v716, 0.0
      %v749 = vmax.f32 %v717, 0.0
      %v750 = vmax.f32 %v718, 0.0
      %v751 = vmax.f32 %v719, 0.0
      %v752 = vmax.f32 %v720, 0.0
      %v753 = vmax.f32 %v721, 0.0
      %v754 = vmax.f32 %v722, 0.0
      %v755 = vmax.f32 %v723, 0.0
      %v756 = vmax.f32 %v724, 0.0
      %v757 = vmax.f32 %v725, 0.0
      %v758 = vmax.f32 %v726, 0.0
      %v759 = vmax.f32 %v727, 0.0
      %v760 = vmax.f32 %v728, 0.0
      %v761 = vmax.f32 %v729, 0.0
      %v762 = vmax.f32 %v730, 0.0
      %v763 = vmax.f32 %v731, 0.0
      %v764 = vmax.f32 %v732, 0.0
      %v765 = vmax.f32 %v733, 0.0
      %v766 = vmax.f32 %v734, 0.0
      %v767 = vmax.f32 %v735, 0.0
      %v768 = vmax.f32 %v736, 0.0
      %v769 = vmax.f32 %v737, 0.0
      %v770 = vmax.f32 %v738, 0.0
      %v771 = vmax.f32 %v739, 0.0
      %v772 = vmax.f32 %v740, 0.0
      %v773 = vmax.f32 %v741, 0.0
      %v774 = vmax.f32 %v742, 0.0
      %vm775 = vcmask 523264
      %776 = vst.msk [vmem:[%s244] sm:$0xff] %vm775, %v743
      %777 = vst.msk [vmem:[%s244 + $0x8] sm:$0xff] %vm775, %v744
      %778 = vst.msk [vmem:[%s244 + $0x10] sm:$0xff] %vm775, %v745
      %779 = vst.msk [vmem:[%s244 + $0x18] sm:$0xff] %vm775, %v746
      %780 = vst.msk [vmem:[%s244 + $0x20] sm:$0xff] %vm775, %v747
      %781 = vst.msk [vmem:[%s244 + $0x28] sm:$0xff] %vm775, %v748
      %782 = vst.msk [vmem:[%s244 + $0x30] sm:$0xff] %vm775, %v749
      %783 = vst.msk [vmem:[%s244 + $0x38] sm:$0xff] %vm775, %v750
      %784 = vst.msk [vmem:[%s244 + $0x40] sm:$0xff] %vm775, %v751
      %785 = vst.msk [vmem:[%s244 + $0x48] sm:$0xff] %vm775, %v752
      %786 = vst.msk [vmem:[%s244 + $0x50] sm:$0xff] %vm775, %v753
      %787 = vst.msk [vmem:[%s244 + $0x58] sm:$0xff] %vm775, %v754
      %788 = vst.msk [vmem:[%s244 + $0x60] sm:$0xff] %vm775, %v755
      %789 = vst.msk [vmem:[%s244 + $0x68] sm:$0xff] %vm775, %v756
      %790 = vst.msk [vmem:[%s244 + $0x70] sm:$0xff] %vm775, %v757
      %791 = vst.msk [vmem:[%s244 + $0x78] sm:$0xff] %vm775, %v758
      %792 = vst.msk [vmem:[%s244 + $0x80] sm:$0xff] %vm775, %v759
      %793 = vst.msk [vmem:[%s244 + $0x88] sm:$0xff] %vm775, %v760
      %794 = vst.msk [vmem:[%s244 + $0x90] sm:$0xff] %vm775, %v761
      %795 = vst.msk [vmem:[%s244 + $0x98] sm:$0xff] %vm775, %v762
      %796 = vst.msk [vmem:[%s244 + $0xa0] sm:$0xff] %vm775, %v763
      %797 = vst.msk [vmem:[%s244 + $0xa8] sm:$0xff] %vm775, %v764
      %798 = vst.msk [vmem:[%s244 + $0xb0] sm:$0xff] %vm775, %v765
      %799 = vst.msk [vmem:[%s244 + $0xb8] sm:$0xff] %vm775, %v766
      %800 = vst.msk [vmem:[%s244 + $0xc0] sm:$0xff] %vm775, %v767
      %801 = vst.msk [vmem:[%s244 + $0xc8] sm:$0xff] %vm775, %v768
      %802 = vst.msk [vmem:[%s244 + $0xd0] sm:$0xff] %vm775, %v769
      %803 = vst.msk [vmem:[%s244 + $0xd8] sm:$0xff] %vm775, %v770
      %804 = vst.msk [vmem:[%s244 + $0xe0] sm:$0xff] %vm775, %v771
      %805 = vst.msk [vmem:[%s244 + $0xe8] sm:$0xff] %vm775, %v772
      %806 = vst.msk [vmem:[%s244 + $0xf0] sm:$0xff] %vm775, %v773
      %807 = vst.msk [vmem:[%s244 + $0xf8] sm:$0xff] %vm775, %v774
      %p808 = scmp.lt.s32.totalorder %s16, 1
      %s809 = scalar_select %p808, %s16, 1
      %s810 = smul.addr %s809, 32
      %s811 = smul.addr %s810, 8
      %s812 = scalar_lea.vmem %s5, %s811
      // Predicated region
      $region41: #{ffc_resnet_block_nchw.14} parent=39 // pred_check
        %p813 = pneg %p149
      $region42: #{ffc_resnet_block_nchw.14} parent=39 // pred_check_branch
        %815 = sbr.rel (%p813) target = $region44
      $region43: #{ffc_resnet_block_nchw.14} parent=39 // pred_region
        _
      $region44: #{ffc_resnet_block_nchw.14} parent=39 // pred_fallthru
        _
    $region40: #{ffc_resnet_block_nchw.14} parent=5 // pred_fallthru
      _
    %p816 = scmp.le.s32.totalorder 2, %s11
    // Predicated region
    $region45: #{ffc_resnet_block_nchw.14} parent=5 // pred_check
      %p817 = pneg %p816
    $region46: #{ffc_resnet_block_nchw.14} parent=5 // pred_check_branch
      %819 = sbr.rel (%p817) target = $region48
    $region47: #{ffc_resnet_block_nchw.14} parent=5 // pred_region
      %s820 = ssub.s32 %s11, 2
      // Predicated region
      $region49: #{ffc_resnet_block_nchw.14} parent=47 // pred_check
        %p821 = pneg %p155
      $region50: #{ffc_resnet_block_nchw.14} parent=47 // pred_check_branch
        %823 = sbr.rel (%p821) target = $region52
      $region51: #{ffc_resnet_block_nchw.14} parent=47 // pred_region
        %p824 = scmp.lt.s32.totalorder %s17, 1
        %s825 = scalar_select %p824, %s17, 1
        %s826 = smul.addr %s825, 32
        %s827 = smul.addr %s826, 8
        %s828 = scalar_lea.vmem %s5, %s827
      $region52: #{ffc_resnet_block_nchw.14} parent=47 // pred_fallthru
        _
    $region48: #{ffc_resnet_block_nchw.14} parent=5 // pred_fallthru
      _
  $region6: #{ffc_resnet_block_nchw.14} parent=0 // loop_footer
    %s15 = sadd.s32 1, %s11
  $region7: #{ffc_resnet_block_nchw.14} parent=0 // loop_footer_branch
    %10 = sbr.rel target = $region3
  $region8: #{ffc_resnet_block_nchw.14} parent=0 // loop_exit
    _

// kernel: ffc_resnet_block_nchw.16
$region0: #{ffc_resnet_block_nchw.16}
  #allocation0 [shape = 'u32[]', space=smem, size = 0x4, offset = 0x4, fixed_abs, tag = 'smem constant byte address 0x4 - core index']
  #allocation1 [shape = 'u32[144,128]{1,0:T(1,128)}', space=vmem, size = 0x12000, scoped, tag = 'internal scratch']
  %s0 = inlined_call_operand.vmem [shape: f32[2,256,32], index: 0, kind: input, shape index: {}]
  %s1 = inlined_call_operand.vmem [shape: f32[32,16], index: 1, kind: input, shape index: {}]
  %s2 = inlined_call_operand.vmem [shape: f32[1,16], index: 2, kind: input, shape index: {}]
  %s3 = inlined_call_operand.vmem [shape: f32[1,16], index: 3, kind: input, shape index: {}]
  %s4 = inlined_call_operand.vmem [shape: f32[2,256,16], index: 4, kind: output, shape index: {}]
  %s5 = sld [smem:[#allocation0]]
  $region49: #{ffc_resnet_block_nchw.16} parent=0
    _
  %s7 = ssub.s32 1, %s5
  %s8 = scalar_select 0, %s7, %s5
  loop: start=0, step=1, limit=4
  $region2: #{ffc_resnet_block_nchw.16} parent=0 // loop_pre_header
    _
  $region3: #{ffc_resnet_block_nchw.16} parent=0 // loop_header
    %s10 = sphi 0, %s14
    %p11 = scmp.ge.s32.totalorder %s10, 4
    %s20 = sphi 0, %s22
    %s23 = sphi 0, %s20
    %s24 = sphi 0, %s23
    %s40 = sphi 0, %s24
    %s44 = sphi 0, %s44
    %s46 = sphi 0, %s44
    %s47 = sphi 0, %s46
    %s61 = sphi 0, %s47
    %s65 = sphi 0, %s65
    %s67 = sphi 0, %s65
    %s68 = sphi 0, %s67
    %s82 = sphi 0, %s68
    %s86 = sphi 0, %s86
    %s88 = sphi 0, %s86
    %s89 = sphi 0, %s88
    %s103 = sphi 0, %s89
    %s109 = sphi 0, %s111
    %s112 = sphi 0, %s109
    %s113 = sphi 0, %s112
    %s129 = sphi 0, %s113
  $region4: #{ffc_resnet_block_nchw.16} parent=0 // loop_header_branch
    %13 = sbr.rel (%p11) target = $region8
  $region5: #{ffc_resnet_block_nchw.16} parent=0 // loop_body
    %s15 = ssub.s32 %s10, 1
    %s16 = ssub.s32 %s10, 2
    %s17 = sadd.s32 %s10, 1
    %s18 = ssub.s32 %s10, %s17
    %p19 = scmp.eq.s32.totalorder %s18, 0
    %s21 = sadd.s32 %s20, 1
    %s22 = scalar_select %p19, %s20, %s21
    %p25 = pneg %p19
    %p26 = scmp.eq.s32.totalorder %s10, 1
    %p27 = por %p25, %p26
    %p28 = scmp.ne.s32.totalorder %s20, %s23
    %p29 = scmp.eq.s32.totalorder %s10, 0
    %p30 = por %p28, %p29
    %p31 = scmp.ne.s32.totalorder %s20, %s23
    %p32 = scmp.eq.s32.totalorder %s15, 1
    %p33 = por %p31, %p32
    %p34 = scmp.ne.s32.totalorder %s23, %s24
    %p35 = scmp.eq.s32.totalorder %s15, 0
    %p36 = por %p34, %p35
    %p37 = scmp.ne.s32.totalorder %s23, %s24
    %p38 = scmp.eq.s32.totalorder %s16, 1
    %p39 = por %p37, %p38
    %p41 = scmp.ne.s32.totalorder %s24, %s40
    %p42 = scmp.eq.s32.totalorder %s16, 0
    %p43 = por %p41, %p42
    %s45 = sadd.s32 %s44, 1
    %p48 = scmp.eq.s32.totalorder %s10, 1
    %p49 = scmp.ne.s32.totalorder %s44, %s46
    %p50 = scmp.eq.s32.totalorder %s10, 0
    %p51 = por %p49, %p50
    %p52 = scmp.ne.s32.totalorder %s44, %s46
    %p53 = scmp.eq.s32.totalorder %s15, 1
    %p54 = por %p52, %p53
    %p55 = scmp.ne.s32.totalorder %s46, %s47
    %p56 = scmp.eq.s32.totalorder %s15, 0
    %p57 = por %p55, %p56
    %p58 = scmp.ne.s32.totalorder %s46, %s47
    %p59 = scmp.eq.s32.totalorder %s16, 1
    %p60 = por %p58, %p59
    %p62 = scmp.ne.s32.totalorder %s47, %s61
    %p63 = scmp.eq.s32.totalorder %s16, 0
    %p64 = por %p62, %p63
    %s66 = sadd.s32 %s65, 1
    %p69 = scmp.eq.s32.totalorder %s10, 1
    %p70 = scmp.ne.s32.totalorder %s65, %s67
    %p71 = scmp.eq.s32.totalorder %s10, 0
    %p72 = por %p70, %p71
    %p73 = scmp.ne.s32.totalorder %s65, %s67
    %p74 = scmp.eq.s32.totalorder %s15, 1
    %p75 = por %p73, %p74
    %p76 = scmp.ne.s32.totalorder %s67, %s68
    %p77 = scmp.eq.s32.totalorder %s15, 0
    %p78 = por %p76, %p77
    %p79 = scmp.ne.s32.totalorder %s67, %s68
    %p80 = scmp.eq.s32.totalorder %s16, 1
    %p81 = por %p79, %p80
    %p83 = scmp.ne.s32.totalorder %s68, %s82
    %p84 = scmp.eq.s32.totalorder %s16, 0
    %p85 = por %p83, %p84
    %s87 = sadd.s32 %s86, 1
    %p90 = scmp.eq.s32.totalorder %s10, 1
    %p91 = scmp.ne.s32.totalorder %s86, %s88
    %p92 = scmp.eq.s32.totalorder %s10, 0
    %p93 = por %p91, %p92
    %p94 = scmp.ne.s32.totalorder %s86, %s88
    %p95 = scmp.eq.s32.totalorder %s15, 1
    %p96 = por %p94, %p95
    %p97 = scmp.ne.s32.totalorder %s88, %s89
    %p98 = scmp.eq.s32.totalorder %s15, 0
    %p99 = por %p97, %p98
    %p100 = scmp.ne.s32.totalorder %s88, %s89
    %p101 = scmp.eq.s32.totalorder %s16, 1
    %p102 = por %p100, %p101
    %p104 = scmp.ne.s32.totalorder %s89, %s103
    %p105 = scmp.eq.s32.totalorder %s16, 0
    %p106 = por %p104, %p105
    %s107 = ssub.s32 %s10, %s17
    %p108 = scmp.eq.s32.totalorder %s107, 0
    %s110 = sadd.s32 %s109, 1
    %s111 = scalar_select %p108, %s109, %s110
    %p114 = pneg %p108
    %p115 = scmp.eq.s32.totalorder %s10, 1
    %p116 = por %p114, %p115
    %p117 = scmp.ne.s32.totalorder %s109, %s112
    %p118 = scmp.eq.s32.totalorder %s10, 0
    %p119 = por %p117, %p118
    %p120 = scmp.ne.s32.totalorder %s109, %s112
    %p121 = scmp.eq.s32.totalorder %s15, 1
    %p122 = por %p120, %p121
    %p123 = scmp.ne.s32.totalorder %s112, %s113
    %p124 = scmp.eq.s32.totalorder %s15, 0
    %p125 = por %p123, %p124
    %p126 = scmp.ne.s32.totalorder %s112, %s113
    %p127 = scmp.eq.s32.totalorder %s16, 1
    %p128 = por %p126, %p127
    %p130 = scmp.ne.s32.totalorder %s113, %s129
    %p131 = scmp.eq.s32.totalorder %s16, 0
    %p132 = por %p130, %p131
    %p133 = scmp.le.s32.totalorder 1, %s10
    %p134 = scmp.lt.s32.totalorder %s10, 3
    %p135 = pnand %p133, %p134
    %p136 = pneg %p135
    // Predicated region
    $region9: #{ffc_resnet_block_nchw.16} parent=5 // pred_check
      _
    $region10: #{ffc_resnet_block_nchw.16} parent=5 // pred_check_branch
      %138 = sbr.rel (%p135) target = $region12
    $region11: #{ffc_resnet_block_nchw.16} parent=5 // pred_region
      %s139 = ssub.s32 %s10, 1
      // Predicated region
      $region13: #{ffc_resnet_block_nchw.16} parent=11 // pred_check
        %p140 = pneg %p57
      $region14: #{ffc_resnet_block_nchw.16} parent=11 // pred_check_branch
        %142 = sbr.rel (%p140) target = $region16
      $region15: #{ffc_resnet_block_nchw.16} parent=11 // pred_region
        _
      $region16: #{ffc_resnet_block_nchw.16} parent=11 // pred_fallthru
        _
      // Predicated region
      $region17: #{ffc_resnet_block_nchw.16} parent=11 // pred_check
        %p143 = pneg %p78
      $region18: #{ffc_resnet_block_nchw.16} parent=11 // pred_check_branch
        %145 = sbr.rel (%p143) target = $region20
      $region19: #{ffc_resnet_block_nchw.16} parent=11 // pred_region
        _
      $region20: #{ffc_resnet_block_nchw.16} parent=11 // pred_fallthru
        _
      // Predicated region
      $region21: #{ffc_resnet_block_nchw.16} parent=11 // pred_check
        %p146 = pneg %p99
      $region22: #{ffc_resnet_block_nchw.16} parent=11 // pred_check_branch
        %148 = sbr.rel (%p146) target = $region24
      $region23: #{ffc_resnet_block_nchw.16} parent=11 // pred_region
        _
      $region24: #{ffc_resnet_block_nchw.16} parent=11 // pred_fallthru
        _
    $region12: #{ffc_resnet_block_nchw.16} parent=5 // pred_fallthru
      _
    %p149 = scmp.lt.s32.totalorder %s10, 2
    // Predicated region
    $region25: #{ffc_resnet_block_nchw.16} parent=5 // pred_check
      %p150 = pneg %p149
    $region26: #{ffc_resnet_block_nchw.16} parent=5 // pred_check_branch
      %152 = sbr.rel (%p150) target = $region28
    $region27: #{ffc_resnet_block_nchw.16} parent=5 // pred_region
      // Predicated region
      $region29: #{ffc_resnet_block_nchw.16} parent=27 // pred_check
        %p153 = pneg %p30
      $region30: #{ffc_resnet_block_nchw.16} parent=27 // pred_check_branch
        %155 = sbr.rel (%p153) target = $region32
      $region31: #{ffc_resnet_block_nchw.16} parent=27 // pred_region
        %p156 = scmp.lt.s32.totalorder %s10, 1
        %s157 = scalar_select %p156, %s10, 1
        %s158 = smul.addr %s157, 32
        %s159 = smul.addr %s158, 8
        %s160 = scalar_lea.vmem %s0, %s159
      $region32: #{ffc_resnet_block_nchw.16} parent=27 // pred_fallthru
        _
    $region28: #{ffc_resnet_block_nchw.16} parent=5 // pred_fallthru
      _
    %p161 = scmp.le.s32.totalorder 1, %s10
    %p162 = scmp.lt.s32.totalorder %s10, 3
    %p163 = pnand %p161, %p162
    %p164 = pneg %p163
    // Predicated region
    $region33: #{ffc_resnet_block_nchw.16} parent=5 // pred_check
      _
    $region34: #{ffc_resnet_block_nchw.16} parent=5 // pred_check_branch
      %166 = sbr.rel (%p163) target = $region36
    $region35: #{ffc_resnet_block_nchw.16} parent=5 // pred_region
      %s167 = ssub.s32 %s10, 1
      %p168 = scmp.lt.s32.totalorder %s15, 1
      %s169 = scalar_select %p168, %s15, 1
      %s170 = smul.addr %s169, 32
      %s171 = smul.addr %s170, 8
      %s172 = scalar_lea.vmem %s0, %s171
      %p173 = pneg %p36
      %p174 = pneg %p33
      %p175 = pneg %p57
      %p176 = pneg %p54
      %p177 = pneg %p78
      %p178 = pneg %p75
      %p179 = pneg %p99
      %p180 = pneg %p96
      %p181 = pneg %p125
      %p182 = pneg %p122
      %p183 = scmp.lt.s32.totalorder %s15, 1
      %s184 = scalar_select %p183, %s15, 1
      %s185 = smul.addr %s184, 32
      %s186 = smul.addr %s185, 8
      %s187 = scalar_lea.vmem %s4, %s186
      %p188 = scmp.lt.s32.totalorder %s15, 1
      %s189 = scalar_select %p188, %s15, 1
      %s190 = smul.addr %s189, 32
      %s191 = smul.addr %s190, 8
      %s192 = scalar_lea.vmem %s0, %s191
      %p193 = scmp.lt.s32.totalorder %s15, 1
      %s194 = scalar_select %p193, %s15, 1
      %s195 = smul.addr %s194, 32
      %s196 = smul.addr %s195, 8
      %s197 = scalar_lea.vmem %s4, %s196
      %v198 = vld [vmem:[%s192] sm:$0xff]
      %v199 = vld [vmem:[%s192 + $0x8] sm:$0xff]
      %v200 = vld [vmem:[%s192 + $0x10] sm:$0xff]
      %v201 = vld [vmem:[%s192 + $0x18] sm:$0xff]
      %v202 = vld [vmem:[%s192 + $0x20] sm:$0xff]
      %v203 = vld [vmem:[%s192 + $0x28] sm:$0xff]
      %v204 = vld [vmem:[%s192 + $0x30] sm:$0xff]
      %v205 = vld [vmem:[%s192 + $0x38] sm:$0xff]
      %v206 = vld [vmem:[%s192 + $0x40] sm:$0xff]
      %v207 = vld [vmem:[%s192 + $0x48] sm:$0xff]
      %v208 = vld [vmem:[%s192 + $0x50] sm:$0xff]
      %v209 = vld [vmem:[%s192 + $0x58] sm:$0xff]
      %v210 = vld [vmem:[%s192 + $0x60] sm:$0xff]
      %v211 = vld [vmem:[%s192 + $0x68] sm:$0xff]
      %v212 = vld [vmem:[%s192 + $0x70] sm:$0xff]
      %v213 = vld [vmem:[%s192 + $0x78] sm:$0xff]
      %v214 = vld [vmem:[%s192 + $0x80] sm:$0xff]
      %v215 = vld [vmem:[%s192 + $0x88] sm:$0xff]
      %v216 = vld [vmem:[%s192 + $0x90] sm:$0xff]
      %v217 = vld [vmem:[%s192 + $0x98] sm:$0xff]
      %v218 = vld [vmem:[%s192 + $0xa0] sm:$0xff]
      %v219 = vld [vmem:[%s192 + $0xa8] sm:$0xff]
      %v220 = vld [vmem:[%s192 + $0xb0] sm:$0xff]
      %v221 = vld [vmem:[%s192 + $0xb8] sm:$0xff]
      %v222 = vld [vmem:[%s192 + $0xc0] sm:$0xff]
      %v223 = vld [vmem:[%s192 + $0xc8] sm:$0xff]
      %v224 = vld [vmem:[%s192 + $0xd0] sm:$0xff]
      %v225 = vld [vmem:[%s192 + $0xd8] sm:$0xff]
      %v226 = vld [vmem:[%s192 + $0xe0] sm:$0xff]
      %v227 = vld [vmem:[%s192 + $0xe8] sm:$0xff]
      %v228 = vld [vmem:[%s192 + $0xf0] sm:$0xff]
      %v229 = vld [vmem:[%s192 + $0xf8] sm:$0xff]
      %v230 = vld [vmem:[%s1] sm:$0xff]
      %v231 = vld [vmem:[%s1 + $0x8] sm:$0xff]
      %v232 = vld [vmem:[%s1 + $0x10] sm:$0xff]
      %v233 = vld [vmem:[%s1 + $0x18] sm:$0xff]
      %vm234 = vcmask 261120
      %v236 = vsel %vm234, %v198, 0
      %v239 = vsel %vm234, %v199, 0
      %v242 = vsel %vm234, %v200, 0
      %v245 = vsel %vm234, %v201, 0
      %v248 = vsel %vm234, %v202, 0
      %v251 = vsel %vm234, %v203, 0
      %v254 = vsel %vm234, %v204, 0
      %v257 = vsel %vm234, %v205, 0
      %v260 = vsel %vm234, %v206, 0
      %v263 = vsel %vm234, %v207, 0
      %v266 = vsel %vm234, %v208, 0
      %v269 = vsel %vm234, %v209, 0
      %v272 = vsel %vm234, %v210, 0
      %v275 = vsel %vm234, %v211, 0
      %v278 = vsel %vm234, %v212, 0
      %v281 = vsel %vm234, %v213, 0
      %v284 = vsel %vm234, %v214, 0
      %v287 = vsel %vm234, %v215, 0
      %v290 = vsel %vm234, %v216, 0
      %v293 = vsel %vm234, %v217, 0
      %v296 = vsel %vm234, %v218, 0
      %v299 = vsel %vm234, %v219, 0
      %v302 = vsel %vm234, %v220, 0
      %v305 = vsel %vm234, %v221, 0
      %v308 = vsel %vm234, %v222, 0
      %v311 = vsel %vm234, %v223, 0
      %v314 = vsel %vm234, %v224, 0
      %v317 = vsel %vm234, %v225, 0
      %v320 = vsel %vm234, %v226, 0
      %v323 = vsel %vm234, %v227, 0
      %v326 = vsel %vm234, %v228, 0
      %v329 = vsel %vm234, %v229, 0
      %331 = vmatprep.subr.mxu0 0.0
      %332 = vmatpush1.msra.mxu0 %v230
      %333 = vmatprep.subr.mxu0 0.0
      %334 = vmatpush1.msra.mxu0 %v231
      %335 = vmatprep.subr.mxu0 0.0
      %336 = vmatpush1.msra.mxu0 %v232
      %337 = vmatprep.subr.mxu0 0.0
      %338 = vmatpush1.msra.mxu0 %v233
      %339 = vmatprep.subr.mxu0 0.0
      %340 = vmatpush1.msra.mxu0 0.0
      %341 = vmatprep.subr.mxu0 0.0
      %342 = vmatpush1.msra.mxu0 0.0
      %343 = vmatprep.subr.mxu0 0.0
      %344 = vmatpush1.msra.mxu0 0.0
      %345 = vmatprep.subr.mxu0 0.0
      %346 = vmatpush1.msra.mxu0 0.0
      %347 = vmatprep.subr.mxu0 0.0
      %348 = vmatpush1.msra.mxu0 0.0
      %349 = vmatprep.subr.mxu0 0.0
      %350 = vmatpush1.msra.mxu0 0.0
      %351 = vmatprep.subr.mxu0 0.0
      %352 = vmatpush1.msra.mxu0 0.0
      %353 = vmatprep.subr.mxu0 0.0
      %354 = vmatpush1.msra.mxu0 0.0
      %355 = vmatprep.subr.mxu0 0.0
      %356 = vmatpush1.msra.mxu0 0.0
      %357 = vmatprep.subr.mxu0 0.0
      %358 = vmatpush1.msra.mxu0 0.0
      %359 = vmatprep.subr.mxu0 0.0
      %360 = vmatpush1.msra.mxu0 0.0
      %361 = vmatprep.subr.mxu0 0.0
      %362 = vmatpush1.msra.mxu0 0.0
      %363 = vmatprep.subr.mxu0 0.0
      %364 = vmatpush1.msra.mxu0 0.0
      %365 = vmatprep.subr.mxu0 0.0
      %366 = vmatpush1.msra.mxu0 0.0
      %367 = vmatprep.subr.mxu0 0.0
      %368 = vmatpush1.msra.mxu0 0.0
      %369 = vmatprep.subr.mxu0 0.0
      %370 = vmatpush1.msra.mxu0 0.0
      %371 = vmatprep.subr.mxu0 0.0
      %372 = vmatpush1.msra.mxu0 0.0
      %373 = vmatprep.subr.mxu0 0.0
      %374 = vmatpush1.msra.mxu0 0.0
      %375 = vmatprep.subr.mxu0 0.0
      %376 = vmatpush1.msra.mxu0 0.0
      %377 = vmatprep.subr.mxu0 0.0
      %378 = vmatpush1.msra.mxu0 0.0
      %379 = vmatprep.subr.mxu0 0.0
      %380 = vmatpush1.msra.mxu0 0.0
      %381 = vmatprep.subr.mxu0 0.0
      %382 = vmatpush1.msra.mxu0 0.0
      %383 = vmatprep.subr.mxu0 0.0
      %384 = vmatpush1.msra.mxu0 0.0
      %385 = vmatprep.subr.mxu0 0.0
      %386 = vmatpush1.msra.mxu0 0.0
      %387 = vmatprep.subr.mxu0 0.0
      %388 = vmatpush1.msra.mxu0 0.0
      %389 = vmatprep.subr.mxu0 0.0
      %390 = vmatpush1.msra.mxu0 0.0
      %391 = vmatprep.subr.mxu0 0.0
      %392 = vmatpush1.msra.mxu0 0.0
      %393 = vmatprep.subr.mxu0 0.0
      %394 = vmatpush1.msra.mxu0 0.0
      %395 = vmatprep.mubr.f32.mxu0 0.0
      %396 = vmatmul.mubr.f32.gmra.mrb[0].mxu0 %v236
      %v397 = vpop.f32.mrb[0].mxu0
      %v398 = vadd.f32 0.0, %v397
      %v399 = vpop.f32.mrb[0].mxu0
      %400 = vmatprep.mubr.f32.mxu0 0.0
      %401 = vmatmul.mubr.f32.gmra.mrb[0].mxu0 %v239
      %v402 = vpop.f32.mrb[0].mxu0
      %v403 = vadd.f32 0.0, %v402
      %v404 = vpop.f32.mrb[0].mxu0
      %405 = vmatprep.mubr.f32.mxu0 0.0
      %406 = vmatmul.mubr.f32.gmra.mrb[0].mxu0 %v242
      %v407 = vpop.f32.mrb[0].mxu0
      %v408 = vadd.f32 0.0, %v407
      %v409 = vpop.f32.mrb[0].mxu0
      %410 = vmatprep.mubr.f32.mxu0 0.0
      %411 = vmatmul.mubr.f32.gmra.mrb[0].mxu0 %v245
      %v412 = vpop.f32.mrb[0].mxu0
      %v413 = vadd.f32 0.0, %v412
      %v414 = vpop.f32.mrb[0].mxu0
      %415 = vmatprep.mubr.f32.mxu0 0.0
      %416 = vmatmul.mubr.f32.gmra.mrb[0].mxu0 %v248
      %v417 = vpop.f32.mrb[0].mxu0
      %v418 = vadd.f32 0.0, %v417
      %v419 = vpop.f32.mrb[0].mxu0
      %420 = vmatprep.mubr.f32.mxu0 0.0
      %421 = vmatmul.mubr.f32.gmra.mrb[0].mxu0 %v251
      %v422 = vpop.f32.mrb[0].mxu0
      %v423 = vadd.f32 0.0, %v422
      %v424 = vpop.f32.mrb[0].mxu0
      %425 = vmatprep.mubr.f32.mxu0 0.0
      %426 = vmatmul.mubr.f32.gmra.mrb[0].mxu0 %v254
      %v427 = vpop.f32.mrb[0].mxu0
      %v428 = vadd.f32 0.0, %v427
      %v429 = vpop.f32.mrb[0].mxu0
      %430 = vmatprep.mubr.f32.mxu0 0.0
      %431 = vmatmul.mubr.f32.gmra.mrb[0].mxu0 %v257
      %v432 = vpop.f32.mrb[0].mxu0
      %v433 = vadd.f32 0.0, %v432
      %v434 = vpop.f32.mrb[0].mxu0
      %435 = vmatprep.mubr.f32.mxu0 0.0
      %436 = vmatmul.mubr.f32.gmra.mrb[0].mxu0 %v260
      %v437 = vpop.f32.mrb[0].mxu0
      %v438 = vadd.f32 0.0, %v437
      %v439 = vpop.f32.mrb[0].mxu0
      %440 = vmatprep.mubr.f32.mxu0 0.0
      %441 = vmatmul.mubr.f32.gmra.mrb[0].mxu0 %v263
      %v442 = vpop.f32.mrb[0].mxu0
      %v443 = vadd.f32 0.0, %v442
      %v444 = vpop.f32.mrb[0].mxu0
      %445 = vmatprep.mubr.f32.mxu0 0.0
      %446 = vmatmul.mubr.f32.gmra.mrb[0].mxu0 %v266
      %v447 = vpop.f32.mrb[0].mxu0
      %v448 = vadd.f32 0.0, %v447
      %v449 = vpop.f32.mrb[0].mxu0
      %450 = vmatprep.mubr.f32.mxu0 0.0
      %451 = vmatmul.mubr.f32.gmra.mrb[0].mxu0 %v269
      %v452 = vpop.f32.mrb[0].mxu0
      %v453 = vadd.f32 0.0, %v452
      %v454 = vpop.f32.mrb[0].mxu0
      %455 = vmatprep.mubr.f32.mxu0 0.0
      %456 = vmatmul.mubr.f32.gmra.mrb[0].mxu0 %v272
      %v457 = vpop.f32.mrb[0].mxu0
      %v458 = vadd.f32 0.0, %v457
      %v459 = vpop.f32.mrb[0].mxu0
      %460 = vmatprep.mubr.f32.mxu0 0.0
      %461 = vmatmul.mubr.f32.gmra.mrb[0].mxu0 %v275
      %v462 = vpop.f32.mrb[0].mxu0
      %v463 = vadd.f32 0.0, %v462
      %v464 = vpop.f32.mrb[0].mxu0
      %465 = vmatprep.mubr.f32.mxu0 0.0
      %466 = vmatmul.mubr.f32.gmra.mrb[0].mxu0 %v278
      %v467 = vpop.f32.mrb[0].mxu0
      %v468 = vadd.f32 0.0, %v467
      %v469 = vpop.f32.mrb[0].mxu0
      %470 = vmatprep.mubr.f32.mxu0 0.0
      %471 = vmatmul.mubr.f32.gmra.mrb[0].mxu0 %v281
      %v472 = vpop.f32.mrb[0].mxu0
      %v473 = vadd.f32 0.0, %v472
      %v474 = vpop.f32.mrb[0].mxu0
      %475 = vmatprep.mubr.f32.mxu0 0.0
      %476 = vmatmul.mubr.f32.gmra.mrb[0].mxu0 %v284
      %v477 = vpop.f32.mrb[0].mxu0
      %v478 = vadd.f32 0.0, %v477
      %v479 = vpop.f32.mrb[0].mxu0
      %480 = vmatprep.mubr.f32.mxu0 0.0
      %481 = vmatmul.mubr.f32.gmra.mrb[0].mxu0 %v287
      %v482 = vpop.f32.mrb[0].mxu0
      %v483 = vadd.f32 0.0, %v482
      %v484 = vpop.f32.mrb[0].mxu0
      %485 = vmatprep.mubr.f32.mxu0 0.0
      %486 = vmatmul.mubr.f32.gmra.mrb[0].mxu0 %v290
      %v487 = vpop.f32.mrb[0].mxu0
      %v488 = vadd.f32 0.0, %v487
      %v489 = vpop.f32.mrb[0].mxu0
      %490 = vmatprep.mubr.f32.mxu0 0.0
      %491 = vmatmul.mubr.f32.gmra.mrb[0].mxu0 %v293
      %v492 = vpop.f32.mrb[0].mxu0
      %v493 = vadd.f32 0.0, %v492
      %v494 = vpop.f32.mrb[0].mxu0
      %495 = vmatprep.mubr.f32.mxu0 0.0
      %496 = vmatmul.mubr.f32.gmra.mrb[0].mxu0 %v296
      %v497 = vpop.f32.mrb[0].mxu0
      %v498 = vadd.f32 0.0, %v497
      %v499 = vpop.f32.mrb[0].mxu0
      %500 = vmatprep.mubr.f32.mxu0 0.0
      %501 = vmatmul.mubr.f32.gmra.mrb[0].mxu0 %v299
      %v502 = vpop.f32.mrb[0].mxu0
      %v503 = vadd.f32 0.0, %v502
      %v504 = vpop.f32.mrb[0].mxu0
      %505 = vmatprep.mubr.f32.mxu0 0.0
      %506 = vmatmul.mubr.f32.gmra.mrb[0].mxu0 %v302
      %v507 = vpop.f32.mrb[0].mxu0
      %v508 = vadd.f32 0.0, %v507
      %v509 = vpop.f32.mrb[0].mxu0
      %510 = vmatprep.mubr.f32.mxu0 0.0
      %511 = vmatmul.mubr.f32.gmra.mrb[0].mxu0 %v305
      %v512 = vpop.f32.mrb[0].mxu0
      %v513 = vadd.f32 0.0, %v512
      %v514 = vpop.f32.mrb[0].mxu0
      %515 = vmatprep.mubr.f32.mxu0 0.0
      %516 = vmatmul.mubr.f32.gmra.mrb[0].mxu0 %v308
      %v517 = vpop.f32.mrb[0].mxu0
      %v518 = vadd.f32 0.0, %v517
      %v519 = vpop.f32.mrb[0].mxu0
      %520 = vmatprep.mubr.f32.mxu0 0.0
      %521 = vmatmul.mubr.f32.gmra.mrb[0].mxu0 %v311
      %v522 = vpop.f32.mrb[0].mxu0
      %v523 = vadd.f32 0.0, %v522
      %v524 = vpop.f32.mrb[0].mxu0
      %525 = vmatprep.mubr.f32.mxu0 0.0
      %526 = vmatmul.mubr.f32.gmra.mrb[0].mxu0 %v314
      %v527 = vpop.f32.mrb[0].mxu0
      %v528 = vadd.f32 0.0, %v527
      %v529 = vpop.f32.mrb[0].mxu0
      %530 = vmatprep.mubr.f32.mxu0 0.0
      %531 = vmatmul.mubr.f32.gmra.mrb[0].mxu0 %v317
      %v532 = vpop.f32.mrb[0].mxu0
      %v533 = vadd.f32 0.0, %v532
      %v534 = vpop.f32.mrb[0].mxu0
      %535 = vmatprep.mubr.f32.mxu0 0.0
      %536 = vmatmul.mubr.f32.gmra.mrb[0].mxu0 %v320
      %v537 = vpop.f32.mrb[0].mxu0
      %v538 = vadd.f32 0.0, %v537
      %v539 = vpop.f32.mrb[0].mxu0
      %540 = vmatprep.mubr.f32.mxu0 0.0
      %541 = vmatmul.mubr.f32.gmra.mrb[0].mxu0 %v323
      %v542 = vpop.f32.mrb[0].mxu0
      %v543 = vadd.f32 0.0, %v542
      %v544 = vpop.f32.mrb[0].mxu0
      %545 = vmatprep.mubr.f32.mxu0 0.0
      %546 = vmatmul.mubr.f32.gmra.mrb[0].mxu0 %v326
      %v547 = vpop.f32.mrb[0].mxu0
      %v548 = vadd.f32 0.0, %v547
      %v549 = vpop.f32.mrb[0].mxu0
      %550 = vmatprep.mubr.f32.mxu0 0.0
      %551 = vmatmul.mubr.f32.gmra.mrb[0].mxu0 %v329
      %v552 = vpop.f32.mrb[0].mxu0
      %v553 = vadd.f32 0.0, %v552
      %v554 = vpop.f32.mrb[0].mxu0
      %555 = vdwg.mxu0
      %v556 = vld [vmem:[%s2] sm:$0x1]
      %v558 = vlaneseq
      %v559 = vshrl.u32 %v558, 7
      %v560 = vsub.s32 0, %v559
      %v561 = vrot.slane %v556, %v560
      %v563 = vmul.f32 %v398, %v561
      %v564 = vmul.f32 %v403, %v561
      %v565 = vmul.f32 %v408, %v561
      %v566 = vmul.f32 %v413, %v561
      %v567 = vmul.f32 %v418, %v561
      %v568 = vmul.f32 %v423, %v561
      %v569 = vmul.f32 %v428, %v561
      %v570 = vmul.f32 %v433, %v561
      %v571 = vmul.f32 %v438, %v561
      %v572 = vmul.f32 %v443, %v561
      %v573 = vmul.f32 %v448, %v561
      %v574 = vmul.f32 %v453, %v561
      %v575 = vmul.f32 %v458, %v561
      %v576 = vmul.f32 %v463, %v561
      %v577 = vmul.f32 %v468, %v561
      %v578 = vmul.f32 %v473, %v561
      %v579 = vmul.f32 %v478, %v561
      %v580 = vmul.f32 %v483, %v561
      %v581 = vmul.f32 %v488, %v561
      %v582 = vmul.f32 %v493, %v561
      %v583 = vmul.f32 %v498, %v561
      %v584 = vmul.f32 %v503, %v561
      %v585 = vmul.f32 %v508, %v561
      %v586 = vmul.f32 %v513, %v561
      %v587 = vmul.f32 %v518, %v561
      %v588 = vmul.f32 %v523, %v561
      %v589 = vmul.f32 %v528, %v561
      %v590 = vmul.f32 %v533, %v561
      %v591 = vmul.f32 %v538, %v561
      %v592 = vmul.f32 %v543, %v561
      %v593 = vmul.f32 %v548, %v561
      %v594 = vmul.f32 %v553, %v561
      %v595 = vld [vmem:[%s3] sm:$0x1]
      %v597 = vlaneseq
      %v598 = vshrl.u32 %v597, 7
      %v599 = vsub.s32 0, %v598
      %v600 = vrot.slane %v595, %v599
      %v602 = vadd.f32 %v563, %v600
      %v603 = vadd.f32 %v564, %v600
      %v604 = vadd.f32 %v565, %v600
      %v605 = vadd.f32 %v566, %v600
      %v606 = vadd.f32 %v567, %v600
      %v607 = vadd.f32 %v568, %v600
      %v608 = vadd.f32 %v569, %v600
      %v609 = vadd.f32 %v570, %v600
      %v610 = vadd.f32 %v571, %v600
      %v611 = vadd.f32 %v572, %v600
      %v612 = vadd.f32 %v573, %v600
      %v613 = vadd.f32 %v574, %v600
      %v614 = vadd.f32 %v575, %v600
      %v615 = vadd.f32 %v576, %v600
      %v616 = vadd.f32 %v577, %v600
      %v617 = vadd.f32 %v578, %v600
      %v618 = vadd.f32 %v579, %v600
      %v619 = vadd.f32 %v580, %v600
      %v620 = vadd.f32 %v581, %v600
      %v621 = vadd.f32 %v582, %v600
      %v622 = vadd.f32 %v583, %v600
      %v623 = vadd.f32 %v584, %v600
      %v624 = vadd.f32 %v585, %v600
      %v625 = vadd.f32 %v586, %v600
      %v626 = vadd.f32 %v587, %v600
      %v627 = vadd.f32 %v588, %v600
      %v628 = vadd.f32 %v589, %v600
      %v629 = vadd.f32 %v590, %v600
      %v630 = vadd.f32 %v591, %v600
      %v631 = vadd.f32 %v592, %v600
      %v632 = vadd.f32 %v593, %v600
      %v633 = vadd.f32 %v594, %v600
      %v634 = vmax.f32 %v602, 0.0
      %v635 = vmax.f32 %v603, 0.0
      %v636 = vmax.f32 %v604, 0.0
      %v637 = vmax.f32 %v605, 0.0
      %v638 = vmax.f32 %v606, 0.0
      %v639 = vmax.f32 %v607, 0.0
      %v640 = vmax.f32 %v608, 0.0
      %v641 = vmax.f32 %v609, 0.0
      %v642 = vmax.f32 %v610, 0.0
      %v643 = vmax.f32 %v611, 0.0
      %v644 = vmax.f32 %v612, 0.0
      %v645 = vmax.f32 %v613, 0.0
      %v646 = vmax.f32 %v614, 0.0
      %v647 = vmax.f32 %v615, 0.0
      %v648 = vmax.f32 %v616, 0.0
      %v649 = vmax.f32 %v617, 0.0
      %v650 = vmax.f32 %v618, 0.0
      %v651 = vmax.f32 %v619, 0.0
      %v652 = vmax.f32 %v620, 0.0
      %v653 = vmax.f32 %v621, 0.0
      %v654 = vmax.f32 %v622, 0.0
      %v655 = vmax.f32 %v623, 0.0
      %v656 = vmax.f32 %v624, 0.0
      %v657 = vmax.f32 %v625, 0.0
      %v658 = vmax.f32 %v626, 0.0
      %v659 = vmax.f32 %v627, 0.0
      %v660 = vmax.f32 %v628, 0.0
      %v661 = vmax.f32 %v629, 0.0
      %v662 = vmax.f32 %v630, 0.0
      %v663 = vmax.f32 %v631, 0.0
      %v664 = vmax.f32 %v632, 0.0
      %v665 = vmax.f32 %v633, 0.0
      %vm666 = vcmask 130048
      %667 = vst.msk [vmem:[%s197] sm:$0xff] %vm666, %v634
      %668 = vst.msk [vmem:[%s197 + $0x8] sm:$0xff] %vm666, %v635
      %669 = vst.msk [vmem:[%s197 + $0x10] sm:$0xff] %vm666, %v636
      %670 = vst.msk [vmem:[%s197 + $0x18] sm:$0xff] %vm666, %v637
      %671 = vst.msk [vmem:[%s197 + $0x20] sm:$0xff] %vm666, %v638
      %672 = vst.msk [vmem:[%s197 + $0x28] sm:$0xff] %vm666, %v639
      %673 = vst.msk [vmem:[%s197 + $0x30] sm:$0xff] %vm666, %v640
      %674 = vst.msk [vmem:[%s197 + $0x38] sm:$0xff] %vm666, %v641
      %675 = vst.msk [vmem:[%s197 + $0x40] sm:$0xff] %vm666, %v642
      %676 = vst.msk [vmem:[%s197 + $0x48] sm:$0xff] %vm666, %v643
      %677 = vst.msk [vmem:[%s197 + $0x50] sm:$0xff] %vm666, %v644
      %678 = vst.msk [vmem:[%s197 + $0x58] sm:$0xff] %vm666, %v645
      %679 = vst.msk [vmem:[%s197 + $0x60] sm:$0xff] %vm666, %v646
      %680 = vst.msk [vmem:[%s197 + $0x68] sm:$0xff] %vm666, %v647
      %681 = vst.msk [vmem:[%s197 + $0x70] sm:$0xff] %vm666, %v648
      %682 = vst.msk [vmem:[%s197 + $0x78] sm:$0xff] %vm666, %v649
      %683 = vst.msk [vmem:[%s197 + $0x80] sm:$0xff] %vm666, %v650
      %684 = vst.msk [vmem:[%s197 + $0x88] sm:$0xff] %vm666, %v651
      %685 = vst.msk [vmem:[%s197 + $0x90] sm:$0xff] %vm666, %v652
      %686 = vst.msk [vmem:[%s197 + $0x98] sm:$0xff] %vm666, %v653
      %687 = vst.msk [vmem:[%s197 + $0xa0] sm:$0xff] %vm666, %v654
      %688 = vst.msk [vmem:[%s197 + $0xa8] sm:$0xff] %vm666, %v655
      %689 = vst.msk [vmem:[%s197 + $0xb0] sm:$0xff] %vm666, %v656
      %690 = vst.msk [vmem:[%s197 + $0xb8] sm:$0xff] %vm666, %v657
      %691 = vst.msk [vmem:[%s197 + $0xc0] sm:$0xff] %vm666, %v658
      %692 = vst.msk [vmem:[%s197 + $0xc8] sm:$0xff] %vm666, %v659
      %693 = vst.msk [vmem:[%s197 + $0xd0] sm:$0xff] %vm666, %v660
      %694 = vst.msk [vmem:[%s197 + $0xd8] sm:$0xff] %vm666, %v661
      %695 = vst.msk [vmem:[%s197 + $0xe0] sm:$0xff] %vm666, %v662
      %696 = vst.msk [vmem:[%s197 + $0xe8] sm:$0xff] %vm666, %v663
      %697 = vst.msk [vmem:[%s197 + $0xf0] sm:$0xff] %vm666, %v664
      %698 = vst.msk [vmem:[%s197 + $0xf8] sm:$0xff] %vm666, %v665
      %p699 = scmp.lt.s32.totalorder %s15, 1
      %s700 = scalar_select %p699, %s15, 1
      %s701 = smul.addr %s700, 32
      %s702 = smul.addr %s701, 8
      %s703 = scalar_lea.vmem %s4, %s702
      // Predicated region
      $region37: #{ffc_resnet_block_nchw.16} parent=35 // pred_check
        %p704 = pneg %p122
      $region38: #{ffc_resnet_block_nchw.16} parent=35 // pred_check_branch
        %706 = sbr.rel (%p704) target = $region40
      $region39: #{ffc_resnet_block_nchw.16} parent=35 // pred_region
        _
      $region40: #{ffc_resnet_block_nchw.16} parent=35 // pred_fallthru
        _
    $region36: #{ffc_resnet_block_nchw.16} parent=5 // pred_fallthru
      _
    %p707 = scmp.le.s32.totalorder 2, %s10
    // Predicated region
    $region41: #{ffc_resnet_block_nchw.16} parent=5 // pred_check
      %p708 = pneg %p707
    $region42: #{ffc_resnet_block_nchw.16} parent=5 // pred_check_branch
      %710 = sbr.rel (%p708) target = $region44
    $region43: #{ffc_resnet_block_nchw.16} parent=5 // pred_region
      %s711 = ssub.s32 %s10, 2
      // Predicated region
      $region45: #{ffc_resnet_block_nchw.16} parent=43 // pred_check
        %p712 = pneg %p128
      $region46: #{ffc_resnet_block_nchw.16} parent=43 // pred_check_branch
        %714 = sbr.rel (%p712) target = $region48
      $region47: #{ffc_resnet_block_nchw.16} parent=43 // pred_region
        %p715 = scmp.lt.s32.totalorder %s16, 1
        %s716 = scalar_select %p715, %s16, 1
        %s717 = smul.addr %s716, 32
        %s718 = smul.addr %s717, 8
        %s719 = scalar_lea.vmem %s4, %s718
      $region48: #{ffc_resnet_block_nchw.16} parent=43 // pred_fallthru
        _
    $region44: #{ffc_resnet_block_nchw.16} parent=5 // pred_fallthru
      _
  $region6: #{ffc_resnet_block_nchw.16} parent=0 // loop_footer
    %s14 = sadd.s32 1, %s10
  $region7: #{ffc_resnet_block_nchw.16} parent=0 // loop_footer_branch
    %9 = sbr.rel target = $region3
  $region8: #{ffc_resnet_block_nchw.16} parent=0 // loop_exit
    _

// kernel: ffc_resnet_block_nchw.19
$region0: #{ffc_resnet_block_nchw.19}
  #allocation0 [shape = 'u32[]', space=smem, size = 0x4, offset = 0x4, fixed_abs, tag = 'smem constant byte address 0x4 - core index']
  #allocation1 [shape = 'u32[144,128]{1,0:T(1,128)}', space=vmem, size = 0x12000, scoped, tag = 'internal scratch']
  %s0 = inlined_call_operand.vmem [shape: f32[2,256,64], index: 0, kind: input, shape index: {}]
  %s1 = inlined_call_operand.vmem [shape: f32[2,256,16], index: 1, kind: input, shape index: {}]
  %s2 = inlined_call_operand.vmem [shape: f32[16,64], index: 2, kind: input, shape index: {}]
  %s3 = inlined_call_operand.vmem [shape: f32[1,64], index: 3, kind: input, shape index: {}]
  %s4 = inlined_call_operand.vmem [shape: f32[1,64], index: 4, kind: input, shape index: {}]
  %s5 = inlined_call_operand.vmem [shape: f32[2,256,64], index: 5, kind: input, shape index: {}]
  %s6 = inlined_call_operand.vmem [shape: f32[2,256,64], index: 6, kind: output, shape index: {}]
  %s7 = sld [smem:[#allocation0]]
  $region57: #{ffc_resnet_block_nchw.19} parent=0
    _
  %s9 = ssub.s32 1, %s7
  %s10 = scalar_select 0, %s9, %s7
  loop: start=0, step=1, limit=4
  $region2: #{ffc_resnet_block_nchw.19} parent=0 // loop_pre_header
    _
  $region3: #{ffc_resnet_block_nchw.19} parent=0 // loop_header
    %s12 = sphi 0, %s16
    %p13 = scmp.ge.s32.totalorder %s12, 4
    %s22 = sphi 0, %s24
    %s25 = sphi 0, %s22
    %s26 = sphi 0, %s25
    %s42 = sphi 0, %s26
    %s48 = sphi 0, %s50
    %s51 = sphi 0, %s48
    %s52 = sphi 0, %s51
    %s68 = sphi 0, %s52
    %s72 = sphi 0, %s72
    %s74 = sphi 0, %s72
    %s75 = sphi 0, %s74
    %s89 = sphi 0, %s75
    %s93 = sphi 0, %s93
    %s95 = sphi 0, %s93
    %s96 = sphi 0, %s95
    %s110 = sphi 0, %s96
    %s114 = sphi 0, %s114
    %s116 = sphi 0, %s114
    %s117 = sphi 0, %s116
    %s131 = sphi 0, %s117
    %s137 = sphi 0, %s139
    %s140 = sphi 0, %s137
    %s141 = sphi 0, %s140
    %s157 = sphi 0, %s141
    %s163 = sphi 0, %s165
    %s166 = sphi 0, %s163
    %s167 = sphi 0, %s166
    %s183 = sphi 0, %s167
  $region4: #{ffc_resnet_block_nchw.19} parent=0 // loop_header_branch
    %15 = sbr.rel (%p13) target = $region8
  $region5: #{ffc_resnet_block_nchw.19} parent=0 // loop_body
    %s17 = ssub.s32 %s12, 1
    %s18 = ssub.s32 %s12, 2
    %s19 = sadd.s32 %s12, 1
    %s20 = ssub.s32 %s12, %s19
    %p21 = scmp.eq.s32.totalorder %s20, 0
    %s23 = sadd.s32 %s22, 1
    %s24 = scalar_select %p21, %s22, %s23
    %p27 = pneg %p21
    %p28 = scmp.eq.s32.totalorder %s12, 1
    %p29 = por %p27, %p28
    %p30 = scmp.ne.s32.totalorder %s22, %s25
    %p31 = scmp.eq.s32.totalorder %s12, 0
    %p32 = por %p30, %p31
    %p33 = scmp.ne.s32.totalorder %s22, %s25
    %p34 = scmp.eq.s32.totalorder %s17, 1
    %p35 = por %p33, %p34
    %p36 = scmp.ne.s32.totalorder %s25, %s26
    %p37 = scmp.eq.s32.totalorder %s17, 0
    %p38 = por %p36, %p37
    %p39 = scmp.ne.s32.totalorder %s25, %s26
    %p40 = scmp.eq.s32.totalorder %s18, 1
    %p41 = por %p39, %p40
    %p43 = scmp.ne.s32.totalorder %s26, %s42
    %p44 = scmp.eq.s32.totalorder %s18, 0
    %p45 = por %p43, %p44
    %s46 = ssub.s32 %s12, %s19
    %p47 = scmp.eq.s32.totalorder %s46, 0
    %s49 = sadd.s32 %s48, 1
    %s50 = scalar_select %p47, %s48, %s49
    %p53 = pneg %p47
    %p54 = scmp.eq.s32.totalorder %s12, 1
    %p55 = por %p53, %p54
    %p56 = scmp.ne.s32.totalorder %s48, %s51
    %p57 = scmp.eq.s32.totalorder %s12, 0
    %p58 = por %p56, %p57
    %p59 = scmp.ne.s32.totalorder %s48, %s51
    %p60 = scmp.eq.s32.totalorder %s17, 1
    %p61 = por %p59, %p60
    %p62 = scmp.ne.s32.totalorder %s51, %s52
    %p63 = scmp.eq.s32.totalorder %s17, 0
    %p64 = por %p62, %p63
    %p65 = scmp.ne.s32.totalorder %s51, %s52
    %p66 = scmp.eq.s32.totalorder %s18, 1
    %p67 = por %p65, %p66
    %p69 = scmp.ne.s32.totalorder %s52, %s68
    %p70 = scmp.eq.s32.totalorder %s18, 0
    %p71 = por %p69, %p70
    %s73 = sadd.s32 %s72, 1
    %p76 = scmp.eq.s32.totalorder %s12, 1
    %p77 = scmp.ne.s32.totalorder %s72, %s74
    %p78 = scmp.eq.s32.totalorder %s12, 0
    %p79 = por %p77, %p78
    %p80 = scmp.ne.s32.totalorder %s72, %s74
    %p81 = scmp.eq.s32.totalorder %s17, 1
    %p82 = por %p80, %p81
    %p83 = scmp.ne.s32.totalorder %s74, %s75
    %p84 = scmp.eq.s32.totalorder %s17, 0
    %p85 = por %p83, %p84
    %p86 = scmp.ne.s32.totalorder %s74, %s75
    %p87 = scmp.eq.s32.totalorder %s18, 1
    %p88 = por %p86, %p87
    %p90 = scmp.ne.s32.totalorder %s75, %s89
    %p91 = scmp.eq.s32.totalorder %s18, 0
    %p92 = por %p90, %p91
    %s94 = sadd.s32 %s93, 1
    %p97 = scmp.eq.s32.totalorder %s12, 1
    %p98 = scmp.ne.s32.totalorder %s93, %s95
    %p99 = scmp.eq.s32.totalorder %s12, 0
    %p100 = por %p98, %p99
    %p101 = scmp.ne.s32.totalorder %s93, %s95
    %p102 = scmp.eq.s32.totalorder %s17, 1
    %p103 = por %p101, %p102
    %p104 = scmp.ne.s32.totalorder %s95, %s96
    %p105 = scmp.eq.s32.totalorder %s17, 0
    %p106 = por %p104, %p105
    %p107 = scmp.ne.s32.totalorder %s95, %s96
    %p108 = scmp.eq.s32.totalorder %s18, 1
    %p109 = por %p107, %p108
    %p111 = scmp.ne.s32.totalorder %s96, %s110
    %p112 = scmp.eq.s32.totalorder %s18, 0
    %p113 = por %p111, %p112
    %s115 = sadd.s32 %s114, 1
    %p118 = scmp.eq.s32.totalorder %s12, 1
    %p119 = scmp.ne.s32.totalorder %s114, %s116
    %p120 = scmp.eq.s32.totalorder %s12, 0
    %p121 = por %p119, %p120
    %p122 = scmp.ne.s32.totalorder %s114, %s116
    %p123 = scmp.eq.s32.totalorder %s17, 1
    %p124 = por %p122, %p123
    %p125 = scmp.ne.s32.totalorder %s116, %s117
    %p126 = scmp.eq.s32.totalorder %s17, 0
    %p127 = por %p125, %p126
    %p128 = scmp.ne.s32.totalorder %s116, %s117
    %p129 = scmp.eq.s32.totalorder %s18, 1
    %p130 = por %p128, %p129
    %p132 = scmp.ne.s32.totalorder %s117, %s131
    %p133 = scmp.eq.s32.totalorder %s18, 0
    %p134 = por %p132, %p133
    %s135 = ssub.s32 %s12, %s19
    %p136 = scmp.eq.s32.totalorder %s135, 0
    %s138 = sadd.s32 %s137, 1
    %s139 = scalar_select %p136, %s137, %s138
    %p142 = pneg %p136
    %p143 = scmp.eq.s32.totalorder %s12, 1
    %p144 = por %p142, %p143
    %p145 = scmp.ne.s32.totalorder %s137, %s140
    %p146 = scmp.eq.s32.totalorder %s12, 0
    %p147 = por %p145, %p146
    %p148 = scmp.ne.s32.totalorder %s137, %s140
    %p149 = scmp.eq.s32.totalorder %s17, 1
    %p150 = por %p148, %p149
    %p151 = scmp.ne.s32.totalorder %s140, %s141
    %p152 = scmp.eq.s32.totalorder %s17, 0
    %p153 = por %p151, %p152
    %p154 = scmp.ne.s32.totalorder %s140, %s141
    %p155 = scmp.eq.s32.totalorder %s18, 1
    %p156 = por %p154, %p155
    %p158 = scmp.ne.s32.totalorder %s141, %s157
    %p159 = scmp.eq.s32.totalorder %s18, 0
    %p160 = por %p158, %p159
    %s161 = ssub.s32 %s12, %s19
    %p162 = scmp.eq.s32.totalorder %s161, 0
    %s164 = sadd.s32 %s163, 1
    %s165 = scalar_select %p162, %s163, %s164
    %p168 = pneg %p162
    %p169 = scmp.eq.s32.totalorder %s12, 1
    %p170 = por %p168, %p169
    %p171 = scmp.ne.s32.totalorder %s163, %s166
    %p172 = scmp.eq.s32.totalorder %s12, 0
    %p173 = por %p171, %p172
    %p174 = scmp.ne.s32.totalorder %s163, %s166
    %p175 = scmp.eq.s32.totalorder %s17, 1
    %p176 = por %p174, %p175
    %p177 = scmp.ne.s32.totalorder %s166, %s167
    %p178 = scmp.eq.s32.totalorder %s17, 0
    %p179 = por %p177, %p178
    %p180 = scmp.ne.s32.totalorder %s166, %s167
    %p181 = scmp.eq.s32.totalorder %s18, 1
    %p182 = por %p180, %p181
    %p184 = scmp.ne.s32.totalorder %s167, %s183
    %p185 = scmp.eq.s32.totalorder %s18, 0
    %p186 = por %p184, %p185
    %p187 = scmp.le.s32.totalorder 1, %s12
    %p188 = scmp.lt.s32.totalorder %s12, 3
    %p189 = pnand %p187, %p188
    %p190 = pneg %p189
    // Predicated region
    $region9: #{ffc_resnet_block_nchw.19} parent=5 // pred_check
      _
    $region10: #{ffc_resnet_block_nchw.19} parent=5 // pred_check_branch
      %192 = sbr.rel (%p189) target = $region12
    $region11: #{ffc_resnet_block_nchw.19} parent=5 // pred_region
      %s193 = ssub.s32 %s12, 1
      // Predicated region
      $region13: #{ffc_resnet_block_nchw.19} parent=11 // pred_check
        %p194 = pneg %p85
      $region14: #{ffc_resnet_block_nchw.19} parent=11 // pred_check_branch
        %196 = sbr.rel (%p194) target = $region16
      $region15: #{ffc_resnet_block_nchw.19} parent=11 // pred_region
        _
      $region16: #{ffc_resnet_block_nchw.19} parent=11 // pred_fallthru
        _
      // Predicated region
      $region17: #{ffc_resnet_block_nchw.19} parent=11 // pred_check
        %p197 = pneg %p106
      $region18: #{ffc_resnet_block_nchw.19} parent=11 // pred_check_branch
        %199 = sbr.rel (%p197) target = $region20
      $region19: #{ffc_resnet_block_nchw.19} parent=11 // pred_region
        _
      $region20: #{ffc_resnet_block_nchw.19} parent=11 // pred_fallthru
        _
      // Predicated region
      $region21: #{ffc_resnet_block_nchw.19} parent=11 // pred_check
        %p200 = pneg %p127
      $region22: #{ffc_resnet_block_nchw.19} parent=11 // pred_check_branch
        %202 = sbr.rel (%p200) target = $region24
      $region23: #{ffc_resnet_block_nchw.19} parent=11 // pred_region
        _
      $region24: #{ffc_resnet_block_nchw.19} parent=11 // pred_fallthru
        _
    $region12: #{ffc_resnet_block_nchw.19} parent=5 // pred_fallthru
      _
    %p203 = scmp.lt.s32.totalorder %s12, 2
    // Predicated region
    $region25: #{ffc_resnet_block_nchw.19} parent=5 // pred_check
      %p204 = pneg %p203
    $region26: #{ffc_resnet_block_nchw.19} parent=5 // pred_check_branch
      %206 = sbr.rel (%p204) target = $region28
    $region27: #{ffc_resnet_block_nchw.19} parent=5 // pred_region
      // Predicated region
      $region29: #{ffc_resnet_block_nchw.19} parent=27 // pred_check
        %p207 = pneg %p32
      $region30: #{ffc_resnet_block_nchw.19} parent=27 // pred_check_branch
        %209 = sbr.rel (%p207) target = $region32
      $region31: #{ffc_resnet_block_nchw.19} parent=27 // pred_region
        %p210 = scmp.lt.s32.totalorder %s12, 1
        %s211 = scalar_select %p210, %s12, 1
        %s212 = smul.addr %s211, 32
        %s213 = smul.addr %s212, 8
        %s214 = scalar_lea.vmem %s0, %s213
      $region32: #{ffc_resnet_block_nchw.19} parent=27 // pred_fallthru
        _
      // Predicated region
      $region33: #{ffc_resnet_block_nchw.19} parent=27 // pred_check
        %p215 = pneg %p58
      $region34: #{ffc_resnet_block_nchw.19} parent=27 // pred_check_branch
        %217 = sbr.rel (%p215) target = $region36
      $region35: #{ffc_resnet_block_nchw.19} parent=27 // pred_region
        %p218 = scmp.lt.s32.totalorder %s12, 1
        %s219 = scalar_select %p218, %s12, 1
        %s220 = smul.addr %s219, 32
        %s221 = smul.addr %s220, 8
        %s222 = scalar_lea.vmem %s1, %s221
      $region36: #{ffc_resnet_block_nchw.19} parent=27 // pred_fallthru
        _
      // Predicated region
      $region37: #{ffc_resnet_block_nchw.19} parent=27 // pred_check
        %p223 = pneg %p147
      $region38: #{ffc_resnet_block_nchw.19} parent=27 // pred_check_branch
        %225 = sbr.rel (%p223) target = $region40
      $region39: #{ffc_resnet_block_nchw.19} parent=27 // pred_region
        %p226 = scmp.lt.s32.totalorder %s12, 1
        %s227 = scalar_select %p226, %s12, 1
        %s228 = smul.addr %s227, 32
        %s229 = smul.addr %s228, 8
        %s230 = scalar_lea.vmem %s5, %s229
      $region40: #{ffc_resnet_block_nchw.19} parent=27 // pred_fallthru
        _
    $region28: #{ffc_resnet_block_nchw.19} parent=5 // pred_fallthru
      _
    %p231 = scmp.le.s32.totalorder 1, %s12
    %p232 = scmp.lt.s32.totalorder %s12, 3
    %p233 = pnand %p231, %p232
    %p234 = pneg %p233
    // Predicated region
    $region41: #{ffc_resnet_block_nchw.19} parent=5 // pred_check
      _
    $region42: #{ffc_resnet_block_nchw.19} parent=5 // pred_check_branch
      %236 = sbr.rel (%p233) target = $region44
    $region43: #{ffc_resnet_block_nchw.19} parent=5 // pred_region
      %s237 = ssub.s32 %s12, 1
      %p238 = scmp.lt.s32.totalorder %s17, 1
      %s239 = scalar_select %p238, %s17, 1
      %s240 = smul.addr %s239, 32
      %s241 = smul.addr %s240, 8
      %s242 = scalar_lea.vmem %s0, %s241
      %p243 = pneg %p38
      %p244 = pneg %p35
      %p245 = scmp.lt.s32.totalorder %s17, 1
      %s246 = scalar_select %p245, %s17, 1
      %s247 = smul.addr %s246, 32
      %s248 = smul.addr %s247, 8
      %s249 = scalar_lea.vmem %s1, %s248
      %p250 = pneg %p64
      %p251 = pneg %p61
      %p252 = pneg %p85
      %p253 = pneg %p82
      %p254 = pneg %p106
      %p255 = pneg %p103
      %p256 = pneg %p127
      %p257 = pneg %p124
      %p258 = scmp.lt.s32.totalorder %s17, 1
      %s259 = scalar_select %p258, %s17, 1
      %s260 = smul.addr %s259, 32
      %s261 = smul.addr %s260, 8
      %s262 = scalar_lea.vmem %s5, %s261
      %p263 = pneg %p153
      %p264 = pneg %p150
      %p265 = pneg %p179
      %p266 = pneg %p176
      %p267 = scmp.lt.s32.totalorder %s17, 1
      %s268 = scalar_select %p267, %s17, 1
      %s269 = smul.addr %s268, 32
      %s270 = smul.addr %s269, 8
      %s271 = scalar_lea.vmem %s6, %s270
      %p272 = scmp.lt.s32.totalorder %s17, 1
      %s273 = scalar_select %p272, %s17, 1
      %s274 = smul.addr %s273, 32
      %s275 = smul.addr %s274, 8
      %s276 = scalar_lea.vmem %s0, %s275
      %p277 = scmp.lt.s32.totalorder %s17, 1
      %s278 = scalar_select %p277, %s17, 1
      %s279 = smul.addr %s278, 32
      %s280 = smul.addr %s279, 8
      %s281 = scalar_lea.vmem %s1, %s280
      %p282 = scmp.lt.s32.totalorder %s17, 1
      %s283 = scalar_select %p282, %s17, 1
      %s284 = smul.addr %s283, 32
      %s285 = smul.addr %s284, 8
      %s286 = scalar_lea.vmem %s5, %s285
      %p287 = scmp.lt.s32.totalorder %s17, 1
      %s288 = scalar_select %p287, %s17, 1
      %s289 = smul.addr %s288, 32
      %s290 = smul.addr %s289, 8
      %s291 = scalar_lea.vmem %s6, %s290
      %v292 = vld [vmem:[%s276] sm:$0xff]
      %v293 = vld [vmem:[%s276 + $0x8] sm:$0xff]
      %v294 = vld [vmem:[%s276 + $0x10] sm:$0xff]
      %v295 = vld [vmem:[%s276 + $0x18] sm:$0xff]
      %v296 = vld [vmem:[%s276 + $0x20] sm:$0xff]
      %v297 = vld [vmem:[%s276 + $0x28] sm:$0xff]
      %v298 = vld [vmem:[%s276 + $0x30] sm:$0xff]
      %v299 = vld [vmem:[%s276 + $0x38] sm:$0xff]
      %v300 = vld [vmem:[%s276 + $0x40] sm:$0xff]
      %v301 = vld [vmem:[%s276 + $0x48] sm:$0xff]
      %v302 = vld [vmem:[%s276 + $0x50] sm:$0xff]
      %v303 = vld [vmem:[%s276 + $0x58] sm:$0xff]
      %v304 = vld [vmem:[%s276 + $0x60] sm:$0xff]
      %v305 = vld [vmem:[%s276 + $0x68] sm:$0xff]
      %v306 = vld [vmem:[%s276 + $0x70] sm:$0xff]
      %v307 = vld [vmem:[%s276 + $0x78] sm:$0xff]
      %v308 = vld [vmem:[%s276 + $0x80] sm:$0xff]
      %v309 = vld [vmem:[%s276 + $0x88] sm:$0xff]
      %v310 = vld [vmem:[%s276 + $0x90] sm:$0xff]
      %v311 = vld [vmem:[%s276 + $0x98] sm:$0xff]
      %v312 = vld [vmem:[%s276 + $0xa0] sm:$0xff]
      %v313 = vld [vmem:[%s276 + $0xa8] sm:$0xff]
      %v314 = vld [vmem:[%s276 + $0xb0] sm:$0xff]
      %v315 = vld [vmem:[%s276 + $0xb8] sm:$0xff]
      %v316 = vld [vmem:[%s276 + $0xc0] sm:$0xff]
      %v317 = vld [vmem:[%s276 + $0xc8] sm:$0xff]
      %v318 = vld [vmem:[%s276 + $0xd0] sm:$0xff]
      %v319 = vld [vmem:[%s276 + $0xd8] sm:$0xff]
      %v320 = vld [vmem:[%s276 + $0xe0] sm:$0xff]
      %v321 = vld [vmem:[%s276 + $0xe8] sm:$0xff]
      %v322 = vld [vmem:[%s276 + $0xf0] sm:$0xff]
      %v323 = vld [vmem:[%s276 + $0xf8] sm:$0xff]
      %v324 = vld [vmem:[%s281] sm:$0xff]
      %v325 = vld [vmem:[%s281 + $0x8] sm:$0xff]
      %v326 = vld [vmem:[%s281 + $0x10] sm:$0xff]
      %v327 = vld [vmem:[%s281 + $0x18] sm:$0xff]
      %v328 = vld [vmem:[%s281 + $0x20] sm:$0xff]
      %v329 = vld [vmem:[%s281 + $0x28] sm:$0xff]
      %v330 = vld [vmem:[%s281 + $0x30] sm:$0xff]
      %v331 = vld [vmem:[%s281 + $0x38] sm:$0xff]
      %v332 = vld [vmem:[%s281 + $0x40] sm:$0xff]
      %v333 = vld [vmem:[%s281 + $0x48] sm:$0xff]
      %v334 = vld [vmem:[%s281 + $0x50] sm:$0xff]
      %v335 = vld [vmem:[%s281 + $0x58] sm:$0xff]
      %v336 = vld [vmem:[%s281 + $0x60] sm:$0xff]
      %v337 = vld [vmem:[%s281 + $0x68] sm:$0xff]
      %v338 = vld [vmem:[%s281 + $0x70] sm:$0xff]
      %v339 = vld [vmem:[%s281 + $0x78] sm:$0xff]
      %v340 = vld [vmem:[%s281 + $0x80] sm:$0xff]
      %v341 = vld [vmem:[%s281 + $0x88] sm:$0xff]
      %v342 = vld [vmem:[%s281 + $0x90] sm:$0xff]
      %v343 = vld [vmem:[%s281 + $0x98] sm:$0xff]
      %v344 = vld [vmem:[%s281 + $0xa0] sm:$0xff]
      %v345 = vld [vmem:[%s281 + $0xa8] sm:$0xff]
      %v346 = vld [vmem:[%s281 + $0xb0] sm:$0xff]
      %v347 = vld [vmem:[%s281 + $0xb8] sm:$0xff]
      %v348 = vld [vmem:[%s281 + $0xc0] sm:$0xff]
      %v349 = vld [vmem:[%s281 + $0xc8] sm:$0xff]
      %v350 = vld [vmem:[%s281 + $0xd0] sm:$0xff]
      %v351 = vld [vmem:[%s281 + $0xd8] sm:$0xff]
      %v352 = vld [vmem:[%s281 + $0xe0] sm:$0xff]
      %v353 = vld [vmem:[%s281 + $0xe8] sm:$0xff]
      %v354 = vld [vmem:[%s281 + $0xf0] sm:$0xff]
      %v355 = vld [vmem:[%s281 + $0xf8] sm:$0xff]
      %v356 = vld [vmem:[%s2] sm:$0xff]
      %v357 = vld [vmem:[%s2 + $0x8] sm:$0xff]
      %vm358 = vcmask 130048
      %v360 = vsel %vm358, %v324, 0
      %v363 = vsel %vm358, %v325, 0
      %v366 = vsel %vm358, %v326, 0
      %v369 = vsel %vm358, %v327, 0
      %v372 = vsel %vm358, %v328, 0
      %v375 = vsel %vm358, %v329, 0
      %v378 = vsel %vm358, %v330, 0
      %v381 = vsel %vm358, %v331, 0
      %v384 = vsel %vm358, %v332, 0
      %v387 = vsel %vm358, %v333, 0
      %v390 = vsel %vm358, %v334, 0
      %v393 = vsel %vm358, %v335, 0
      %v396 = vsel %vm358, %v336, 0
      %v399 = vsel %vm358, %v337, 0
      %v402 = vsel %vm358, %v338, 0
      %v405 = vsel %vm358, %v339, 0
      %v408 = vsel %vm358, %v340, 0
      %v411 = vsel %vm358, %v341, 0
      %v414 = vsel %vm358, %v342, 0
      %v417 = vsel %vm358, %v343, 0
      %v420 = vsel %vm358, %v344, 0
      %v423 = vsel %vm358, %v345, 0
      %v426 = vsel %vm358, %v346, 0
      %v429 = vsel %vm358, %v347, 0
      %v432 = vsel %vm358, %v348, 0
      %v435 = vsel %vm358, %v349, 0
      %v438 = vsel %vm358, %v350, 0
      %v441 = vsel %vm358, %v351, 0
      %v444 = vsel %vm358, %v352, 0
      %v447 = vsel %vm358, %v353, 0
      %v450 = vsel %vm358, %v354, 0
      %v453 = vsel %vm358, %v355, 0
      %455 = vmatprep.subr.mxu0 0.0
      %456 = vmatpush1.msra.mxu0 %v356
      %457 = vmatprep.subr.mxu0 0.0
      %458 = vmatpush1.msra.mxu0 %v357
      %459 = vmatprep.subr.mxu0 0.0
      %460 = vmatpush1.msra.mxu0 0.0
      %461 = vmatprep.subr.mxu0 0.0
      %462 = vmatpush1.msra.mxu0 0.0
      %463 = vmatprep.subr.mxu0 0.0
      %464 = vmatpush1.msra.mxu0 0.0
      %465 = vmatprep.subr.mxu0 0.0
      %466 = vmatpush1.msra.mxu0 0.0
      %467 = vmatprep.subr.mxu0 0.0
      %468 = vmatpush1.msra.mxu0 0.0
      %469 = vmatprep.subr.mxu0 0.0
      %470 = vmatpush1.msra.mxu0 0.0
      %471 = vmatprep.subr.mxu0 0.0
      %472 = vmatpush1.msra.mxu0 0.0
      %473 = vmatprep.subr.mxu0 0.0
      %474 = vmatpush1.msra.mxu0 0.0
      %475 = vmatprep.subr.mxu0 0.0
      %476 = vmatpush1.msra.mxu0 0.0
      %477 = vmatprep.subr.mxu0 0.0
      %478 = vmatpush1.msra.mxu0 0.0
      %479 = vmatprep.subr.mxu0 0.0
      %480 = vmatpush1.msra.mxu0 0.0
      %481 = vmatprep.subr.mxu0 0.0
      %482 = vmatpush1.msra.mxu0 0.0
      %483 = vmatprep.subr.mxu0 0.0
      %484 = vmatpush1.msra.mxu0 0.0
      %485 = vmatprep.subr.mxu0 0.0
      %486 = vmatpush1.msra.mxu0 0.0
      %487 = vmatprep.subr.mxu0 0.0
      %488 = vmatpush1.msra.mxu0 0.0
      %489 = vmatprep.subr.mxu0 0.0
      %490 = vmatpush1.msra.mxu0 0.0
      %491 = vmatprep.subr.mxu0 0.0
      %492 = vmatpush1.msra.mxu0 0.0
      %493 = vmatprep.subr.mxu0 0.0
      %494 = vmatpush1.msra.mxu0 0.0
      %495 = vmatprep.subr.mxu0 0.0
      %496 = vmatpush1.msra.mxu0 0.0
      %497 = vmatprep.subr.mxu0 0.0
      %498 = vmatpush1.msra.mxu0 0.0
      %499 = vmatprep.subr.mxu0 0.0
      %500 = vmatpush1.msra.mxu0 0.0
      %501 = vmatprep.subr.mxu0 0.0
      %502 = vmatpush1.msra.mxu0 0.0
      %503 = vmatprep.subr.mxu0 0.0
      %504 = vmatpush1.msra.mxu0 0.0
      %505 = vmatprep.subr.mxu0 0.0
      %506 = vmatpush1.msra.mxu0 0.0
      %507 = vmatprep.subr.mxu0 0.0
      %508 = vmatpush1.msra.mxu0 0.0
      %509 = vmatprep.subr.mxu0 0.0
      %510 = vmatpush1.msra.mxu0 0.0
      %511 = vmatprep.subr.mxu0 0.0
      %512 = vmatpush1.msra.mxu0 0.0
      %513 = vmatprep.subr.mxu0 0.0
      %514 = vmatpush1.msra.mxu0 0.0
      %515 = vmatprep.subr.mxu0 0.0
      %516 = vmatpush1.msra.mxu0 0.0
      %517 = vmatprep.subr.mxu0 0.0
      %518 = vmatpush1.msra.mxu0 0.0
      %519 = vmatprep.mubr.f32.mxu0 0.0
      %520 = vmatmul.mubr.f32.gmra.mrb[0].mxu0 %v360
      %v521 = vpop.f32.mrb[0].mxu0
      %v522 = vadd.f32 0.0, %v521
      %v523 = vpop.f32.mrb[0].mxu0
      %524 = vmatprep.mubr.f32.mxu0 0.0
      %525 = vmatmul.mubr.f32.gmra.mrb[0].mxu0 %v363
      %v526 = vpop.f32.mrb[0].mxu0
      %v527 = vadd.f32 0.0, %v526
      %v528 = vpop.f32.mrb[0].mxu0
      %529 = vmatprep.mubr.f32.mxu0 0.0
      %530 = vmatmul.mubr.f32.gmra.mrb[0].mxu0 %v366
      %v531 = vpop.f32.mrb[0].mxu0
      %v532 = vadd.f32 0.0, %v531
      %v533 = vpop.f32.mrb[0].mxu0
      %534 = vmatprep.mubr.f32.mxu0 0.0
      %535 = vmatmul.mubr.f32.gmra.mrb[0].mxu0 %v369
      %v536 = vpop.f32.mrb[0].mxu0
      %v537 = vadd.f32 0.0, %v536
      %v538 = vpop.f32.mrb[0].mxu0
      %539 = vmatprep.mubr.f32.mxu0 0.0
      %540 = vmatmul.mubr.f32.gmra.mrb[0].mxu0 %v372
      %v541 = vpop.f32.mrb[0].mxu0
      %v542 = vadd.f32 0.0, %v541
      %v543 = vpop.f32.mrb[0].mxu0
      %544 = vmatprep.mubr.f32.mxu0 0.0
      %545 = vmatmul.mubr.f32.gmra.mrb[0].mxu0 %v375
      %v546 = vpop.f32.mrb[0].mxu0
      %v547 = vadd.f32 0.0, %v546
      %v548 = vpop.f32.mrb[0].mxu0
      %549 = vmatprep.mubr.f32.mxu0 0.0
      %550 = vmatmul.mubr.f32.gmra.mrb[0].mxu0 %v378
      %v551 = vpop.f32.mrb[0].mxu0
      %v552 = vadd.f32 0.0, %v551
      %v553 = vpop.f32.mrb[0].mxu0
      %554 = vmatprep.mubr.f32.mxu0 0.0
      %555 = vmatmul.mubr.f32.gmra.mrb[0].mxu0 %v381
      %v556 = vpop.f32.mrb[0].mxu0
      %v557 = vadd.f32 0.0, %v556
      %v558 = vpop.f32.mrb[0].mxu0
      %559 = vmatprep.mubr.f32.mxu0 0.0
      %560 = vmatmul.mubr.f32.gmra.mrb[0].mxu0 %v384
      %v561 = vpop.f32.mrb[0].mxu0
      %v562 = vadd.f32 0.0, %v561
      %v563 = vpop.f32.mrb[0].mxu0
      %564 = vmatprep.mubr.f32.mxu0 0.0
      %565 = vmatmul.mubr.f32.gmra.mrb[0].mxu0 %v387
      %v566 = vpop.f32.mrb[0].mxu0
      %v567 = vadd.f32 0.0, %v566
      %v568 = vpop.f32.mrb[0].mxu0
      %569 = vmatprep.mubr.f32.mxu0 0.0
      %570 = vmatmul.mubr.f32.gmra.mrb[0].mxu0 %v390
      %v571 = vpop.f32.mrb[0].mxu0
      %v572 = vadd.f32 0.0, %v571
      %v573 = vpop.f32.mrb[0].mxu0
      %574 = vmatprep.mubr.f32.mxu0 0.0
      %575 = vmatmul.mubr.f32.gmra.mrb[0].mxu0 %v393
      %v576 = vpop.f32.mrb[0].mxu0
      %v577 = vadd.f32 0.0, %v576
      %v578 = vpop.f32.mrb[0].mxu0
      %579 = vmatprep.mubr.f32.mxu0 0.0
      %580 = vmatmul.mubr.f32.gmra.mrb[0].mxu0 %v396
      %v581 = vpop.f32.mrb[0].mxu0
      %v582 = vadd.f32 0.0, %v581
      %v583 = vpop.f32.mrb[0].mxu0
      %584 = vmatprep.mubr.f32.mxu0 0.0
      %585 = vmatmul.mubr.f32.gmra.mrb[0].mxu0 %v399
      %v586 = vpop.f32.mrb[0].mxu0
      %v587 = vadd.f32 0.0, %v586
      %v588 = vpop.f32.mrb[0].mxu0
      %589 = vmatprep.mubr.f32.mxu0 0.0
      %590 = vmatmul.mubr.f32.gmra.mrb[0].mxu0 %v402
      %v591 = vpop.f32.mrb[0].mxu0
      %v592 = vadd.f32 0.0, %v591
      %v593 = vpop.f32.mrb[0].mxu0
      %594 = vmatprep.mubr.f32.mxu0 0.0
      %595 = vmatmul.mubr.f32.gmra.mrb[0].mxu0 %v405
      %v596 = vpop.f32.mrb[0].mxu0
      %v597 = vadd.f32 0.0, %v596
      %v598 = vpop.f32.mrb[0].mxu0
      %599 = vmatprep.mubr.f32.mxu0 0.0
      %600 = vmatmul.mubr.f32.gmra.mrb[0].mxu0 %v408
      %v601 = vpop.f32.mrb[0].mxu0
      %v602 = vadd.f32 0.0, %v601
      %v603 = vpop.f32.mrb[0].mxu0
      %604 = vmatprep.mubr.f32.mxu0 0.0
      %605 = vmatmul.mubr.f32.gmra.mrb[0].mxu0 %v411
      %v606 = vpop.f32.mrb[0].mxu0
      %v607 = vadd.f32 0.0, %v606
      %v608 = vpop.f32.mrb[0].mxu0
      %609 = vmatprep.mubr.f32.mxu0 0.0
      %610 = vmatmul.mubr.f32.gmra.mrb[0].mxu0 %v414
      %v611 = vpop.f32.mrb[0].mxu0
      %v612 = vadd.f32 0.0, %v611
      %v613 = vpop.f32.mrb[0].mxu0
      %614 = vmatprep.mubr.f32.mxu0 0.0
      %615 = vmatmul.mubr.f32.gmra.mrb[0].mxu0 %v417
      %v616 = vpop.f32.mrb[0].mxu0
      %v617 = vadd.f32 0.0, %v616
      %v618 = vpop.f32.mrb[0].mxu0
      %619 = vmatprep.mubr.f32.mxu0 0.0
      %620 = vmatmul.mubr.f32.gmra.mrb[0].mxu0 %v420
      %v621 = vpop.f32.mrb[0].mxu0
      %v622 = vadd.f32 0.0, %v621
      %v623 = vpop.f32.mrb[0].mxu0
      %624 = vmatprep.mubr.f32.mxu0 0.0
      %625 = vmatmul.mubr.f32.gmra.mrb[0].mxu0 %v423
      %v626 = vpop.f32.mrb[0].mxu0
      %v627 = vadd.f32 0.0, %v626
      %v628 = vpop.f32.mrb[0].mxu0
      %629 = vmatprep.mubr.f32.mxu0 0.0
      %630 = vmatmul.mubr.f32.gmra.mrb[0].mxu0 %v426
      %v631 = vpop.f32.mrb[0].mxu0
      %v632 = vadd.f32 0.0, %v631
      %v633 = vpop.f32.mrb[0].mxu0
      %634 = vmatprep.mubr.f32.mxu0 0.0
      %635 = vmatmul.mubr.f32.gmra.mrb[0].mxu0 %v429
      %v636 = vpop.f32.mrb[0].mxu0
      %v637 = vadd.f32 0.0, %v636
      %v638 = vpop.f32.mrb[0].mxu0
      %639 = vmatprep.mubr.f32.mxu0 0.0
      %640 = vmatmul.mubr.f32.gmra.mrb[0].mxu0 %v432
      %v641 = vpop.f32.mrb[0].mxu0
      %v642 = vadd.f32 0.0, %v641
      %v643 = vpop.f32.mrb[0].mxu0
      %644 = vmatprep.mubr.f32.mxu0 0.0
      %645 = vmatmul.mubr.f32.gmra.mrb[0].mxu0 %v435
      %v646 = vpop.f32.mrb[0].mxu0
      %v647 = vadd.f32 0.0, %v646
      %v648 = vpop.f32.mrb[0].mxu0
      %649 = vmatprep.mubr.f32.mxu0 0.0
      %650 = vmatmul.mubr.f32.gmra.mrb[0].mxu0 %v438
      %v651 = vpop.f32.mrb[0].mxu0
      %v652 = vadd.f32 0.0, %v651
      %v653 = vpop.f32.mrb[0].mxu0
      %654 = vmatprep.mubr.f32.mxu0 0.0
      %655 = vmatmul.mubr.f32.gmra.mrb[0].mxu0 %v441
      %v656 = vpop.f32.mrb[0].mxu0
      %v657 = vadd.f32 0.0, %v656
      %v658 = vpop.f32.mrb[0].mxu0
      %659 = vmatprep.mubr.f32.mxu0 0.0
      %660 = vmatmul.mubr.f32.gmra.mrb[0].mxu0 %v444
      %v661 = vpop.f32.mrb[0].mxu0
      %v662 = vadd.f32 0.0, %v661
      %v663 = vpop.f32.mrb[0].mxu0
      %664 = vmatprep.mubr.f32.mxu0 0.0
      %665 = vmatmul.mubr.f32.gmra.mrb[0].mxu0 %v447
      %v666 = vpop.f32.mrb[0].mxu0
      %v667 = vadd.f32 0.0, %v666
      %v668 = vpop.f32.mrb[0].mxu0
      %669 = vmatprep.mubr.f32.mxu0 0.0
      %670 = vmatmul.mubr.f32.gmra.mrb[0].mxu0 %v450
      %v671 = vpop.f32.mrb[0].mxu0
      %v672 = vadd.f32 0.0, %v671
      %v673 = vpop.f32.mrb[0].mxu0
      %674 = vmatprep.mubr.f32.mxu0 0.0
      %675 = vmatmul.mubr.f32.gmra.mrb[0].mxu0 %v453
      %v676 = vpop.f32.mrb[0].mxu0
      %v677 = vadd.f32 0.0, %v676
      %v678 = vpop.f32.mrb[0].mxu0
      %679 = vdwg.mxu0
      %v680 = vadd.f32 %v292, %v522
      %v681 = vadd.f32 %v293, %v527
      %v682 = vadd.f32 %v294, %v532
      %v683 = vadd.f32 %v295, %v537
      %v684 = vadd.f32 %v296, %v542
      %v685 = vadd.f32 %v297, %v547
      %v686 = vadd.f32 %v298, %v552
      %v687 = vadd.f32 %v299, %v557
      %v688 = vadd.f32 %v300, %v562
      %v689 = vadd.f32 %v301, %v567
      %v690 = vadd.f32 %v302, %v572
      %v691 = vadd.f32 %v303, %v577
      %v692 = vadd.f32 %v304, %v582
      %v693 = vadd.f32 %v305, %v587
      %v694 = vadd.f32 %v306, %v592
      %v695 = vadd.f32 %v307, %v597
      %v696 = vadd.f32 %v308, %v602
      %v697 = vadd.f32 %v309, %v607
      %v698 = vadd.f32 %v310, %v612
      %v699 = vadd.f32 %v311, %v617
      %v700 = vadd.f32 %v312, %v622
      %v701 = vadd.f32 %v313, %v627
      %v702 = vadd.f32 %v314, %v632
      %v703 = vadd.f32 %v315, %v637
      %v704 = vadd.f32 %v316, %v642
      %v705 = vadd.f32 %v317, %v647
      %v706 = vadd.f32 %v318, %v652
      %v707 = vadd.f32 %v319, %v657
      %v708 = vadd.f32 %v320, %v662
      %v709 = vadd.f32 %v321, %v667
      %v710 = vadd.f32 %v322, %v672
      %v711 = vadd.f32 %v323, %v677
      %v712 = vld [vmem:[%s3] sm:$0x1]
      %v714 = vlaneseq
      %v715 = vshrl.u32 %v714, 7
      %v716 = vsub.s32 0, %v715
      %v717 = vrot.slane %v712, %v716
      %v719 = vmul.f32 %v680, %v717
      %v720 = vmul.f32 %v681, %v717
      %v721 = vmul.f32 %v682, %v717
      %v722 = vmul.f32 %v683, %v717
      %v723 = vmul.f32 %v684, %v717
      %v724 = vmul.f32 %v685, %v717
      %v725 = vmul.f32 %v686, %v717
      %v726 = vmul.f32 %v687, %v717
      %v727 = vmul.f32 %v688, %v717
      %v728 = vmul.f32 %v689, %v717
      %v729 = vmul.f32 %v690, %v717
      %v730 = vmul.f32 %v691, %v717
      %v731 = vmul.f32 %v692, %v717
      %v732 = vmul.f32 %v693, %v717
      %v733 = vmul.f32 %v694, %v717
      %v734 = vmul.f32 %v695, %v717
      %v735 = vmul.f32 %v696, %v717
      %v736 = vmul.f32 %v697, %v717
      %v737 = vmul.f32 %v698, %v717
      %v738 = vmul.f32 %v699, %v717
      %v739 = vmul.f32 %v700, %v717
      %v740 = vmul.f32 %v701, %v717
      %v741 = vmul.f32 %v702, %v717
      %v742 = vmul.f32 %v703, %v717
      %v743 = vmul.f32 %v704, %v717
      %v744 = vmul.f32 %v705, %v717
      %v745 = vmul.f32 %v706, %v717
      %v746 = vmul.f32 %v707, %v717
      %v747 = vmul.f32 %v708, %v717
      %v748 = vmul.f32 %v709, %v717
      %v749 = vmul.f32 %v710, %v717
      %v750 = vmul.f32 %v711, %v717
      %v751 = vld [vmem:[%s4] sm:$0x1]
      %v753 = vlaneseq
      %v754 = vshrl.u32 %v753, 7
      %v755 = vsub.s32 0, %v754
      %v756 = vrot.slane %v751, %v755
      %v758 = vadd.f32 %v719, %v756
      %v759 = vadd.f32 %v720, %v756
      %v760 = vadd.f32 %v721, %v756
      %v761 = vadd.f32 %v722, %v756
      %v762 = vadd.f32 %v723, %v756
      %v763 = vadd.f32 %v724, %v756
      %v764 = vadd.f32 %v725, %v756
      %v765 = vadd.f32 %v726, %v756
      %v766 = vadd.f32 %v727, %v756
      %v767 = vadd.f32 %v728, %v756
      %v768 = vadd.f32 %v729, %v756
      %v769 = vadd.f32 %v730, %v756
      %v770 = vadd.f32 %v731, %v756
      %v771 = vadd.f32 %v732, %v756
      %v772 = vadd.f32 %v733, %v756
      %v773 = vadd.f32 %v734, %v756
      %v774 = vadd.f32 %v735, %v756
      %v775 = vadd.f32 %v736, %v756
      %v776 = vadd.f32 %v737, %v756
      %v777 = vadd.f32 %v738, %v756
      %v778 = vadd.f32 %v739, %v756
      %v779 = vadd.f32 %v740, %v756
      %v780 = vadd.f32 %v741, %v756
      %v781 = vadd.f32 %v742, %v756
      %v782 = vadd.f32 %v743, %v756
      %v783 = vadd.f32 %v744, %v756
      %v784 = vadd.f32 %v745, %v756
      %v785 = vadd.f32 %v746, %v756
      %v786 = vadd.f32 %v747, %v756
      %v787 = vadd.f32 %v748, %v756
      %v788 = vadd.f32 %v749, %v756
      %v789 = vadd.f32 %v750, %v756
      %v790 = vmax.f32 %v758, 0.0
      %v791 = vmax.f32 %v759, 0.0
      %v792 = vmax.f32 %v760, 0.0
      %v793 = vmax.f32 %v761, 0.0
      %v794 = vmax.f32 %v762, 0.0
      %v795 = vmax.f32 %v763, 0.0
      %v796 = vmax.f32 %v764, 0.0
      %v797 = vmax.f32 %v765, 0.0
      %v798 = vmax.f32 %v766, 0.0
      %v799 = vmax.f32 %v767, 0.0
      %v800 = vmax.f32 %v768, 0.0
      %v801 = vmax.f32 %v769, 0.0
      %v802 = vmax.f32 %v770, 0.0
      %v803 = vmax.f32 %v771, 0.0
      %v804 = vmax.f32 %v772, 0.0
      %v805 = vmax.f32 %v773, 0.0
      %v806 = vmax.f32 %v774, 0.0
      %v807 = vmax.f32 %v775, 0.0
      %v808 = vmax.f32 %v776, 0.0
      %v809 = vmax.f32 %v777, 0.0
      %v810 = vmax.f32 %v778, 0.0
      %v811 = vmax.f32 %v779, 0.0
      %v812 = vmax.f32 %v780, 0.0
      %v813 = vmax.f32 %v781, 0.0
      %v814 = vmax.f32 %v782, 0.0
      %v815 = vmax.f32 %v783, 0.0
      %v816 = vmax.f32 %v784, 0.0
      %v817 = vmax.f32 %v785, 0.0
      %v818 = vmax.f32 %v786, 0.0
      %v819 = vmax.f32 %v787, 0.0
      %v820 = vmax.f32 %v788, 0.0
      %v821 = vmax.f32 %v789, 0.0
      %v822 = vld [vmem:[%s286] sm:$0xff]
      %v823 = vld [vmem:[%s286 + $0x8] sm:$0xff]
      %v824 = vld [vmem:[%s286 + $0x10] sm:$0xff]
      %v825 = vld [vmem:[%s286 + $0x18] sm:$0xff]
      %v826 = vld [vmem:[%s286 + $0x20] sm:$0xff]
      %v827 = vld [vmem:[%s286 + $0x28] sm:$0xff]
      %v828 = vld [vmem:[%s286 + $0x30] sm:$0xff]
      %v829 = vld [vmem:[%s286 + $0x38] sm:$0xff]
      %v830 = vld [vmem:[%s286 + $0x40] sm:$0xff]
      %v831 = vld [vmem:[%s286 + $0x48] sm:$0xff]
      %v832 = vld [vmem:[%s286 + $0x50] sm:$0xff]
      %v833 = vld [vmem:[%s286 + $0x58] sm:$0xff]
      %v834 = vld [vmem:[%s286 + $0x60] sm:$0xff]
      %v835 = vld [vmem:[%s286 + $0x68] sm:$0xff]
      %v836 = vld [vmem:[%s286 + $0x70] sm:$0xff]
      %v837 = vld [vmem:[%s286 + $0x78] sm:$0xff]
      %v838 = vld [vmem:[%s286 + $0x80] sm:$0xff]
      %v839 = vld [vmem:[%s286 + $0x88] sm:$0xff]
      %v840 = vld [vmem:[%s286 + $0x90] sm:$0xff]
      %v841 = vld [vmem:[%s286 + $0x98] sm:$0xff]
      %v842 = vld [vmem:[%s286 + $0xa0] sm:$0xff]
      %v843 = vld [vmem:[%s286 + $0xa8] sm:$0xff]
      %v844 = vld [vmem:[%s286 + $0xb0] sm:$0xff]
      %v845 = vld [vmem:[%s286 + $0xb8] sm:$0xff]
      %v846 = vld [vmem:[%s286 + $0xc0] sm:$0xff]
      %v847 = vld [vmem:[%s286 + $0xc8] sm:$0xff]
      %v848 = vld [vmem:[%s286 + $0xd0] sm:$0xff]
      %v849 = vld [vmem:[%s286 + $0xd8] sm:$0xff]
      %v850 = vld [vmem:[%s286 + $0xe0] sm:$0xff]
      %v851 = vld [vmem:[%s286 + $0xe8] sm:$0xff]
      %v852 = vld [vmem:[%s286 + $0xf0] sm:$0xff]
      %v853 = vld [vmem:[%s286 + $0xf8] sm:$0xff]
      %v854 = vadd.f32 %v790, %v822
      %v855 = vadd.f32 %v791, %v823
      %v856 = vadd.f32 %v792, %v824
      %v857 = vadd.f32 %v793, %v825
      %v858 = vadd.f32 %v794, %v826
      %v859 = vadd.f32 %v795, %v827
      %v860 = vadd.f32 %v796, %v828
      %v861 = vadd.f32 %v797, %v829
      %v862 = vadd.f32 %v798, %v830
      %v863 = vadd.f32 %v799, %v831
      %v864 = vadd.f32 %v800, %v832
      %v865 = vadd.f32 %v801, %v833
      %v866 = vadd.f32 %v802, %v834
      %v867 = vadd.f32 %v803, %v835
      %v868 = vadd.f32 %v804, %v836
      %v869 = vadd.f32 %v805, %v837
      %v870 = vadd.f32 %v806, %v838
      %v871 = vadd.f32 %v807, %v839
      %v872 = vadd.f32 %v808, %v840
      %v873 = vadd.f32 %v809, %v841
      %v874 = vadd.f32 %v810, %v842
      %v875 = vadd.f32 %v811, %v843
      %v876 = vadd.f32 %v812, %v844
      %v877 = vadd.f32 %v813, %v845
      %v878 = vadd.f32 %v814, %v846
      %v879 = vadd.f32 %v815, %v847
      %v880 = vadd.f32 %v816, %v848
      %v881 = vadd.f32 %v817, %v849
      %v882 = vadd.f32 %v818, %v850
      %v883 = vadd.f32 %v819, %v851
      %v884 = vadd.f32 %v820, %v852
      %v885 = vadd.f32 %v821, %v853
      %vm886 = vcmask 523264
      %887 = vst.msk [vmem:[%s291] sm:$0xff] %vm886, %v854
      %888 = vst.msk [vmem:[%s291 + $0x8] sm:$0xff] %vm886, %v855
      %889 = vst.msk [vmem:[%s291 + $0x10] sm:$0xff] %vm886, %v856
      %890 = vst.msk [vmem:[%s291 + $0x18] sm:$0xff] %vm886, %v857
      %891 = vst.msk [vmem:[%s291 + $0x20] sm:$0xff] %vm886, %v858
      %892 = vst.msk [vmem:[%s291 + $0x28] sm:$0xff] %vm886, %v859
      %893 = vst.msk [vmem:[%s291 + $0x30] sm:$0xff] %vm886, %v860
      %894 = vst.msk [vmem:[%s291 + $0x38] sm:$0xff] %vm886, %v861
      %895 = vst.msk [vmem:[%s291 + $0x40] sm:$0xff] %vm886, %v862
      %896 = vst.msk [vmem:[%s291 + $0x48] sm:$0xff] %vm886, %v863
      %897 = vst.msk [vmem:[%s291 + $0x50] sm:$0xff] %vm886, %v864
      %898 = vst.msk [vmem:[%s291 + $0x58] sm:$0xff] %vm886, %v865
      %899 = vst.msk [vmem:[%s291 + $0x60] sm:$0xff] %vm886, %v866
      %900 = vst.msk [vmem:[%s291 + $0x68] sm:$0xff] %vm886, %v867
      %901 = vst.msk [vmem:[%s291 + $0x70] sm:$0xff] %vm886, %v868
      %902 = vst.msk [vmem:[%s291 + $0x78] sm:$0xff] %vm886, %v869
      %903 = vst.msk [vmem:[%s291 + $0x80] sm:$0xff] %vm886, %v870
      %904 = vst.msk [vmem:[%s291 + $0x88] sm:$0xff] %vm886, %v871
      %905 = vst.msk [vmem:[%s291 + $0x90] sm:$0xff] %vm886, %v872
      %906 = vst.msk [vmem:[%s291 + $0x98] sm:$0xff] %vm886, %v873
      %907 = vst.msk [vmem:[%s291 + $0xa0] sm:$0xff] %vm886, %v874
      %908 = vst.msk [vmem:[%s291 + $0xa8] sm:$0xff] %vm886, %v875
      %909 = vst.msk [vmem:[%s291 + $0xb0] sm:$0xff] %vm886, %v876
      %910 = vst.msk [vmem:[%s291 + $0xb8] sm:$0xff] %vm886, %v877
      %911 = vst.msk [vmem:[%s291 + $0xc0] sm:$0xff] %vm886, %v878
      %912 = vst.msk [vmem:[%s291 + $0xc8] sm:$0xff] %vm886, %v879
      %913 = vst.msk [vmem:[%s291 + $0xd0] sm:$0xff] %vm886, %v880
      %914 = vst.msk [vmem:[%s291 + $0xd8] sm:$0xff] %vm886, %v881
      %915 = vst.msk [vmem:[%s291 + $0xe0] sm:$0xff] %vm886, %v882
      %916 = vst.msk [vmem:[%s291 + $0xe8] sm:$0xff] %vm886, %v883
      %917 = vst.msk [vmem:[%s291 + $0xf0] sm:$0xff] %vm886, %v884
      %918 = vst.msk [vmem:[%s291 + $0xf8] sm:$0xff] %vm886, %v885
      %p919 = scmp.lt.s32.totalorder %s17, 1
      %s920 = scalar_select %p919, %s17, 1
      %s921 = smul.addr %s920, 32
      %s922 = smul.addr %s921, 8
      %s923 = scalar_lea.vmem %s6, %s922
      // Predicated region
      $region45: #{ffc_resnet_block_nchw.19} parent=43 // pred_check
        %p924 = pneg %p176
      $region46: #{ffc_resnet_block_nchw.19} parent=43 // pred_check_branch
        %926 = sbr.rel (%p924) target = $region48
      $region47: #{ffc_resnet_block_nchw.19} parent=43 // pred_region
        _
      $region48: #{ffc_resnet_block_nchw.19} parent=43 // pred_fallthru
        _
    $region44: #{ffc_resnet_block_nchw.19} parent=5 // pred_fallthru
      _
    %p927 = scmp.le.s32.totalorder 2, %s12
    // Predicated region
    $region49: #{ffc_resnet_block_nchw.19} parent=5 // pred_check
      %p928 = pneg %p927
    $region50: #{ffc_resnet_block_nchw.19} parent=5 // pred_check_branch
      %930 = sbr.rel (%p928) target = $region52
    $region51: #{ffc_resnet_block_nchw.19} parent=5 // pred_region
      %s931 = ssub.s32 %s12, 2
      // Predicated region
      $region53: #{ffc_resnet_block_nchw.19} parent=51 // pred_check
        %p932 = pneg %p182
      $region54: #{ffc_resnet_block_nchw.19} parent=51 // pred_check_branch
        %934 = sbr.rel (%p932) target = $region56
      $region55: #{ffc_resnet_block_nchw.19} parent=51 // pred_region
        %p935 = scmp.lt.s32.totalorder %s18, 1
        %s936 = scalar_select %p935, %s18, 1
        %s937 = smul.addr %s936, 32
        %s938 = smul.addr %s937, 8
        %s939 = scalar_lea.vmem %s6, %s938
      $region56: #{ffc_resnet_block_nchw.19} parent=51 // pred_fallthru
        _
    $region52: #{ffc_resnet_block_nchw.19} parent=5 // pred_fallthru
      _
  $region6: #{ffc_resnet_block_nchw.19} parent=0 // loop_footer
    %s16 = sadd.s32 1, %s12
  $region7: #{ffc_resnet_block_nchw.19} parent=0 // loop_footer_branch
    %11 = sbr.rel target = $region3
  $region8: #{ffc_resnet_block_nchw.19} parent=0 // loop_exit
    _

</llo_original>
